<compile_context>
chip_gen: v5e
topology: v5e:2x2
jax: 0.10.0
libtpu: 0.0.40
codegen_flags: <defaults>
</compile_context>

<pallas_src>
import functools

import jax
import jax.numpy as jnp
from jax.experimental import pallas as pl
from jax.experimental.pallas import tpu as pltpu

LANE = 128


def _round_up(x, m):
    return (x + m - 1) // m * m


# ----------------------------- Pallas kernels ------------------------------

def _matmul_bias_act_kernel(x_ref, w_ref, b_ref, o_ref, *, relu):
    # bf16 x bf16 -> f32 accumulate on the MXU; bias/ReLU in f32.
    y = jnp.dot(x_ref[...], w_ref[...], preferred_element_type=jnp.float32)
    y = y + b_ref[...]
    if relu:
        y = jnp.maximum(y, 0.0)
    o_ref[...] = y.astype(o_ref.dtype)


def _fc_head_kernel(x_ref, scale_ref, shift_ref, w1_ref, b1_ref,
                    w2_ref, b2_ref, o_ref):
    # Fused decoder: BN(eval) scale/shift + fc1 + ReLU + fc2, one kernel.
    x = x_ref[...].astype(jnp.float32) * scale_ref[...] + shift_ref[...]
    h = jnp.dot(x.astype(jnp.bfloat16), w1_ref[...],
                preferred_element_type=jnp.float32)
    h = jnp.maximum(h + b1_ref[...], 0.0)
    y = jnp.dot(h.astype(jnp.bfloat16), w2_ref[...],
                preferred_element_type=jnp.float32)
    o_ref[...] = y + b2_ref[...]


def _maxpool_kernel(p_ref, o_ref):
    # p: (4, TR, lanes) -> elementwise max over the 4 pooling taps.
    o_ref[...] = jnp.max(p_ref[...], axis=0)


# ----------------------------- Pallas wrappers ------------------------------

def _choose_tm(m_pad):
    """Row-tile size: large tiles, but keep >= 2 grid steps (megacore)."""
    if m_pad <= 16:
        return m_pad
    return min(1024, _round_up(m_pad // 2, 16))


def pallas_matmul_bias_act(x, w, b, *, relu, out_dtype=jnp.bfloat16):
    """act(x @ w + b), lane-dense (K, N padded to 128), bf16 MXU, f32 accumulate."""
    M, K = x.shape
    N = w.shape[1]
    K_pad = _round_up(K, LANE)
    N_pad = _round_up(N, LANE)
    M16 = _round_up(M, 16)
    TM = _choose_tm(M16)
    M_pad = _round_up(M16, TM)

    x_p = jnp.pad(x.astype(jnp.bfloat16), ((0, M_pad - M), (0, K_pad - K)))
    w_p = jnp.pad(w.astype(jnp.bfloat16), ((0, K_pad - K), (0, N_pad - N)))
    b_p = jnp.pad(b.astype(jnp.float32), (0, N_pad - N)).reshape(1, N_pad)

    out = pl.pallas_call(
        functools.partial(_matmul_bias_act_kernel, relu=relu),
        out_shape=jax.ShapeDtypeStruct((M_pad, N_pad), out_dtype),
        grid=(M_pad // TM,),
        in_specs=[
            pl.BlockSpec((TM, K_pad), lambda i: (i, 0)),
            pl.BlockSpec((K_pad, N_pad), lambda i: (0, 0)),
            pl.BlockSpec((1, N_pad), lambda i: (0, 0)),
        ],
        out_specs=pl.BlockSpec((TM, N_pad), lambda i: (i, 0)),
        compiler_params=pltpu.CompilerParams(dimension_semantics=("parallel",)),
    )(x_p, w_p, b_p)
    # Slice padded rows/cols off BEFORE anything downstream sees them.
    return out[:M, :N]


def conv2d_relu(x_nhwc, w_hwio, b, *, stride, padding):
    """Conv2d + bias + ReLU via im2col and a lane-dense Pallas matmul kernel."""
    N, H, W, C = x_nhwc.shape
    KH, KW, _, Cout = w_hwio.shape
    xp = jnp.pad(x_nhwc, ((0, 0), (padding, padding), (padding, padding), (0, 0)))
    xp = xp.astype(jnp.bfloat16)  # halves HBM traffic of the im2col expansion
    Ho = (H + 2 * padding - KH) // stride + 1
    Wo = (W + 2 * padding - KW) // stride + 1
    cols = []
    for kh in range(KH):
        for kw in range(KW):
            cols.append(xp[:, kh:kh + stride * Ho:stride,
                           kw:kw + stride * Wo:stride, :])
    # TODO(synk): im2col is still materialized by XLA (KH*KW x expansion of the
    # activation); moving it into the Pallas kernel as a (kh, kw) reduction grid
    # axis would remove that extra HBM pass.
    patches = jnp.concatenate(cols, axis=-1).reshape(N * Ho * Wo, KH * KW * C)
    w2 = w_hwio.reshape(KH * KW * C, Cout)
    out = pallas_matmul_bias_act(patches, w2, b, relu=True, out_dtype=jnp.bfloat16)
    return out.reshape(N, Ho, Wo, Cout)


def maxpool2(x_nhwc):
    """MaxPool2d(2,2): lane-dense, row-tiled Pallas max-reduction over 4 taps."""
    # TODO(synk): could be fused into the preceding conv's epilogue to remove an
    # HBM round trip entirely.
    N, H, W, C = x_nhwc.shape
    Ho, Wo = H // 2, W // 2
    taps = jnp.stack(
        [x_nhwc[:, 0::2, 0::2, :], x_nhwc[:, 0::2, 1::2, :],
         x_nhwc[:, 1::2, 0::2, :], x_nhwc[:, 1::2, 1::2, :]], axis=0)
    total = N * Ho * Wo * C
    lanes = LANE if total % LANE == 0 else C   # lane-dense reshape when possible
    R = total // lanes
    taps = taps.reshape(4, R, lanes)

    if R >= 32:
        TR = min(512, _round_up(pl.cdiv(R, 2), 16))
    else:
        TR = _round_up(R, 8)
    R_pad = _round_up(R, TR)
    if R_pad != R:
        taps = jnp.pad(taps, ((0, 0), (0, R_pad - R), (0, 0)))

    out = pl.pallas_call(
        _maxpool_kernel,
        out_shape=jax.ShapeDtypeStruct((R_pad, lanes), x_nhwc.dtype),
        grid=(R_pad // TR,),
        in_specs=[pl.BlockSpec((4, TR, lanes), lambda i: (0, i, 0))],
        out_specs=pl.BlockSpec((TR, lanes), lambda i: (i, 0)),
        compiler_params=pltpu.CompilerParams(dimension_semantics=("parallel",)),
    )(taps)
    return out[:R].reshape(N, Ho, Wo, C)


def pallas_fc_head(feats_nhwc, scale, shift, w1, b1, w2, b2):
    """Fused BN(eval) + Linear(2048,218) + ReLU + Linear(218,10), row-tiled."""
    M, K = feats_nhwc.shape           # K = 2048, already a multiple of 128
    H1 = w1.shape[1]                  # 218
    H2 = w2.shape[1]                  # 10
    H1_pad = _round_up(H1, LANE)      # 256
    H2_pad = _round_up(H2, LANE)      # 128
    M8 = _round_up(M, 8)
    TM = M8 if M8 <= 512 else min(512, _round_up(M8 // 2, 16))
    M_pad = _round_up(M8, TM)

    x_p = jnp.pad(feats_nhwc.astype(jnp.bfloat16), ((0, M_pad - M), (0, 0)))
    scale_p = scale.astype(jnp.float32).reshape(1, K)
    shift_p = shift.astype(jnp.float32).reshape(1, K)
    w1_p = jnp.pad(w1.astype(jnp.bfloat16), ((0, 0), (0, H1_pad - H1)))
    b1_p = jnp.pad(b1.astype(jnp.float32), (0, H1_pad - H1)).reshape(1, H1_pad)
    w2_p = jnp.pad(w2.astype(jnp.bfloat16), ((0, H1_pad - H1), (0, H2_pad - H2)))
    b2_p = jnp.pad(b2.astype(jnp.float32), (0, H2_pad - H2)).reshape(1, H2_pad)

    out = pl.pallas_call(
        _fc_head_kernel,
        out_shape=jax.ShapeDtypeStruct((M_pad, H2_pad), jnp.float32),
        grid=(M_pad // TM,),
        in_specs=[
            pl.BlockSpec((TM, K), lambda i: (i, 0)),
            pl.BlockSpec((1, K), lambda i: (0, 0)),
            pl.BlockSpec((1, K), lambda i: (0, 0)),
            pl.BlockSpec((K, H1_pad), lambda i: (0, 0)),
            pl.BlockSpec((1, H1_pad), lambda i: (0, 0)),
            pl.BlockSpec((H1_pad, H2_pad), lambda i: (0, 0)),
            pl.BlockSpec((1, H2_pad), lambda i: (0, 0)),
        ],
        out_specs=pl.BlockSpec((TM, H2_pad), lambda i: (i, 0)),
        compiler_params=pltpu.CompilerParams(dimension_semantics=("parallel",)),
    )(x_p, scale_p, shift_p, w1_p, b1_p, w2_p, b2_p)
    return out[:M, :H2]


# ----------------------------- Model definition -----------------------------

def init_params(key):
    ks = jax.random.split(key, 9)

    def w_init(k, shape, fan_in):
        return jax.random.normal(k, shape, jnp.float32) / jnp.sqrt(float(fan_in))

    return {
        # conv weights stored in HWIO layout (== torch weight.permute(2,3,1,0))
        "w1": w_init(ks[0], (5, 5, 3, 16), 5 * 5 * 3),
        "b1": jnp.full((16,), 0.01, jnp.float32),
        "w2": w_init(ks[1], (3, 3, 16, 16), 3 * 3 * 16),
        "b2": jnp.full((16,), 0.01, jnp.float32),
        "w3": w_init(ks[2], (5, 5, 16, 32), 5 * 5 * 16),
        "b3": jnp.full((32,), 0.01, jnp.float32),
        "w4": w_init(ks[3], (3, 3, 32, 32), 3 * 3 * 32),
        "b4": jnp.full((32,), 0.01, jnp.float32),
        # BatchNorm1d(2048) eval-mode params / running stats (torch NCHW order)
        "bn_gamma": 1.0 + 0.1 * jax.random.normal(ks[4], (2048,), jnp.float32),
        "bn_beta": 0.1 * jax.random.normal(ks[5], (2048,), jnp.float32),
        "bn_mean": 0.05 * jax.random.normal(ks[6], (2048,), jnp.float32),
        "bn_var": jnp.ones((2048,), jnp.float32),
        # FC head (rows in torch NCHW-flatten order, (in, out) layout)
        "fc1_w": w_init(ks[7], (2048, 218), 2048),
        "fc1_b": jnp.zeros((218,), jnp.float32),
        "fc2_w": w_init(ks[8], (218, 10), 218),
        "fc2_b": jnp.zeros((10,), jnp.float32),
    }


def cnn_forward(params, x_nchw):
    x = jnp.transpose(x_nchw, (0, 2, 3, 1))  # NCHW -> NHWC

    # encoder
    x = conv2d_relu(x, params["w1"], params["b1"], stride=1, padding=2)  # 32x32x16
    # Dropout(0.2): identity in inference mode
    x = conv2d_relu(x, params["w2"], params["b2"], stride=1, padding=1)  # 32x32x16
    x = maxpool2(x)                                                      # 16x16x16
    # Dropout(0.25): identity
    x = conv2d_relu(x, params["w3"], params["b3"], stride=1, padding=2)  # 16x16x32
    # Dropout(0.5): identity
    x = conv2d_relu(x, params["w4"], params["b4"], stride=2, padding=1)  # 8x8x32
    # Dropout(0.5): identity

    # Flatten in NHWC order (no runtime transpose); fold torch's NCHW
    # x.view(N, -1) ordering into fc1 weight rows and BN params instead.
    N, Hf, Wf, Cf = x.shape
    feats = x.reshape(N, Hf * Wf * Cf)  # (N, 2048), NHWC order, bf16

    perm = jnp.arange(Cf * Hf * Wf).reshape(Cf, Hf, Wf).transpose(1, 2, 0).reshape(-1)
    eps = 1e-5
    scale = params["bn_gamma"] / jnp.sqrt(params["bn_var"] + eps)
    shift = params["bn_beta"] - params["bn_mean"] * scale
    scale = scale[perm]
    shift = shift[perm]
    fc1_w = params["fc1_w"][perm, :]

    # decoder: fused BN(eval) + Linear(2048,218) + ReLU + Linear(218,10)
    out = pallas_fc_head(feats, scale, shift,
                         fc1_w, params["fc1_b"],
                         params["fc2_w"], params["fc2_b"])
    return out


if __name__ == "__main__":
    key = jax.random.PRNGKey(0)
    pkey, xkey = jax.random.split(key)
    params = init_params(pkey)
    x = jax.random.normal(xkey, (2, 3, 32, 32), jnp.float32)  # NCHW, like torch

    fwd = jax.jit(cnn_forward)
    out = fwd(params, x)
    out = jax.block_until_ready(out)
    assert out.shape == (2, 10) and out.dtype == jnp.float32
    assert bool(jnp.all(jnp.isfinite(out)))
    print("KERNEL_OK")
</pallas_src>

<mosaic_0001>
module attributes {stable_mosaic.version = 11 : i64} {
  func.func @_matmul_bias_act_kernel(%arg0: i32, %arg1: memref<1024x128xbf16, #tpu.memory_space<vmem>>, %arg2: memref<128x128xbf16, #tpu.memory_space<vmem>>, %arg3: memref<1x128xf32, #tpu.memory_space<vmem>>, %arg4: memref<1024x128xbf16, #tpu.memory_space<vmem>>) attributes {dimension_semantics = [#tpu.dimension_semantics<parallel>], iteration_bounds = array<i64: 2>, scalar_prefetch = 0 : i64, scratch_operands = 0 : i64, tpu.core_type = #tpu.core_type<tc>, window_params = [{transform_indices = @transform_0, window_bounds = array<i64: 1024, 128>}, {pipeline_mode = #tpu.pipeline_mode<synchronous>, transform_indices = @transform_1, window_bounds = array<i64: 128, 128>}, {pipeline_mode = #tpu.pipeline_mode<synchronous>, transform_indices = @transform_2, window_bounds = array<i64: 1, 128>}, {transform_indices = @transform_3, window_bounds = array<i64: 1024, 128>}]} {
    %c0 = arith.constant 0 : index
    %c0_0 = arith.constant 0 : index
    %0 = vector.load %arg1[%c0, %c0_0] : memref<1024x128xbf16, #tpu.memory_space<vmem>>, vector<1024x128xbf16>
    %c0_1 = arith.constant 0 : index
    %c0_2 = arith.constant 0 : index
    %1 = vector.load %arg2[%c0_1, %c0_2] : memref<128x128xbf16, #tpu.memory_space<vmem>>, vector<128x128xbf16>
    %cst = arith.constant dense<0.000000e+00> : vector<1024x128xf32>
    %2 = tpu.matmul %0, %1, %cst {dimension_numbers = #tpu.dot_dimension_numbers<[1], [0], [0], [1], [0, 0, 1, 1], [], []>} : vector<1024x128xbf16>, vector<128x128xbf16>, vector<1024x128xf32> -> vector<1024x128xf32>
    %c0_3 = arith.constant 0 : index
    %c0_4 = arith.constant 0 : index
    %3 = vector.load %arg3[%c0_3, %c0_4] : memref<1x128xf32, #tpu.memory_space<vmem>>, vector<1x128xf32>
    %4 = vector.broadcast %3 : vector<1x128xf32> to vector<1024x128xf32>
    %5 = arith.addf %2, %4 : vector<1024x128xf32>
    %cst_5 = arith.constant 0.000000e+00 : f32
    %6 = vector.broadcast %cst_5 : f32 to vector<1024x128xf32>
    %7 = arith.maximumf %5, %6 : vector<1024x128xf32>
    %8 = arith.truncf %7 : vector<1024x128xf32> to vector<1024x128xbf16>
    %c0_6 = arith.constant 0 : index
    %c0_7 = arith.constant 0 : index
    %9 = vector.load %arg4[%c0_6, %c0_7] : memref<1024x128xbf16, #tpu.memory_space<vmem>>, vector<1024x128xbf16>
    tpu.vector_store %arg4[%c0_6, %c0_7], %8 {strides = array<i32>} : memref<1024x128xbf16, #tpu.memory_space<vmem>>, vector<1024x128xbf16>,
    return
  }
  func.func @transform_0(%arg0: i32) -> (i32, i32) {
    %c0_i32 = arith.constant 0 : i32
    %c0_i32_0 = arith.constant 0 : i32
    return %arg0, %c0_i32 : i32, i32
  }
  func.func @transform_1(%arg0: i32) -> (i32, i32) {
    %c0_i32 = arith.constant 0 : i32
    %c0_i32_0 = arith.constant 0 : i32
    %c0_i32_1 = arith.constant 0 : i32
    return %c0_i32, %c0_i32_0 : i32, i32
  }
  func.func @transform_2(%arg0: i32) -> (i32, i32) {
    %c0_i32 = arith.constant 0 : i32
    %c0_i32_0 = arith.constant 0 : i32
    %c0_i32_1 = arith.constant 0 : i32
    return %c0_i32, %c0_i32_0 : i32, i32
  }
  func.func @transform_3(%arg0: i32) -> (i32, i32) {
    %c0_i32 = arith.constant 0 : i32
    %c0_i32_0 = arith.constant 0 : i32
    return %arg0, %c0_i32 : i32, i32
  }
}

module attributes {stable_mosaic.version = 11 : i64} {
  func.func @_matmul_bias_act_kernel(%arg0: i32, %arg1: memref<1024x256xbf16, #tpu.memory_space<vmem>>, %arg2: memref<256x128xbf16, #tpu.memory_space<vmem>>, %arg3: memref<1x128xf32, #tpu.memory_space<vmem>>, %arg4: memref<1024x128xbf16, #tpu.memory_space<vmem>>) attributes {dimension_semantics = [#tpu.dimension_semantics<parallel>], iteration_bounds = array<i64: 2>, scalar_prefetch = 0 : i64, scratch_operands = 0 : i64, tpu.core_type = #tpu.core_type<tc>, window_params = [{transform_indices = @transform_0, window_bounds = array<i64: 1024, 256>}, {pipeline_mode = #tpu.pipeline_mode<synchronous>, transform_indices = @transform_1, window_bounds = array<i64: 256, 128>}, {pipeline_mode = #tpu.pipeline_mode<synchronous>, transform_indices = @transform_2, window_bounds = array<i64: 1, 128>}, {transform_indices = @transform_3, window_bounds = array<i64: 1024, 128>}]} {
    %c0 = arith.constant 0 : index
    %c0_0 = arith.constant 0 : index
    %0 = vector.load %arg1[%c0, %c0_0] : memref<1024x256xbf16, #tpu.memory_space<vmem>>, vector<1024x256xbf16>
    %c0_1 = arith.constant 0 : index
    %c0_2 = arith.constant 0 : index
    %1 = vector.load %arg2[%c0_1, %c0_2] : memref<256x128xbf16, #tpu.memory_space<vmem>>, vector<256x128xbf16>
    %cst = arith.constant dense<0.000000e+00> : vector<1024x128xf32>
    %2 = tpu.matmul %0, %1, %cst {dimension_numbers = #tpu.dot_dimension_numbers<[1], [0], [0], [1], [0, 0, 1, 1], [], []>} : vector<1024x256xbf16>, vector<256x128xbf16>, vector<1024x128xf32> -> vector<1024x128xf32>
    %c0_3 = arith.constant 0 : index
    %c0_4 = arith.constant 0 : index
    %3 = vector.load %arg3[%c0_3, %c0_4] : memref<1x128xf32, #tpu.memory_space<vmem>>, vector<1x128xf32>
    %4 = vector.broadcast %3 : vector<1x128xf32> to vector<1024x128xf32>
    %5 = arith.addf %2, %4 : vector<1024x128xf32>
    %cst_5 = arith.constant 0.000000e+00 : f32
    %6 = vector.broadcast %cst_5 : f32 to vector<1024x128xf32>
    %7 = arith.maximumf %5, %6 : vector<1024x128xf32>
    %8 = arith.truncf %7 : vector<1024x128xf32> to vector<1024x128xbf16>
    %c0_6 = arith.constant 0 : index
    %c0_7 = arith.constant 0 : index
    %9 = vector.load %arg4[%c0_6, %c0_7] : memref<1024x128xbf16, #tpu.memory_space<vmem>>, vector<1024x128xbf16>
    tpu.vector_store %arg4[%c0_6, %c0_7], %8 {strides = array<i32>} : memref<1024x128xbf16, #tpu.memory_space<vmem>>, vector<1024x128xbf16>,
    return
  }
  func.func @transform_0(%arg0: i32) -> (i32, i32) {
    %c0_i32 = arith.constant 0 : i32
    %c0_i32_0 = arith.constant 0 : i32
    return %arg0, %c0_i32 : i32, i32
  }
  func.func @transform_1(%arg0: i32) -> (i32, i32) {
    %c0_i32 = arith.constant 0 : i32
    %c0_i32_0 = arith.constant 0 : i32
    %c0_i32_1 = arith.constant 0 : i32
    return %c0_i32, %c0_i32_0 : i32, i32
  }
  func.func @transform_2(%arg0: i32) -> (i32, i32) {
    %c0_i32 = arith.constant 0 : i32
    %c0_i32_0 = arith.constant 0 : i32
    %c0_i32_1 = arith.constant 0 : i32
    return %c0_i32, %c0_i32_0 : i32, i32
  }
  func.func @transform_3(%arg0: i32) -> (i32, i32) {
    %c0_i32 = arith.constant 0 : i32
    %c0_i32_0 = arith.constant 0 : i32
    return %arg0, %c0_i32 : i32, i32
  }
}

module attributes {stable_mosaic.version = 11 : i64} {
  func.func @_maxpool_kernel(%arg0: i32, %arg1: memref<4x32x128xbf16, #tpu.memory_space<vmem>>, %arg2: memref<32x128xbf16, #tpu.memory_space<vmem>>) attributes {dimension_semantics = [#tpu.dimension_semantics<parallel>], iteration_bounds = array<i64: 2>, scalar_prefetch = 0 : i64, scratch_operands = 0 : i64, tpu.core_type = #tpu.core_type<tc>, window_params = [{transform_indices = @transform_0, window_bounds = array<i64: 4, 32, 128>}, {transform_indices = @transform_1, window_bounds = array<i64: 32, 128>}]} {
    %c0 = arith.constant 0 : index
    %c0_0 = arith.constant 0 : index
    %c0_1 = arith.constant 0 : index
    %0 = vector.load %arg1[%c0, %c0_0, %c0_1] : memref<4x32x128xbf16, #tpu.memory_space<vmem>>, vector<4x32x128xbf16>
    %cst = arith.constant dense<0xFF80> : vector<32x128xbf16>
    %1 = vector.multi_reduction <maximumf>, %0, %cst [0] : vector<4x32x128xbf16> to vector<32x128xbf16>
    %c0_2 = arith.constant 0 : index
    %c0_3 = arith.constant 0 : index
    %2 = vector.load %arg2[%c0_2, %c0_3] : memref<32x128xbf16, #tpu.memory_space<vmem>>, vector<32x128xbf16>
    tpu.vector_store %arg2[%c0_2, %c0_3], %1 {strides = array<i32>} : memref<32x128xbf16, #tpu.memory_space<vmem>>, vector<32x128xbf16>,
    return
  }
  func.func @transform_0(%arg0: i32) -> (i32, i32, i32) {
    %c0_i32 = arith.constant 0 : i32
    %c0_i32_0 = arith.constant 0 : i32
    %c0_i32_1 = arith.constant 0 : i32
    return %c0_i32, %arg0, %c0_i32_0 : i32, i32, i32
  }
  func.func @transform_1(%arg0: i32) -> (i32, i32) {
    %c0_i32 = arith.constant 0 : i32
    %c0_i32_0 = arith.constant 0 : i32
    return %arg0, %c0_i32 : i32, i32
  }
}

module attributes {stable_mosaic.version = 11 : i64} {
  func.func @_matmul_bias_act_kernel(%arg0: i32, %arg1: memref<256x512xbf16, #tpu.memory_space<vmem>>, %arg2: memref<512x128xbf16, #tpu.memory_space<vmem>>, %arg3: memref<1x128xf32, #tpu.memory_space<vmem>>, %arg4: memref<256x128xbf16, #tpu.memory_space<vmem>>) attributes {dimension_semantics = [#tpu.dimension_semantics<parallel>], iteration_bounds = array<i64: 2>, scalar_prefetch = 0 : i64, scratch_operands = 0 : i64, tpu.core_type = #tpu.core_type<tc>, window_params = [{transform_indices = @transform_0, window_bounds = array<i64: 256, 512>}, {pipeline_mode = #tpu.pipeline_mode<synchronous>, transform_indices = @transform_1, window_bounds = array<i64: 512, 128>}, {pipeline_mode = #tpu.pipeline_mode<synchronous>, transform_indices = @transform_2, window_bounds = array<i64: 1, 128>}, {transform_indices = @transform_3, window_bounds = array<i64: 256, 128>}]} {
    %c0 = arith.constant 0 : index
    %c0_0 = arith.constant 0 : index
    %0 = vector.load %arg1[%c0, %c0_0] : memref<256x512xbf16, #tpu.memory_space<vmem>>, vector<256x512xbf16>
    %c0_1 = arith.constant 0 : index
    %c0_2 = arith.constant 0 : index
    %1 = vector.load %arg2[%c0_1, %c0_2] : memref<512x128xbf16, #tpu.memory_space<vmem>>, vector<512x128xbf16>
    %cst = arith.constant dense<0.000000e+00> : vector<256x128xf32>
    %2 = tpu.matmul %0, %1, %cst {dimension_numbers = #tpu.dot_dimension_numbers<[1], [0], [0], [1], [0, 0, 1, 1], [], []>} : vector<256x512xbf16>, vector<512x128xbf16>, vector<256x128xf32> -> vector<256x128xf32>
    %c0_3 = arith.constant 0 : index
    %c0_4 = arith.constant 0 : index
    %3 = vector.load %arg3[%c0_3, %c0_4] : memref<1x128xf32, #tpu.memory_space<vmem>>, vector<1x128xf32>
    %4 = vector.broadcast %3 : vector<1x128xf32> to vector<256x128xf32>
    %5 = arith.addf %2, %4 : vector<256x128xf32>
    %cst_5 = arith.constant 0.000000e+00 : f32
    %6 = vector.broadcast %cst_5 : f32 to vector<256x128xf32>
    %7 = arith.maximumf %5, %6 : vector<256x128xf32>
    %8 = arith.truncf %7 : vector<256x128xf32> to vector<256x128xbf16>
    %c0_6 = arith.constant 0 : index
    %c0_7 = arith.constant 0 : index
    %9 = vector.load %arg4[%c0_6, %c0_7] : memref<256x128xbf16, #tpu.memory_space<vmem>>, vector<256x128xbf16>
    tpu.vector_store %arg4[%c0_6, %c0_7], %8 {strides = array<i32>} : memref<256x128xbf16, #tpu.memory_space<vmem>>, vector<256x128xbf16>,
    return
  }
  func.func @transform_0(%arg0: i32) -> (i32, i32) {
    %c0_i32 = arith.constant 0 : i32
    %c0_i32_0 = arith.constant 0 : i32
    return %arg0, %c0_i32 : i32, i32
  }
  func.func @transform_1(%arg0: i32) -> (i32, i32) {
    %c0_i32 = arith.constant 0 : i32
    %c0_i32_0 = arith.constant 0 : i32
    %c0_i32_1 = arith.constant 0 : i32
    return %c0_i32, %c0_i32_0 : i32, i32
  }
  func.func @transform_2(%arg0: i32) -> (i32, i32) {
    %c0_i32 = arith.constant 0 : i32
    %c0_i32_0 = arith.constant 0 : i32
    %c0_i32_1 = arith.constant 0 : i32
    return %c0_i32, %c0_i32_0 : i32, i32
  }
  func.func @transform_3(%arg0: i32) -> (i32, i32) {
    %c0_i32 = arith.constant 0 : i32
    %c0_i32_0 = arith.constant 0 : i32
    return %arg0, %c0_i32 : i32, i32
  }
}

module attributes {stable_mosaic.version = 11 : i64} {
  func.func @_matmul_bias_act_kernel(%arg0: i32, %arg1: memref<64x384xbf16, #tpu.memory_space<vmem>>, %arg2: memref<384x128xbf16, #tpu.memory_space<vmem>>, %arg3: memref<1x128xf32, #tpu.memory_space<vmem>>, %arg4: memref<64x128xbf16, #tpu.memory_space<vmem>>) attributes {dimension_semantics = [#tpu.dimension_semantics<parallel>], iteration_bounds = array<i64: 2>, scalar_prefetch = 0 : i64, scratch_operands = 0 : i64, tpu.core_type = #tpu.core_type<tc>, window_params = [{transform_indices = @transform_0, window_bounds = array<i64: 64, 384>}, {pipeline_mode = #tpu.pipeline_mode<synchronous>, transform_indices = @transform_1, window_bounds = array<i64: 384, 128>}, {pipeline_mode = #tpu.pipeline_mode<synchronous>, transform_indices = @transform_2, window_bounds = array<i64: 1, 128>}, {transform_indices = @transform_3, window_bounds = array<i64: 64, 128>}]} {
    %c0 = arith.constant 0 : index
    %c0_0 = arith.constant 0 : index
    %0 = vector.load %arg1[%c0, %c0_0] : memref<64x384xbf16, #tpu.memory_space<vmem>>, vector<64x384xbf16>
    %c0_1 = arith.constant 0 : index
    %c0_2 = arith.constant 0 : index
    %1 = vector.load %arg2[%c0_1, %c0_2] : memref<384x128xbf16, #tpu.memory_space<vmem>>, vector<384x128xbf16>
    %cst = arith.constant dense<0.000000e+00> : vector<64x128xf32>
    %2 = tpu.matmul %0, %1, %cst {dimension_numbers = #tpu.dot_dimension_numbers<[1], [0], [0], [1], [0, 0, 1, 1], [], []>} : vector<64x384xbf16>, vector<384x128xbf16>, vector<64x128xf32> -> vector<64x128xf32>
    %c0_3 = arith.constant 0 : index
    %c0_4 = arith.constant 0 : index
    %3 = vector.load %arg3[%c0_3, %c0_4] : memref<1x128xf32, #tpu.memory_space<vmem>>, vector<1x128xf32>
    %4 = vector.broadcast %3 : vector<1x128xf32> to vector<64x128xf32>
    %5 = arith.addf %2, %4 : vector<64x128xf32>
    %cst_5 = arith.constant 0.000000e+00 : f32
    %6 = vector.broadcast %cst_5 : f32 to vector<64x128xf32>
    %7 = arith.maximumf %5, %6 : vector<64x128xf32>
    %8 = arith.truncf %7 : vector<64x128xf32> to vector<64x128xbf16>
    %c0_6 = arith.constant 0 : index
    %c0_7 = arith.constant 0 : index
    %9 = vector.load %arg4[%c0_6, %c0_7] : memref<64x128xbf16, #tpu.memory_space<vmem>>, vector<64x128xbf16>
    tpu.vector_store %arg4[%c0_6, %c0_7], %8 {strides = array<i32>} : memref<64x128xbf16, #tpu.memory_space<vmem>>, vector<64x128xbf16>,
    return
  }
  func.func @transform_0(%arg0: i32) -> (i32, i32) {
    %c0_i32 = arith.constant 0 : i32
    %c0_i32_0 = arith.constant 0 : i32
    return %arg0, %c0_i32 : i32, i32
  }
  func.func @transform_1(%arg0: i32) -> (i32, i32) {
    %c0_i32 = arith.constant 0 : i32
    %c0_i32_0 = arith.constant 0 : i32
    %c0_i32_1 = arith.constant 0 : i32
    return %c0_i32, %c0_i32_0 : i32, i32
  }
  func.func @transform_2(%arg0: i32) -> (i32, i32) {
    %c0_i32 = arith.constant 0 : i32
    %c0_i32_0 = arith.constant 0 : i32
    %c0_i32_1 = arith.constant 0 : i32
    return %c0_i32, %c0_i32_0 : i32, i32
  }
  func.func @transform_3(%arg0: i32) -> (i32, i32) {
    %c0_i32 = arith.constant 0 : i32
    %c0_i32_0 = arith.constant 0 : i32
    return %arg0, %c0_i32 : i32, i32
  }
}

module attributes {stable_mosaic.version = 11 : i64} {
  func.func @_fc_head_kernel(%arg0: i32, %arg1: memref<8x2048xbf16, #tpu.memory_space<vmem>>, %arg2: memref<1x2048xf32, #tpu.memory_space<vmem>>, %arg3: memref<1x2048xf32, #tpu.memory_space<vmem>>, %arg4: memref<2048x256xbf16, #tpu.memory_space<vmem>>, %arg5: memref<1x256xf32, #tpu.memory_space<vmem>>, %arg6: memref<256x128xbf16, #tpu.memory_space<vmem>>, %arg7: memref<1x128xf32, #tpu.memory_space<vmem>>, %arg8: memref<8x128xf32, #tpu.memory_space<vmem>>) attributes {dimension_semantics = [#tpu.dimension_semantics<parallel>], iteration_bounds = array<i64: 1>, scalar_prefetch = 0 : i64, scratch_operands = 0 : i64, tpu.core_type = #tpu.core_type<tc>, window_params = [{transform_indices = @transform_0, window_bounds = array<i64: 8, 2048>}, {pipeline_mode = #tpu.pipeline_mode<synchronous>, transform_indices = @transform_1, window_bounds = array<i64: 1, 2048>}, {pipeline_mode = #tpu.pipeline_mode<synchronous>, transform_indices = @transform_2, window_bounds = array<i64: 1, 2048>}, {pipeline_mode = #tpu.pipeline_mode<synchronous>, transform_indices = @transform_3, window_bounds = array<i64: 2048, 256>}, {pipeline_mode = #tpu.pipeline_mode<synchronous>, transform_indices = @transform_4, window_bounds = array<i64: 1, 256>}, {pipeline_mode = #tpu.pipeline_mode<synchronous>, transform_indices = @transform_5, window_bounds = array<i64: 256, 128>}, {pipeline_mode = #tpu.pipeline_mode<synchronous>, transform_indices = @transform_6, window_bounds = array<i64: 1, 128>}, {transform_indices = @transform_7, window_bounds = array<i64: 8, 128>}]} {
    %c0 = arith.constant 0 : index
    %c0_0 = arith.constant 0 : index
    %0 = vector.load %arg1[%c0, %c0_0] : memref<8x2048xbf16, #tpu.memory_space<vmem>>, vector<8x2048xbf16>
    %1 = arith.extf %0 : vector<8x2048xbf16> to vector<8x2048xf32>
    %c0_1 = arith.constant 0 : index
    %c0_2 = arith.constant 0 : index
    %2 = vector.load %arg2[%c0_1, %c0_2] : memref<1x2048xf32, #tpu.memory_space<vmem>>, vector<1x2048xf32>
    %3 = vector.broadcast %2 : vector<1x2048xf32> to vector<8x2048xf32>
    %4 = arith.mulf %1, %3 : vector<8x2048xf32>
    %c0_3 = arith.constant 0 : index
    %c0_4 = arith.constant 0 : index
    %5 = vector.load %arg3[%c0_3, %c0_4] : memref<1x2048xf32, #tpu.memory_space<vmem>>, vector<1x2048xf32>
    %6 = vector.broadcast %5 : vector<1x2048xf32> to vector<8x2048xf32>
    %7 = arith.addf %4, %6 : vector<8x2048xf32>
    %8 = arith.truncf %7 : vector<8x2048xf32> to vector<8x2048xbf16>
    %c0_5 = arith.constant 0 : index
    %c0_6 = arith.constant 0 : index
    %9 = vector.load %arg4[%c0_5, %c0_6] : memref<2048x256xbf16, #tpu.memory_space<vmem>>, vector<2048x256xbf16>
    %cst = arith.constant dense<0.000000e+00> : vector<8x256xf32>
    %10 = tpu.matmul %8, %9, %cst {dimension_numbers = #tpu.dot_dimension_numbers<[1], [0], [0], [1], [0, 0, 1, 1], [], []>} : vector<8x2048xbf16>, vector<2048x256xbf16>, vector<8x256xf32> -> vector<8x256xf32>
    %c0_7 = arith.constant 0 : index
    %c0_8 = arith.constant 0 : index
    %11 = vector.load %arg5[%c0_7, %c0_8] : memref<1x256xf32, #tpu.memory_space<vmem>>, vector<1x256xf32>
    %12 = vector.broadcast %11 : vector<1x256xf32> to vector<8x256xf32>
    %13 = arith.addf %10, %12 : vector<8x256xf32>
    %cst_9 = arith.constant 0.000000e+00 : f32
    %14 = vector.broadcast %cst_9 : f32 to vector<8x256xf32>
    %15 = arith.maximumf %13, %14 : vector<8x256xf32>
    %16 = arith.truncf %15 : vector<8x256xf32> to vector<8x256xbf16>
    %c0_10 = arith.constant 0 : index
    %c0_11 = arith.constant 0 : index
    %17 = vector.load %arg6[%c0_10, %c0_11] : memref<256x128xbf16, #tpu.memory_space<vmem>>, vector<256x128xbf16>
    %cst_12 = arith.constant dense<0.000000e+00> : vector<8x128xf32>
    %18 = tpu.matmul %16, %17, %cst_12 {dimension_numbers = #tpu.dot_dimension_numbers<[1], [0], [0], [1], [0, 0, 1, 1], [], []>} : vector<8x256xbf16>, vector<256x128xbf16>, vector<8x128xf32> -> vector<8x128xf32>
    %c0_13 = arith.constant 0 : index
    %c0_14 = arith.constant 0 : index
    %19 = vector.load %arg7[%c0_13, %c0_14] : memref<1x128xf32, #tpu.memory_space<vmem>>, vector<1x128xf32>
    %20 = vector.broadcast %19 : vector<1x128xf32> to vector<8x128xf32>
    %21 = arith.addf %18, %20 : vector<8x128xf32>
    %c0_15 = arith.constant 0 : index
    %c0_16 = arith.constant 0 : index
    %22 = vector.load %arg8[%c0_15, %c0_16] : memref<8x128xf32, #tpu.memory_space<vmem>>, vector<8x128xf32>
    tpu.vector_store %arg8[%c0_15, %c0_16], %21 {strides = array<i32>} : memref<8x128xf32, #tpu.memory_space<vmem>>, vector<8x128xf32>,
    return
  }
  func.func @transform_0(%arg0: i32) -> (i32, i32) {
    %c0_i32 = arith.constant 0 : i32
    %c0_i32_0 = arith.constant 0 : i32
    return %arg0, %c0_i32 : i32, i32
  }
  func.func @transform_1(%arg0: i32) -> (i32, i32) {
    %c0_i32 = arith.constant 0 : i32
    %c0_i32_0 = arith.constant 0 : i32
    %c0_i32_1 = arith.constant 0 : i32
    return %c0_i32, %c0_i32_0 : i32, i32
  }
  func.func @transform_2(%arg0: i32) -> (i32, i32) {
    %c0_i32 = arith.constant 0 : i32
    %c0_i32_0 = arith.constant 0 : i32
    %c0_i32_1 = arith.constant 0 : i32
    return %c0_i32, %c0_i32_0 : i32, i32
  }
  func.func @transform_3(%arg0: i32) -> (i32, i32) {
    %c0_i32 = arith.constant 0 : i32
    %c0_i32_0 = arith.constant 0 : i32
    %c0_i32_1 = arith.constant 0 : i32
    return %c0_i32, %c0_i32_0 : i32, i32
  }
  func.func @transform_4(%arg0: i32) -> (i32, i32) {
    %c0_i32 = arith.constant 0 : i32
    %c0_i32_0 = arith.constant 0 : i32
    %c0_i32_1 = arith.constant 0 : i32
    return %c0_i32, %c0_i32_0 : i32, i32
  }
  func.func @transform_5(%arg0: i32) -> (i32, i32) {
    %c0_i32 = arith.constant 0 : i32
    %c0_i32_0 = arith.constant 0 : i32
    %c0_i32_1 = arith.constant 0 : i32
    return %c0_i32, %c0_i32_0 : i32, i32
  }
  func.func @transform_6(%arg0: i32) -> (i32, i32) {
    %c0_i32 = arith.constant 0 : i32
    %c0_i32_0 = arith.constant 0 : i32
    %c0_i32_1 = arith.constant 0 : i32
    return %c0_i32, %c0_i32_0 : i32, i32
  }
  func.func @transform_7(%arg0: i32) -> (i32, i32) {
    %c0_i32 = arith.constant 0 : i32
    %c0_i32_0 = arith.constant 0 : i32
    return %arg0, %c0_i32 : i32, i32
  }
}

</mosaic_0001>

<llo_original>
// kernel: cnn_forward.6
$region0: #{cnn_forward.6}
  #allocation0 [shape = 'u32[]', space=smem, size = 0x4, offset = 0x4, fixed_abs, tag = 'smem constant byte address 0x4 - core index']
  #allocation1 [shape = 'u32[72,128]{1,0:T(1,128)}', space=vmem, size = 0x9000, scoped, tag = 'internal scratch']
  %s0 = inlined_call_operand.vmem [shape: bf16[2048,128], index: 0, kind: input, shape index: {}]
  %s1 = inlined_call_operand.vmem [shape: bf16[128,128], index: 1, kind: input, shape index: {}]
  %s2 = inlined_call_operand.vmem [shape: f32[1,128], index: 2, kind: input, shape index: {}]
  %s3 = inlined_call_operand.vmem [shape: bf16[2048,128], index: 3, kind: output, shape index: {}]
  %s4 = sld [smem:[#allocation0]]
  $region45: #{cnn_forward.6} parent=0
    _
  %s6 = ssub.s32 1, %s4
  %s7 = scalar_select 0, %s6, %s4
  loop: start=0, step=1, limit=4
  $region2: #{cnn_forward.6} parent=0 // loop_pre_header
    _
  $region3: #{cnn_forward.6} parent=0 // loop_header
    %s9 = sphi 0, %s13
    %p10 = scmp.ge.s32.totalorder %s9, 4
    %s19 = sphi 0, %s21
    %s22 = sphi 0, %s19
    %s23 = sphi 0, %s22
    %s39 = sphi 0, %s23
    %s43 = sphi 0, %s43
    %s45 = sphi 0, %s43
    %s46 = sphi 0, %s45
    %s60 = sphi 0, %s46
    %s64 = sphi 0, %s64
    %s66 = sphi 0, %s64
    %s67 = sphi 0, %s66
    %s81 = sphi 0, %s67
    %s87 = sphi 0, %s89
    %s90 = sphi 0, %s87
    %s91 = sphi 0, %s90
    %s107 = sphi 0, %s91
  $region4: #{cnn_forward.6} parent=0 // loop_header_branch
    %12 = sbr.rel (%p10) target = $region8
  $region5: #{cnn_forward.6} parent=0 // loop_body
    %s14 = ssub.s32 %s9, 1
    %s15 = ssub.s32 %s9, 2
    %s16 = sadd.s32 %s9, 1
    %s17 = ssub.s32 %s9, %s16
    %p18 = scmp.eq.s32.totalorder %s17, 0
    %s20 = sadd.s32 %s19, 1
    %s21 = scalar_select %p18, %s19, %s20
    %p24 = pneg %p18
    %p25 = scmp.eq.s32.totalorder %s9, 1
    %p26 = por %p24, %p25
    %p27 = scmp.ne.s32.totalorder %s19, %s22
    %p28 = scmp.eq.s32.totalorder %s9, 0
    %p29 = por %p27, %p28
    %p30 = scmp.ne.s32.totalorder %s19, %s22
    %p31 = scmp.eq.s32.totalorder %s14, 1
    %p32 = por %p30, %p31
    %p33 = scmp.ne.s32.totalorder %s22, %s23
    %p34 = scmp.eq.s32.totalorder %s14, 0
    %p35 = por %p33, %p34
    %p36 = scmp.ne.s32.totalorder %s22, %s23
    %p37 = scmp.eq.s32.totalorder %s15, 1
    %p38 = por %p36, %p37
    %p40 = scmp.ne.s32.totalorder %s23, %s39
    %p41 = scmp.eq.s32.totalorder %s15, 0
    %p42 = por %p40, %p41
    %s44 = sadd.s32 %s43, 1
    %p47 = scmp.eq.s32.totalorder %s9, 1
    %p48 = scmp.ne.s32.totalorder %s43, %s45
    %p49 = scmp.eq.s32.totalorder %s9, 0
    %p50 = por %p48, %p49
    %p51 = scmp.ne.s32.totalorder %s43, %s45
    %p52 = scmp.eq.s32.totalorder %s14, 1
    %p53 = por %p51, %p52
    %p54 = scmp.ne.s32.totalorder %s45, %s46
    %p55 = scmp.eq.s32.totalorder %s14, 0
    %p56 = por %p54, %p55
    %p57 = scmp.ne.s32.totalorder %s45, %s46
    %p58 = scmp.eq.s32.totalorder %s15, 1
    %p59 = por %p57, %p58
    %p61 = scmp.ne.s32.totalorder %s46, %s60
    %p62 = scmp.eq.s32.totalorder %s15, 0
    %p63 = por %p61, %p62
    %s65 = sadd.s32 %s64, 1
    %p68 = scmp.eq.s32.totalorder %s9, 1
    %p69 = scmp.ne.s32.totalorder %s64, %s66
    %p70 = scmp.eq.s32.totalorder %s9, 0
    %p71 = por %p69, %p70
    %p72 = scmp.ne.s32.totalorder %s64, %s66
    %p73 = scmp.eq.s32.totalorder %s14, 1
    %p74 = por %p72, %p73
    %p75 = scmp.ne.s32.totalorder %s66, %s67
    %p76 = scmp.eq.s32.totalorder %s14, 0
    %p77 = por %p75, %p76
    %p78 = scmp.ne.s32.totalorder %s66, %s67
    %p79 = scmp.eq.s32.totalorder %s15, 1
    %p80 = por %p78, %p79
    %p82 = scmp.ne.s32.totalorder %s67, %s81
    %p83 = scmp.eq.s32.totalorder %s15, 0
    %p84 = por %p82, %p83
    %s85 = ssub.s32 %s9, %s16
    %p86 = scmp.eq.s32.totalorder %s85, 0
    %s88 = sadd.s32 %s87, 1
    %s89 = scalar_select %p86, %s87, %s88
    %p92 = pneg %p86
    %p93 = scmp.eq.s32.totalorder %s9, 1
    %p94 = por %p92, %p93
    %p95 = scmp.ne.s32.totalorder %s87, %s90
    %p96 = scmp.eq.s32.totalorder %s9, 0
    %p97 = por %p95, %p96
    %p98 = scmp.ne.s32.totalorder %s87, %s90
    %p99 = scmp.eq.s32.totalorder %s14, 1
    %p100 = por %p98, %p99
    %p101 = scmp.ne.s32.totalorder %s90, %s91
    %p102 = scmp.eq.s32.totalorder %s14, 0
    %p103 = por %p101, %p102
    %p104 = scmp.ne.s32.totalorder %s90, %s91
    %p105 = scmp.eq.s32.totalorder %s15, 1
    %p106 = por %p104, %p105
    %p108 = scmp.ne.s32.totalorder %s91, %s107
    %p109 = scmp.eq.s32.totalorder %s15, 0
    %p110 = por %p108, %p109
    %p111 = scmp.le.s32.totalorder 1, %s9
    %p112 = scmp.lt.s32.totalorder %s9, 3
    %p113 = pnand %p111, %p112
    %p114 = pneg %p113
    // Predicated region
    $region9: #{cnn_forward.6} parent=5 // pred_check
      _
    $region10: #{cnn_forward.6} parent=5 // pred_check_branch
      %116 = sbr.rel (%p113) target = $region12
    $region11: #{cnn_forward.6} parent=5 // pred_region
      %s117 = ssub.s32 %s9, 1
      // Predicated region
      $region13: #{cnn_forward.6} parent=11 // pred_check
        %p118 = pneg %p56
      $region14: #{cnn_forward.6} parent=11 // pred_check_branch
        %120 = sbr.rel (%p118) target = $region16
      $region15: #{cnn_forward.6} parent=11 // pred_region
        _
      $region16: #{cnn_forward.6} parent=11 // pred_fallthru
        _
      // Predicated region
      $region17: #{cnn_forward.6} parent=11 // pred_check
        %p121 = pneg %p77
      $region18: #{cnn_forward.6} parent=11 // pred_check_branch
        %123 = sbr.rel (%p121) target = $region20
      $region19: #{cnn_forward.6} parent=11 // pred_region
        _
      $region20: #{cnn_forward.6} parent=11 // pred_fallthru
        _
    $region12: #{cnn_forward.6} parent=5 // pred_fallthru
      _
    %p124 = scmp.lt.s32.totalorder %s9, 2
    // Predicated region
    $region21: #{cnn_forward.6} parent=5 // pred_check
      %p125 = pneg %p124
    $region22: #{cnn_forward.6} parent=5 // pred_check_branch
      %127 = sbr.rel (%p125) target = $region24
    $region23: #{cnn_forward.6} parent=5 // pred_region
      // Predicated region
      $region25: #{cnn_forward.6} parent=23 // pred_check
        %p128 = pneg %p29
      $region26: #{cnn_forward.6} parent=23 // pred_check_branch
        %130 = sbr.rel (%p128) target = $region28
      $region27: #{cnn_forward.6} parent=23 // pred_region
        %s131 = smul.u32 128, %s9
        %p132 = scmp.lt.s32.totalorder %s131, 255
        %s133 = scalar_select %p132, %s131, 255
        %s134 = smul.addr %s133, 4
        %s135 = scalar_lea.vmem %s0, %s134
        %s136 = smul.u32 128, %s9
      $region28: #{cnn_forward.6} parent=23 // pred_fallthru
        _
    $region24: #{cnn_forward.6} parent=5 // pred_fallthru
      _
    %p137 = scmp.le.s32.totalorder 1, %s9
    %p138 = scmp.lt.s32.totalorder %s9, 3
    %p139 = pnand %p137, %p138
    %p140 = pneg %p139
    // Predicated region
    $region29: #{cnn_forward.6} parent=5 // pred_check
      _
    $region30: #{cnn_forward.6} parent=5 // pred_check_branch
      %142 = sbr.rel (%p139) target = $region32
    $region31: #{cnn_forward.6} parent=5 // pred_region
      %s143 = ssub.s32 %s9, 1
      %s144 = smul.u32 128, %s14
      %p145 = scmp.lt.s32.totalorder %s144, 255
      %s146 = scalar_select %p145, %s144, 255
      %s147 = smul.addr %s146, 4
      %s148 = scalar_lea.vmem %s0, %s147
      %p149 = pneg %p35
      %p150 = pneg %p32
      %p151 = pneg %p56
      %p152 = pneg %p53
      %p153 = pneg %p77
      %p154 = pneg %p74
      %p155 = pneg %p103
      %p156 = pneg %p100
      %s157 = smul.u32 128, %s14
      %p158 = scmp.lt.s32.totalorder %s157, 255
      %s159 = scalar_select %p158, %s157, 255
      %s160 = smul.addr %s159, 4
      %s161 = scalar_lea.vmem %s3, %s160
      %s162 = smul.u32 128, %s14
      %p163 = scmp.lt.s32.totalorder %s162, 255
      %s164 = scalar_select %p163, %s162, 255
      %s165 = smul.addr %s164, 4
      %s166 = scalar_lea.vmem %s0, %s165
      %s167 = smul.u32 128, %s14
      %s168 = smul.u32 128, %s14
      %p169 = scmp.lt.s32.totalorder %s168, 255
      %s170 = scalar_select %p169, %s168, 255
      %s171 = smul.addr %s170, 4
      %s172 = scalar_lea.vmem %s3, %s171
      %s173 = smul.u32 128, %s14
      %v174 = vld [vmem:[%s166] sm:$0xf]
      %v175 = vld [vmem:[%s166 + $0x4] sm:$0xf]
      %v176 = vld [vmem:[%s166 + $0x8] sm:$0xf]
      %v177 = vld [vmem:[%s166 + $0xc] sm:$0xf]
      %v178 = vld [vmem:[%s166 + $0x10] sm:$0xf]
      %v179 = vld [vmem:[%s166 + $0x14] sm:$0xf]
      %v180 = vld [vmem:[%s166 + $0x18] sm:$0xf]
      %v181 = vld [vmem:[%s166 + $0x1c] sm:$0xf]
      %v182 = vld [vmem:[%s166 + $0x20] sm:$0xf]
      %v183 = vld [vmem:[%s166 + $0x24] sm:$0xf]
      %v184 = vld [vmem:[%s166 + $0x28] sm:$0xf]
      %v185 = vld [vmem:[%s166 + $0x2c] sm:$0xf]
      %v186 = vld [vmem:[%s166 + $0x30] sm:$0xf]
      %v187 = vld [vmem:[%s166 + $0x34] sm:$0xf]
      %v188 = vld [vmem:[%s166 + $0x38] sm:$0xf]
      %v189 = vld [vmem:[%s166 + $0x3c] sm:$0xf]
      %v190 = vld [vmem:[%s166 + $0x40] sm:$0xf]
      %v191 = vld [vmem:[%s166 + $0x44] sm:$0xf]
      %v192 = vld [vmem:[%s166 + $0x48] sm:$0xf]
      %v193 = vld [vmem:[%s166 + $0x4c] sm:$0xf]
      %v194 = vld [vmem:[%s166 + $0x50] sm:$0xf]
      %v195 = vld [vmem:[%s166 + $0x54] sm:$0xf]
      %v196 = vld [vmem:[%s166 + $0x58] sm:$0xf]
      %v197 = vld [vmem:[%s166 + $0x5c] sm:$0xf]
      %v198 = vld [vmem:[%s166 + $0x60] sm:$0xf]
      %v199 = vld [vmem:[%s166 + $0x64] sm:$0xf]
      %v200 = vld [vmem:[%s166 + $0x68] sm:$0xf]
      %v201 = vld [vmem:[%s166 + $0x6c] sm:$0xf]
      %v202 = vld [vmem:[%s166 + $0x70] sm:$0xf]
      %v203 = vld [vmem:[%s166 + $0x74] sm:$0xf]
      %v204 = vld [vmem:[%s166 + $0x78] sm:$0xf]
      %v205 = vld [vmem:[%s166 + $0x7c] sm:$0xf]
      %v206 = vld [vmem:[%s166 + $0x80] sm:$0xf]
      %v207 = vld [vmem:[%s166 + $0x84] sm:$0xf]
      %v208 = vld [vmem:[%s166 + $0x88] sm:$0xf]
      %v209 = vld [vmem:[%s166 + $0x8c] sm:$0xf]
      %v210 = vld [vmem:[%s166 + $0x90] sm:$0xf]
      %v211 = vld [vmem:[%s166 + $0x94] sm:$0xf]
      %v212 = vld [vmem:[%s166 + $0x98] sm:$0xf]
      %v213 = vld [vmem:[%s166 + $0x9c] sm:$0xf]
      %v214 = vld [vmem:[%s166 + $0xa0] sm:$0xf]
      %v215 = vld [vmem:[%s166 + $0xa4] sm:$0xf]
      %v216 = vld [vmem:[%s166 + $0xa8] sm:$0xf]
      %v217 = vld [vmem:[%s166 + $0xac] sm:$0xf]
      %v218 = vld [vmem:[%s166 + $0xb0] sm:$0xf]
      %v219 = vld [vmem:[%s166 + $0xb4] sm:$0xf]
      %v220 = vld [vmem:[%s166 + $0xb8] sm:$0xf]
      %v221 = vld [vmem:[%s166 + $0xbc] sm:$0xf]
      %v222 = vld [vmem:[%s166 + $0xc0] sm:$0xf]
      %v223 = vld [vmem:[%s166 + $0xc4] sm:$0xf]
      %v224 = vld [vmem:[%s166 + $0xc8] sm:$0xf]
      %v225 = vld [vmem:[%s166 + $0xcc] sm:$0xf]
      %v226 = vld [vmem:[%s166 + $0xd0] sm:$0xf]
      %v227 = vld [vmem:[%s166 + $0xd4] sm:$0xf]
      %v228 = vld [vmem:[%s166 + $0xd8] sm:$0xf]
      %v229 = vld [vmem:[%s166 + $0xdc] sm:$0xf]
      %v230 = vld [vmem:[%s166 + $0xe0] sm:$0xf]
      %v231 = vld [vmem:[%s166 + $0xe4] sm:$0xf]
      %v232 = vld [vmem:[%s166 + $0xe8] sm:$0xf]
      %v233 = vld [vmem:[%s166 + $0xec] sm:$0xf]
      %v234 = vld [vmem:[%s166 + $0xf0] sm:$0xf]
      %v235 = vld [vmem:[%s166 + $0xf4] sm:$0xf]
      %v236 = vld [vmem:[%s166 + $0xf8] sm:$0xf]
      %v237 = vld [vmem:[%s166 + $0xfc] sm:$0xf]
      %v238 = vld [vmem:[%s166 + $0x100] sm:$0xf]
      %v239 = vld [vmem:[%s166 + $0x104] sm:$0xf]
      %v240 = vld [vmem:[%s166 + $0x108] sm:$0xf]
      %v241 = vld [vmem:[%s166 + $0x10c] sm:$0xf]
      %v242 = vld [vmem:[%s166 + $0x110] sm:$0xf]
      %v243 = vld [vmem:[%s166 + $0x114] sm:$0xf]
      %v244 = vld [vmem:[%s166 + $0x118] sm:$0xf]
      %v245 = vld [vmem:[%s166 + $0x11c] sm:$0xf]
      %v246 = vld [vmem:[%s166 + $0x120] sm:$0xf]
      %v247 = vld [vmem:[%s166 + $0x124] sm:$0xf]
      %v248 = vld [vmem:[%s166 + $0x128] sm:$0xf]
      %v249 = vld [vmem:[%s166 + $0x12c] sm:$0xf]
      %v250 = vld [vmem:[%s166 + $0x130] sm:$0xf]
      %v251 = vld [vmem:[%s166 + $0x134] sm:$0xf]
      %v252 = vld [vmem:[%s166 + $0x138] sm:$0xf]
      %v253 = vld [vmem:[%s166 + $0x13c] sm:$0xf]
      %v254 = vld [vmem:[%s166 + $0x140] sm:$0xf]
      %v255 = vld [vmem:[%s166 + $0x144] sm:$0xf]
      %v256 = vld [vmem:[%s166 + $0x148] sm:$0xf]
      %v257 = vld [vmem:[%s166 + $0x14c] sm:$0xf]
      %v258 = vld [vmem:[%s166 + $0x150] sm:$0xf]
      %v259 = vld [vmem:[%s166 + $0x154] sm:$0xf]
      %v260 = vld [vmem:[%s166 + $0x158] sm:$0xf]
      %v261 = vld [vmem:[%s166 + $0x15c] sm:$0xf]
      %v262 = vld [vmem:[%s166 + $0x160] sm:$0xf]
      %v263 = vld [vmem:[%s166 + $0x164] sm:$0xf]
      %v264 = vld [vmem:[%s166 + $0x168] sm:$0xf]
      %v265 = vld [vmem:[%s166 + $0x16c] sm:$0xf]
      %v266 = vld [vmem:[%s166 + $0x170] sm:$0xf]
      %v267 = vld [vmem:[%s166 + $0x174] sm:$0xf]
      %v268 = vld [vmem:[%s166 + $0x178] sm:$0xf]
      %v269 = vld [vmem:[%s166 + $0x17c] sm:$0xf]
      %v270 = vld [vmem:[%s166 + $0x180] sm:$0xf]
      %v271 = vld [vmem:[%s166 + $0x184] sm:$0xf]
      %v272 = vld [vmem:[%s166 + $0x188] sm:$0xf]
      %v273 = vld [vmem:[%s166 + $0x18c] sm:$0xf]
      %v274 = vld [vmem:[%s166 + $0x190] sm:$0xf]
      %v275 = vld [vmem:[%s166 + $0x194] sm:$0xf]
      %v276 = vld [vmem:[%s166 + $0x198] sm:$0xf]
      %v277 = vld [vmem:[%s166 + $0x19c] sm:$0xf]
      %v278 = vld [vmem:[%s166 + $0x1a0] sm:$0xf]
      %v279 = vld [vmem:[%s166 + $0x1a4] sm:$0xf]
      %v280 = vld [vmem:[%s166 + $0x1a8] sm:$0xf]
      %v281 = vld [vmem:[%s166 + $0x1ac] sm:$0xf]
      %v282 = vld [vmem:[%s166 + $0x1b0] sm:$0xf]
      %v283 = vld [vmem:[%s166 + $0x1b4] sm:$0xf]
      %v284 = vld [vmem:[%s166 + $0x1b8] sm:$0xf]
      %v285 = vld [vmem:[%s166 + $0x1bc] sm:$0xf]
      %v286 = vld [vmem:[%s166 + $0x1c0] sm:$0xf]
      %v287 = vld [vmem:[%s166 + $0x1c4] sm:$0xf]
      %v288 = vld [vmem:[%s166 + $0x1c8] sm:$0xf]
      %v289 = vld [vmem:[%s166 + $0x1cc] sm:$0xf]
      %v290 = vld [vmem:[%s166 + $0x1d0] sm:$0xf]
      %v291 = vld [vmem:[%s166 + $0x1d4] sm:$0xf]
      %v292 = vld [vmem:[%s166 + $0x1d8] sm:$0xf]
      %v293 = vld [vmem:[%s166 + $0x1dc] sm:$0xf]
      %v294 = vld [vmem:[%s166 + $0x1e0] sm:$0xf]
      %v295 = vld [vmem:[%s166 + $0x1e4] sm:$0xf]
      %v296 = vld [vmem:[%s166 + $0x1e8] sm:$0xf]
      %v297 = vld [vmem:[%s166 + $0x1ec] sm:$0xf]
      %v298 = vld [vmem:[%s166 + $0x1f0] sm:$0xf]
      %v299 = vld [vmem:[%s166 + $0x1f4] sm:$0xf]
      %v300 = vld [vmem:[%s166 + $0x1f8] sm:$0xf]
      %v301 = vld [vmem:[%s166 + $0x1fc] sm:$0xf]
      %v302 = vld [vmem:[%s1] sm:$0xf]
      %v303 = vld [vmem:[%s1 + $0x4] sm:$0xf]
      %v304 = vld [vmem:[%s1 + $0x8] sm:$0xf]
      %v305 = vld [vmem:[%s1 + $0xc] sm:$0xf]
      %v306 = vld [vmem:[%s1 + $0x10] sm:$0xf]
      %v307 = vld [vmem:[%s1 + $0x14] sm:$0xf]
      %v308 = vld [vmem:[%s1 + $0x18] sm:$0xf]
      %v309 = vld [vmem:[%s1 + $0x1c] sm:$0xf]
      %v310 = vld [vmem:[%s1 + $0x20] sm:$0xf]
      %v311 = vld [vmem:[%s1 + $0x24] sm:$0xf]
      %v312 = vld [vmem:[%s1 + $0x28] sm:$0xf]
      %v313 = vld [vmem:[%s1 + $0x2c] sm:$0xf]
      %v314 = vld [vmem:[%s1 + $0x30] sm:$0xf]
      %v315 = vld [vmem:[%s1 + $0x34] sm:$0xf]
      %v316 = vld [vmem:[%s1 + $0x38] sm:$0xf]
      %v317 = vld [vmem:[%s1 + $0x3c] sm:$0xf]
      %v318 = vld [vmem:[%s2] sm:$0x1]
      %v320 = vperm.slane %v318, 0
      %v450 = vunpack.c.l.b16 %v174
      %v451 = vunpack.c.l.b16 %v175
      %v452 = vunpack.c.l.b16 %v176
      %v453 = vunpack.c.l.b16 %v177
      %v454 = vunpack.c.l.b16 %v178
      %v455 = vunpack.c.l.b16 %v179
      %v456 = vunpack.c.l.b16 %v180
      %v457 = vunpack.c.l.b16 %v181
      %v458 = vunpack.c.l.b16 %v182
      %v459 = vunpack.c.l.b16 %v183
      %v460 = vunpack.c.l.b16 %v184
      %v461 = vunpack.c.l.b16 %v185
      %v462 = vunpack.c.l.b16 %v186
      %v463 = vunpack.c.l.b16 %v187
      %v464 = vunpack.c.l.b16 %v188
      %v465 = vunpack.c.l.b16 %v189
      %v466 = vunpack.c.l.b16 %v190
      %v467 = vunpack.c.l.b16 %v191
      %v468 = vunpack.c.l.b16 %v192
      %v469 = vunpack.c.l.b16 %v193
      %v470 = vunpack.c.l.b16 %v194
      %v471 = vunpack.c.l.b16 %v195
      %v472 = vunpack.c.l.b16 %v196
      %v473 = vunpack.c.l.b16 %v197
      %v474 = vunpack.c.l.b16 %v198
      %v475 = vunpack.c.l.b16 %v199
      %v476 = vunpack.c.l.b16 %v200
      %v477 = vunpack.c.l.b16 %v201
      %v478 = vunpack.c.l.b16 %v202
      %v479 = vunpack.c.l.b16 %v203
      %v480 = vunpack.c.l.b16 %v204
      %v481 = vunpack.c.l.b16 %v205
      %v482 = vunpack.c.l.b16 %v206
      %v483 = vunpack.c.l.b16 %v207
      %v484 = vunpack.c.l.b16 %v208
      %v485 = vunpack.c.l.b16 %v209
      %v486 = vunpack.c.l.b16 %v210
      %v487 = vunpack.c.l.b16 %v211
      %v488 = vunpack.c.l.b16 %v212
      %v489 = vunpack.c.l.b16 %v213
      %v490 = vunpack.c.l.b16 %v214
      %v491 = vunpack.c.l.b16 %v215
      %v492 = vunpack.c.l.b16 %v216
      %v493 = vunpack.c.l.b16 %v217
      %v494 = vunpack.c.l.b16 %v218
      %v495 = vunpack.c.l.b16 %v219
      %v496 = vunpack.c.l.b16 %v220
      %v497 = vunpack.c.l.b16 %v221
      %v498 = vunpack.c.l.b16 %v222
      %v499 = vunpack.c.l.b16 %v223
      %v500 = vunpack.c.l.b16 %v224
      %v501 = vunpack.c.l.b16 %v225
      %v502 = vunpack.c.l.b16 %v226
      %v503 = vunpack.c.l.b16 %v227
      %v504 = vunpack.c.l.b16 %v228
      %v505 = vunpack.c.l.b16 %v229
      %v506 = vunpack.c.l.b16 %v230
      %v507 = vunpack.c.l.b16 %v231
      %v508 = vunpack.c.l.b16 %v232
      %v509 = vunpack.c.l.b16 %v233
      %v510 = vunpack.c.l.b16 %v234
      %v511 = vunpack.c.l.b16 %v235
      %v512 = vunpack.c.l.b16 %v236
      %v513 = vunpack.c.l.b16 %v237
      %v514 = vunpack.c.l.b16 %v238
      %v515 = vunpack.c.l.b16 %v239
      %v516 = vunpack.c.l.b16 %v240
      %v517 = vunpack.c.l.b16 %v241
      %v518 = vunpack.c.l.b16 %v242
      %v519 = vunpack.c.l.b16 %v243
      %v520 = vunpack.c.l.b16 %v244
      %v521 = vunpack.c.l.b16 %v245
      %v522 = vunpack.c.l.b16 %v246
      %v523 = vunpack.c.l.b16 %v247
      %v524 = vunpack.c.l.b16 %v248
      %v525 = vunpack.c.l.b16 %v249
      %v526 = vunpack.c.l.b16 %v250
      %v527 = vunpack.c.l.b16 %v251
      %v528 = vunpack.c.l.b16 %v252
      %v529 = vunpack.c.l.b16 %v253
      %v530 = vunpack.c.l.b16 %v254
      %v531 = vunpack.c.l.b16 %v255
      %v532 = vunpack.c.l.b16 %v256
      %v533 = vunpack.c.l.b16 %v257
      %v534 = vunpack.c.l.b16 %v258
      %v535 = vunpack.c.l.b16 %v259
      %v536 = vunpack.c.l.b16 %v260
      %v537 = vunpack.c.l.b16 %v261
      %v538 = vunpack.c.l.b16 %v262
      %v539 = vunpack.c.l.b16 %v263
      %v540 = vunpack.c.l.b16 %v264
      %v541 = vunpack.c.l.b16 %v265
      %v542 = vunpack.c.l.b16 %v266
      %v543 = vunpack.c.l.b16 %v267
      %v544 = vunpack.c.l.b16 %v268
      %v545 = vunpack.c.l.b16 %v269
      %v546 = vunpack.c.l.b16 %v270
      %v547 = vunpack.c.l.b16 %v271
      %v548 = vunpack.c.l.b16 %v272
      %v549 = vunpack.c.l.b16 %v273
      %v550 = vunpack.c.l.b16 %v274
      %v551 = vunpack.c.l.b16 %v275
      %v552 = vunpack.c.l.b16 %v276
      %v553 = vunpack.c.l.b16 %v277
      %v554 = vunpack.c.l.b16 %v278
      %v555 = vunpack.c.l.b16 %v279
      %v556 = vunpack.c.l.b16 %v280
      %v557 = vunpack.c.l.b16 %v281
      %v558 = vunpack.c.l.b16 %v282
      %v559 = vunpack.c.l.b16 %v283
      %v560 = vunpack.c.l.b16 %v284
      %v561 = vunpack.c.l.b16 %v285
      %v562 = vunpack.c.l.b16 %v286
      %v563 = vunpack.c.l.b16 %v287
      %v564 = vunpack.c.l.b16 %v288
      %v565 = vunpack.c.l.b16 %v289
      %v566 = vunpack.c.l.b16 %v290
      %v567 = vunpack.c.l.b16 %v291
      %v568 = vunpack.c.l.b16 %v292
      %v569 = vunpack.c.l.b16 %v293
      %v570 = vunpack.c.l.b16 %v294
      %v571 = vunpack.c.l.b16 %v295
      %v572 = vunpack.c.l.b16 %v296
      %v573 = vunpack.c.l.b16 %v297
      %v574 = vunpack.c.l.b16 %v298
      %v575 = vunpack.c.l.b16 %v299
      %v576 = vunpack.c.l.b16 %v300
      %v577 = vunpack.c.l.b16 %v301
      %v578 = vpack.c.b16 %v451, %v450
      %v579 = vpack.c.b16 %v453, %v452
      %v580 = vpack.c.b16 %v455, %v454
      %v581 = vpack.c.b16 %v457, %v456
      %v582 = vpack.c.b16 %v459, %v458
      %v583 = vpack.c.b16 %v461, %v460
      %v584 = vpack.c.b16 %v463, %v462
      %v585 = vpack.c.b16 %v465, %v464
      %v586 = vpack.c.b16 %v467, %v466
      %v587 = vpack.c.b16 %v469, %v468
      %v588 = vpack.c.b16 %v471, %v470
      %v589 = vpack.c.b16 %v473, %v472
      %v590 = vpack.c.b16 %v475, %v474
      %v591 = vpack.c.b16 %v477, %v476
      %v592 = vpack.c.b16 %v479, %v478
      %v593 = vpack.c.b16 %v481, %v480
      %v594 = vpack.c.b16 %v483, %v482
      %v595 = vpack.c.b16 %v485, %v484
      %v596 = vpack.c.b16 %v487, %v486
      %v597 = vpack.c.b16 %v489, %v488
      %v598 = vpack.c.b16 %v491, %v490
      %v599 = vpack.c.b16 %v493, %v492
      %v600 = vpack.c.b16 %v495, %v494
      %v601 = vpack.c.b16 %v497, %v496
      %v602 = vpack.c.b16 %v499, %v498
      %v603 = vpack.c.b16 %v501, %v500
      %v604 = vpack.c.b16 %v503, %v502
      %v605 = vpack.c.b16 %v505, %v504
      %v606 = vpack.c.b16 %v507, %v506
      %v607 = vpack.c.b16 %v509, %v508
      %v608 = vpack.c.b16 %v511, %v510
      %v609 = vpack.c.b16 %v513, %v512
      %v610 = vpack.c.b16 %v515, %v514
      %v611 = vpack.c.b16 %v517, %v516
      %v612 = vpack.c.b16 %v519, %v518
      %v613 = vpack.c.b16 %v521, %v520
      %v614 = vpack.c.b16 %v523, %v522
      %v615 = vpack.c.b16 %v525, %v524
      %v616 = vpack.c.b16 %v527, %v526
      %v617 = vpack.c.b16 %v529, %v528
      %v618 = vpack.c.b16 %v531, %v530
      %v619 = vpack.c.b16 %v533, %v532
      %v620 = vpack.c.b16 %v535, %v534
      %v621 = vpack.c.b16 %v537, %v536
      %v622 = vpack.c.b16 %v539, %v538
      %v623 = vpack.c.b16 %v541, %v540
      %v624 = vpack.c.b16 %v543, %v542
      %v625 = vpack.c.b16 %v545, %v544
      %v626 = vpack.c.b16 %v547, %v546
      %v627 = vpack.c.b16 %v549, %v548
      %v628 = vpack.c.b16 %v551, %v550
      %v629 = vpack.c.b16 %v553, %v552
      %v630 = vpack.c.b16 %v555, %v554
      %v631 = vpack.c.b16 %v557, %v556
      %v632 = vpack.c.b16 %v559, %v558
      %v633 = vpack.c.b16 %v561, %v560
      %v634 = vpack.c.b16 %v563, %v562
      %v635 = vpack.c.b16 %v565, %v564
      %v636 = vpack.c.b16 %v567, %v566
      %v637 = vpack.c.b16 %v569, %v568
      %v638 = vpack.c.b16 %v571, %v570
      %v639 = vpack.c.b16 %v573, %v572
      %v640 = vpack.c.b16 %v575, %v574
      %v641 = vpack.c.b16 %v577, %v576
      %v722 = vunpack.c.l.b16 %v302
      %v723 = vunpack.c.l.b16 %v303
      %v724 = vunpack.c.l.b16 %v304
      %v725 = vunpack.c.l.b16 %v305
      %v726 = vunpack.c.l.b16 %v306
      %v727 = vunpack.c.l.b16 %v307
      %v728 = vunpack.c.l.b16 %v308
      %v729 = vunpack.c.l.b16 %v309
      %v730 = vunpack.c.l.b16 %v310
      %v731 = vunpack.c.l.b16 %v311
      %v732 = vunpack.c.l.b16 %v312
      %v733 = vunpack.c.l.b16 %v313
      %v734 = vunpack.c.l.b16 %v314
      %v735 = vunpack.c.l.b16 %v315
      %v736 = vunpack.c.l.b16 %v316
      %v737 = vunpack.c.l.b16 %v317
      %v738 = vpack.c.b16 %v723, %v722
      %v739 = vpack.c.b16 %v725, %v724
      %v740 = vpack.c.b16 %v727, %v726
      %v741 = vpack.c.b16 %v729, %v728
      %v742 = vpack.c.b16 %v731, %v730
      %v743 = vpack.c.b16 %v733, %v732
      %v744 = vpack.c.b16 %v735, %v734
      %v745 = vpack.c.b16 %v737, %v736
      %754 = vmatpush.bf16.msra.mxu0 %v745
      %755 = vmatpush.bf16.msra.mxu0 %v744
      %756 = vmatpush.bf16.msra.mxu0 %v743
      %757 = vmatpush.bf16.msra.mxu0 %v742
      %758 = vmatpush.bf16.msra.mxu0 %v741
      %759 = vmatpush.bf16.msra.mxu0 %v740
      %760 = vmatpush.bf16.msra.mxu0 %v739
      %761 = vmatpush.bf16.msra.mxu0 %v738
      %762 = vmatmul.bf16.gmra.mxu0 %v578
      %v763 = vpop.f32.mrf.mxu0
      %v764 = vadd.f32 %v320, %v763
      %v765 = vpop.f32.mrf.mxu0
      %v766 = vadd.f32 %v320, %v765
      %767 = vmatmul.bf16.gmra.mxu0 %v579
      %v768 = vpop.f32.mrf.mxu0
      %v769 = vadd.f32 %v320, %v768
      %v770 = vpop.f32.mrf.mxu0
      %v771 = vadd.f32 %v320, %v770
      %772 = vmatmul.bf16.gmra.mxu0 %v580
      %v773 = vpop.f32.mrf.mxu0
      %v774 = vadd.f32 %v320, %v773
      %v775 = vpop.f32.mrf.mxu0
      %v776 = vadd.f32 %v320, %v775
      %777 = vmatmul.bf16.gmra.mxu0 %v581
      %v778 = vpop.f32.mrf.mxu0
      %v779 = vadd.f32 %v320, %v778
      %v780 = vpop.f32.mrf.mxu0
      %v781 = vadd.f32 %v320, %v780
      %782 = vmatmul.bf16.gmra.mxu0 %v582
      %v783 = vpop.f32.mrf.mxu0
      %v784 = vadd.f32 %v320, %v783
      %v785 = vpop.f32.mrf.mxu0
      %v786 = vadd.f32 %v320, %v785
      %787 = vmatmul.bf16.gmra.mxu0 %v583
      %v788 = vpop.f32.mrf.mxu0
      %v789 = vadd.f32 %v320, %v788
      %v790 = vpop.f32.mrf.mxu0
      %v791 = vadd.f32 %v320, %v790
      %792 = vmatmul.bf16.gmra.mxu0 %v584
      %v793 = vpop.f32.mrf.mxu0
      %v794 = vadd.f32 %v320, %v793
      %v795 = vpop.f32.mrf.mxu0
      %v796 = vadd.f32 %v320, %v795
      %797 = vmatmul.bf16.gmra.mxu0 %v585
      %v798 = vpop.f32.mrf.mxu0
      %v799 = vadd.f32 %v320, %v798
      %v800 = vpop.f32.mrf.mxu0
      %v801 = vadd.f32 %v320, %v800
      %802 = vmatmul.bf16.gmra.mxu0 %v586
      %v803 = vpop.f32.mrf.mxu0
      %v804 = vadd.f32 %v320, %v803
      %v805 = vpop.f32.mrf.mxu0
      %v806 = vadd.f32 %v320, %v805
      %807 = vmatmul.bf16.gmra.mxu0 %v587
      %v808 = vpop.f32.mrf.mxu0
      %v809 = vadd.f32 %v320, %v808
      %v810 = vpop.f32.mrf.mxu0
      %v811 = vadd.f32 %v320, %v810
      %812 = vmatmul.bf16.gmra.mxu0 %v588
      %v813 = vpop.f32.mrf.mxu0
      %v814 = vadd.f32 %v320, %v813
      %v815 = vpop.f32.mrf.mxu0
      %v816 = vadd.f32 %v320, %v815
      %817 = vmatmul.bf16.gmra.mxu0 %v589
      %v818 = vpop.f32.mrf.mxu0
      %v819 = vadd.f32 %v320, %v818
      %v820 = vpop.f32.mrf.mxu0
      %v821 = vadd.f32 %v320, %v820
      %822 = vmatmul.bf16.gmra.mxu0 %v590
      %v823 = vpop.f32.mrf.mxu0
      %v824 = vadd.f32 %v320, %v823
      %v825 = vpop.f32.mrf.mxu0
      %v826 = vadd.f32 %v320, %v825
      %827 = vmatmul.bf16.gmra.mxu0 %v591
      %v828 = vpop.f32.mrf.mxu0
      %v829 = vadd.f32 %v320, %v828
      %v830 = vpop.f32.mrf.mxu0
      %v831 = vadd.f32 %v320, %v830
      %832 = vmatmul.bf16.gmra.mxu0 %v592
      %v833 = vpop.f32.mrf.mxu0
      %v834 = vadd.f32 %v320, %v833
      %v835 = vpop.f32.mrf.mxu0
      %v836 = vadd.f32 %v320, %v835
      %837 = vmatmul.bf16.gmra.mxu0 %v593
      %v838 = vpop.f32.mrf.mxu0
      %v839 = vadd.f32 %v320, %v838
      %v840 = vpop.f32.mrf.mxu0
      %v841 = vadd.f32 %v320, %v840
      %842 = vmatmul.bf16.gmra.mxu0 %v594
      %v843 = vpop.f32.mrf.mxu0
      %v844 = vadd.f32 %v320, %v843
      %v845 = vpop.f32.mrf.mxu0
      %v846 = vadd.f32 %v320, %v845
      %847 = vmatmul.bf16.gmra.mxu0 %v595
      %v848 = vpop.f32.mrf.mxu0
      %v849 = vadd.f32 %v320, %v848
      %v850 = vpop.f32.mrf.mxu0
      %v851 = vadd.f32 %v320, %v850
      %852 = vmatmul.bf16.gmra.mxu0 %v596
      %v853 = vpop.f32.mrf.mxu0
      %v854 = vadd.f32 %v320, %v853
      %v855 = vpop.f32.mrf.mxu0
      %v856 = vadd.f32 %v320, %v855
      %857 = vmatmul.bf16.gmra.mxu0 %v597
      %v858 = vpop.f32.mrf.mxu0
      %v859 = vadd.f32 %v320, %v858
      %v860 = vpop.f32.mrf.mxu0
      %v861 = vadd.f32 %v320, %v860
      %862 = vmatmul.bf16.gmra.mxu0 %v598
      %v863 = vpop.f32.mrf.mxu0
      %v864 = vadd.f32 %v320, %v863
      %v865 = vpop.f32.mrf.mxu0
      %v866 = vadd.f32 %v320, %v865
      %867 = vmatmul.bf16.gmra.mxu0 %v599
      %v868 = vpop.f32.mrf.mxu0
      %v869 = vadd.f32 %v320, %v868
      %v870 = vpop.f32.mrf.mxu0
      %v871 = vadd.f32 %v320, %v870
      %872 = vmatmul.bf16.gmra.mxu0 %v600
      %v873 = vpop.f32.mrf.mxu0
      %v874 = vadd.f32 %v320, %v873
      %v875 = vpop.f32.mrf.mxu0
      %v876 = vadd.f32 %v320, %v875
      %877 = vmatmul.bf16.gmra.mxu0 %v601
      %v878 = vpop.f32.mrf.mxu0
      %v879 = vadd.f32 %v320, %v878
      %v880 = vpop.f32.mrf.mxu0
      %v881 = vadd.f32 %v320, %v880
      %882 = vmatmul.bf16.gmra.mxu0 %v602
      %v883 = vpop.f32.mrf.mxu0
      %v884 = vadd.f32 %v320, %v883
      %v885 = vpop.f32.mrf.mxu0
      %v886 = vadd.f32 %v320, %v885
      %887 = vmatmul.bf16.gmra.mxu0 %v603
      %v888 = vpop.f32.mrf.mxu0
      %v889 = vadd.f32 %v320, %v888
      %v890 = vpop.f32.mrf.mxu0
      %v891 = vadd.f32 %v320, %v890
      %892 = vmatmul.bf16.gmra.mxu0 %v604
      %v893 = vpop.f32.mrf.mxu0
      %v894 = vadd.f32 %v320, %v893
      %v895 = vpop.f32.mrf.mxu0
      %v896 = vadd.f32 %v320, %v895
      %897 = vmatmul.bf16.gmra.mxu0 %v605
      %v898 = vpop.f32.mrf.mxu0
      %v899 = vadd.f32 %v320, %v898
      %v900 = vpop.f32.mrf.mxu0
      %v901 = vadd.f32 %v320, %v900
      %902 = vmatmul.bf16.gmra.mxu0 %v606
      %v903 = vpop.f32.mrf.mxu0
      %v904 = vadd.f32 %v320, %v903
      %v905 = vpop.f32.mrf.mxu0
      %v906 = vadd.f32 %v320, %v905
      %907 = vmatmul.bf16.gmra.mxu0 %v607
      %v908 = vpop.f32.mrf.mxu0
      %v909 = vadd.f32 %v320, %v908
      %v910 = vpop.f32.mrf.mxu0
      %v911 = vadd.f32 %v320, %v910
      %912 = vmatmul.bf16.gmra.mxu0 %v608
      %v913 = vpop.f32.mrf.mxu0
      %v914 = vadd.f32 %v320, %v913
      %v915 = vpop.f32.mrf.mxu0
      %v916 = vadd.f32 %v320, %v915
      %917 = vmatmul.bf16.gmra.mxu0 %v609
      %v918 = vpop.f32.mrf.mxu0
      %v919 = vadd.f32 %v320, %v918
      %v920 = vpop.f32.mrf.mxu0
      %v921 = vadd.f32 %v320, %v920
      %922 = vmatmul.bf16.gmra.mxu0 %v610
      %v923 = vpop.f32.mrf.mxu0
      %v924 = vadd.f32 %v320, %v923
      %v925 = vpop.f32.mrf.mxu0
      %v926 = vadd.f32 %v320, %v925
      %927 = vmatmul.bf16.gmra.mxu0 %v611
      %v928 = vpop.f32.mrf.mxu0
      %v929 = vadd.f32 %v320, %v928
      %v930 = vpop.f32.mrf.mxu0
      %v931 = vadd.f32 %v320, %v930
      %932 = vmatmul.bf16.gmra.mxu0 %v612
      %v933 = vpop.f32.mrf.mxu0
      %v934 = vadd.f32 %v320, %v933
      %v935 = vpop.f32.mrf.mxu0
      %v936 = vadd.f32 %v320, %v935
      %937 = vmatmul.bf16.gmra.mxu0 %v613
      %v938 = vpop.f32.mrf.mxu0
      %v939 = vadd.f32 %v320, %v938
      %v940 = vpop.f32.mrf.mxu0
      %v941 = vadd.f32 %v320, %v940
      %942 = vmatmul.bf16.gmra.mxu0 %v614
      %v943 = vpop.f32.mrf.mxu0
      %v944 = vadd.f32 %v320, %v943
      %v945 = vpop.f32.mrf.mxu0
      %v946 = vadd.f32 %v320, %v945
      %947 = vmatmul.bf16.gmra.mxu0 %v615
      %v948 = vpop.f32.mrf.mxu0
      %v949 = vadd.f32 %v320, %v948
      %v950 = vpop.f32.mrf.mxu0
      %v951 = vadd.f32 %v320, %v950
      %952 = vmatmul.bf16.gmra.mxu0 %v616
      %v953 = vpop.f32.mrf.mxu0
      %v954 = vadd.f32 %v320, %v953
      %v955 = vpop.f32.mrf.mxu0
      %v956 = vadd.f32 %v320, %v955
      %957 = vmatmul.bf16.gmra.mxu0 %v617
      %v958 = vpop.f32.mrf.mxu0
      %v959 = vadd.f32 %v320, %v958
      %v960 = vpop.f32.mrf.mxu0
      %v961 = vadd.f32 %v320, %v960
      %962 = vmatmul.bf16.gmra.mxu0 %v618
      %v963 = vpop.f32.mrf.mxu0
      %v964 = vadd.f32 %v320, %v963
      %v965 = vpop.f32.mrf.mxu0
      %v966 = vadd.f32 %v320, %v965
      %967 = vmatmul.bf16.gmra.mxu0 %v619
      %v968 = vpop.f32.mrf.mxu0
      %v969 = vadd.f32 %v320, %v968
      %v970 = vpop.f32.mrf.mxu0
      %v971 = vadd.f32 %v320, %v970
      %972 = vmatmul.bf16.gmra.mxu0 %v620
      %v973 = vpop.f32.mrf.mxu0
      %v974 = vadd.f32 %v320, %v973
      %v975 = vpop.f32.mrf.mxu0
      %v976 = vadd.f32 %v320, %v975
      %977 = vmatmul.bf16.gmra.mxu0 %v621
      %v978 = vpop.f32.mrf.mxu0
      %v979 = vadd.f32 %v320, %v978
      %v980 = vpop.f32.mrf.mxu0
      %v981 = vadd.f32 %v320, %v980
      %982 = vmatmul.bf16.gmra.mxu0 %v622
      %v983 = vpop.f32.mrf.mxu0
      %v984 = vadd.f32 %v320, %v983
      %v985 = vpop.f32.mrf.mxu0
      %v986 = vadd.f32 %v320, %v985
      %987 = vmatmul.bf16.gmra.mxu0 %v623
      %v988 = vpop.f32.mrf.mxu0
      %v989 = vadd.f32 %v320, %v988
      %v990 = vpop.f32.mrf.mxu0
      %v991 = vadd.f32 %v320, %v990
      %992 = vmatmul.bf16.gmra.mxu0 %v624
      %v993 = vpop.f32.mrf.mxu0
      %v994 = vadd.f32 %v320, %v993
      %v995 = vpop.f32.mrf.mxu0
      %v996 = vadd.f32 %v320, %v995
      %997 = vmatmul.bf16.gmra.mxu0 %v625
      %v998 = vpop.f32.mrf.mxu0
      %v999 = vadd.f32 %v320, %v998
      %v1000 = vpop.f32.mrf.mxu0
      %v1001 = vadd.f32 %v320, %v1000
      %1002 = vmatmul.bf16.gmra.mxu0 %v626
      %v1003 = vpop.f32.mrf.mxu0
      %v1004 = vadd.f32 %v320, %v1003
      %v1005 = vpop.f32.mrf.mxu0
      %v1006 = vadd.f32 %v320, %v1005
      %1007 = vmatmul.bf16.gmra.mxu0 %v627
      %v1008 = vpop.f32.mrf.mxu0
      %v1009 = vadd.f32 %v320, %v1008
      %v1010 = vpop.f32.mrf.mxu0
      %v1011 = vadd.f32 %v320, %v1010
      %1012 = vmatmul.bf16.gmra.mxu0 %v628
      %v1013 = vpop.f32.mrf.mxu0
      %v1014 = vadd.f32 %v320, %v1013
      %v1015 = vpop.f32.mrf.mxu0
      %v1016 = vadd.f32 %v320, %v1015
      %1017 = vmatmul.bf16.gmra.mxu0 %v629
      %v1018 = vpop.f32.mrf.mxu0
      %v1019 = vadd.f32 %v320, %v1018
      %v1020 = vpop.f32.mrf.mxu0
      %v1021 = vadd.f32 %v320, %v1020
      %1022 = vmatmul.bf16.gmra.mxu0 %v630
      %v1023 = vpop.f32.mrf.mxu0
      %v1024 = vadd.f32 %v320, %v1023
      %v1025 = vpop.f32.mrf.mxu0
      %v1026 = vadd.f32 %v320, %v1025
      %1027 = vmatmul.bf16.gmra.mxu0 %v631
      %v1028 = vpop.f32.mrf.mxu0
      %v1029 = vadd.f32 %v320, %v1028
      %v1030 = vpop.f32.mrf.mxu0
      %v1031 = vadd.f32 %v320, %v1030
      %1032 = vmatmul.bf16.gmra.mxu0 %v632
      %v1033 = vpop.f32.mrf.mxu0
      %v1034 = vadd.f32 %v320, %v1033
      %v1035 = vpop.f32.mrf.mxu0
      %v1036 = vadd.f32 %v320, %v1035
      %1037 = vmatmul.bf16.gmra.mxu0 %v633
      %v1038 = vpop.f32.mrf.mxu0
      %v1039 = vadd.f32 %v320, %v1038
      %v1040 = vpop.f32.mrf.mxu0
      %v1041 = vadd.f32 %v320, %v1040
      %1042 = vmatmul.bf16.gmra.mxu0 %v634
      %v1043 = vpop.f32.mrf.mxu0
      %v1044 = vadd.f32 %v320, %v1043
      %v1045 = vpop.f32.mrf.mxu0
      %v1046 = vadd.f32 %v320, %v1045
      %1047 = vmatmul.bf16.gmra.mxu0 %v635
      %v1048 = vpop.f32.mrf.mxu0
      %v1049 = vadd.f32 %v320, %v1048
      %v1050 = vpop.f32.mrf.mxu0
      %v1051 = vadd.f32 %v320, %v1050
      %1052 = vmatmul.bf16.gmra.mxu0 %v636
      %v1053 = vpop.f32.mrf.mxu0
      %v1054 = vadd.f32 %v320, %v1053
      %v1055 = vpop.f32.mrf.mxu0
      %v1056 = vadd.f32 %v320, %v1055
      %1057 = vmatmul.bf16.gmra.mxu0 %v637
      %v1058 = vpop.f32.mrf.mxu0
      %v1059 = vadd.f32 %v320, %v1058
      %v1060 = vpop.f32.mrf.mxu0
      %v1061 = vadd.f32 %v320, %v1060
      %1062 = vmatmul.bf16.gmra.mxu0 %v638
      %v1063 = vpop.f32.mrf.mxu0
      %v1064 = vadd.f32 %v320, %v1063
      %v1065 = vpop.f32.mrf.mxu0
      %v1066 = vadd.f32 %v320, %v1065
      %1067 = vmatmul.bf16.gmra.mxu0 %v639
      %v1068 = vpop.f32.mrf.mxu0
      %v1069 = vadd.f32 %v320, %v1068
      %v1070 = vpop.f32.mrf.mxu0
      %v1071 = vadd.f32 %v320, %v1070
      %1072 = vmatmul.bf16.gmra.mxu0 %v640
      %v1073 = vpop.f32.mrf.mxu0
      %v1074 = vadd.f32 %v320, %v1073
      %v1075 = vpop.f32.mrf.mxu0
      %v1076 = vadd.f32 %v320, %v1075
      %1077 = vmatmul.bf16.gmra.mxu0 %v641
      %v1078 = vpop.f32.mrf.mxu0
      %v1079 = vadd.f32 %v320, %v1078
      %v1080 = vpop.f32.mrf.mxu0
      %v1081 = vadd.f32 %v320, %v1080
      %1082 = vdwg.mxu0
      %v1083 = vmax.f32 %v764, 0.0
      %v1084 = vmax.f32 %v766, 0.0
      %v1085 = vmax.f32 %v769, 0.0
      %v1086 = vmax.f32 %v771, 0.0
      %v1087 = vmax.f32 %v774, 0.0
      %v1088 = vmax.f32 %v776, 0.0
      %v1089 = vmax.f32 %v779, 0.0
      %v1090 = vmax.f32 %v781, 0.0
      %v1091 = vmax.f32 %v784, 0.0
      %v1092 = vmax.f32 %v786, 0.0
      %v1093 = vmax.f32 %v789, 0.0
      %v1094 = vmax.f32 %v791, 0.0
      %v1095 = vmax.f32 %v794, 0.0
      %v1096 = vmax.f32 %v796, 0.0
      %v1097 = vmax.f32 %v799, 0.0
      %v1098 = vmax.f32 %v801, 0.0
      %v1099 = vmax.f32 %v804, 0.0
      %v1100 = vmax.f32 %v806, 0.0
      %v1101 = vmax.f32 %v809, 0.0
      %v1102 = vmax.f32 %v811, 0.0
      %v1103 = vmax.f32 %v814, 0.0
      %v1104 = vmax.f32 %v816, 0.0
      %v1105 = vmax.f32 %v819, 0.0
      %v1106 = vmax.f32 %v821, 0.0
      %v1107 = vmax.f32 %v824, 0.0
      %v1108 = vmax.f32 %v826, 0.0
      %v1109 = vmax.f32 %v829, 0.0
      %v1110 = vmax.f32 %v831, 0.0
      %v1111 = vmax.f32 %v834, 0.0
      %v1112 = vmax.f32 %v836, 0.0
      %v1113 = vmax.f32 %v839, 0.0
      %v1114 = vmax.f32 %v841, 0.0
      %v1115 = vmax.f32 %v844, 0.0
      %v1116 = vmax.f32 %v846, 0.0
      %v1117 = vmax.f32 %v849, 0.0
      %v1118 = vmax.f32 %v851, 0.0
      %v1119 = vmax.f32 %v854, 0.0
      %v1120 = vmax.f32 %v856, 0.0
      %v1121 = vmax.f32 %v859, 0.0
      %v1122 = vmax.f32 %v861, 0.0
      %v1123 = vmax.f32 %v864, 0.0
      %v1124 = vmax.f32 %v866, 0.0
      %v1125 = vmax.f32 %v869, 0.0
      %v1126 = vmax.f32 %v871, 0.0
      %v1127 = vmax.f32 %v874, 0.0
      %v1128 = vmax.f32 %v876, 0.0
      %v1129 = vmax.f32 %v879, 0.0
      %v1130 = vmax.f32 %v881, 0.0
      %v1131 = vmax.f32 %v884, 0.0
      %v1132 = vmax.f32 %v886, 0.0
      %v1133 = vmax.f32 %v889, 0.0
      %v1134 = vmax.f32 %v891, 0.0
      %v1135 = vmax.f32 %v894, 0.0
      %v1136 = vmax.f32 %v896, 0.0
      %v1137 = vmax.f32 %v899, 0.0
      %v1138 = vmax.f32 %v901, 0.0
      %v1139 = vmax.f32 %v904, 0.0
      %v1140 = vmax.f32 %v906, 0.0
      %v1141 = vmax.f32 %v909, 0.0
      %v1142 = vmax.f32 %v911, 0.0
      %v1143 = vmax.f32 %v914, 0.0
      %v1144 = vmax.f32 %v916, 0.0
      %v1145 = vmax.f32 %v919, 0.0
      %v1146 = vmax.f32 %v921, 0.0
      %v1147 = vmax.f32 %v924, 0.0
      %v1148 = vmax.f32 %v926, 0.0
      %v1149 = vmax.f32 %v929, 0.0
      %v1150 = vmax.f32 %v931, 0.0
      %v1151 = vmax.f32 %v934, 0.0
      %v1152 = vmax.f32 %v936, 0.0
      %v1153 = vmax.f32 %v939, 0.0
      %v1154 = vmax.f32 %v941, 0.0
      %v1155 = vmax.f32 %v944, 0.0
      %v1156 = vmax.f32 %v946, 0.0
      %v1157 = vmax.f32 %v949, 0.0
      %v1158 = vmax.f32 %v951, 0.0
      %v1159 = vmax.f32 %v954, 0.0
      %v1160 = vmax.f32 %v956, 0.0
      %v1161 = vmax.f32 %v959, 0.0
      %v1162 = vmax.f32 %v961, 0.0
      %v1163 = vmax.f32 %v964, 0.0
      %v1164 = vmax.f32 %v966, 0.0
      %v1165 = vmax.f32 %v969, 0.0
      %v1166 = vmax.f32 %v971, 0.0
      %v1167 = vmax.f32 %v974, 0.0
      %v1168 = vmax.f32 %v976, 0.0
      %v1169 = vmax.f32 %v979, 0.0
      %v1170 = vmax.f32 %v981, 0.0
      %v1171 = vmax.f32 %v984, 0.0
      %v1172 = vmax.f32 %v986, 0.0
      %v1173 = vmax.f32 %v989, 0.0
      %v1174 = vmax.f32 %v991, 0.0
      %v1175 = vmax.f32 %v994, 0.0
      %v1176 = vmax.f32 %v996, 0.0
      %v1177 = vmax.f32 %v999, 0.0
      %v1178 = vmax.f32 %v1001, 0.0
      %v1179 = vmax.f32 %v1004, 0.0
      %v1180 = vmax.f32 %v1006, 0.0
      %v1181 = vmax.f32 %v1009, 0.0
      %v1182 = vmax.f32 %v1011, 0.0
      %v1183 = vmax.f32 %v1014, 0.0
      %v1184 = vmax.f32 %v1016, 0.0
      %v1185 = vmax.f32 %v1019, 0.0
      %v1186 = vmax.f32 %v1021, 0.0
      %v1187 = vmax.f32 %v1024, 0.0
      %v1188 = vmax.f32 %v1026, 0.0
      %v1189 = vmax.f32 %v1029, 0.0
      %v1190 = vmax.f32 %v1031, 0.0
      %v1191 = vmax.f32 %v1034, 0.0
      %v1192 = vmax.f32 %v1036, 0.0
      %v1193 = vmax.f32 %v1039, 0.0
      %v1194 = vmax.f32 %v1041, 0.0
      %v1195 = vmax.f32 %v1044, 0.0
      %v1196 = vmax.f32 %v1046, 0.0
      %v1197 = vmax.f32 %v1049, 0.0
      %v1198 = vmax.f32 %v1051, 0.0
      %v1199 = vmax.f32 %v1054, 0.0
      %v1200 = vmax.f32 %v1056, 0.0
      %v1201 = vmax.f32 %v1059, 0.0
      %v1202 = vmax.f32 %v1061, 0.0
      %v1203 = vmax.f32 %v1064, 0.0
      %v1204 = vmax.f32 %v1066, 0.0
      %v1205 = vmax.f32 %v1069, 0.0
      %v1206 = vmax.f32 %v1071, 0.0
      %v1207 = vmax.f32 %v1074, 0.0
      %v1208 = vmax.f32 %v1076, 0.0
      %v1209 = vmax.f32 %v1079, 0.0
      %v1210 = vmax.f32 %v1081, 0.0
      %v1211 = vpack.c.bf16 %v1083, %v1083
      %v1212 = vpack.c.bf16 %v1084, %v1084
      %v1213 = vpack.c.bf16 %v1085, %v1085
      %v1214 = vpack.c.bf16 %v1086, %v1086
      %v1215 = vpack.c.bf16 %v1087, %v1087
      %v1216 = vpack.c.bf16 %v1088, %v1088
      %v1217 = vpack.c.bf16 %v1089, %v1089
      %v1218 = vpack.c.bf16 %v1090, %v1090
      %v1219 = vpack.c.bf16 %v1091, %v1091
      %v1220 = vpack.c.bf16 %v1092, %v1092
      %v1221 = vpack.c.bf16 %v1093, %v1093
      %v1222 = vpack.c.bf16 %v1094, %v1094
      %v1223 = vpack.c.bf16 %v1095, %v1095
      %v1224 = vpack.c.bf16 %v1096, %v1096
      %v1225 = vpack.c.bf16 %v1097, %v1097
      %v1226 = vpack.c.bf16 %v1098, %v1098
      %v1227 = vpack.c.bf16 %v1099, %v1099
      %v1228 = vpack.c.bf16 %v1100, %v1100
      %v1229 = vpack.c.bf16 %v1101, %v1101
      %v1230 = vpack.c.bf16 %v1102, %v1102
      %v1231 = vpack.c.bf16 %v1103, %v1103
      %v1232 = vpack.c.bf16 %v1104, %v1104
      %v1233 = vpack.c.bf16 %v1105, %v1105
      %v1234 = vpack.c.bf16 %v1106, %v1106
      %v1235 = vpack.c.bf16 %v1107, %v1107
      %v1236 = vpack.c.bf16 %v1108, %v1108
      %v1237 = vpack.c.bf16 %v1109, %v1109
      %v1238 = vpack.c.bf16 %v1110, %v1110
      %v1239 = vpack.c.bf16 %v1111, %v1111
      %v1240 = vpack.c.bf16 %v1112, %v1112
      %v1241 = vpack.c.bf16 %v1113, %v1113
      %v1242 = vpack.c.bf16 %v1114, %v1114
      %v1243 = vpack.c.bf16 %v1115, %v1115
      %v1244 = vpack.c.bf16 %v1116, %v1116
      %v1245 = vpack.c.bf16 %v1117, %v1117
      %v1246 = vpack.c.bf16 %v1118, %v1118
      %v1247 = vpack.c.bf16 %v1119, %v1119
      %v1248 = vpack.c.bf16 %v1120, %v1120
      %v1249 = vpack.c.bf16 %v1121, %v1121
      %v1250 = vpack.c.bf16 %v1122, %v1122
      %v1251 = vpack.c.bf16 %v1123, %v1123
      %v1252 = vpack.c.bf16 %v1124, %v1124
      %v1253 = vpack.c.bf16 %v1125, %v1125
      %v1254 = vpack.c.bf16 %v1126, %v1126
      %v1255 = vpack.c.bf16 %v1127, %v1127
      %v1256 = vpack.c.bf16 %v1128, %v1128
      %v1257 = vpack.c.bf16 %v1129, %v1129
      %v1258 = vpack.c.bf16 %v1130, %v1130
      %v1259 = vpack.c.bf16 %v1131, %v1131
      %v1260 = vpack.c.bf16 %v1132, %v1132
      %v1261 = vpack.c.bf16 %v1133, %v1133
      %v1262 = vpack.c.bf16 %v1134, %v1134
      %v1263 = vpack.c.bf16 %v1135, %v1135
      %v1264 = vpack.c.bf16 %v1136, %v1136
      %v1265 = vpack.c.bf16 %v1137, %v1137
      %v1266 = vpack.c.bf16 %v1138, %v1138
      %v1267 = vpack.c.bf16 %v1139, %v1139
      %v1268 = vpack.c.bf16 %v1140, %v1140
      %v1269 = vpack.c.bf16 %v1141, %v1141
      %v1270 = vpack.c.bf16 %v1142, %v1142
      %v1271 = vpack.c.bf16 %v1143, %v1143
      %v1272 = vpack.c.bf16 %v1144, %v1144
      %v1273 = vpack.c.bf16 %v1145, %v1145
      %v1274 = vpack.c.bf16 %v1146, %v1146
      %v1275 = vpack.c.bf16 %v1147, %v1147
      %v1276 = vpack.c.bf16 %v1148, %v1148
      %v1277 = vpack.c.bf16 %v1149, %v1149
      %v1278 = vpack.c.bf16 %v1150, %v1150
      %v1279 = vpack.c.bf16 %v1151, %v1151
      %v1280 = vpack.c.bf16 %v1152, %v1152
      %v1281 = vpack.c.bf16 %v1153, %v1153
      %v1282 = vpack.c.bf16 %v1154, %v1154
      %v1283 = vpack.c.bf16 %v1155, %v1155
      %v1284 = vpack.c.bf16 %v1156, %v1156
      %v1285 = vpack.c.bf16 %v1157, %v1157
      %v1286 = vpack.c.bf16 %v1158, %v1158
      %v1287 = vpack.c.bf16 %v1159, %v1159
      %v1288 = vpack.c.bf16 %v1160, %v1160
      %v1289 = vpack.c.bf16 %v1161, %v1161
      %v1290 = vpack.c.bf16 %v1162, %v1162
      %v1291 = vpack.c.bf16 %v1163, %v1163
      %v1292 = vpack.c.bf16 %v1164, %v1164
      %v1293 = vpack.c.bf16 %v1165, %v1165
      %v1294 = vpack.c.bf16 %v1166, %v1166
      %v1295 = vpack.c.bf16 %v1167, %v1167
      %v1296 = vpack.c.bf16 %v1168, %v1168
      %v1297 = vpack.c.bf16 %v1169, %v1169
      %v1298 = vpack.c.bf16 %v1170, %v1170
      %v1299 = vpack.c.bf16 %v1171, %v1171
      %v1300 = vpack.c.bf16 %v1172, %v1172
      %v1301 = vpack.c.bf16 %v1173, %v1173
      %v1302 = vpack.c.bf16 %v1174, %v1174
      %v1303 = vpack.c.bf16 %v1175, %v1175
      %v1304 = vpack.c.bf16 %v1176, %v1176
      %v1305 = vpack.c.bf16 %v1177, %v1177
      %v1306 = vpack.c.bf16 %v1178, %v1178
      %v1307 = vpack.c.bf16 %v1179, %v1179
      %v1308 = vpack.c.bf16 %v1180, %v1180
      %v1309 = vpack.c.bf16 %v1181, %v1181
      %v1310 = vpack.c.bf16 %v1182, %v1182
      %v1311 = vpack.c.bf16 %v1183, %v1183
      %v1312 = vpack.c.bf16 %v1184, %v1184
      %v1313 = vpack.c.bf16 %v1185, %v1185
      %v1314 = vpack.c.bf16 %v1186, %v1186
      %v1315 = vpack.c.bf16 %v1187, %v1187
      %v1316 = vpack.c.bf16 %v1188, %v1188
      %v1317 = vpack.c.bf16 %v1189, %v1189
      %v1318 = vpack.c.bf16 %v1190, %v1190
      %v1319 = vpack.c.bf16 %v1191, %v1191
      %v1320 = vpack.c.bf16 %v1192, %v1192
      %v1321 = vpack.c.bf16 %v1193, %v1193
      %v1322 = vpack.c.bf16 %v1194, %v1194
      %v1323 = vpack.c.bf16 %v1195, %v1195
      %v1324 = vpack.c.bf16 %v1196, %v1196
      %v1325 = vpack.c.bf16 %v1197, %v1197
      %v1326 = vpack.c.bf16 %v1198, %v1198
      %v1327 = vpack.c.bf16 %v1199, %v1199
      %v1328 = vpack.c.bf16 %v1200, %v1200
      %v1329 = vpack.c.bf16 %v1201, %v1201
      %v1330 = vpack.c.bf16 %v1202, %v1202
      %v1331 = vpack.c.bf16 %v1203, %v1203
      %v1332 = vpack.c.bf16 %v1204, %v1204
      %v1333 = vpack.c.bf16 %v1205, %v1205
      %v1334 = vpack.c.bf16 %v1206, %v1206
      %v1335 = vpack.c.bf16 %v1207, %v1207
      %v1336 = vpack.c.bf16 %v1208, %v1208
      %v1337 = vpack.c.bf16 %v1209, %v1209
      %v1338 = vpack.c.bf16 %v1210, %v1210
      %1339 = vst [vmem:[%s172] sm:$0xf] %v1211
      %1340 = vst [vmem:[%s172 + $0x4] sm:$0xf] %v1212
      %1341 = vst [vmem:[%s172 + $0x8] sm:$0xf] %v1213
      %1342 = vst [vmem:[%s172 + $0xc] sm:$0xf] %v1214
      %1343 = vst [vmem:[%s172 + $0x10] sm:$0xf] %v1215
      %1344 = vst [vmem:[%s172 + $0x14] sm:$0xf] %v1216
      %1345 = vst [vmem:[%s172 + $0x18] sm:$0xf] %v1217
      %1346 = vst [vmem:[%s172 + $0x1c] sm:$0xf] %v1218
      %1347 = vst [vmem:[%s172 + $0x20] sm:$0xf] %v1219
      %1348 = vst [vmem:[%s172 + $0x24] sm:$0xf] %v1220
      %1349 = vst [vmem:[%s172 + $0x28] sm:$0xf] %v1221
      %1350 = vst [vmem:[%s172 + $0x2c] sm:$0xf] %v1222
      %1351 = vst [vmem:[%s172 + $0x30] sm:$0xf] %v1223
      %1352 = vst [vmem:[%s172 + $0x34] sm:$0xf] %v1224
      %1353 = vst [vmem:[%s172 + $0x38] sm:$0xf] %v1225
      %1354 = vst [vmem:[%s172 + $0x3c] sm:$0xf] %v1226
      %1355 = vst [vmem:[%s172 + $0x40] sm:$0xf] %v1227
      %1356 = vst [vmem:[%s172 + $0x44] sm:$0xf] %v1228
      %1357 = vst [vmem:[%s172 + $0x48] sm:$0xf] %v1229
      %1358 = vst [vmem:[%s172 + $0x4c] sm:$0xf] %v1230
      %1359 = vst [vmem:[%s172 + $0x50] sm:$0xf] %v1231
      %1360 = vst [vmem:[%s172 + $0x54] sm:$0xf] %v1232
      %1361 = vst [vmem:[%s172 + $0x58] sm:$0xf] %v1233
      %1362 = vst [vmem:[%s172 + $0x5c] sm:$0xf] %v1234
      %1363 = vst [vmem:[%s172 + $0x60] sm:$0xf] %v1235
      %1364 = vst [vmem:[%s172 + $0x64] sm:$0xf] %v1236
      %1365 = vst [vmem:[%s172 + $0x68] sm:$0xf] %v1237
      %1366 = vst [vmem:[%s172 + $0x6c] sm:$0xf] %v1238
      %1367 = vst [vmem:[%s172 + $0x70] sm:$0xf] %v1239
      %1368 = vst [vmem:[%s172 + $0x74] sm:$0xf] %v1240
      %1369 = vst [vmem:[%s172 + $0x78] sm:$0xf] %v1241
      %1370 = vst [vmem:[%s172 + $0x7c] sm:$0xf] %v1242
      %1371 = vst [vmem:[%s172 + $0x80] sm:$0xf] %v1243
      %1372 = vst [vmem:[%s172 + $0x84] sm:$0xf] %v1244
      %1373 = vst [vmem:[%s172 + $0x88] sm:$0xf] %v1245
      %1374 = vst [vmem:[%s172 + $0x8c] sm:$0xf] %v1246
      %1375 = vst [vmem:[%s172 + $0x90] sm:$0xf] %v1247
      %1376 = vst [vmem:[%s172 + $0x94] sm:$0xf] %v1248
      %1377 = vst [vmem:[%s172 + $0x98] sm:$0xf] %v1249
      %1378 = vst [vmem:[%s172 + $0x9c] sm:$0xf] %v1250
      %1379 = vst [vmem:[%s172 + $0xa0] sm:$0xf] %v1251
      %1380 = vst [vmem:[%s172 + $0xa4] sm:$0xf] %v1252
      %1381 = vst [vmem:[%s172 + $0xa8] sm:$0xf] %v1253
      %1382 = vst [vmem:[%s172 + $0xac] sm:$0xf] %v1254
      %1383 = vst [vmem:[%s172 + $0xb0] sm:$0xf] %v1255
      %1384 = vst [vmem:[%s172 + $0xb4] sm:$0xf] %v1256
      %1385 = vst [vmem:[%s172 + $0xb8] sm:$0xf] %v1257
      %1386 = vst [vmem:[%s172 + $0xbc] sm:$0xf] %v1258
      %1387 = vst [vmem:[%s172 + $0xc0] sm:$0xf] %v1259
      %1388 = vst [vmem:[%s172 + $0xc4] sm:$0xf] %v1260
      %1389 = vst [vmem:[%s172 + $0xc8] sm:$0xf] %v1261
      %1390 = vst [vmem:[%s172 + $0xcc] sm:$0xf] %v1262
      %1391 = vst [vmem:[%s172 + $0xd0] sm:$0xf] %v1263
      %1392 = vst [vmem:[%s172 + $0xd4] sm:$0xf] %v1264
      %1393 = vst [vmem:[%s172 + $0xd8] sm:$0xf] %v1265
      %1394 = vst [vmem:[%s172 + $0xdc] sm:$0xf] %v1266
      %1395 = vst [vmem:[%s172 + $0xe0] sm:$0xf] %v1267
      %1396 = vst [vmem:[%s172 + $0xe4] sm:$0xf] %v1268
      %1397 = vst [vmem:[%s172 + $0xe8] sm:$0xf] %v1269
      %1398 = vst [vmem:[%s172 + $0xec] sm:$0xf] %v1270
      %1399 = vst [vmem:[%s172 + $0xf0] sm:$0xf] %v1271
      %1400 = vst [vmem:[%s172 + $0xf4] sm:$0xf] %v1272
      %1401 = vst [vmem:[%s172 + $0xf8] sm:$0xf] %v1273
      %1402 = vst [vmem:[%s172 + $0xfc] sm:$0xf] %v1274
      %1403 = vst [vmem:[%s172 + $0x100] sm:$0xf] %v1275
      %1404 = vst [vmem:[%s172 + $0x104] sm:$0xf] %v1276
      %1405 = vst [vmem:[%s172 + $0x108] sm:$0xf] %v1277
      %1406 = vst [vmem:[%s172 + $0x10c] sm:$0xf] %v1278
      %1407 = vst [vmem:[%s172 + $0x110] sm:$0xf] %v1279
      %1408 = vst [vmem:[%s172 + $0x114] sm:$0xf] %v1280
      %1409 = vst [vmem:[%s172 + $0x118] sm:$0xf] %v1281
      %1410 = vst [vmem:[%s172 + $0x11c] sm:$0xf] %v1282
      %1411 = vst [vmem:[%s172 + $0x120] sm:$0xf] %v1283
      %1412 = vst [vmem:[%s172 + $0x124] sm:$0xf] %v1284
      %1413 = vst [vmem:[%s172 + $0x128] sm:$0xf] %v1285
      %1414 = vst [vmem:[%s172 + $0x12c] sm:$0xf] %v1286
      %1415 = vst [vmem:[%s172 + $0x130] sm:$0xf] %v1287
      %1416 = vst [vmem:[%s172 + $0x134] sm:$0xf] %v1288
      %1417 = vst [vmem:[%s172 + $0x138] sm:$0xf] %v1289
      %1418 = vst [vmem:[%s172 + $0x13c] sm:$0xf] %v1290
      %1419 = vst [vmem:[%s172 + $0x140] sm:$0xf] %v1291
      %1420 = vst [vmem:[%s172 + $0x144] sm:$0xf] %v1292
      %1421 = vst [vmem:[%s172 + $0x148] sm:$0xf] %v1293
      %1422 = vst [vmem:[%s172 + $0x14c] sm:$0xf] %v1294
      %1423 = vst [vmem:[%s172 + $0x150] sm:$0xf] %v1295
      %1424 = vst [vmem:[%s172 + $0x154] sm:$0xf] %v1296
      %1425 = vst [vmem:[%s172 + $0x158] sm:$0xf] %v1297
      %1426 = vst [vmem:[%s172 + $0x15c] sm:$0xf] %v1298
      %1427 = vst [vmem:[%s172 + $0x160] sm:$0xf] %v1299
      %1428 = vst [vmem:[%s172 + $0x164] sm:$0xf] %v1300
      %1429 = vst [vmem:[%s172 + $0x168] sm:$0xf] %v1301
      %1430 = vst [vmem:[%s172 + $0x16c] sm:$0xf] %v1302
      %1431 = vst [vmem:[%s172 + $0x170] sm:$0xf] %v1303
      %1432 = vst [vmem:[%s172 + $0x174] sm:$0xf] %v1304
      %1433 = vst [vmem:[%s172 + $0x178] sm:$0xf] %v1305
      %1434 = vst [vmem:[%s172 + $0x17c] sm:$0xf] %v1306
      %1435 = vst [vmem:[%s172 + $0x180] sm:$0xf] %v1307
      %1436 = vst [vmem:[%s172 + $0x184] sm:$0xf] %v1308
      %1437 = vst [vmem:[%s172 + $0x188] sm:$0xf] %v1309
      %1438 = vst [vmem:[%s172 + $0x18c] sm:$0xf] %v1310
      %1439 = vst [vmem:[%s172 + $0x190] sm:$0xf] %v1311
      %1440 = vst [vmem:[%s172 + $0x194] sm:$0xf] %v1312
      %1441 = vst [vmem:[%s172 + $0x198] sm:$0xf] %v1313
      %1442 = vst [vmem:[%s172 + $0x19c] sm:$0xf] %v1314
      %1443 = vst [vmem:[%s172 + $0x1a0] sm:$0xf] %v1315
      %1444 = vst [vmem:[%s172 + $0x1a4] sm:$0xf] %v1316
      %1445 = vst [vmem:[%s172 + $0x1a8] sm:$0xf] %v1317
      %1446 = vst [vmem:[%s172 + $0x1ac] sm:$0xf] %v1318
      %1447 = vst [vmem:[%s172 + $0x1b0] sm:$0xf] %v1319
      %1448 = vst [vmem:[%s172 + $0x1b4] sm:$0xf] %v1320
      %1449 = vst [vmem:[%s172 + $0x1b8] sm:$0xf] %v1321
      %1450 = vst [vmem:[%s172 + $0x1bc] sm:$0xf] %v1322
      %1451 = vst [vmem:[%s172 + $0x1c0] sm:$0xf] %v1323
      %1452 = vst [vmem:[%s172 + $0x1c4] sm:$0xf] %v1324
      %1453 = vst [vmem:[%s172 + $0x1c8] sm:$0xf] %v1325
      %1454 = vst [vmem:[%s172 + $0x1cc] sm:$0xf] %v1326
      %1455 = vst [vmem:[%s172 + $0x1d0] sm:$0xf] %v1327
      %1456 = vst [vmem:[%s172 + $0x1d4] sm:$0xf] %v1328
      %1457 = vst [vmem:[%s172 + $0x1d8] sm:$0xf] %v1329
      %1458 = vst [vmem:[%s172 + $0x1dc] sm:$0xf] %v1330
      %1459 = vst [vmem:[%s172 + $0x1e0] sm:$0xf] %v1331
      %1460 = vst [vmem:[%s172 + $0x1e4] sm:$0xf] %v1332
      %1461 = vst [vmem:[%s172 + $0x1e8] sm:$0xf] %v1333
      %1462 = vst [vmem:[%s172 + $0x1ec] sm:$0xf] %v1334
      %1463 = vst [vmem:[%s172 + $0x1f0] sm:$0xf] %v1335
      %1464 = vst [vmem:[%s172 + $0x1f4] sm:$0xf] %v1336
      %1465 = vst [vmem:[%s172 + $0x1f8] sm:$0xf] %v1337
      %1466 = vst [vmem:[%s172 + $0x1fc] sm:$0xf] %v1338
      %s1467 = smul.u32 128, %s14
      %p1468 = scmp.lt.s32.totalorder %s1467, 255
      %s1469 = scalar_select %p1468, %s1467, 255
      %s1470 = smul.addr %s1469, 4
      %s1471 = scalar_lea.vmem %s3, %s1470
      // Predicated region
      $region33: #{cnn_forward.6} parent=31 // pred_check
        %p1472 = pneg %p100
      $region34: #{cnn_forward.6} parent=31 // pred_check_branch
        %1474 = sbr.rel (%p1472) target = $region36
      $region35: #{cnn_forward.6} parent=31 // pred_region
        %s1475 = smul.u32 128, %s14
      $region36: #{cnn_forward.6} parent=31 // pred_fallthru
        _
    $region32: #{cnn_forward.6} parent=5 // pred_fallthru
      _
    %p1476 = scmp.le.s32.totalorder 2, %s9
    // Predicated region
    $region37: #{cnn_forward.6} parent=5 // pred_check
      %p1477 = pneg %p1476
    $region38: #{cnn_forward.6} parent=5 // pred_check_branch
      %1479 = sbr.rel (%p1477) target = $region40
    $region39: #{cnn_forward.6} parent=5 // pred_region
      %s1480 = ssub.s32 %s9, 2
      // Predicated region
      $region41: #{cnn_forward.6} parent=39 // pred_check
        %p1481 = pneg %p106
      $region42: #{cnn_forward.6} parent=39 // pred_check_branch
        %1483 = sbr.rel (%p1481) target = $region44
      $region43: #{cnn_forward.6} parent=39 // pred_region
        %s1484 = smul.u32 128, %s15
        %p1485 = scmp.lt.s32.totalorder %s1484, 255
        %s1486 = scalar_select %p1485, %s1484, 255
        %s1487 = smul.addr %s1486, 4
        %s1488 = scalar_lea.vmem %s3, %s1487
      $region44: #{cnn_forward.6} parent=39 // pred_fallthru
        _
    $region40: #{cnn_forward.6} parent=5 // pred_fallthru
      _
  $region6: #{cnn_forward.6} parent=0 // loop_footer
    %s13 = sadd.s32 1, %s9
  $region7: #{cnn_forward.6} parent=0 // loop_footer_branch
    %8 = sbr.rel target = $region3
  $region8: #{cnn_forward.6} parent=0 // loop_exit
    _

// kernel: cnn_forward.7
$region0: #{cnn_forward.7}
  #allocation0 [shape = 'u32[]', space=smem, size = 0x4, offset = 0x4, fixed_abs, tag = 'smem constant byte address 0x4 - core index']
  #allocation1 [shape = 'u32[72,128]{1,0:T(1,128)}', space=vmem, size = 0x9000, scoped, tag = 'internal scratch']
  %s0 = inlined_call_operand.vmem [shape: bf16[2048,256], index: 0, kind: input, shape index: {}]
  %s1 = inlined_call_operand.vmem [shape: bf16[256,128], index: 1, kind: input, shape index: {}]
  %s2 = inlined_call_operand.vmem [shape: f32[1,128], index: 2, kind: input, shape index: {}]
  %s3 = inlined_call_operand.vmem [shape: bf16[2048,128], index: 3, kind: output, shape index: {}]
  %s4 = sld [smem:[#allocation0]]
  $region45: #{cnn_forward.7} parent=0
    _
  %s6 = ssub.s32 1, %s4
  %s7 = scalar_select 0, %s6, %s4
  loop: start=0, step=1, limit=4
  $region2: #{cnn_forward.7} parent=0 // loop_pre_header
    _
  $region3: #{cnn_forward.7} parent=0 // loop_header
    %s9 = sphi 0, %s13
    %p10 = scmp.ge.s32.totalorder %s9, 4
    %s19 = sphi 0, %s21
    %s22 = sphi 0, %s19
    %s23 = sphi 0, %s22
    %s39 = sphi 0, %s23
    %s43 = sphi 0, %s43
    %s45 = sphi 0, %s43
    %s46 = sphi 0, %s45
    %s60 = sphi 0, %s46
    %s64 = sphi 0, %s64
    %s66 = sphi 0, %s64
    %s67 = sphi 0, %s66
    %s81 = sphi 0, %s67
    %s87 = sphi 0, %s89
    %s90 = sphi 0, %s87
    %s91 = sphi 0, %s90
    %s107 = sphi 0, %s91
  $region4: #{cnn_forward.7} parent=0 // loop_header_branch
    %12 = sbr.rel (%p10) target = $region8
  $region5: #{cnn_forward.7} parent=0 // loop_body
    %s14 = ssub.s32 %s9, 1
    %s15 = ssub.s32 %s9, 2
    %s16 = sadd.s32 %s9, 1
    %s17 = ssub.s32 %s9, %s16
    %p18 = scmp.eq.s32.totalorder %s17, 0
    %s20 = sadd.s32 %s19, 1
    %s21 = scalar_select %p18, %s19, %s20
    %p24 = pneg %p18
    %p25 = scmp.eq.s32.totalorder %s9, 1
    %p26 = por %p24, %p25
    %p27 = scmp.ne.s32.totalorder %s19, %s22
    %p28 = scmp.eq.s32.totalorder %s9, 0
    %p29 = por %p27, %p28
    %p30 = scmp.ne.s32.totalorder %s19, %s22
    %p31 = scmp.eq.s32.totalorder %s14, 1
    %p32 = por %p30, %p31
    %p33 = scmp.ne.s32.totalorder %s22, %s23
    %p34 = scmp.eq.s32.totalorder %s14, 0
    %p35 = por %p33, %p34
    %p36 = scmp.ne.s32.totalorder %s22, %s23
    %p37 = scmp.eq.s32.totalorder %s15, 1
    %p38 = por %p36, %p37
    %p40 = scmp.ne.s32.totalorder %s23, %s39
    %p41 = scmp.eq.s32.totalorder %s15, 0
    %p42 = por %p40, %p41
    %s44 = sadd.s32 %s43, 1
    %p47 = scmp.eq.s32.totalorder %s9, 1
    %p48 = scmp.ne.s32.totalorder %s43, %s45
    %p49 = scmp.eq.s32.totalorder %s9, 0
    %p50 = por %p48, %p49
    %p51 = scmp.ne.s32.totalorder %s43, %s45
    %p52 = scmp.eq.s32.totalorder %s14, 1
    %p53 = por %p51, %p52
    %p54 = scmp.ne.s32.totalorder %s45, %s46
    %p55 = scmp.eq.s32.totalorder %s14, 0
    %p56 = por %p54, %p55
    %p57 = scmp.ne.s32.totalorder %s45, %s46
    %p58 = scmp.eq.s32.totalorder %s15, 1
    %p59 = por %p57, %p58
    %p61 = scmp.ne.s32.totalorder %s46, %s60
    %p62 = scmp.eq.s32.totalorder %s15, 0
    %p63 = por %p61, %p62
    %s65 = sadd.s32 %s64, 1
    %p68 = scmp.eq.s32.totalorder %s9, 1
    %p69 = scmp.ne.s32.totalorder %s64, %s66
    %p70 = scmp.eq.s32.totalorder %s9, 0
    %p71 = por %p69, %p70
    %p72 = scmp.ne.s32.totalorder %s64, %s66
    %p73 = scmp.eq.s32.totalorder %s14, 1
    %p74 = por %p72, %p73
    %p75 = scmp.ne.s32.totalorder %s66, %s67
    %p76 = scmp.eq.s32.totalorder %s14, 0
    %p77 = por %p75, %p76
    %p78 = scmp.ne.s32.totalorder %s66, %s67
    %p79 = scmp.eq.s32.totalorder %s15, 1
    %p80 = por %p78, %p79
    %p82 = scmp.ne.s32.totalorder %s67, %s81
    %p83 = scmp.eq.s32.totalorder %s15, 0
    %p84 = por %p82, %p83
    %s85 = ssub.s32 %s9, %s16
    %p86 = scmp.eq.s32.totalorder %s85, 0
    %s88 = sadd.s32 %s87, 1
    %s89 = scalar_select %p86, %s87, %s88
    %p92 = pneg %p86
    %p93 = scmp.eq.s32.totalorder %s9, 1
    %p94 = por %p92, %p93
    %p95 = scmp.ne.s32.totalorder %s87, %s90
    %p96 = scmp.eq.s32.totalorder %s9, 0
    %p97 = por %p95, %p96
    %p98 = scmp.ne.s32.totalorder %s87, %s90
    %p99 = scmp.eq.s32.totalorder %s14, 1
    %p100 = por %p98, %p99
    %p101 = scmp.ne.s32.totalorder %s90, %s91
    %p102 = scmp.eq.s32.totalorder %s14, 0
    %p103 = por %p101, %p102
    %p104 = scmp.ne.s32.totalorder %s90, %s91
    %p105 = scmp.eq.s32.totalorder %s15, 1
    %p106 = por %p104, %p105
    %p108 = scmp.ne.s32.totalorder %s91, %s107
    %p109 = scmp.eq.s32.totalorder %s15, 0
    %p110 = por %p108, %p109
    %p111 = scmp.le.s32.totalorder 1, %s9
    %p112 = scmp.lt.s32.totalorder %s9, 3
    %p113 = pnand %p111, %p112
    %p114 = pneg %p113
    // Predicated region
    $region9: #{cnn_forward.7} parent=5 // pred_check
      _
    $region10: #{cnn_forward.7} parent=5 // pred_check_branch
      %116 = sbr.rel (%p113) target = $region12
    $region11: #{cnn_forward.7} parent=5 // pred_region
      %s117 = ssub.s32 %s9, 1
      // Predicated region
      $region13: #{cnn_forward.7} parent=11 // pred_check
        %p118 = pneg %p56
      $region14: #{cnn_forward.7} parent=11 // pred_check_branch
        %120 = sbr.rel (%p118) target = $region16
      $region15: #{cnn_forward.7} parent=11 // pred_region
        _
      $region16: #{cnn_forward.7} parent=11 // pred_fallthru
        _
      // Predicated region
      $region17: #{cnn_forward.7} parent=11 // pred_check
        %p121 = pneg %p77
      $region18: #{cnn_forward.7} parent=11 // pred_check_branch
        %123 = sbr.rel (%p121) target = $region20
      $region19: #{cnn_forward.7} parent=11 // pred_region
        _
      $region20: #{cnn_forward.7} parent=11 // pred_fallthru
        _
    $region12: #{cnn_forward.7} parent=5 // pred_fallthru
      _
    %p124 = scmp.lt.s32.totalorder %s9, 2
    // Predicated region
    $region21: #{cnn_forward.7} parent=5 // pred_check
      %p125 = pneg %p124
    $region22: #{cnn_forward.7} parent=5 // pred_check_branch
      %127 = sbr.rel (%p125) target = $region24
    $region23: #{cnn_forward.7} parent=5 // pred_region
      // Predicated region
      $region25: #{cnn_forward.7} parent=23 // pred_check
        %p128 = pneg %p29
      $region26: #{cnn_forward.7} parent=23 // pred_check_branch
        %130 = sbr.rel (%p128) target = $region28
      $region27: #{cnn_forward.7} parent=23 // pred_region
        %s131 = smul.u32 128, %s9
        %p132 = scmp.lt.s32.totalorder %s131, 255
        %s133 = scalar_select %p132, %s131, 255
        %s134 = smul.addr %s133, 2
        %s135 = smul.addr %s134, 4
        %s136 = scalar_lea.vmem %s0, %s135
        %s137 = smul.u32 128, %s9
      $region28: #{cnn_forward.7} parent=23 // pred_fallthru
        _
    $region24: #{cnn_forward.7} parent=5 // pred_fallthru
      _
    %p138 = scmp.le.s32.totalorder 1, %s9
    %p139 = scmp.lt.s32.totalorder %s9, 3
    %p140 = pnand %p138, %p139
    %p141 = pneg %p140
    // Predicated region
    $region29: #{cnn_forward.7} parent=5 // pred_check
      _
    $region30: #{cnn_forward.7} parent=5 // pred_check_branch
      %143 = sbr.rel (%p140) target = $region32
    $region31: #{cnn_forward.7} parent=5 // pred_region
      %s144 = ssub.s32 %s9, 1
      %s145 = smul.u32 128, %s14
      %p146 = scmp.lt.s32.totalorder %s145, 255
      %s147 = scalar_select %p146, %s145, 255
      %s148 = smul.addr %s147, 2
      %s149 = smul.addr %s148, 4
      %s150 = scalar_lea.vmem %s0, %s149
      %p151 = pneg %p35
      %p152 = pneg %p32
      %p153 = pneg %p56
      %p154 = pneg %p53
      %p155 = pneg %p77
      %p156 = pneg %p74
      %p157 = pneg %p103
      %p158 = pneg %p100
      %s159 = smul.u32 128, %s14
      %p160 = scmp.lt.s32.totalorder %s159, 255
      %s161 = scalar_select %p160, %s159, 255
      %s162 = smul.addr %s161, 4
      %s163 = scalar_lea.vmem %s3, %s162
      %s164 = smul.u32 128, %s14
      %p165 = scmp.lt.s32.totalorder %s164, 255
      %s166 = scalar_select %p165, %s164, 255
      %s167 = smul.addr %s166, 2
      %s168 = smul.addr %s167, 4
      %s169 = scalar_lea.vmem %s0, %s168
      %s170 = smul.u32 128, %s14
      %s171 = smul.u32 128, %s14
      %p172 = scmp.lt.s32.totalorder %s171, 255
      %s173 = scalar_select %p172, %s171, 255
      %s174 = smul.addr %s173, 4
      %s175 = scalar_lea.vmem %s3, %s174
      %s176 = smul.u32 128, %s14
      %v177 = vld [vmem:[%s169] sm:$0xff]
      %v178 = vld [vmem:[%s169 + $0x8] sm:$0xff]
      %v179 = vld [vmem:[%s169 + $0x10] sm:$0xff]
      %v180 = vld [vmem:[%s169 + $0x18] sm:$0xff]
      %v181 = vld [vmem:[%s169 + $0x20] sm:$0xff]
      %v182 = vld [vmem:[%s169 + $0x28] sm:$0xff]
      %v183 = vld [vmem:[%s169 + $0x30] sm:$0xff]
      %v184 = vld [vmem:[%s169 + $0x38] sm:$0xff]
      %v185 = vld [vmem:[%s169 + $0x40] sm:$0xff]
      %v186 = vld [vmem:[%s169 + $0x48] sm:$0xff]
      %v187 = vld [vmem:[%s169 + $0x50] sm:$0xff]
      %v188 = vld [vmem:[%s169 + $0x58] sm:$0xff]
      %v189 = vld [vmem:[%s169 + $0x60] sm:$0xff]
      %v190 = vld [vmem:[%s169 + $0x68] sm:$0xff]
      %v191 = vld [vmem:[%s169 + $0x70] sm:$0xff]
      %v192 = vld [vmem:[%s169 + $0x78] sm:$0xff]
      %v193 = vld [vmem:[%s169 + $0x80] sm:$0xff]
      %v194 = vld [vmem:[%s169 + $0x88] sm:$0xff]
      %v195 = vld [vmem:[%s169 + $0x90] sm:$0xff]
      %v196 = vld [vmem:[%s169 + $0x98] sm:$0xff]
      %v197 = vld [vmem:[%s169 + $0xa0] sm:$0xff]
      %v198 = vld [vmem:[%s169 + $0xa8] sm:$0xff]
      %v199 = vld [vmem:[%s169 + $0xb0] sm:$0xff]
      %v200 = vld [vmem:[%s169 + $0xb8] sm:$0xff]
      %v201 = vld [vmem:[%s169 + $0xc0] sm:$0xff]
      %v202 = vld [vmem:[%s169 + $0xc8] sm:$0xff]
      %v203 = vld [vmem:[%s169 + $0xd0] sm:$0xff]
      %v204 = vld [vmem:[%s169 + $0xd8] sm:$0xff]
      %v205 = vld [vmem:[%s169 + $0xe0] sm:$0xff]
      %v206 = vld [vmem:[%s169 + $0xe8] sm:$0xff]
      %v207 = vld [vmem:[%s169 + $0xf0] sm:$0xff]
      %v208 = vld [vmem:[%s169 + $0xf8] sm:$0xff]
      %v209 = vld [vmem:[%s169 + $0x100] sm:$0xff]
      %v210 = vld [vmem:[%s169 + $0x108] sm:$0xff]
      %v211 = vld [vmem:[%s169 + $0x110] sm:$0xff]
      %v212 = vld [vmem:[%s169 + $0x118] sm:$0xff]
      %v213 = vld [vmem:[%s169 + $0x120] sm:$0xff]
      %v214 = vld [vmem:[%s169 + $0x128] sm:$0xff]
      %v215 = vld [vmem:[%s169 + $0x130] sm:$0xff]
      %v216 = vld [vmem:[%s169 + $0x138] sm:$0xff]
      %v217 = vld [vmem:[%s169 + $0x140] sm:$0xff]
      %v218 = vld [vmem:[%s169 + $0x148] sm:$0xff]
      %v219 = vld [vmem:[%s169 + $0x150] sm:$0xff]
      %v220 = vld [vmem:[%s169 + $0x158] sm:$0xff]
      %v221 = vld [vmem:[%s169 + $0x160] sm:$0xff]
      %v222 = vld [vmem:[%s169 + $0x168] sm:$0xff]
      %v223 = vld [vmem:[%s169 + $0x170] sm:$0xff]
      %v224 = vld [vmem:[%s169 + $0x178] sm:$0xff]
      %v225 = vld [vmem:[%s169 + $0x180] sm:$0xff]
      %v226 = vld [vmem:[%s169 + $0x188] sm:$0xff]
      %v227 = vld [vmem:[%s169 + $0x190] sm:$0xff]
      %v228 = vld [vmem:[%s169 + $0x198] sm:$0xff]
      %v229 = vld [vmem:[%s169 + $0x1a0] sm:$0xff]
      %v230 = vld [vmem:[%s169 + $0x1a8] sm:$0xff]
      %v231 = vld [vmem:[%s169 + $0x1b0] sm:$0xff]
      %v232 = vld [vmem:[%s169 + $0x1b8] sm:$0xff]
      %v233 = vld [vmem:[%s169 + $0x1c0] sm:$0xff]
      %v234 = vld [vmem:[%s169 + $0x1c8] sm:$0xff]
      %v235 = vld [vmem:[%s169 + $0x1d0] sm:$0xff]
      %v236 = vld [vmem:[%s169 + $0x1d8] sm:$0xff]
      %v237 = vld [vmem:[%s169 + $0x1e0] sm:$0xff]
      %v238 = vld [vmem:[%s169 + $0x1e8] sm:$0xff]
      %v239 = vld [vmem:[%s169 + $0x1f0] sm:$0xff]
      %v240 = vld [vmem:[%s169 + $0x1f8] sm:$0xff]
      %v241 = vld [vmem:[%s169 + $0x200] sm:$0xff]
      %v242 = vld [vmem:[%s169 + $0x208] sm:$0xff]
      %v243 = vld [vmem:[%s169 + $0x210] sm:$0xff]
      %v244 = vld [vmem:[%s169 + $0x218] sm:$0xff]
      %v245 = vld [vmem:[%s169 + $0x220] sm:$0xff]
      %v246 = vld [vmem:[%s169 + $0x228] sm:$0xff]
      %v247 = vld [vmem:[%s169 + $0x230] sm:$0xff]
      %v248 = vld [vmem:[%s169 + $0x238] sm:$0xff]
      %v249 = vld [vmem:[%s169 + $0x240] sm:$0xff]
      %v250 = vld [vmem:[%s169 + $0x248] sm:$0xff]
      %v251 = vld [vmem:[%s169 + $0x250] sm:$0xff]
      %v252 = vld [vmem:[%s169 + $0x258] sm:$0xff]
      %v253 = vld [vmem:[%s169 + $0x260] sm:$0xff]
      %v254 = vld [vmem:[%s169 + $0x268] sm:$0xff]
      %v255 = vld [vmem:[%s169 + $0x270] sm:$0xff]
      %v256 = vld [vmem:[%s169 + $0x278] sm:$0xff]
      %v257 = vld [vmem:[%s169 + $0x280] sm:$0xff]
      %v258 = vld [vmem:[%s169 + $0x288] sm:$0xff]
      %v259 = vld [vmem:[%s169 + $0x290] sm:$0xff]
      %v260 = vld [vmem:[%s169 + $0x298] sm:$0xff]
      %v261 = vld [vmem:[%s169 + $0x2a0] sm:$0xff]
      %v262 = vld [vmem:[%s169 + $0x2a8] sm:$0xff]
      %v263 = vld [vmem:[%s169 + $0x2b0] sm:$0xff]
      %v264 = vld [vmem:[%s169 + $0x2b8] sm:$0xff]
      %v265 = vld [vmem:[%s169 + $0x2c0] sm:$0xff]
      %v266 = vld [vmem:[%s169 + $0x2c8] sm:$0xff]
      %v267 = vld [vmem:[%s169 + $0x2d0] sm:$0xff]
      %v268 = vld [vmem:[%s169 + $0x2d8] sm:$0xff]
      %v269 = vld [vmem:[%s169 + $0x2e0] sm:$0xff]
      %v270 = vld [vmem:[%s169 + $0x2e8] sm:$0xff]
      %v271 = vld [vmem:[%s169 + $0x2f0] sm:$0xff]
      %v272 = vld [vmem:[%s169 + $0x2f8] sm:$0xff]
      %v273 = vld [vmem:[%s169 + $0x300] sm:$0xff]
      %v274 = vld [vmem:[%s169 + $0x308] sm:$0xff]
      %v275 = vld [vmem:[%s169 + $0x310] sm:$0xff]
      %v276 = vld [vmem:[%s169 + $0x318] sm:$0xff]
      %v277 = vld [vmem:[%s169 + $0x320] sm:$0xff]
      %v278 = vld [vmem:[%s169 + $0x328] sm:$0xff]
      %v279 = vld [vmem:[%s169 + $0x330] sm:$0xff]
      %v280 = vld [vmem:[%s169 + $0x338] sm:$0xff]
      %v281 = vld [vmem:[%s169 + $0x340] sm:$0xff]
      %v282 = vld [vmem:[%s169 + $0x348] sm:$0xff]
      %v283 = vld [vmem:[%s169 + $0x350] sm:$0xff]
      %v284 = vld [vmem:[%s169 + $0x358] sm:$0xff]
      %v285 = vld [vmem:[%s169 + $0x360] sm:$0xff]
      %v286 = vld [vmem:[%s169 + $0x368] sm:$0xff]
      %v287 = vld [vmem:[%s169 + $0x370] sm:$0xff]
      %v288 = vld [vmem:[%s169 + $0x378] sm:$0xff]
      %v289 = vld [vmem:[%s169 + $0x380] sm:$0xff]
      %v290 = vld [vmem:[%s169 + $0x388] sm:$0xff]
      %v291 = vld [vmem:[%s169 + $0x390] sm:$0xff]
      %v292 = vld [vmem:[%s169 + $0x398] sm:$0xff]
      %v293 = vld [vmem:[%s169 + $0x3a0] sm:$0xff]
      %v294 = vld [vmem:[%s169 + $0x3a8] sm:$0xff]
      %v295 = vld [vmem:[%s169 + $0x3b0] sm:$0xff]
      %v296 = vld [vmem:[%s169 + $0x3b8] sm:$0xff]
      %v297 = vld [vmem:[%s169 + $0x3c0] sm:$0xff]
      %v298 = vld [vmem:[%s169 + $0x3c8] sm:$0xff]
      %v299 = vld [vmem:[%s169 + $0x3d0] sm:$0xff]
      %v300 = vld [vmem:[%s169 + $0x3d8] sm:$0xff]
      %v301 = vld [vmem:[%s169 + $0x3e0] sm:$0xff]
      %v302 = vld [vmem:[%s169 + $0x3e8] sm:$0xff]
      %v303 = vld [vmem:[%s169 + $0x3f0] sm:$0xff]
      %v304 = vld [vmem:[%s169 + $0x3f8] sm:$0xff]
      %v305 = vld [vmem:[%s1] sm:$0xf]
      %v306 = vld [vmem:[%s1 + $0x4] sm:$0xf]
      %v307 = vld [vmem:[%s1 + $0x8] sm:$0xf]
      %v308 = vld [vmem:[%s1 + $0xc] sm:$0xf]
      %v309 = vld [vmem:[%s1 + $0x10] sm:$0xf]
      %v310 = vld [vmem:[%s1 + $0x14] sm:$0xf]
      %v311 = vld [vmem:[%s1 + $0x18] sm:$0xf]
      %v312 = vld [vmem:[%s1 + $0x1c] sm:$0xf]
      %v313 = vld [vmem:[%s1 + $0x20] sm:$0xf]
      %v314 = vld [vmem:[%s1 + $0x24] sm:$0xf]
      %v315 = vld [vmem:[%s1 + $0x28] sm:$0xf]
      %v316 = vld [vmem:[%s1 + $0x2c] sm:$0xf]
      %v317 = vld [vmem:[%s1 + $0x30] sm:$0xf]
      %v318 = vld [vmem:[%s1 + $0x34] sm:$0xf]
      %v319 = vld [vmem:[%s1 + $0x38] sm:$0xf]
      %v320 = vld [vmem:[%s1 + $0x3c] sm:$0xf]
      %v321 = vld [vmem:[%s1 + $0x40] sm:$0xf]
      %v322 = vld [vmem:[%s1 + $0x44] sm:$0xf]
      %v323 = vld [vmem:[%s1 + $0x48] sm:$0xf]
      %v324 = vld [vmem:[%s1 + $0x4c] sm:$0xf]
      %v325 = vld [vmem:[%s1 + $0x50] sm:$0xf]
      %v326 = vld [vmem:[%s1 + $0x54] sm:$0xf]
      %v327 = vld [vmem:[%s1 + $0x58] sm:$0xf]
      %v328 = vld [vmem:[%s1 + $0x5c] sm:$0xf]
      %v329 = vld [vmem:[%s1 + $0x60] sm:$0xf]
      %v330 = vld [vmem:[%s1 + $0x64] sm:$0xf]
      %v331 = vld [vmem:[%s1 + $0x68] sm:$0xf]
      %v332 = vld [vmem:[%s1 + $0x6c] sm:$0xf]
      %v333 = vld [vmem:[%s1 + $0x70] sm:$0xf]
      %v334 = vld [vmem:[%s1 + $0x74] sm:$0xf]
      %v335 = vld [vmem:[%s1 + $0x78] sm:$0xf]
      %v336 = vld [vmem:[%s1 + $0x7c] sm:$0xf]
      %v337 = vld [vmem:[%s2] sm:$0x1]
      %v339 = vperm.slane %v337, 0
      %v469 = vunpack.c.l.b16 %v177
      %v470 = vunpack.c.h.b16 %v177
      %v471 = vunpack.c.l.b16 %v178
      %v472 = vunpack.c.h.b16 %v178
      %v473 = vunpack.c.l.b16 %v179
      %v474 = vunpack.c.h.b16 %v179
      %v475 = vunpack.c.l.b16 %v180
      %v476 = vunpack.c.h.b16 %v180
      %v477 = vunpack.c.l.b16 %v181
      %v478 = vunpack.c.h.b16 %v181
      %v479 = vunpack.c.l.b16 %v182
      %v480 = vunpack.c.h.b16 %v182
      %v481 = vunpack.c.l.b16 %v183
      %v482 = vunpack.c.h.b16 %v183
      %v483 = vunpack.c.l.b16 %v184
      %v484 = vunpack.c.h.b16 %v184
      %v485 = vunpack.c.l.b16 %v185
      %v486 = vunpack.c.h.b16 %v185
      %v487 = vunpack.c.l.b16 %v186
      %v488 = vunpack.c.h.b16 %v186
      %v489 = vunpack.c.l.b16 %v187
      %v490 = vunpack.c.h.b16 %v187
      %v491 = vunpack.c.l.b16 %v188
      %v492 = vunpack.c.h.b16 %v188
      %v493 = vunpack.c.l.b16 %v189
      %v494 = vunpack.c.h.b16 %v189
      %v495 = vunpack.c.l.b16 %v190
      %v496 = vunpack.c.h.b16 %v190
      %v497 = vunpack.c.l.b16 %v191
      %v498 = vunpack.c.h.b16 %v191
      %v499 = vunpack.c.l.b16 %v192
      %v500 = vunpack.c.h.b16 %v192
      %v501 = vunpack.c.l.b16 %v193
      %v502 = vunpack.c.h.b16 %v193
      %v503 = vunpack.c.l.b16 %v194
      %v504 = vunpack.c.h.b16 %v194
      %v505 = vunpack.c.l.b16 %v195
      %v506 = vunpack.c.h.b16 %v195
      %v507 = vunpack.c.l.b16 %v196
      %v508 = vunpack.c.h.b16 %v196
      %v509 = vunpack.c.l.b16 %v197
      %v510 = vunpack.c.h.b16 %v197
      %v511 = vunpack.c.l.b16 %v198
      %v512 = vunpack.c.h.b16 %v198
      %v513 = vunpack.c.l.b16 %v199
      %v514 = vunpack.c.h.b16 %v199
      %v515 = vunpack.c.l.b16 %v200
      %v516 = vunpack.c.h.b16 %v200
      %v517 = vunpack.c.l.b16 %v201
      %v518 = vunpack.c.h.b16 %v201
      %v519 = vunpack.c.l.b16 %v202
      %v520 = vunpack.c.h.b16 %v202
      %v521 = vunpack.c.l.b16 %v203
      %v522 = vunpack.c.h.b16 %v203
      %v523 = vunpack.c.l.b16 %v204
      %v524 = vunpack.c.h.b16 %v204
      %v525 = vunpack.c.l.b16 %v205
      %v526 = vunpack.c.h.b16 %v205
      %v527 = vunpack.c.l.b16 %v206
      %v528 = vunpack.c.h.b16 %v206
      %v529 = vunpack.c.l.b16 %v207
      %v530 = vunpack.c.h.b16 %v207
      %v531 = vunpack.c.l.b16 %v208
      %v532 = vunpack.c.h.b16 %v208
      %v533 = vunpack.c.l.b16 %v209
      %v534 = vunpack.c.h.b16 %v209
      %v535 = vunpack.c.l.b16 %v210
      %v536 = vunpack.c.h.b16 %v210
      %v537 = vunpack.c.l.b16 %v211
      %v538 = vunpack.c.h.b16 %v211
      %v539 = vunpack.c.l.b16 %v212
      %v540 = vunpack.c.h.b16 %v212
      %v541 = vunpack.c.l.b16 %v213
      %v542 = vunpack.c.h.b16 %v213
      %v543 = vunpack.c.l.b16 %v214
      %v544 = vunpack.c.h.b16 %v214
      %v545 = vunpack.c.l.b16 %v215
      %v546 = vunpack.c.h.b16 %v215
      %v547 = vunpack.c.l.b16 %v216
      %v548 = vunpack.c.h.b16 %v216
      %v549 = vunpack.c.l.b16 %v217
      %v550 = vunpack.c.h.b16 %v217
      %v551 = vunpack.c.l.b16 %v218
      %v552 = vunpack.c.h.b16 %v218
      %v553 = vunpack.c.l.b16 %v219
      %v554 = vunpack.c.h.b16 %v219
      %v555 = vunpack.c.l.b16 %v220
      %v556 = vunpack.c.h.b16 %v220
      %v557 = vunpack.c.l.b16 %v221
      %v558 = vunpack.c.h.b16 %v221
      %v559 = vunpack.c.l.b16 %v222
      %v560 = vunpack.c.h.b16 %v222
      %v561 = vunpack.c.l.b16 %v223
      %v562 = vunpack.c.h.b16 %v223
      %v563 = vunpack.c.l.b16 %v224
      %v564 = vunpack.c.h.b16 %v224
      %v565 = vunpack.c.l.b16 %v225
      %v566 = vunpack.c.h.b16 %v225
      %v567 = vunpack.c.l.b16 %v226
      %v568 = vunpack.c.h.b16 %v226
      %v569 = vunpack.c.l.b16 %v227
      %v570 = vunpack.c.h.b16 %v227
      %v571 = vunpack.c.l.b16 %v228
      %v572 = vunpack.c.h.b16 %v228
      %v573 = vunpack.c.l.b16 %v229
      %v574 = vunpack.c.h.b16 %v229
      %v575 = vunpack.c.l.b16 %v230
      %v576 = vunpack.c.h.b16 %v230
      %v577 = vunpack.c.l.b16 %v231
      %v578 = vunpack.c.h.b16 %v231
      %v579 = vunpack.c.l.b16 %v232
      %v580 = vunpack.c.h.b16 %v232
      %v581 = vunpack.c.l.b16 %v233
      %v582 = vunpack.c.h.b16 %v233
      %v583 = vunpack.c.l.b16 %v234
      %v584 = vunpack.c.h.b16 %v234
      %v585 = vunpack.c.l.b16 %v235
      %v586 = vunpack.c.h.b16 %v235
      %v587 = vunpack.c.l.b16 %v236
      %v588 = vunpack.c.h.b16 %v236
      %v589 = vunpack.c.l.b16 %v237
      %v590 = vunpack.c.h.b16 %v237
      %v591 = vunpack.c.l.b16 %v238
      %v592 = vunpack.c.h.b16 %v238
      %v593 = vunpack.c.l.b16 %v239
      %v594 = vunpack.c.h.b16 %v239
      %v595 = vunpack.c.l.b16 %v240
      %v596 = vunpack.c.h.b16 %v240
      %v597 = vunpack.c.l.b16 %v241
      %v598 = vunpack.c.h.b16 %v241
      %v599 = vunpack.c.l.b16 %v242
      %v600 = vunpack.c.h.b16 %v242
      %v601 = vunpack.c.l.b16 %v243
      %v602 = vunpack.c.h.b16 %v243
      %v603 = vunpack.c.l.b16 %v244
      %v604 = vunpack.c.h.b16 %v244
      %v605 = vunpack.c.l.b16 %v245
      %v606 = vunpack.c.h.b16 %v245
      %v607 = vunpack.c.l.b16 %v246
      %v608 = vunpack.c.h.b16 %v246
      %v609 = vunpack.c.l.b16 %v247
      %v610 = vunpack.c.h.b16 %v247
      %v611 = vunpack.c.l.b16 %v248
      %v612 = vunpack.c.h.b16 %v248
      %v613 = vunpack.c.l.b16 %v249
      %v614 = vunpack.c.h.b16 %v249
      %v615 = vunpack.c.l.b16 %v250
      %v616 = vunpack.c.h.b16 %v250
      %v617 = vunpack.c.l.b16 %v251
      %v618 = vunpack.c.h.b16 %v251
      %v619 = vunpack.c.l.b16 %v252
      %v620 = vunpack.c.h.b16 %v252
      %v621 = vunpack.c.l.b16 %v253
      %v622 = vunpack.c.h.b16 %v253
      %v623 = vunpack.c.l.b16 %v254
      %v624 = vunpack.c.h.b16 %v254
      %v625 = vunpack.c.l.b16 %v255
      %v626 = vunpack.c.h.b16 %v255
      %v627 = vunpack.c.l.b16 %v256
      %v628 = vunpack.c.h.b16 %v256
      %v629 = vunpack.c.l.b16 %v257
      %v630 = vunpack.c.h.b16 %v257
      %v631 = vunpack.c.l.b16 %v258
      %v632 = vunpack.c.h.b16 %v258
      %v633 = vunpack.c.l.b16 %v259
      %v634 = vunpack.c.h.b16 %v259
      %v635 = vunpack.c.l.b16 %v260
      %v636 = vunpack.c.h.b16 %v260
      %v637 = vunpack.c.l.b16 %v261
      %v638 = vunpack.c.h.b16 %v261
      %v639 = vunpack.c.l.b16 %v262
      %v640 = vunpack.c.h.b16 %v262
      %v641 = vunpack.c.l.b16 %v263
      %v642 = vunpack.c.h.b16 %v263
      %v643 = vunpack.c.l.b16 %v264
      %v644 = vunpack.c.h.b16 %v264
      %v645 = vunpack.c.l.b16 %v265
      %v646 = vunpack.c.h.b16 %v265
      %v647 = vunpack.c.l.b16 %v266
      %v648 = vunpack.c.h.b16 %v266
      %v649 = vunpack.c.l.b16 %v267
      %v650 = vunpack.c.h.b16 %v267
      %v651 = vunpack.c.l.b16 %v268
      %v652 = vunpack.c.h.b16 %v268
      %v653 = vunpack.c.l.b16 %v269
      %v654 = vunpack.c.h.b16 %v269
      %v655 = vunpack.c.l.b16 %v270
      %v656 = vunpack.c.h.b16 %v270
      %v657 = vunpack.c.l.b16 %v271
      %v658 = vunpack.c.h.b16 %v271
      %v659 = vunpack.c.l.b16 %v272
      %v660 = vunpack.c.h.b16 %v272
      %v661 = vunpack.c.l.b16 %v273
      %v662 = vunpack.c.h.b16 %v273
      %v663 = vunpack.c.l.b16 %v274
      %v664 = vunpack.c.h.b16 %v274
      %v665 = vunpack.c.l.b16 %v275
      %v666 = vunpack.c.h.b16 %v275
      %v667 = vunpack.c.l.b16 %v276
      %v668 = vunpack.c.h.b16 %v276
      %v669 = vunpack.c.l.b16 %v277
      %v670 = vunpack.c.h.b16 %v277
      %v671 = vunpack.c.l.b16 %v278
      %v672 = vunpack.c.h.b16 %v278
      %v673 = vunpack.c.l.b16 %v279
      %v674 = vunpack.c.h.b16 %v279
      %v675 = vunpack.c.l.b16 %v280
      %v676 = vunpack.c.h.b16 %v280
      %v677 = vunpack.c.l.b16 %v281
      %v678 = vunpack.c.h.b16 %v281
      %v679 = vunpack.c.l.b16 %v282
      %v680 = vunpack.c.h.b16 %v282
      %v681 = vunpack.c.l.b16 %v283
      %v682 = vunpack.c.h.b16 %v283
      %v683 = vunpack.c.l.b16 %v284
      %v684 = vunpack.c.h.b16 %v284
      %v685 = vunpack.c.l.b16 %v285
      %v686 = vunpack.c.h.b16 %v285
      %v687 = vunpack.c.l.b16 %v286
      %v688 = vunpack.c.h.b16 %v286
      %v689 = vunpack.c.l.b16 %v287
      %v690 = vunpack.c.h.b16 %v287
      %v691 = vunpack.c.l.b16 %v288
      %v692 = vunpack.c.h.b16 %v288
      %v693 = vunpack.c.l.b16 %v289
      %v694 = vunpack.c.h.b16 %v289
      %v695 = vunpack.c.l.b16 %v290
      %v696 = vunpack.c.h.b16 %v290
      %v697 = vunpack.c.l.b16 %v291
      %v698 = vunpack.c.h.b16 %v291
      %v699 = vunpack.c.l.b16 %v292
      %v700 = vunpack.c.h.b16 %v292
      %v701 = vunpack.c.l.b16 %v293
      %v702 = vunpack.c.h.b16 %v293
      %v703 = vunpack.c.l.b16 %v294
      %v704 = vunpack.c.h.b16 %v294
      %v705 = vunpack.c.l.b16 %v295
      %v706 = vunpack.c.h.b16 %v295
      %v707 = vunpack.c.l.b16 %v296
      %v708 = vunpack.c.h.b16 %v296
      %v709 = vunpack.c.l.b16 %v297
      %v710 = vunpack.c.h.b16 %v297
      %v711 = vunpack.c.l.b16 %v298
      %v712 = vunpack.c.h.b16 %v298
      %v713 = vunpack.c.l.b16 %v299
      %v714 = vunpack.c.h.b16 %v299
      %v715 = vunpack.c.l.b16 %v300
      %v716 = vunpack.c.h.b16 %v300
      %v717 = vunpack.c.l.b16 %v301
      %v718 = vunpack.c.h.b16 %v301
      %v719 = vunpack.c.l.b16 %v302
      %v720 = vunpack.c.h.b16 %v302
      %v721 = vunpack.c.l.b16 %v303
      %v722 = vunpack.c.h.b16 %v303
      %v723 = vunpack.c.l.b16 %v304
      %v724 = vunpack.c.h.b16 %v304
      %v725 = vpack.c.b16 %v471, %v469
      %v726 = vpack.c.b16 %v472, %v470
      %v727 = vpack.c.b16 %v475, %v473
      %v728 = vpack.c.b16 %v476, %v474
      %v729 = vpack.c.b16 %v479, %v477
      %v730 = vpack.c.b16 %v480, %v478
      %v731 = vpack.c.b16 %v483, %v481
      %v732 = vpack.c.b16 %v484, %v482
      %v733 = vpack.c.b16 %v487, %v485
      %v734 = vpack.c.b16 %v488, %v486
      %v735 = vpack.c.b16 %v491, %v489
      %v736 = vpack.c.b16 %v492, %v490
      %v737 = vpack.c.b16 %v495, %v493
      %v738 = vpack.c.b16 %v496, %v494
      %v739 = vpack.c.b16 %v499, %v497
      %v740 = vpack.c.b16 %v500, %v498
      %v741 = vpack.c.b16 %v503, %v501
      %v742 = vpack.c.b16 %v504, %v502
      %v743 = vpack.c.b16 %v507, %v505
      %v744 = vpack.c.b16 %v508, %v506
      %v745 = vpack.c.b16 %v511, %v509
      %v746 = vpack.c.b16 %v512, %v510
      %v747 = vpack.c.b16 %v515, %v513
      %v748 = vpack.c.b16 %v516, %v514
      %v749 = vpack.c.b16 %v519, %v517
      %v750 = vpack.c.b16 %v520, %v518
      %v751 = vpack.c.b16 %v523, %v521
      %v752 = vpack.c.b16 %v524, %v522
      %v753 = vpack.c.b16 %v527, %v525
      %v754 = vpack.c.b16 %v528, %v526
      %v755 = vpack.c.b16 %v531, %v529
      %v756 = vpack.c.b16 %v532, %v530
      %v757 = vpack.c.b16 %v535, %v533
      %v758 = vpack.c.b16 %v536, %v534
      %v759 = vpack.c.b16 %v539, %v537
      %v760 = vpack.c.b16 %v540, %v538
      %v761 = vpack.c.b16 %v543, %v541
      %v762 = vpack.c.b16 %v544, %v542
      %v763 = vpack.c.b16 %v547, %v545
      %v764 = vpack.c.b16 %v548, %v546
      %v765 = vpack.c.b16 %v551, %v549
      %v766 = vpack.c.b16 %v552, %v550
      %v767 = vpack.c.b16 %v555, %v553
      %v768 = vpack.c.b16 %v556, %v554
      %v769 = vpack.c.b16 %v559, %v557
      %v770 = vpack.c.b16 %v560, %v558
      %v771 = vpack.c.b16 %v563, %v561
      %v772 = vpack.c.b16 %v564, %v562
      %v773 = vpack.c.b16 %v567, %v565
      %v774 = vpack.c.b16 %v568, %v566
      %v775 = vpack.c.b16 %v571, %v569
      %v776 = vpack.c.b16 %v572, %v570
      %v777 = vpack.c.b16 %v575, %v573
      %v778 = vpack.c.b16 %v576, %v574
      %v779 = vpack.c.b16 %v579, %v577
      %v780 = vpack.c.b16 %v580, %v578
      %v781 = vpack.c.b16 %v583, %v581
      %v782 = vpack.c.b16 %v584, %v582
      %v783 = vpack.c.b16 %v587, %v585
      %v784 = vpack.c.b16 %v588, %v586
      %v785 = vpack.c.b16 %v591, %v589
      %v786 = vpack.c.b16 %v592, %v590
      %v787 = vpack.c.b16 %v595, %v593
      %v788 = vpack.c.b16 %v596, %v594
      %v789 = vpack.c.b16 %v599, %v597
      %v790 = vpack.c.b16 %v600, %v598
      %v791 = vpack.c.b16 %v603, %v601
      %v792 = vpack.c.b16 %v604, %v602
      %v793 = vpack.c.b16 %v607, %v605
      %v794 = vpack.c.b16 %v608, %v606
      %v795 = vpack.c.b16 %v611, %v609
      %v796 = vpack.c.b16 %v612, %v610
      %v797 = vpack.c.b16 %v615, %v613
      %v798 = vpack.c.b16 %v616, %v614
      %v799 = vpack.c.b16 %v619, %v617
      %v800 = vpack.c.b16 %v620, %v618
      %v801 = vpack.c.b16 %v623, %v621
      %v802 = vpack.c.b16 %v624, %v622
      %v803 = vpack.c.b16 %v627, %v625
      %v804 = vpack.c.b16 %v628, %v626
      %v805 = vpack.c.b16 %v631, %v629
      %v806 = vpack.c.b16 %v632, %v630
      %v807 = vpack.c.b16 %v635, %v633
      %v808 = vpack.c.b16 %v636, %v634
      %v809 = vpack.c.b16 %v639, %v637
      %v810 = vpack.c.b16 %v640, %v638
      %v811 = vpack.c.b16 %v643, %v641
      %v812 = vpack.c.b16 %v644, %v642
      %v813 = vpack.c.b16 %v647, %v645
      %v814 = vpack.c.b16 %v648, %v646
      %v815 = vpack.c.b16 %v651, %v649
      %v816 = vpack.c.b16 %v652, %v650
      %v817 = vpack.c.b16 %v655, %v653
      %v818 = vpack.c.b16 %v656, %v654
      %v819 = vpack.c.b16 %v659, %v657
      %v820 = vpack.c.b16 %v660, %v658
      %v821 = vpack.c.b16 %v663, %v661
      %v822 = vpack.c.b16 %v664, %v662
      %v823 = vpack.c.b16 %v667, %v665
      %v824 = vpack.c.b16 %v668, %v666
      %v825 = vpack.c.b16 %v671, %v669
      %v826 = vpack.c.b16 %v672, %v670
      %v827 = vpack.c.b16 %v675, %v673
      %v828 = vpack.c.b16 %v676, %v674
      %v829 = vpack.c.b16 %v679, %v677
      %v830 = vpack.c.b16 %v680, %v678
      %v831 = vpack.c.b16 %v683, %v681
      %v832 = vpack.c.b16 %v684, %v682
      %v833 = vpack.c.b16 %v687, %v685
      %v834 = vpack.c.b16 %v688, %v686
      %v835 = vpack.c.b16 %v691, %v689
      %v836 = vpack.c.b16 %v692, %v690
      %v837 = vpack.c.b16 %v695, %v693
      %v838 = vpack.c.b16 %v696, %v694
      %v839 = vpack.c.b16 %v699, %v697
      %v840 = vpack.c.b16 %v700, %v698
      %v841 = vpack.c.b16 %v703, %v701
      %v842 = vpack.c.b16 %v704, %v702
      %v843 = vpack.c.b16 %v707, %v705
      %v844 = vpack.c.b16 %v708, %v706
      %v845 = vpack.c.b16 %v711, %v709
      %v846 = vpack.c.b16 %v712, %v710
      %v847 = vpack.c.b16 %v715, %v713
      %v848 = vpack.c.b16 %v716, %v714
      %v849 = vpack.c.b16 %v719, %v717
      %v850 = vpack.c.b16 %v720, %v718
      %v851 = vpack.c.b16 %v723, %v721
      %v852 = vpack.c.b16 %v724, %v722
      %v1013 = vunpack.c.l.b16 %v305
      %v1014 = vunpack.c.l.b16 %v306
      %v1015 = vunpack.c.l.b16 %v307
      %v1016 = vunpack.c.l.b16 %v308
      %v1017 = vunpack.c.l.b16 %v309
      %v1018 = vunpack.c.l.b16 %v310
      %v1019 = vunpack.c.l.b16 %v311
      %v1020 = vunpack.c.l.b16 %v312
      %v1021 = vunpack.c.l.b16 %v313
      %v1022 = vunpack.c.l.b16 %v314
      %v1023 = vunpack.c.l.b16 %v315
      %v1024 = vunpack.c.l.b16 %v316
      %v1025 = vunpack.c.l.b16 %v317
      %v1026 = vunpack.c.l.b16 %v318
      %v1027 = vunpack.c.l.b16 %v319
      %v1028 = vunpack.c.l.b16 %v320
      %v1029 = vunpack.c.l.b16 %v321
      %v1030 = vunpack.c.l.b16 %v322
      %v1031 = vunpack.c.l.b16 %v323
      %v1032 = vunpack.c.l.b16 %v324
      %v1033 = vunpack.c.l.b16 %v325
      %v1034 = vunpack.c.l.b16 %v326
      %v1035 = vunpack.c.l.b16 %v327
      %v1036 = vunpack.c.l.b16 %v328
      %v1037 = vunpack.c.l.b16 %v329
      %v1038 = vunpack.c.l.b16 %v330
      %v1039 = vunpack.c.l.b16 %v331
      %v1040 = vunpack.c.l.b16 %v332
      %v1041 = vunpack.c.l.b16 %v333
      %v1042 = vunpack.c.l.b16 %v334
      %v1043 = vunpack.c.l.b16 %v335
      %v1044 = vunpack.c.l.b16 %v336
      %v1045 = vpack.c.b16 %v1014, %v1013
      %v1046 = vpack.c.b16 %v1016, %v1015
      %v1047 = vpack.c.b16 %v1018, %v1017
      %v1048 = vpack.c.b16 %v1020, %v1019
      %v1049 = vpack.c.b16 %v1022, %v1021
      %v1050 = vpack.c.b16 %v1024, %v1023
      %v1051 = vpack.c.b16 %v1026, %v1025
      %v1052 = vpack.c.b16 %v1028, %v1027
      %v1053 = vpack.c.b16 %v1030, %v1029
      %v1054 = vpack.c.b16 %v1032, %v1031
      %v1055 = vpack.c.b16 %v1034, %v1033
      %v1056 = vpack.c.b16 %v1036, %v1035
      %v1057 = vpack.c.b16 %v1038, %v1037
      %v1058 = vpack.c.b16 %v1040, %v1039
      %v1059 = vpack.c.b16 %v1042, %v1041
      %v1060 = vpack.c.b16 %v1044, %v1043
      %1077 = vmatpush.bf16.msra.mxu0 %v1052
      %1078 = vmatpush.bf16.msra.mxu0 %v1051
      %1079 = vmatpush.bf16.msra.mxu0 %v1050
      %1080 = vmatpush.bf16.msra.mxu0 %v1049
      %1081 = vmatpush.bf16.msra.mxu0 %v1048
      %1082 = vmatpush.bf16.msra.mxu0 %v1047
      %1083 = vmatpush.bf16.msra.mxu0 %v1046
      %1084 = vmatpush.bf16.msra.mxu0 %v1045
      %1085 = vmatmul.bf16.gmra.mxu0 %v725
      %v1086 = vpop.f32.mrf.mxu0
      %v1087 = vadd.f32 %v339, %v1086
      %v1088 = vpop.f32.mrf.mxu0
      %v1089 = vadd.f32 %v339, %v1088
      %1090 = vmatmul.bf16.gmra.mxu0 %v727
      %v1091 = vpop.f32.mrf.mxu0
      %v1092 = vadd.f32 %v339, %v1091
      %v1093 = vpop.f32.mrf.mxu0
      %v1094 = vadd.f32 %v339, %v1093
      %1095 = vmatmul.bf16.gmra.mxu0 %v729
      %v1096 = vpop.f32.mrf.mxu0
      %v1097 = vadd.f32 %v339, %v1096
      %v1098 = vpop.f32.mrf.mxu0
      %v1099 = vadd.f32 %v339, %v1098
      %1100 = vmatmul.bf16.gmra.mxu0 %v731
      %v1101 = vpop.f32.mrf.mxu0
      %v1102 = vadd.f32 %v339, %v1101
      %v1103 = vpop.f32.mrf.mxu0
      %v1104 = vadd.f32 %v339, %v1103
      %1105 = vmatmul.bf16.gmra.mxu0 %v733
      %v1106 = vpop.f32.mrf.mxu0
      %v1107 = vadd.f32 %v339, %v1106
      %v1108 = vpop.f32.mrf.mxu0
      %v1109 = vadd.f32 %v339, %v1108
      %1110 = vmatmul.bf16.gmra.mxu0 %v735
      %v1111 = vpop.f32.mrf.mxu0
      %v1112 = vadd.f32 %v339, %v1111
      %v1113 = vpop.f32.mrf.mxu0
      %v1114 = vadd.f32 %v339, %v1113
      %1115 = vmatmul.bf16.gmra.mxu0 %v737
      %v1116 = vpop.f32.mrf.mxu0
      %v1117 = vadd.f32 %v339, %v1116
      %v1118 = vpop.f32.mrf.mxu0
      %v1119 = vadd.f32 %v339, %v1118
      %1120 = vmatmul.bf16.gmra.mxu0 %v739
      %v1121 = vpop.f32.mrf.mxu0
      %v1122 = vadd.f32 %v339, %v1121
      %v1123 = vpop.f32.mrf.mxu0
      %v1124 = vadd.f32 %v339, %v1123
      %1125 = vmatmul.bf16.gmra.mxu0 %v741
      %v1126 = vpop.f32.mrf.mxu0
      %v1127 = vadd.f32 %v339, %v1126
      %v1128 = vpop.f32.mrf.mxu0
      %v1129 = vadd.f32 %v339, %v1128
      %1130 = vmatmul.bf16.gmra.mxu0 %v743
      %v1131 = vpop.f32.mrf.mxu0
      %v1132 = vadd.f32 %v339, %v1131
      %v1133 = vpop.f32.mrf.mxu0
      %v1134 = vadd.f32 %v339, %v1133
      %1135 = vmatmul.bf16.gmra.mxu0 %v745
      %v1136 = vpop.f32.mrf.mxu0
      %v1137 = vadd.f32 %v339, %v1136
      %v1138 = vpop.f32.mrf.mxu0
      %v1139 = vadd.f32 %v339, %v1138
      %1140 = vmatmul.bf16.gmra.mxu0 %v747
      %v1141 = vpop.f32.mrf.mxu0
      %v1142 = vadd.f32 %v339, %v1141
      %v1143 = vpop.f32.mrf.mxu0
      %v1144 = vadd.f32 %v339, %v1143
      %1145 = vmatmul.bf16.gmra.mxu0 %v749
      %v1146 = vpop.f32.mrf.mxu0
      %v1147 = vadd.f32 %v339, %v1146
      %v1148 = vpop.f32.mrf.mxu0
      %v1149 = vadd.f32 %v339, %v1148
      %1150 = vmatmul.bf16.gmra.mxu0 %v751
      %v1151 = vpop.f32.mrf.mxu0
      %v1152 = vadd.f32 %v339, %v1151
      %v1153 = vpop.f32.mrf.mxu0
      %v1154 = vadd.f32 %v339, %v1153
      %1155 = vmatmul.bf16.gmra.mxu0 %v753
      %v1156 = vpop.f32.mrf.mxu0
      %v1157 = vadd.f32 %v339, %v1156
      %v1158 = vpop.f32.mrf.mxu0
      %v1159 = vadd.f32 %v339, %v1158
      %1160 = vmatmul.bf16.gmra.mxu0 %v755
      %v1161 = vpop.f32.mrf.mxu0
      %v1162 = vadd.f32 %v339, %v1161
      %v1163 = vpop.f32.mrf.mxu0
      %v1164 = vadd.f32 %v339, %v1163
      %1165 = vmatmul.bf16.gmra.mxu0 %v757
      %v1166 = vpop.f32.mrf.mxu0
      %v1167 = vadd.f32 %v339, %v1166
      %v1168 = vpop.f32.mrf.mxu0
      %v1169 = vadd.f32 %v339, %v1168
      %1170 = vmatmul.bf16.gmra.mxu0 %v759
      %v1171 = vpop.f32.mrf.mxu0
      %v1172 = vadd.f32 %v339, %v1171
      %v1173 = vpop.f32.mrf.mxu0
      %v1174 = vadd.f32 %v339, %v1173
      %1175 = vmatmul.bf16.gmra.mxu0 %v761
      %v1176 = vpop.f32.mrf.mxu0
      %v1177 = vadd.f32 %v339, %v1176
      %v1178 = vpop.f32.mrf.mxu0
      %v1179 = vadd.f32 %v339, %v1178
      %1180 = vmatmul.bf16.gmra.mxu0 %v763
      %v1181 = vpop.f32.mrf.mxu0
      %v1182 = vadd.f32 %v339, %v1181
      %v1183 = vpop.f32.mrf.mxu0
      %v1184 = vadd.f32 %v339, %v1183
      %1185 = vmatmul.bf16.gmra.mxu0 %v765
      %v1186 = vpop.f32.mrf.mxu0
      %v1187 = vadd.f32 %v339, %v1186
      %v1188 = vpop.f32.mrf.mxu0
      %v1189 = vadd.f32 %v339, %v1188
      %1190 = vmatmul.bf16.gmra.mxu0 %v767
      %v1191 = vpop.f32.mrf.mxu0
      %v1192 = vadd.f32 %v339, %v1191
      %v1193 = vpop.f32.mrf.mxu0
      %v1194 = vadd.f32 %v339, %v1193
      %1195 = vmatmul.bf16.gmra.mxu0 %v769
      %v1196 = vpop.f32.mrf.mxu0
      %v1197 = vadd.f32 %v339, %v1196
      %v1198 = vpop.f32.mrf.mxu0
      %v1199 = vadd.f32 %v339, %v1198
      %1200 = vmatmul.bf16.gmra.mxu0 %v771
      %v1201 = vpop.f32.mrf.mxu0
      %v1202 = vadd.f32 %v339, %v1201
      %v1203 = vpop.f32.mrf.mxu0
      %v1204 = vadd.f32 %v339, %v1203
      %1205 = vmatmul.bf16.gmra.mxu0 %v773
      %v1206 = vpop.f32.mrf.mxu0
      %v1207 = vadd.f32 %v339, %v1206
      %v1208 = vpop.f32.mrf.mxu0
      %v1209 = vadd.f32 %v339, %v1208
      %1210 = vmatmul.bf16.gmra.mxu0 %v775
      %v1211 = vpop.f32.mrf.mxu0
      %v1212 = vadd.f32 %v339, %v1211
      %v1213 = vpop.f32.mrf.mxu0
      %v1214 = vadd.f32 %v339, %v1213
      %1215 = vmatmul.bf16.gmra.mxu0 %v777
      %v1216 = vpop.f32.mrf.mxu0
      %v1217 = vadd.f32 %v339, %v1216
      %v1218 = vpop.f32.mrf.mxu0
      %v1219 = vadd.f32 %v339, %v1218
      %1220 = vmatmul.bf16.gmra.mxu0 %v779
      %v1221 = vpop.f32.mrf.mxu0
      %v1222 = vadd.f32 %v339, %v1221
      %v1223 = vpop.f32.mrf.mxu0
      %v1224 = vadd.f32 %v339, %v1223
      %1225 = vmatmul.bf16.gmra.mxu0 %v781
      %v1226 = vpop.f32.mrf.mxu0
      %v1227 = vadd.f32 %v339, %v1226
      %v1228 = vpop.f32.mrf.mxu0
      %v1229 = vadd.f32 %v339, %v1228
      %1230 = vmatmul.bf16.gmra.mxu0 %v783
      %v1231 = vpop.f32.mrf.mxu0
      %v1232 = vadd.f32 %v339, %v1231
      %v1233 = vpop.f32.mrf.mxu0
      %v1234 = vadd.f32 %v339, %v1233
      %1235 = vmatmul.bf16.gmra.mxu0 %v785
      %v1236 = vpop.f32.mrf.mxu0
      %v1237 = vadd.f32 %v339, %v1236
      %v1238 = vpop.f32.mrf.mxu0
      %v1239 = vadd.f32 %v339, %v1238
      %1240 = vmatmul.bf16.gmra.mxu0 %v787
      %v1241 = vpop.f32.mrf.mxu0
      %v1242 = vadd.f32 %v339, %v1241
      %v1243 = vpop.f32.mrf.mxu0
      %v1244 = vadd.f32 %v339, %v1243
      %1245 = vmatmul.bf16.gmra.mxu0 %v789
      %v1246 = vpop.f32.mrf.mxu0
      %v1247 = vadd.f32 %v339, %v1246
      %v1248 = vpop.f32.mrf.mxu0
      %v1249 = vadd.f32 %v339, %v1248
      %1250 = vmatmul.bf16.gmra.mxu0 %v791
      %v1251 = vpop.f32.mrf.mxu0
      %v1252 = vadd.f32 %v339, %v1251
      %v1253 = vpop.f32.mrf.mxu0
      %v1254 = vadd.f32 %v339, %v1253
      %1255 = vmatmul.bf16.gmra.mxu0 %v793
      %v1256 = vpop.f32.mrf.mxu0
      %v1257 = vadd.f32 %v339, %v1256
      %v1258 = vpop.f32.mrf.mxu0
      %v1259 = vadd.f32 %v339, %v1258
      %1260 = vmatmul.bf16.gmra.mxu0 %v795
      %v1261 = vpop.f32.mrf.mxu0
      %v1262 = vadd.f32 %v339, %v1261
      %v1263 = vpop.f32.mrf.mxu0
      %v1264 = vadd.f32 %v339, %v1263
      %1265 = vmatmul.bf16.gmra.mxu0 %v797
      %v1266 = vpop.f32.mrf.mxu0
      %v1267 = vadd.f32 %v339, %v1266
      %v1268 = vpop.f32.mrf.mxu0
      %v1269 = vadd.f32 %v339, %v1268
      %1270 = vmatmul.bf16.gmra.mxu0 %v799
      %v1271 = vpop.f32.mrf.mxu0
      %v1272 = vadd.f32 %v339, %v1271
      %v1273 = vpop.f32.mrf.mxu0
      %v1274 = vadd.f32 %v339, %v1273
      %1275 = vmatmul.bf16.gmra.mxu0 %v801
      %v1276 = vpop.f32.mrf.mxu0
      %v1277 = vadd.f32 %v339, %v1276
      %v1278 = vpop.f32.mrf.mxu0
      %v1279 = vadd.f32 %v339, %v1278
      %1280 = vmatmul.bf16.gmra.mxu0 %v803
      %v1281 = vpop.f32.mrf.mxu0
      %v1282 = vadd.f32 %v339, %v1281
      %v1283 = vpop.f32.mrf.mxu0
      %v1284 = vadd.f32 %v339, %v1283
      %1285 = vmatmul.bf16.gmra.mxu0 %v805
      %v1286 = vpop.f32.mrf.mxu0
      %v1287 = vadd.f32 %v339, %v1286
      %v1288 = vpop.f32.mrf.mxu0
      %v1289 = vadd.f32 %v339, %v1288
      %1290 = vmatmul.bf16.gmra.mxu0 %v807
      %v1291 = vpop.f32.mrf.mxu0
      %v1292 = vadd.f32 %v339, %v1291
      %v1293 = vpop.f32.mrf.mxu0
      %v1294 = vadd.f32 %v339, %v1293
      %1295 = vmatmul.bf16.gmra.mxu0 %v809
      %v1296 = vpop.f32.mrf.mxu0
      %v1297 = vadd.f32 %v339, %v1296
      %v1298 = vpop.f32.mrf.mxu0
      %v1299 = vadd.f32 %v339, %v1298
      %1300 = vmatmul.bf16.gmra.mxu0 %v811
      %v1301 = vpop.f32.mrf.mxu0
      %v1302 = vadd.f32 %v339, %v1301
      %v1303 = vpop.f32.mrf.mxu0
      %v1304 = vadd.f32 %v339, %v1303
      %1305 = vmatmul.bf16.gmra.mxu0 %v813
      %v1306 = vpop.f32.mrf.mxu0
      %v1307 = vadd.f32 %v339, %v1306
      %v1308 = vpop.f32.mrf.mxu0
      %v1309 = vadd.f32 %v339, %v1308
      %1310 = vmatmul.bf16.gmra.mxu0 %v815
      %v1311 = vpop.f32.mrf.mxu0
      %v1312 = vadd.f32 %v339, %v1311
      %v1313 = vpop.f32.mrf.mxu0
      %v1314 = vadd.f32 %v339, %v1313
      %1315 = vmatmul.bf16.gmra.mxu0 %v817
      %v1316 = vpop.f32.mrf.mxu0
      %v1317 = vadd.f32 %v339, %v1316
      %v1318 = vpop.f32.mrf.mxu0
      %v1319 = vadd.f32 %v339, %v1318
      %1320 = vmatmul.bf16.gmra.mxu0 %v819
      %v1321 = vpop.f32.mrf.mxu0
      %v1322 = vadd.f32 %v339, %v1321
      %v1323 = vpop.f32.mrf.mxu0
      %v1324 = vadd.f32 %v339, %v1323
      %1325 = vmatmul.bf16.gmra.mxu0 %v821
      %v1326 = vpop.f32.mrf.mxu0
      %v1327 = vadd.f32 %v339, %v1326
      %v1328 = vpop.f32.mrf.mxu0
      %v1329 = vadd.f32 %v339, %v1328
      %1330 = vmatmul.bf16.gmra.mxu0 %v823
      %v1331 = vpop.f32.mrf.mxu0
      %v1332 = vadd.f32 %v339, %v1331
      %v1333 = vpop.f32.mrf.mxu0
      %v1334 = vadd.f32 %v339, %v1333
      %1335 = vmatmul.bf16.gmra.mxu0 %v825
      %v1336 = vpop.f32.mrf.mxu0
      %v1337 = vadd.f32 %v339, %v1336
      %v1338 = vpop.f32.mrf.mxu0
      %v1339 = vadd.f32 %v339, %v1338
      %1340 = vmatmul.bf16.gmra.mxu0 %v827
      %v1341 = vpop.f32.mrf.mxu0
      %v1342 = vadd.f32 %v339, %v1341
      %v1343 = vpop.f32.mrf.mxu0
      %v1344 = vadd.f32 %v339, %v1343
      %1345 = vmatmul.bf16.gmra.mxu0 %v829
      %v1346 = vpop.f32.mrf.mxu0
      %v1347 = vadd.f32 %v339, %v1346
      %v1348 = vpop.f32.mrf.mxu0
      %v1349 = vadd.f32 %v339, %v1348
      %1350 = vmatmul.bf16.gmra.mxu0 %v831
      %v1351 = vpop.f32.mrf.mxu0
      %v1352 = vadd.f32 %v339, %v1351
      %v1353 = vpop.f32.mrf.mxu0
      %v1354 = vadd.f32 %v339, %v1353
      %1355 = vmatmul.bf16.gmra.mxu0 %v833
      %v1356 = vpop.f32.mrf.mxu0
      %v1357 = vadd.f32 %v339, %v1356
      %v1358 = vpop.f32.mrf.mxu0
      %v1359 = vadd.f32 %v339, %v1358
      %1360 = vmatmul.bf16.gmra.mxu0 %v835
      %v1361 = vpop.f32.mrf.mxu0
      %v1362 = vadd.f32 %v339, %v1361
      %v1363 = vpop.f32.mrf.mxu0
      %v1364 = vadd.f32 %v339, %v1363
      %1365 = vmatmul.bf16.gmra.mxu0 %v837
      %v1366 = vpop.f32.mrf.mxu0
      %v1367 = vadd.f32 %v339, %v1366
      %v1368 = vpop.f32.mrf.mxu0
      %v1369 = vadd.f32 %v339, %v1368
      %1370 = vmatmul.bf16.gmra.mxu0 %v839
      %v1371 = vpop.f32.mrf.mxu0
      %v1372 = vadd.f32 %v339, %v1371
      %v1373 = vpop.f32.mrf.mxu0
      %v1374 = vadd.f32 %v339, %v1373
      %1375 = vmatmul.bf16.gmra.mxu0 %v841
      %v1376 = vpop.f32.mrf.mxu0
      %v1377 = vadd.f32 %v339, %v1376
      %v1378 = vpop.f32.mrf.mxu0
      %v1379 = vadd.f32 %v339, %v1378
      %1380 = vmatmul.bf16.gmra.mxu0 %v843
      %v1381 = vpop.f32.mrf.mxu0
      %v1382 = vadd.f32 %v339, %v1381
      %v1383 = vpop.f32.mrf.mxu0
      %v1384 = vadd.f32 %v339, %v1383
      %1385 = vmatmul.bf16.gmra.mxu0 %v845
      %v1386 = vpop.f32.mrf.mxu0
      %v1387 = vadd.f32 %v339, %v1386
      %v1388 = vpop.f32.mrf.mxu0
      %v1389 = vadd.f32 %v339, %v1388
      %1390 = vmatmul.bf16.gmra.mxu0 %v847
      %v1391 = vpop.f32.mrf.mxu0
      %v1392 = vadd.f32 %v339, %v1391
      %v1393 = vpop.f32.mrf.mxu0
      %v1394 = vadd.f32 %v339, %v1393
      %1395 = vmatmul.bf16.gmra.mxu0 %v849
      %v1396 = vpop.f32.mrf.mxu0
      %v1397 = vadd.f32 %v339, %v1396
      %v1398 = vpop.f32.mrf.mxu0
      %v1399 = vadd.f32 %v339, %v1398
      %1400 = vmatmul.bf16.gmra.mxu0 %v851
      %v1401 = vpop.f32.mrf.mxu0
      %v1402 = vadd.f32 %v339, %v1401
      %v1403 = vpop.f32.mrf.mxu0
      %v1404 = vadd.f32 %v339, %v1403
      %1405 = vdwg.mxu0
      %1406 = vmatpush.bf16.msra.mxu0 %v1060
      %1407 = vmatpush.bf16.msra.mxu0 %v1059
      %1408 = vmatpush.bf16.msra.mxu0 %v1058
      %1409 = vmatpush.bf16.msra.mxu0 %v1057
      %1410 = vmatpush.bf16.msra.mxu0 %v1056
      %1411 = vmatpush.bf16.msra.mxu0 %v1055
      %1412 = vmatpush.bf16.msra.mxu0 %v1054
      %1413 = vmatpush.bf16.msra.mxu0 %v1053
      %1414 = vmatmul.bf16.gmra.mxu0 %v726
      %v1415 = vpop.f32.mrf.mxu0
      %v1416 = vadd.f32 %v1087, %v1415
      %v1417 = vpop.f32.mrf.mxu0
      %v1418 = vadd.f32 %v1089, %v1417
      %1419 = vmatmul.bf16.gmra.mxu0 %v728
      %v1420 = vpop.f32.mrf.mxu0
      %v1421 = vadd.f32 %v1092, %v1420
      %v1422 = vpop.f32.mrf.mxu0
      %v1423 = vadd.f32 %v1094, %v1422
      %1424 = vmatmul.bf16.gmra.mxu0 %v730
      %v1425 = vpop.f32.mrf.mxu0
      %v1426 = vadd.f32 %v1097, %v1425
      %v1427 = vpop.f32.mrf.mxu0
      %v1428 = vadd.f32 %v1099, %v1427
      %1429 = vmatmul.bf16.gmra.mxu0 %v732
      %v1430 = vpop.f32.mrf.mxu0
      %v1431 = vadd.f32 %v1102, %v1430
      %v1432 = vpop.f32.mrf.mxu0
      %v1433 = vadd.f32 %v1104, %v1432
      %1434 = vmatmul.bf16.gmra.mxu0 %v734
      %v1435 = vpop.f32.mrf.mxu0
      %v1436 = vadd.f32 %v1107, %v1435
      %v1437 = vpop.f32.mrf.mxu0
      %v1438 = vadd.f32 %v1109, %v1437
      %1439 = vmatmul.bf16.gmra.mxu0 %v736
      %v1440 = vpop.f32.mrf.mxu0
      %v1441 = vadd.f32 %v1112, %v1440
      %v1442 = vpop.f32.mrf.mxu0
      %v1443 = vadd.f32 %v1114, %v1442
      %1444 = vmatmul.bf16.gmra.mxu0 %v738
      %v1445 = vpop.f32.mrf.mxu0
      %v1446 = vadd.f32 %v1117, %v1445
      %v1447 = vpop.f32.mrf.mxu0
      %v1448 = vadd.f32 %v1119, %v1447
      %1449 = vmatmul.bf16.gmra.mxu0 %v740
      %v1450 = vpop.f32.mrf.mxu0
      %v1451 = vadd.f32 %v1122, %v1450
      %v1452 = vpop.f32.mrf.mxu0
      %v1453 = vadd.f32 %v1124, %v1452
      %1454 = vmatmul.bf16.gmra.mxu0 %v742
      %v1455 = vpop.f32.mrf.mxu0
      %v1456 = vadd.f32 %v1127, %v1455
      %v1457 = vpop.f32.mrf.mxu0
      %v1458 = vadd.f32 %v1129, %v1457
      %1459 = vmatmul.bf16.gmra.mxu0 %v744
      %v1460 = vpop.f32.mrf.mxu0
      %v1461 = vadd.f32 %v1132, %v1460
      %v1462 = vpop.f32.mrf.mxu0
      %v1463 = vadd.f32 %v1134, %v1462
      %1464 = vmatmul.bf16.gmra.mxu0 %v746
      %v1465 = vpop.f32.mrf.mxu0
      %v1466 = vadd.f32 %v1137, %v1465
      %v1467 = vpop.f32.mrf.mxu0
      %v1468 = vadd.f32 %v1139, %v1467
      %1469 = vmatmul.bf16.gmra.mxu0 %v748
      %v1470 = vpop.f32.mrf.mxu0
      %v1471 = vadd.f32 %v1142, %v1470
      %v1472 = vpop.f32.mrf.mxu0
      %v1473 = vadd.f32 %v1144, %v1472
      %1474 = vmatmul.bf16.gmra.mxu0 %v750
      %v1475 = vpop.f32.mrf.mxu0
      %v1476 = vadd.f32 %v1147, %v1475
      %v1477 = vpop.f32.mrf.mxu0
      %v1478 = vadd.f32 %v1149, %v1477
      %1479 = vmatmul.bf16.gmra.mxu0 %v752
      %v1480 = vpop.f32.mrf.mxu0
      %v1481 = vadd.f32 %v1152, %v1480
      %v1482 = vpop.f32.mrf.mxu0
      %v1483 = vadd.f32 %v1154, %v1482
      %1484 = vmatmul.bf16.gmra.mxu0 %v754
      %v1485 = vpop.f32.mrf.mxu0
      %v1486 = vadd.f32 %v1157, %v1485
      %v1487 = vpop.f32.mrf.mxu0
      %v1488 = vadd.f32 %v1159, %v1487
      %1489 = vmatmul.bf16.gmra.mxu0 %v756
      %v1490 = vpop.f32.mrf.mxu0
      %v1491 = vadd.f32 %v1162, %v1490
      %v1492 = vpop.f32.mrf.mxu0
      %v1493 = vadd.f32 %v1164, %v1492
      %1494 = vmatmul.bf16.gmra.mxu0 %v758
      %v1495 = vpop.f32.mrf.mxu0
      %v1496 = vadd.f32 %v1167, %v1495
      %v1497 = vpop.f32.mrf.mxu0
      %v1498 = vadd.f32 %v1169, %v1497
      %1499 = vmatmul.bf16.gmra.mxu0 %v760
      %v1500 = vpop.f32.mrf.mxu0
      %v1501 = vadd.f32 %v1172, %v1500
      %v1502 = vpop.f32.mrf.mxu0
      %v1503 = vadd.f32 %v1174, %v1502
      %1504 = vmatmul.bf16.gmra.mxu0 %v762
      %v1505 = vpop.f32.mrf.mxu0
      %v1506 = vadd.f32 %v1177, %v1505
      %v1507 = vpop.f32.mrf.mxu0
      %v1508 = vadd.f32 %v1179, %v1507
      %1509 = vmatmul.bf16.gmra.mxu0 %v764
      %v1510 = vpop.f32.mrf.mxu0
      %v1511 = vadd.f32 %v1182, %v1510
      %v1512 = vpop.f32.mrf.mxu0
      %v1513 = vadd.f32 %v1184, %v1512
      %1514 = vmatmul.bf16.gmra.mxu0 %v766
      %v1515 = vpop.f32.mrf.mxu0
      %v1516 = vadd.f32 %v1187, %v1515
      %v1517 = vpop.f32.mrf.mxu0
      %v1518 = vadd.f32 %v1189, %v1517
      %1519 = vmatmul.bf16.gmra.mxu0 %v768
      %v1520 = vpop.f32.mrf.mxu0
      %v1521 = vadd.f32 %v1192, %v1520
      %v1522 = vpop.f32.mrf.mxu0
      %v1523 = vadd.f32 %v1194, %v1522
      %1524 = vmatmul.bf16.gmra.mxu0 %v770
      %v1525 = vpop.f32.mrf.mxu0
      %v1526 = vadd.f32 %v1197, %v1525
      %v1527 = vpop.f32.mrf.mxu0
      %v1528 = vadd.f32 %v1199, %v1527
      %1529 = vmatmul.bf16.gmra.mxu0 %v772
      %v1530 = vpop.f32.mrf.mxu0
      %v1531 = vadd.f32 %v1202, %v1530
      %v1532 = vpop.f32.mrf.mxu0
      %v1533 = vadd.f32 %v1204, %v1532
      %1534 = vmatmul.bf16.gmra.mxu0 %v774
      %v1535 = vpop.f32.mrf.mxu0
      %v1536 = vadd.f32 %v1207, %v1535
      %v1537 = vpop.f32.mrf.mxu0
      %v1538 = vadd.f32 %v1209, %v1537
      %1539 = vmatmul.bf16.gmra.mxu0 %v776
      %v1540 = vpop.f32.mrf.mxu0
      %v1541 = vadd.f32 %v1212, %v1540
      %v1542 = vpop.f32.mrf.mxu0
      %v1543 = vadd.f32 %v1214, %v1542
      %1544 = vmatmul.bf16.gmra.mxu0 %v778
      %v1545 = vpop.f32.mrf.mxu0
      %v1546 = vadd.f32 %v1217, %v1545
      %v1547 = vpop.f32.mrf.mxu0
      %v1548 = vadd.f32 %v1219, %v1547
      %1549 = vmatmul.bf16.gmra.mxu0 %v780
      %v1550 = vpop.f32.mrf.mxu0
      %v1551 = vadd.f32 %v1222, %v1550
      %v1552 = vpop.f32.mrf.mxu0
      %v1553 = vadd.f32 %v1224, %v1552
      %1554 = vmatmul.bf16.gmra.mxu0 %v782
      %v1555 = vpop.f32.mrf.mxu0
      %v1556 = vadd.f32 %v1227, %v1555
      %v1557 = vpop.f32.mrf.mxu0
      %v1558 = vadd.f32 %v1229, %v1557
      %1559 = vmatmul.bf16.gmra.mxu0 %v784
      %v1560 = vpop.f32.mrf.mxu0
      %v1561 = vadd.f32 %v1232, %v1560
      %v1562 = vpop.f32.mrf.mxu0
      %v1563 = vadd.f32 %v1234, %v1562
      %1564 = vmatmul.bf16.gmra.mxu0 %v786
      %v1565 = vpop.f32.mrf.mxu0
      %v1566 = vadd.f32 %v1237, %v1565
      %v1567 = vpop.f32.mrf.mxu0
      %v1568 = vadd.f32 %v1239, %v1567
      %1569 = vmatmul.bf16.gmra.mxu0 %v788
      %v1570 = vpop.f32.mrf.mxu0
      %v1571 = vadd.f32 %v1242, %v1570
      %v1572 = vpop.f32.mrf.mxu0
      %v1573 = vadd.f32 %v1244, %v1572
      %1574 = vmatmul.bf16.gmra.mxu0 %v790
      %v1575 = vpop.f32.mrf.mxu0
      %v1576 = vadd.f32 %v1247, %v1575
      %v1577 = vpop.f32.mrf.mxu0
      %v1578 = vadd.f32 %v1249, %v1577
      %1579 = vmatmul.bf16.gmra.mxu0 %v792
      %v1580 = vpop.f32.mrf.mxu0
      %v1581 = vadd.f32 %v1252, %v1580
      %v1582 = vpop.f32.mrf.mxu0
      %v1583 = vadd.f32 %v1254, %v1582
      %1584 = vmatmul.bf16.gmra.mxu0 %v794
      %v1585 = vpop.f32.mrf.mxu0
      %v1586 = vadd.f32 %v1257, %v1585
      %v1587 = vpop.f32.mrf.mxu0
      %v1588 = vadd.f32 %v1259, %v1587
      %1589 = vmatmul.bf16.gmra.mxu0 %v796
      %v1590 = vpop.f32.mrf.mxu0
      %v1591 = vadd.f32 %v1262, %v1590
      %v1592 = vpop.f32.mrf.mxu0
      %v1593 = vadd.f32 %v1264, %v1592
      %1594 = vmatmul.bf16.gmra.mxu0 %v798
      %v1595 = vpop.f32.mrf.mxu0
      %v1596 = vadd.f32 %v1267, %v1595
      %v1597 = vpop.f32.mrf.mxu0
      %v1598 = vadd.f32 %v1269, %v1597
      %1599 = vmatmul.bf16.gmra.mxu0 %v800
      %v1600 = vpop.f32.mrf.mxu0
      %v1601 = vadd.f32 %v1272, %v1600
      %v1602 = vpop.f32.mrf.mxu0
      %v1603 = vadd.f32 %v1274, %v1602
      %1604 = vmatmul.bf16.gmra.mxu0 %v802
      %v1605 = vpop.f32.mrf.mxu0
      %v1606 = vadd.f32 %v1277, %v1605
      %v1607 = vpop.f32.mrf.mxu0
      %v1608 = vadd.f32 %v1279, %v1607
      %1609 = vmatmul.bf16.gmra.mxu0 %v804
      %v1610 = vpop.f32.mrf.mxu0
      %v1611 = vadd.f32 %v1282, %v1610
      %v1612 = vpop.f32.mrf.mxu0
      %v1613 = vadd.f32 %v1284, %v1612
      %1614 = vmatmul.bf16.gmra.mxu0 %v806
      %v1615 = vpop.f32.mrf.mxu0
      %v1616 = vadd.f32 %v1287, %v1615
      %v1617 = vpop.f32.mrf.mxu0
      %v1618 = vadd.f32 %v1289, %v1617
      %1619 = vmatmul.bf16.gmra.mxu0 %v808
      %v1620 = vpop.f32.mrf.mxu0
      %v1621 = vadd.f32 %v1292, %v1620
      %v1622 = vpop.f32.mrf.mxu0
      %v1623 = vadd.f32 %v1294, %v1622
      %1624 = vmatmul.bf16.gmra.mxu0 %v810
      %v1625 = vpop.f32.mrf.mxu0
      %v1626 = vadd.f32 %v1297, %v1625
      %v1627 = vpop.f32.mrf.mxu0
      %v1628 = vadd.f32 %v1299, %v1627
      %1629 = vmatmul.bf16.gmra.mxu0 %v812
      %v1630 = vpop.f32.mrf.mxu0
      %v1631 = vadd.f32 %v1302, %v1630
      %v1632 = vpop.f32.mrf.mxu0
      %v1633 = vadd.f32 %v1304, %v1632
      %1634 = vmatmul.bf16.gmra.mxu0 %v814
      %v1635 = vpop.f32.mrf.mxu0
      %v1636 = vadd.f32 %v1307, %v1635
      %v1637 = vpop.f32.mrf.mxu0
      %v1638 = vadd.f32 %v1309, %v1637
      %1639 = vmatmul.bf16.gmra.mxu0 %v816
      %v1640 = vpop.f32.mrf.mxu0
      %v1641 = vadd.f32 %v1312, %v1640
      %v1642 = vpop.f32.mrf.mxu0
      %v1643 = vadd.f32 %v1314, %v1642
      %1644 = vmatmul.bf16.gmra.mxu0 %v818
      %v1645 = vpop.f32.mrf.mxu0
      %v1646 = vadd.f32 %v1317, %v1645
      %v1647 = vpop.f32.mrf.mxu0
      %v1648 = vadd.f32 %v1319, %v1647
      %1649 = vmatmul.bf16.gmra.mxu0 %v820
      %v1650 = vpop.f32.mrf.mxu0
      %v1651 = vadd.f32 %v1322, %v1650
      %v1652 = vpop.f32.mrf.mxu0
      %v1653 = vadd.f32 %v1324, %v1652
      %1654 = vmatmul.bf16.gmra.mxu0 %v822
      %v1655 = vpop.f32.mrf.mxu0
      %v1656 = vadd.f32 %v1327, %v1655
      %v1657 = vpop.f32.mrf.mxu0
      %v1658 = vadd.f32 %v1329, %v1657
      %1659 = vmatmul.bf16.gmra.mxu0 %v824
      %v1660 = vpop.f32.mrf.mxu0
      %v1661 = vadd.f32 %v1332, %v1660
      %v1662 = vpop.f32.mrf.mxu0
      %v1663 = vadd.f32 %v1334, %v1662
      %1664 = vmatmul.bf16.gmra.mxu0 %v826
      %v1665 = vpop.f32.mrf.mxu0
      %v1666 = vadd.f32 %v1337, %v1665
      %v1667 = vpop.f32.mrf.mxu0
      %v1668 = vadd.f32 %v1339, %v1667
      %1669 = vmatmul.bf16.gmra.mxu0 %v828
      %v1670 = vpop.f32.mrf.mxu0
      %v1671 = vadd.f32 %v1342, %v1670
      %v1672 = vpop.f32.mrf.mxu0
      %v1673 = vadd.f32 %v1344, %v1672
      %1674 = vmatmul.bf16.gmra.mxu0 %v830
      %v1675 = vpop.f32.mrf.mxu0
      %v1676 = vadd.f32 %v1347, %v1675
      %v1677 = vpop.f32.mrf.mxu0
      %v1678 = vadd.f32 %v1349, %v1677
      %1679 = vmatmul.bf16.gmra.mxu0 %v832
      %v1680 = vpop.f32.mrf.mxu0
      %v1681 = vadd.f32 %v1352, %v1680
      %v1682 = vpop.f32.mrf.mxu0
      %v1683 = vadd.f32 %v1354, %v1682
      %1684 = vmatmul.bf16.gmra.mxu0 %v834
      %v1685 = vpop.f32.mrf.mxu0
      %v1686 = vadd.f32 %v1357, %v1685
      %v1687 = vpop.f32.mrf.mxu0
      %v1688 = vadd.f32 %v1359, %v1687
      %1689 = vmatmul.bf16.gmra.mxu0 %v836
      %v1690 = vpop.f32.mrf.mxu0
      %v1691 = vadd.f32 %v1362, %v1690
      %v1692 = vpop.f32.mrf.mxu0
      %v1693 = vadd.f32 %v1364, %v1692
      %1694 = vmatmul.bf16.gmra.mxu0 %v838
      %v1695 = vpop.f32.mrf.mxu0
      %v1696 = vadd.f32 %v1367, %v1695
      %v1697 = vpop.f32.mrf.mxu0
      %v1698 = vadd.f32 %v1369, %v1697
      %1699 = vmatmul.bf16.gmra.mxu0 %v840
      %v1700 = vpop.f32.mrf.mxu0
      %v1701 = vadd.f32 %v1372, %v1700
      %v1702 = vpop.f32.mrf.mxu0
      %v1703 = vadd.f32 %v1374, %v1702
      %1704 = vmatmul.bf16.gmra.mxu0 %v842
      %v1705 = vpop.f32.mrf.mxu0
      %v1706 = vadd.f32 %v1377, %v1705
      %v1707 = vpop.f32.mrf.mxu0
      %v1708 = vadd.f32 %v1379, %v1707
      %1709 = vmatmul.bf16.gmra.mxu0 %v844
      %v1710 = vpop.f32.mrf.mxu0
      %v1711 = vadd.f32 %v1382, %v1710
      %v1712 = vpop.f32.mrf.mxu0
      %v1713 = vadd.f32 %v1384, %v1712
      %1714 = vmatmul.bf16.gmra.mxu0 %v846
      %v1715 = vpop.f32.mrf.mxu0
      %v1716 = vadd.f32 %v1387, %v1715
      %v1717 = vpop.f32.mrf.mxu0
      %v1718 = vadd.f32 %v1389, %v1717
      %1719 = vmatmul.bf16.gmra.mxu0 %v848
      %v1720 = vpop.f32.mrf.mxu0
      %v1721 = vadd.f32 %v1392, %v1720
      %v1722 = vpop.f32.mrf.mxu0
      %v1723 = vadd.f32 %v1394, %v1722
      %1724 = vmatmul.bf16.gmra.mxu0 %v850
      %v1725 = vpop.f32.mrf.mxu0
      %v1726 = vadd.f32 %v1397, %v1725
      %v1727 = vpop.f32.mrf.mxu0
      %v1728 = vadd.f32 %v1399, %v1727
      %1729 = vmatmul.bf16.gmra.mxu0 %v852
      %v1730 = vpop.f32.mrf.mxu0
      %v1731 = vadd.f32 %v1402, %v1730
      %v1732 = vpop.f32.mrf.mxu0
      %v1733 = vadd.f32 %v1404, %v1732
      %1734 = vdwg.mxu0
      %v1735 = vmax.f32 %v1416, 0.0
      %v1736 = vmax.f32 %v1418, 0.0
      %v1737 = vmax.f32 %v1421, 0.0
      %v1738 = vmax.f32 %v1423, 0.0
      %v1739 = vmax.f32 %v1426, 0.0
      %v1740 = vmax.f32 %v1428, 0.0
      %v1741 = vmax.f32 %v1431, 0.0
      %v1742 = vmax.f32 %v1433, 0.0
      %v1743 = vmax.f32 %v1436, 0.0
      %v1744 = vmax.f32 %v1438, 0.0
      %v1745 = vmax.f32 %v1441, 0.0
      %v1746 = vmax.f32 %v1443, 0.0
      %v1747 = vmax.f32 %v1446, 0.0
      %v1748 = vmax.f32 %v1448, 0.0
      %v1749 = vmax.f32 %v1451, 0.0
      %v1750 = vmax.f32 %v1453, 0.0
      %v1751 = vmax.f32 %v1456, 0.0
      %v1752 = vmax.f32 %v1458, 0.0
      %v1753 = vmax.f32 %v1461, 0.0
      %v1754 = vmax.f32 %v1463, 0.0
      %v1755 = vmax.f32 %v1466, 0.0
      %v1756 = vmax.f32 %v1468, 0.0
      %v1757 = vmax.f32 %v1471, 0.0
      %v1758 = vmax.f32 %v1473, 0.0
      %v1759 = vmax.f32 %v1476, 0.0
      %v1760 = vmax.f32 %v1478, 0.0
      %v1761 = vmax.f32 %v1481, 0.0
      %v1762 = vmax.f32 %v1483, 0.0
      %v1763 = vmax.f32 %v1486, 0.0
      %v1764 = vmax.f32 %v1488, 0.0
      %v1765 = vmax.f32 %v1491, 0.0
      %v1766 = vmax.f32 %v1493, 0.0
      %v1767 = vmax.f32 %v1496, 0.0
      %v1768 = vmax.f32 %v1498, 0.0
      %v1769 = vmax.f32 %v1501, 0.0
      %v1770 = vmax.f32 %v1503, 0.0
      %v1771 = vmax.f32 %v1506, 0.0
      %v1772 = vmax.f32 %v1508, 0.0
      %v1773 = vmax.f32 %v1511, 0.0
      %v1774 = vmax.f32 %v1513, 0.0
      %v1775 = vmax.f32 %v1516, 0.0
      %v1776 = vmax.f32 %v1518, 0.0
      %v1777 = vmax.f32 %v1521, 0.0
      %v1778 = vmax.f32 %v1523, 0.0
      %v1779 = vmax.f32 %v1526, 0.0
      %v1780 = vmax.f32 %v1528, 0.0
      %v1781 = vmax.f32 %v1531, 0.0
      %v1782 = vmax.f32 %v1533, 0.0
      %v1783 = vmax.f32 %v1536, 0.0
      %v1784 = vmax.f32 %v1538, 0.0
      %v1785 = vmax.f32 %v1541, 0.0
      %v1786 = vmax.f32 %v1543, 0.0
      %v1787 = vmax.f32 %v1546, 0.0
      %v1788 = vmax.f32 %v1548, 0.0
      %v1789 = vmax.f32 %v1551, 0.0
      %v1790 = vmax.f32 %v1553, 0.0
      %v1791 = vmax.f32 %v1556, 0.0
      %v1792 = vmax.f32 %v1558, 0.0
      %v1793 = vmax.f32 %v1561, 0.0
      %v1794 = vmax.f32 %v1563, 0.0
      %v1795 = vmax.f32 %v1566, 0.0
      %v1796 = vmax.f32 %v1568, 0.0
      %v1797 = vmax.f32 %v1571, 0.0
      %v1798 = vmax.f32 %v1573, 0.0
      %v1799 = vmax.f32 %v1576, 0.0
      %v1800 = vmax.f32 %v1578, 0.0
      %v1801 = vmax.f32 %v1581, 0.0
      %v1802 = vmax.f32 %v1583, 0.0
      %v1803 = vmax.f32 %v1586, 0.0
      %v1804 = vmax.f32 %v1588, 0.0
      %v1805 = vmax.f32 %v1591, 0.0
      %v1806 = vmax.f32 %v1593, 0.0
      %v1807 = vmax.f32 %v1596, 0.0
      %v1808 = vmax.f32 %v1598, 0.0
      %v1809 = vmax.f32 %v1601, 0.0
      %v1810 = vmax.f32 %v1603, 0.0
      %v1811 = vmax.f32 %v1606, 0.0
      %v1812 = vmax.f32 %v1608, 0.0
      %v1813 = vmax.f32 %v1611, 0.0
      %v1814 = vmax.f32 %v1613, 0.0
      %v1815 = vmax.f32 %v1616, 0.0
      %v1816 = vmax.f32 %v1618, 0.0
      %v1817 = vmax.f32 %v1621, 0.0
      %v1818 = vmax.f32 %v1623, 0.0
      %v1819 = vmax.f32 %v1626, 0.0
      %v1820 = vmax.f32 %v1628, 0.0
      %v1821 = vmax.f32 %v1631, 0.0
      %v1822 = vmax.f32 %v1633, 0.0
      %v1823 = vmax.f32 %v1636, 0.0
      %v1824 = vmax.f32 %v1638, 0.0
      %v1825 = vmax.f32 %v1641, 0.0
      %v1826 = vmax.f32 %v1643, 0.0
      %v1827 = vmax.f32 %v1646, 0.0
      %v1828 = vmax.f32 %v1648, 0.0
      %v1829 = vmax.f32 %v1651, 0.0
      %v1830 = vmax.f32 %v1653, 0.0
      %v1831 = vmax.f32 %v1656, 0.0
      %v1832 = vmax.f32 %v1658, 0.0
      %v1833 = vmax.f32 %v1661, 0.0
      %v1834 = vmax.f32 %v1663, 0.0
      %v1835 = vmax.f32 %v1666, 0.0
      %v1836 = vmax.f32 %v1668, 0.0
      %v1837 = vmax.f32 %v1671, 0.0
      %v1838 = vmax.f32 %v1673, 0.0
      %v1839 = vmax.f32 %v1676, 0.0
      %v1840 = vmax.f32 %v1678, 0.0
      %v1841 = vmax.f32 %v1681, 0.0
      %v1842 = vmax.f32 %v1683, 0.0
      %v1843 = vmax.f32 %v1686, 0.0
      %v1844 = vmax.f32 %v1688, 0.0
      %v1845 = vmax.f32 %v1691, 0.0
      %v1846 = vmax.f32 %v1693, 0.0
      %v1847 = vmax.f32 %v1696, 0.0
      %v1848 = vmax.f32 %v1698, 0.0
      %v1849 = vmax.f32 %v1701, 0.0
      %v1850 = vmax.f32 %v1703, 0.0
      %v1851 = vmax.f32 %v1706, 0.0
      %v1852 = vmax.f32 %v1708, 0.0
      %v1853 = vmax.f32 %v1711, 0.0
      %v1854 = vmax.f32 %v1713, 0.0
      %v1855 = vmax.f32 %v1716, 0.0
      %v1856 = vmax.f32 %v1718, 0.0
      %v1857 = vmax.f32 %v1721, 0.0
      %v1858 = vmax.f32 %v1723, 0.0
      %v1859 = vmax.f32 %v1726, 0.0
      %v1860 = vmax.f32 %v1728, 0.0
      %v1861 = vmax.f32 %v1731, 0.0
      %v1862 = vmax.f32 %v1733, 0.0
      %v1863 = vpack.c.bf16 %v1735, %v1735
      %v1864 = vpack.c.bf16 %v1736, %v1736
      %v1865 = vpack.c.bf16 %v1737, %v1737
      %v1866 = vpack.c.bf16 %v1738, %v1738
      %v1867 = vpack.c.bf16 %v1739, %v1739
      %v1868 = vpack.c.bf16 %v1740, %v1740
      %v1869 = vpack.c.bf16 %v1741, %v1741
      %v1870 = vpack.c.bf16 %v1742, %v1742
      %v1871 = vpack.c.bf16 %v1743, %v1743
      %v1872 = vpack.c.bf16 %v1744, %v1744
      %v1873 = vpack.c.bf16 %v1745, %v1745
      %v1874 = vpack.c.bf16 %v1746, %v1746
      %v1875 = vpack.c.bf16 %v1747, %v1747
      %v1876 = vpack.c.bf16 %v1748, %v1748
      %v1877 = vpack.c.bf16 %v1749, %v1749
      %v1878 = vpack.c.bf16 %v1750, %v1750
      %v1879 = vpack.c.bf16 %v1751, %v1751
      %v1880 = vpack.c.bf16 %v1752, %v1752
      %v1881 = vpack.c.bf16 %v1753, %v1753
      %v1882 = vpack.c.bf16 %v1754, %v1754
      %v1883 = vpack.c.bf16 %v1755, %v1755
      %v1884 = vpack.c.bf16 %v1756, %v1756
      %v1885 = vpack.c.bf16 %v1757, %v1757
      %v1886 = vpack.c.bf16 %v1758, %v1758
      %v1887 = vpack.c.bf16 %v1759, %v1759
      %v1888 = vpack.c.bf16 %v1760, %v1760
      %v1889 = vpack.c.bf16 %v1761, %v1761
      %v1890 = vpack.c.bf16 %v1762, %v1762
      %v1891 = vpack.c.bf16 %v1763, %v1763
      %v1892 = vpack.c.bf16 %v1764, %v1764
      %v1893 = vpack.c.bf16 %v1765, %v1765
      %v1894 = vpack.c.bf16 %v1766, %v1766
      %v1895 = vpack.c.bf16 %v1767, %v1767
      %v1896 = vpack.c.bf16 %v1768, %v1768
      %v1897 = vpack.c.bf16 %v1769, %v1769
      %v1898 = vpack.c.bf16 %v1770, %v1770
      %v1899 = vpack.c.bf16 %v1771, %v1771
      %v1900 = vpack.c.bf16 %v1772, %v1772
      %v1901 = vpack.c.bf16 %v1773, %v1773
      %v1902 = vpack.c.bf16 %v1774, %v1774
      %v1903 = vpack.c.bf16 %v1775, %v1775
      %v1904 = vpack.c.bf16 %v1776, %v1776
      %v1905 = vpack.c.bf16 %v1777, %v1777
      %v1906 = vpack.c.bf16 %v1778, %v1778
      %v1907 = vpack.c.bf16 %v1779, %v1779
      %v1908 = vpack.c.bf16 %v1780, %v1780
      %v1909 = vpack.c.bf16 %v1781, %v1781
      %v1910 = vpack.c.bf16 %v1782, %v1782
      %v1911 = vpack.c.bf16 %v1783, %v1783
      %v1912 = vpack.c.bf16 %v1784, %v1784
      %v1913 = vpack.c.bf16 %v1785, %v1785
      %v1914 = vpack.c.bf16 %v1786, %v1786
      %v1915 = vpack.c.bf16 %v1787, %v1787
      %v1916 = vpack.c.bf16 %v1788, %v1788
      %v1917 = vpack.c.bf16 %v1789, %v1789
      %v1918 = vpack.c.bf16 %v1790, %v1790
      %v1919 = vpack.c.bf16 %v1791, %v1791
      %v1920 = vpack.c.bf16 %v1792, %v1792
      %v1921 = vpack.c.bf16 %v1793, %v1793
      %v1922 = vpack.c.bf16 %v1794, %v1794
      %v1923 = vpack.c.bf16 %v1795, %v1795
      %v1924 = vpack.c.bf16 %v1796, %v1796
      %v1925 = vpack.c.bf16 %v1797, %v1797
      %v1926 = vpack.c.bf16 %v1798, %v1798
      %v1927 = vpack.c.bf16 %v1799, %v1799
      %v1928 = vpack.c.bf16 %v1800, %v1800
      %v1929 = vpack.c.bf16 %v1801, %v1801
      %v1930 = vpack.c.bf16 %v1802, %v1802
      %v1931 = vpack.c.bf16 %v1803, %v1803
      %v1932 = vpack.c.bf16 %v1804, %v1804
      %v1933 = vpack.c.bf16 %v1805, %v1805
      %v1934 = vpack.c.bf16 %v1806, %v1806
      %v1935 = vpack.c.bf16 %v1807, %v1807
      %v1936 = vpack.c.bf16 %v1808, %v1808
      %v1937 = vpack.c.bf16 %v1809, %v1809
      %v1938 = vpack.c.bf16 %v1810, %v1810
      %v1939 = vpack.c.bf16 %v1811, %v1811
      %v1940 = vpack.c.bf16 %v1812, %v1812
      %v1941 = vpack.c.bf16 %v1813, %v1813
      %v1942 = vpack.c.bf16 %v1814, %v1814
      %v1943 = vpack.c.bf16 %v1815, %v1815
      %v1944 = vpack.c.bf16 %v1816, %v1816
      %v1945 = vpack.c.bf16 %v1817, %v1817
      %v1946 = vpack.c.bf16 %v1818, %v1818
      %v1947 = vpack.c.bf16 %v1819, %v1819
      %v1948 = vpack.c.bf16 %v1820, %v1820
      %v1949 = vpack.c.bf16 %v1821, %v1821
      %v1950 = vpack.c.bf16 %v1822, %v1822
      %v1951 = vpack.c.bf16 %v1823, %v1823
      %v1952 = vpack.c.bf16 %v1824, %v1824
      %v1953 = vpack.c.bf16 %v1825, %v1825
      %v1954 = vpack.c.bf16 %v1826, %v1826
      %v1955 = vpack.c.bf16 %v1827, %v1827
      %v1956 = vpack.c.bf16 %v1828, %v1828
      %v1957 = vpack.c.bf16 %v1829, %v1829
      %v1958 = vpack.c.bf16 %v1830, %v1830
      %v1959 = vpack.c.bf16 %v1831, %v1831
      %v1960 = vpack.c.bf16 %v1832, %v1832
      %v1961 = vpack.c.bf16 %v1833, %v1833
      %v1962 = vpack.c.bf16 %v1834, %v1834
      %v1963 = vpack.c.bf16 %v1835, %v1835
      %v1964 = vpack.c.bf16 %v1836, %v1836
      %v1965 = vpack.c.bf16 %v1837, %v1837
      %v1966 = vpack.c.bf16 %v1838, %v1838
      %v1967 = vpack.c.bf16 %v1839, %v1839
      %v1968 = vpack.c.bf16 %v1840, %v1840
      %v1969 = vpack.c.bf16 %v1841, %v1841
      %v1970 = vpack.c.bf16 %v1842, %v1842
      %v1971 = vpack.c.bf16 %v1843, %v1843
      %v1972 = vpack.c.bf16 %v1844, %v1844
      %v1973 = vpack.c.bf16 %v1845, %v1845
      %v1974 = vpack.c.bf16 %v1846, %v1846
      %v1975 = vpack.c.bf16 %v1847, %v1847
      %v1976 = vpack.c.bf16 %v1848, %v1848
      %v1977 = vpack.c.bf16 %v1849, %v1849
      %v1978 = vpack.c.bf16 %v1850, %v1850
      %v1979 = vpack.c.bf16 %v1851, %v1851
      %v1980 = vpack.c.bf16 %v1852, %v1852
      %v1981 = vpack.c.bf16 %v1853, %v1853
      %v1982 = vpack.c.bf16 %v1854, %v1854
      %v1983 = vpack.c.bf16 %v1855, %v1855
      %v1984 = vpack.c.bf16 %v1856, %v1856
      %v1985 = vpack.c.bf16 %v1857, %v1857
      %v1986 = vpack.c.bf16 %v1858, %v1858
      %v1987 = vpack.c.bf16 %v1859, %v1859
      %v1988 = vpack.c.bf16 %v1860, %v1860
      %v1989 = vpack.c.bf16 %v1861, %v1861
      %v1990 = vpack.c.bf16 %v1862, %v1862
      %1991 = vst [vmem:[%s175] sm:$0xf] %v1863
      %1992 = vst [vmem:[%s175 + $0x4] sm:$0xf] %v1864
      %1993 = vst [vmem:[%s175 + $0x8] sm:$0xf] %v1865
      %1994 = vst [vmem:[%s175 + $0xc] sm:$0xf] %v1866
      %1995 = vst [vmem:[%s175 + $0x10] sm:$0xf] %v1867
      %1996 = vst [vmem:[%s175 + $0x14] sm:$0xf] %v1868
      %1997 = vst [vmem:[%s175 + $0x18] sm:$0xf] %v1869
      %1998 = vst [vmem:[%s175 + $0x1c] sm:$0xf] %v1870
      %1999 = vst [vmem:[%s175 + $0x20] sm:$0xf] %v1871
      %2000 = vst [vmem:[%s175 + $0x24] sm:$0xf] %v1872
      %2001 = vst [vmem:[%s175 + $0x28] sm:$0xf] %v1873
      %2002 = vst [vmem:[%s175 + $0x2c] sm:$0xf] %v1874
      %2003 = vst [vmem:[%s175 + $0x30] sm:$0xf] %v1875
      %2004 = vst [vmem:[%s175 + $0x34] sm:$0xf] %v1876
      %2005 = vst [vmem:[%s175 + $0x38] sm:$0xf] %v1877
      %2006 = vst [vmem:[%s175 + $0x3c] sm:$0xf] %v1878
      %2007 = vst [vmem:[%s175 + $0x40] sm:$0xf] %v1879
      %2008 = vst [vmem:[%s175 + $0x44] sm:$0xf] %v1880
      %2009 = vst [vmem:[%s175 + $0x48] sm:$0xf] %v1881
      %2010 = vst [vmem:[%s175 + $0x4c] sm:$0xf] %v1882
      %2011 = vst [vmem:[%s175 + $0x50] sm:$0xf] %v1883
      %2012 = vst [vmem:[%s175 + $0x54] sm:$0xf] %v1884
      %2013 = vst [vmem:[%s175 + $0x58] sm:$0xf] %v1885
      %2014 = vst [vmem:[%s175 + $0x5c] sm:$0xf] %v1886
      %2015 = vst [vmem:[%s175 + $0x60] sm:$0xf] %v1887
      %2016 = vst [vmem:[%s175 + $0x64] sm:$0xf] %v1888
      %2017 = vst [vmem:[%s175 + $0x68] sm:$0xf] %v1889
      %2018 = vst [vmem:[%s175 + $0x6c] sm:$0xf] %v1890
      %2019 = vst [vmem:[%s175 + $0x70] sm:$0xf] %v1891
      %2020 = vst [vmem:[%s175 + $0x74] sm:$0xf] %v1892
      %2021 = vst [vmem:[%s175 + $0x78] sm:$0xf] %v1893
      %2022 = vst [vmem:[%s175 + $0x7c] sm:$0xf] %v1894
      %2023 = vst [vmem:[%s175 + $0x80] sm:$0xf] %v1895
      %2024 = vst [vmem:[%s175 + $0x84] sm:$0xf] %v1896
      %2025 = vst [vmem:[%s175 + $0x88] sm:$0xf] %v1897
      %2026 = vst [vmem:[%s175 + $0x8c] sm:$0xf] %v1898
      %2027 = vst [vmem:[%s175 + $0x90] sm:$0xf] %v1899
      %2028 = vst [vmem:[%s175 + $0x94] sm:$0xf] %v1900
      %2029 = vst [vmem:[%s175 + $0x98] sm:$0xf] %v1901
      %2030 = vst [vmem:[%s175 + $0x9c] sm:$0xf] %v1902
      %2031 = vst [vmem:[%s175 + $0xa0] sm:$0xf] %v1903
      %2032 = vst [vmem:[%s175 + $0xa4] sm:$0xf] %v1904
      %2033 = vst [vmem:[%s175 + $0xa8] sm:$0xf] %v1905
      %2034 = vst [vmem:[%s175 + $0xac] sm:$0xf] %v1906
      %2035 = vst [vmem:[%s175 + $0xb0] sm:$0xf] %v1907
      %2036 = vst [vmem:[%s175 + $0xb4] sm:$0xf] %v1908
      %2037 = vst [vmem:[%s175 + $0xb8] sm:$0xf] %v1909
      %2038 = vst [vmem:[%s175 + $0xbc] sm:$0xf] %v1910
      %2039 = vst [vmem:[%s175 + $0xc0] sm:$0xf] %v1911
      %2040 = vst [vmem:[%s175 + $0xc4] sm:$0xf] %v1912
      %2041 = vst [vmem:[%s175 + $0xc8] sm:$0xf] %v1913
      %2042 = vst [vmem:[%s175 + $0xcc] sm:$0xf] %v1914
      %2043 = vst [vmem:[%s175 + $0xd0] sm:$0xf] %v1915
      %2044 = vst [vmem:[%s175 + $0xd4] sm:$0xf] %v1916
      %2045 = vst [vmem:[%s175 + $0xd8] sm:$0xf] %v1917
      %2046 = vst [vmem:[%s175 + $0xdc] sm:$0xf] %v1918
      %2047 = vst [vmem:[%s175 + $0xe0] sm:$0xf] %v1919
      %2048 = vst [vmem:[%s175 + $0xe4] sm:$0xf] %v1920
      %2049 = vst [vmem:[%s175 + $0xe8] sm:$0xf] %v1921
      %2050 = vst [vmem:[%s175 + $0xec] sm:$0xf] %v1922
      %2051 = vst [vmem:[%s175 + $0xf0] sm:$0xf] %v1923
      %2052 = vst [vmem:[%s175 + $0xf4] sm:$0xf] %v1924
      %2053 = vst [vmem:[%s175 + $0xf8] sm:$0xf] %v1925
      %2054 = vst [vmem:[%s175 + $0xfc] sm:$0xf] %v1926
      %2055 = vst [vmem:[%s175 + $0x100] sm:$0xf] %v1927
      %2056 = vst [vmem:[%s175 + $0x104] sm:$0xf] %v1928
      %2057 = vst [vmem:[%s175 + $0x108] sm:$0xf] %v1929
      %2058 = vst [vmem:[%s175 + $0x10c] sm:$0xf] %v1930
      %2059 = vst [vmem:[%s175 + $0x110] sm:$0xf] %v1931
      %2060 = vst [vmem:[%s175 + $0x114] sm:$0xf] %v1932
      %2061 = vst [vmem:[%s175 + $0x118] sm:$0xf] %v1933
      %2062 = vst [vmem:[%s175 + $0x11c] sm:$0xf] %v1934
      %2063 = vst [vmem:[%s175 + $0x120] sm:$0xf] %v1935
      %2064 = vst [vmem:[%s175 + $0x124] sm:$0xf] %v1936
      %2065 = vst [vmem:[%s175 + $0x128] sm:$0xf] %v1937
      %2066 = vst [vmem:[%s175 + $0x12c] sm:$0xf] %v1938
      %2067 = vst [vmem:[%s175 + $0x130] sm:$0xf] %v1939
      %2068 = vst [vmem:[%s175 + $0x134] sm:$0xf] %v1940
      %2069 = vst [vmem:[%s175 + $0x138] sm:$0xf] %v1941
      %2070 = vst [vmem:[%s175 + $0x13c] sm:$0xf] %v1942
      %2071 = vst [vmem:[%s175 + $0x140] sm:$0xf] %v1943
      %2072 = vst [vmem:[%s175 + $0x144] sm:$0xf] %v1944
      %2073 = vst [vmem:[%s175 + $0x148] sm:$0xf] %v1945
      %2074 = vst [vmem:[%s175 + $0x14c] sm:$0xf] %v1946
      %2075 = vst [vmem:[%s175 + $0x150] sm:$0xf] %v1947
      %2076 = vst [vmem:[%s175 + $0x154] sm:$0xf] %v1948
      %2077 = vst [vmem:[%s175 + $0x158] sm:$0xf] %v1949
      %2078 = vst [vmem:[%s175 + $0x15c] sm:$0xf] %v1950
      %2079 = vst [vmem:[%s175 + $0x160] sm:$0xf] %v1951
      %2080 = vst [vmem:[%s175 + $0x164] sm:$0xf] %v1952
      %2081 = vst [vmem:[%s175 + $0x168] sm:$0xf] %v1953
      %2082 = vst [vmem:[%s175 + $0x16c] sm:$0xf] %v1954
      %2083 = vst [vmem:[%s175 + $0x170] sm:$0xf] %v1955
      %2084 = vst [vmem:[%s175 + $0x174] sm:$0xf] %v1956
      %2085 = vst [vmem:[%s175 + $0x178] sm:$0xf] %v1957
      %2086 = vst [vmem:[%s175 + $0x17c] sm:$0xf] %v1958
      %2087 = vst [vmem:[%s175 + $0x180] sm:$0xf] %v1959
      %2088 = vst [vmem:[%s175 + $0x184] sm:$0xf] %v1960
      %2089 = vst [vmem:[%s175 + $0x188] sm:$0xf] %v1961
      %2090 = vst [vmem:[%s175 + $0x18c] sm:$0xf] %v1962
      %2091 = vst [vmem:[%s175 + $0x190] sm:$0xf] %v1963
      %2092 = vst [vmem:[%s175 + $0x194] sm:$0xf] %v1964
      %2093 = vst [vmem:[%s175 + $0x198] sm:$0xf] %v1965
      %2094 = vst [vmem:[%s175 + $0x19c] sm:$0xf] %v1966
      %2095 = vst [vmem:[%s175 + $0x1a0] sm:$0xf] %v1967
      %2096 = vst [vmem:[%s175 + $0x1a4] sm:$0xf] %v1968
      %2097 = vst [vmem:[%s175 + $0x1a8] sm:$0xf] %v1969
      %2098 = vst [vmem:[%s175 + $0x1ac] sm:$0xf] %v1970
      %2099 = vst [vmem:[%s175 + $0x1b0] sm:$0xf] %v1971
      %2100 = vst [vmem:[%s175 + $0x1b4] sm:$0xf] %v1972
      %2101 = vst [vmem:[%s175 + $0x1b8] sm:$0xf] %v1973
      %2102 = vst [vmem:[%s175 + $0x1bc] sm:$0xf] %v1974
      %2103 = vst [vmem:[%s175 + $0x1c0] sm:$0xf] %v1975
      %2104 = vst [vmem:[%s175 + $0x1c4] sm:$0xf] %v1976
      %2105 = vst [vmem:[%s175 + $0x1c8] sm:$0xf] %v1977
      %2106 = vst [vmem:[%s175 + $0x1cc] sm:$0xf] %v1978
      %2107 = vst [vmem:[%s175 + $0x1d0] sm:$0xf] %v1979
      %2108 = vst [vmem:[%s175 + $0x1d4] sm:$0xf] %v1980
      %2109 = vst [vmem:[%s175 + $0x1d8] sm:$0xf] %v1981
      %2110 = vst [vmem:[%s175 + $0x1dc] sm:$0xf] %v1982
      %2111 = vst [vmem:[%s175 + $0x1e0] sm:$0xf] %v1983
      %2112 = vst [vmem:[%s175 + $0x1e4] sm:$0xf] %v1984
      %2113 = vst [vmem:[%s175 + $0x1e8] sm:$0xf] %v1985
      %2114 = vst [vmem:[%s175 + $0x1ec] sm:$0xf] %v1986
      %2115 = vst [vmem:[%s175 + $0x1f0] sm:$0xf] %v1987
      %2116 = vst [vmem:[%s175 + $0x1f4] sm:$0xf] %v1988
      %2117 = vst [vmem:[%s175 + $0x1f8] sm:$0xf] %v1989
      %2118 = vst [vmem:[%s175 + $0x1fc] sm:$0xf] %v1990
      %s2119 = smul.u32 128, %s14
      %p2120 = scmp.lt.s32.totalorder %s2119, 255
      %s2121 = scalar_select %p2120, %s2119, 255
      %s2122 = smul.addr %s2121, 4
      %s2123 = scalar_lea.vmem %s3, %s2122
      // Predicated region
      $region33: #{cnn_forward.7} parent=31 // pred_check
        %p2124 = pneg %p100
      $region34: #{cnn_forward.7} parent=31 // pred_check_branch
        %2126 = sbr.rel (%p2124) target = $region36
      $region35: #{cnn_forward.7} parent=31 // pred_region
        %s2127 = smul.u32 128, %s14
      $region36: #{cnn_forward.7} parent=31 // pred_fallthru
        _
    $region32: #{cnn_forward.7} parent=5 // pred_fallthru
      _
    %p2128 = scmp.le.s32.totalorder 2, %s9
    // Predicated region
    $region37: #{cnn_forward.7} parent=5 // pred_check
      %p2129 = pneg %p2128
    $region38: #{cnn_forward.7} parent=5 // pred_check_branch
      %2131 = sbr.rel (%p2129) target = $region40
    $region39: #{cnn_forward.7} parent=5 // pred_region
      %s2132 = ssub.s32 %s9, 2
      // Predicated region
      $region41: #{cnn_forward.7} parent=39 // pred_check
        %p2133 = pneg %p106
      $region42: #{cnn_forward.7} parent=39 // pred_check_branch
        %2135 = sbr.rel (%p2133) target = $region44
      $region43: #{cnn_forward.7} parent=39 // pred_region
        %s2136 = smul.u32 128, %s15
        %p2137 = scmp.lt.s32.totalorder %s2136, 255
        %s2138 = scalar_select %p2137, %s2136, 255
        %s2139 = smul.addr %s2138, 4
        %s2140 = scalar_lea.vmem %s3, %s2139
      $region44: #{cnn_forward.7} parent=39 // pred_fallthru
        _
    $region40: #{cnn_forward.7} parent=5 // pred_fallthru
      _
  $region6: #{cnn_forward.7} parent=0 // loop_footer
    %s13 = sadd.s32 1, %s9
  $region7: #{cnn_forward.7} parent=0 // loop_footer_branch
    %8 = sbr.rel target = $region3
  $region8: #{cnn_forward.7} parent=0 // loop_exit
    _

// kernel: cnn_forward.8
$region0: #{cnn_forward.8}
  #allocation0 [shape = 'u32[]', space=smem, size = 0x4, offset = 0x4, fixed_abs, tag = 'smem constant byte address 0x4 - core index']
  #allocation1 [shape = 'u32[72,128]{1,0:T(1,128)}', space=vmem, size = 0x9000, scoped, tag = 'internal scratch']
  %s0 = inlined_call_operand.vmem [shape: bf16[4,64,128], index: 0, kind: input, shape index: {}]
  %s1 = inlined_call_operand.vmem [shape: bf16[64,128], index: 1, kind: output, shape index: {}]
  %s2 = sld [smem:[#allocation0]]
  $region78: #{cnn_forward.8} parent=0
    _
  %s4 = ssub.s32 1, %s2
  %s5 = scalar_select 0, %s4, %s2
  $region1: #{cnn_forward.8} parent=0
    #allocation2 [shape = 'u8[65536]{0}', space=vmem, size = 0x10000, scoped, tag = 'input window, operand 0']
    loop: start=0, step=1, limit=4
    $region2: #{cnn_forward.8} parent=1 // loop_pre_header
      _
    $region3: #{cnn_forward.8} parent=1 // loop_header
      %s7 = sphi 0, %s11
      %p8 = scmp.ge.s32.totalorder %s7, 4
      %s17 = sphi 0, %s19
      %s20 = sphi 0, %s17
      %s21 = sphi 0, %s20
      %s37 = sphi 0, %s21
      %s43 = sphi 0, %s45
      %s46 = sphi 0, %s43
      %s47 = sphi 0, %s46
      %s63 = sphi 0, %s47
    $region4: #{cnn_forward.8} parent=1 // loop_header_branch
      %10 = sbr.rel (%p8) target = $region8
    $region5: #{cnn_forward.8} parent=1 // loop_body
      %s12 = ssub.s32 %s7, 1
      %s13 = ssub.s32 %s7, 2
      %s14 = sadd.s32 %s7, 1
      %s15 = ssub.s32 %s7, %s14
      %p16 = scmp.eq.s32.totalorder %s15, 0
      %s18 = sadd.s32 %s17, 1
      %s19 = scalar_select %p16, %s17, %s18
      %p22 = pneg %p16
      %p23 = scmp.eq.s32.totalorder %s7, 1
      %p24 = por %p22, %p23
      %p25 = scmp.ne.s32.totalorder %s17, %s20
      %p26 = scmp.eq.s32.totalorder %s7, 0
      %p27 = por %p25, %p26
      %p28 = scmp.ne.s32.totalorder %s17, %s20
      %p29 = scmp.eq.s32.totalorder %s12, 1
      %p30 = por %p28, %p29
      %p31 = scmp.ne.s32.totalorder %s20, %s21
      %p32 = scmp.eq.s32.totalorder %s12, 0
      %p33 = por %p31, %p32
      %p34 = scmp.ne.s32.totalorder %s20, %s21
      %p35 = scmp.eq.s32.totalorder %s13, 1
      %p36 = por %p34, %p35
      %p38 = scmp.ne.s32.totalorder %s21, %s37
      %p39 = scmp.eq.s32.totalorder %s13, 0
      %p40 = por %p38, %p39
      %s41 = ssub.s32 %s7, %s14
      %p42 = scmp.eq.s32.totalorder %s41, 0
      %s44 = sadd.s32 %s43, 1
      %s45 = scalar_select %p42, %s43, %s44
      %p48 = pneg %p42
      %p49 = scmp.eq.s32.totalorder %s7, 1
      %p50 = por %p48, %p49
      %p51 = scmp.ne.s32.totalorder %s43, %s46
      %p52 = scmp.eq.s32.totalorder %s7, 0
      %p53 = por %p51, %p52
      %p54 = scmp.ne.s32.totalorder %s43, %s46
      %p55 = scmp.eq.s32.totalorder %s12, 1
      %p56 = por %p54, %p55
      %p57 = scmp.ne.s32.totalorder %s46, %s47
      %p58 = scmp.eq.s32.totalorder %s12, 0
      %p59 = por %p57, %p58
      %p60 = scmp.ne.s32.totalorder %s46, %s47
      %p61 = scmp.eq.s32.totalorder %s13, 1
      %p62 = por %p60, %p61
      %p64 = scmp.ne.s32.totalorder %s47, %s63
      %p65 = scmp.eq.s32.totalorder %s13, 0
      %p66 = por %p64, %p65
      %p67 = scmp.le.s32.totalorder 1, %s7
      %p68 = scmp.lt.s32.totalorder %s7, 3
      %p69 = pnand %p67, %p68
      %p70 = pneg %p69
      // Predicated region
      $region9: #{cnn_forward.8} parent=5 // pred_check
        _
      $region10: #{cnn_forward.8} parent=5 // pred_check_branch
        %72 = sbr.rel (%p69) target = $region12
      $region11: #{cnn_forward.8} parent=5 // pred_region
        %s73 = ssub.s32 %s7, 1
      $region12: #{cnn_forward.8} parent=5 // pred_fallthru
        _
      %p74 = scmp.lt.s32.totalorder %s7, 2
      // Predicated region
      $region13: #{cnn_forward.8} parent=5 // pred_check
        %p75 = pneg %p74
      $region14: #{cnn_forward.8} parent=5 // pred_check_branch
        %77 = sbr.rel (%p75) target = $region16
      $region15: #{cnn_forward.8} parent=5 // pred_region
        // Predicated region
        $region17: #{cnn_forward.8} parent=15 // pred_check
          %p78 = pneg %p27
        $region18: #{cnn_forward.8} parent=15 // pred_check_branch
          %80 = sbr.rel (%p78) target = $region20
        $region19: #{cnn_forward.8} parent=15 // pred_region
          %s81 = sand.u32 %s17, 1
          %s82 = sand.u32 %s17, 1
          %s83 = smul.addr %s82, 64
          %s84 = scalar_lea.vmem [#allocation2], %s83
          %s85 = smul.u32 4, %s7
          %s86 = smul.addr %s85, 4
          %s87 = scalar_lea.vmem %s0, %s86
          // Predicated region
          $region21: #{cnn_forward.8} parent=19 // pred_check
            _
          $region22: #{cnn_forward.8} parent=19 // pred_check_branch
            %89 = sbr.rel (0) target = $region24
          $region23: #{cnn_forward.8} parent=19 // pred_region
            // Predicated region
            $region25: #{cnn_forward.8} parent=23 // pred_check
              _
            $region26: #{cnn_forward.8} parent=23 // pred_check_branch
              %91 = sbr.rel target = $region28
            $region27: #{cnn_forward.8} parent=23 // pred_region
              // Predicated region
              $region40: #{cnn_forward.8} parent=27 // pred_check
                _
              $region41: #{cnn_forward.8} parent=27 // pred_check_branch
                %137 = sbr.rel (0) target = $region43
              $region42: #{cnn_forward.8} parent=27 // pred_region
                loop: start=0, step=1, limit=1
                $region44: #{cnn_forward.8} parent=42 // loop_pre_header
                  _
                $region45: #{cnn_forward.8} parent=42 // loop_header
                  %s139 = sphi 0, %s143
                  %p140 = scmp.ge.s32.totalorder %s139, 1
                  %s144 = sphi %s87, %s87
                  %s145 = sphi %s84, %s84
                $region46: #{cnn_forward.8} parent=42 // loop_header_branch
                  %142 = sbr.rel (%p140) target = $region50
                $region47: #{cnn_forward.8} parent=42 // loop_body
                  _
                $region48: #{cnn_forward.8} parent=42 // loop_footer
                  %s143 = sadd.s32 1, %s139
                $region49: #{cnn_forward.8} parent=42 // loop_footer_branch
                  %138 = sbr.rel target = $region45
                $region50: #{cnn_forward.8} parent=42 // loop_exit
                  _
                %s147 = ssub.s32 16, 1
                loop: start=0, step=1, limit=1
                $region51: #{cnn_forward.8} parent=42 // loop_pre_header
                  _
                $region52: #{cnn_forward.8} parent=42 // loop_header
                  %s149 = sphi 0, %s153
                  %p150 = scmp.ge.s32.totalorder %s149, 1
                  %s154 = sphi %s87, %s87
                  %s155 = sphi %s84, %s84
                $region53: #{cnn_forward.8} parent=42 // loop_header_branch
                  %152 = sbr.rel (%p150) target = $region57
                $region54: #{cnn_forward.8} parent=42 // loop_body
                  %v156 = vld [vmem:[%s154] sm:%s147]
                  %157 = vst [vmem:[%s155] sm:%s147] %v156
                  %v158 = vld [vmem:[%s154 + $0x4] sm:%s147]
                  %159 = vst [vmem:[%s155 + $0x4] sm:%s147] %v158
                  %v160 = vld [vmem:[%s154 + $0x8] sm:%s147]
                  %161 = vst [vmem:[%s155 + $0x8] sm:%s147] %v160
                  %v162 = vld [vmem:[%s154 + $0xc] sm:%s147]
                  %163 = vst [vmem:[%s155 + $0xc] sm:%s147] %v162
                  %v164 = vld [vmem:[%s154 + $0x20] sm:%s147]
                  %165 = vst [vmem:[%s155 + $0x10] sm:%s147] %v164
                  %v166 = vld [vmem:[%s154 + $0x24] sm:%s147]
                  %167 = vst [vmem:[%s155 + $0x14] sm:%s147] %v166
                  %v168 = vld [vmem:[%s154 + $0x28] sm:%s147]
                  %169 = vst [vmem:[%s155 + $0x18] sm:%s147] %v168
                  %v170 = vld [vmem:[%s154 + $0x2c] sm:%s147]
                  %171 = vst [vmem:[%s155 + $0x1c] sm:%s147] %v170
                  %v172 = vld [vmem:[%s154 + $0x40] sm:%s147]
                  %173 = vst [vmem:[%s155 + $0x20] sm:%s147] %v172
                  %v174 = vld [vmem:[%s154 + $0x44] sm:%s147]
                  %175 = vst [vmem:[%s155 + $0x24] sm:%s147] %v174
                  %v176 = vld [vmem:[%s154 + $0x48] sm:%s147]
                  %177 = vst [vmem:[%s155 + $0x28] sm:%s147] %v176
                  %v178 = vld [vmem:[%s154 + $0x4c] sm:%s147]
                  %179 = vst [vmem:[%s155 + $0x2c] sm:%s147] %v178
                  %v180 = vld [vmem:[%s154 + $0x60] sm:%s147]
                  %181 = vst [vmem:[%s155 + $0x30] sm:%s147] %v180
                  %v182 = vld [vmem:[%s154 + $0x64] sm:%s147]
                  %183 = vst [vmem:[%s155 + $0x34] sm:%s147] %v182
                  %v184 = vld [vmem:[%s154 + $0x68] sm:%s147]
                  %185 = vst [vmem:[%s155 + $0x38] sm:%s147] %v184
                  %v186 = vld [vmem:[%s154 + $0x6c] sm:%s147]
                  %187 = vst [vmem:[%s155 + $0x3c] sm:%s147] %v186
                $region55: #{cnn_forward.8} parent=42 // loop_footer
                  %s153 = sadd.s32 1, %s149
                $region56: #{cnn_forward.8} parent=42 // loop_footer_branch
                  %148 = sbr.rel target = $region52
                $region57: #{cnn_forward.8} parent=42 // loop_exit
                  _
              $region43: #{cnn_forward.8} parent=27 // pred_fallthru
                _
            $region28: #{cnn_forward.8} parent=23 // pred_fallthru
              _
            // Predicated region
            $region29: #{cnn_forward.8} parent=23 // pred_check
              _
            $region30: #{cnn_forward.8} parent=23 // pred_check_branch
              %93 = sbr.rel (0) target = $region32
            $region31: #{cnn_forward.8} parent=23 // pred_region
              %s95 = ssub.s32 16, 1
              loop: start=0, step=1, limit=1
              $region33: #{cnn_forward.8} parent=31 // loop_pre_header
                _
              $region34: #{cnn_forward.8} parent=31 // loop_header
                %s97 = sphi 0, %s101
                %p98 = scmp.ge.s32.totalorder %s97, 1
                %s102 = sphi %s87, %s87
                %s103 = sphi %s84, %s84
              $region35: #{cnn_forward.8} parent=31 // loop_header_branch
                %100 = sbr.rel (%p98) target = $region39
              $region36: #{cnn_forward.8} parent=31 // loop_body
                %v104 = vld [vmem:[%s102] sm:%s95]
                %105 = vst [vmem:[%s103] sm:%s95] %v104
                %v106 = vld [vmem:[%s102 + $0x4] sm:%s95]
                %107 = vst [vmem:[%s103 + $0x4] sm:%s95] %v106
                %v108 = vld [vmem:[%s102 + $0x8] sm:%s95]
                %109 = vst [vmem:[%s103 + $0x8] sm:%s95] %v108
                %v110 = vld [vmem:[%s102 + $0xc] sm:%s95]
                %111 = vst [vmem:[%s103 + $0xc] sm:%s95] %v110
                %v112 = vld [vmem:[%s102 + $0x20] sm:%s95]
                %113 = vst [vmem:[%s103 + $0x10] sm:%s95] %v112
                %v114 = vld [vmem:[%s102 + $0x24] sm:%s95]
                %115 = vst [vmem:[%s103 + $0x14] sm:%s95] %v114
                %v116 = vld [vmem:[%s102 + $0x28] sm:%s95]
                %117 = vst [vmem:[%s103 + $0x18] sm:%s95] %v116
                %v118 = vld [vmem:[%s102 + $0x2c] sm:%s95]
                %119 = vst [vmem:[%s103 + $0x1c] sm:%s95] %v118
                %v120 = vld [vmem:[%s102 + $0x40] sm:%s95]
                %121 = vst [vmem:[%s103 + $0x20] sm:%s95] %v120
                %v122 = vld [vmem:[%s102 + $0x44] sm:%s95]
                %123 = vst [vmem:[%s103 + $0x24] sm:%s95] %v122
                %v124 = vld [vmem:[%s102 + $0x48] sm:%s95]
                %125 = vst [vmem:[%s103 + $0x28] sm:%s95] %v124
                %v126 = vld [vmem:[%s102 + $0x4c] sm:%s95]
                %127 = vst [vmem:[%s103 + $0x2c] sm:%s95] %v126
                %v128 = vld [vmem:[%s102 + $0x60] sm:%s95]
                %129 = vst [vmem:[%s103 + $0x30] sm:%s95] %v128
                %v130 = vld [vmem:[%s102 + $0x64] sm:%s95]
                %131 = vst [vmem:[%s103 + $0x34] sm:%s95] %v130
                %v132 = vld [vmem:[%s102 + $0x68] sm:%s95]
                %133 = vst [vmem:[%s103 + $0x38] sm:%s95] %v132
                %v134 = vld [vmem:[%s102 + $0x6c] sm:%s95]
                %135 = vst [vmem:[%s103 + $0x3c] sm:%s95] %v134
              $region37: #{cnn_forward.8} parent=31 // loop_footer
                %s101 = sadd.s32 1, %s97
              $region38: #{cnn_forward.8} parent=31 // loop_footer_branch
                %96 = sbr.rel target = $region34
              $region39: #{cnn_forward.8} parent=31 // loop_exit
                _
            $region32: #{cnn_forward.8} parent=23 // pred_fallthru
              _
          $region24: #{cnn_forward.8} parent=19 // pred_fallthru
            _
          %188 = vnop
        $region20: #{cnn_forward.8} parent=15 // pred_fallthru
          _
      $region16: #{cnn_forward.8} parent=5 // pred_fallthru
        _
      %p189 = scmp.le.s32.totalorder 1, %s7
      %p190 = scmp.lt.s32.totalorder %s7, 3
      %p191 = pnand %p189, %p190
      %p192 = pneg %p191
      // Predicated region
      $region58: #{cnn_forward.8} parent=5 // pred_check
        _
      $region59: #{cnn_forward.8} parent=5 // pred_check_branch
        %194 = sbr.rel (%p191) target = $region61
      $region60: #{cnn_forward.8} parent=5 // pred_region
        %s195 = ssub.s32 %s7, 1
        %s196 = sand.u32 %s20, 1
        %s197 = sand.u32 %s20, 1
        %s198 = smul.addr %s197, 64
        %s199 = scalar_lea.vmem [#allocation2], %s198
        // Predicated region
        $region62: #{cnn_forward.8} parent=60 // pred_check
          %p200 = pneg %p33
        $region63: #{cnn_forward.8} parent=60 // pred_check_branch
          %202 = sbr.rel (%p200) target = $region65
        $region64: #{cnn_forward.8} parent=60 // pred_region
          _
        $region65: #{cnn_forward.8} parent=60 // pred_fallthru
          _
        %s203 = sand.u32 %s20, 1
        %s204 = sand.u32 %s20, 1
        %s205 = smul.addr %s204, 64
        %s206 = scalar_lea.vmem [#allocation2], %s205
        %p207 = pneg %p33
        %p208 = pneg %p30
        %p209 = pneg %p59
        %p210 = pneg %p56
        %s211 = smul.u32 4, %s12
        %p212 = scmp.lt.s32.totalorder %s211, 7
        %s213 = scalar_select %p212, %s211, 7
        %s214 = smul.addr %s213, 4
        %s215 = scalar_lea.vmem %s1, %s214
        %s216 = smul.u32 4, %s12
        %s217 = smul.u32 4, %s12
        %p218 = scmp.lt.s32.totalorder %s217, 7
        %s219 = scalar_select %p218, %s217, 7
        %s220 = smul.addr %s219, 4
        %s221 = scalar_lea.vmem %s1, %s220
        %s222 = smul.u32 4, %s12
        %v223 = vld [vmem:[%s199] sm:$0xf]
        %v224 = vld [vmem:[%s199 + $0x4] sm:$0xf]
        %v225 = vld [vmem:[%s199 + $0x8] sm:$0xf]
        %v226 = vld [vmem:[%s199 + $0xc] sm:$0xf]
        %v227 = vld [vmem:[%s199 + $0x10] sm:$0xf]
        %v228 = vld [vmem:[%s199 + $0x14] sm:$0xf]
        %v229 = vld [vmem:[%s199 + $0x18] sm:$0xf]
        %v230 = vld [vmem:[%s199 + $0x1c] sm:$0xf]
        %v231 = vld [vmem:[%s199 + $0x20] sm:$0xf]
        %v232 = vld [vmem:[%s199 + $0x24] sm:$0xf]
        %v233 = vld [vmem:[%s199 + $0x28] sm:$0xf]
        %v234 = vld [vmem:[%s199 + $0x2c] sm:$0xf]
        %v235 = vld [vmem:[%s199 + $0x30] sm:$0xf]
        %v236 = vld [vmem:[%s199 + $0x34] sm:$0xf]
        %v237 = vld [vmem:[%s199 + $0x38] sm:$0xf]
        %v238 = vld [vmem:[%s199 + $0x3c] sm:$0xf]
        %v239 = vunpack.c.l.bf16 %v223
        %v240 = vunpack.c.l.bf16 %v224
        %v241 = vunpack.c.l.bf16 %v225
        %v242 = vunpack.c.l.bf16 %v226
        %v243 = vunpack.c.l.bf16 %v227
        %v244 = vunpack.c.l.bf16 %v228
        %v245 = vunpack.c.l.bf16 %v229
        %v246 = vunpack.c.l.bf16 %v230
        %v247 = vunpack.c.l.bf16 %v231
        %v248 = vunpack.c.l.bf16 %v232
        %v249 = vunpack.c.l.bf16 %v233
        %v250 = vunpack.c.l.bf16 %v234
        %v251 = vunpack.c.l.bf16 %v235
        %v252 = vunpack.c.l.bf16 %v236
        %v253 = vunpack.c.l.bf16 %v237
        %v254 = vunpack.c.l.bf16 %v238
        %v255 = vmax.f32 %v239, %v243
        %v256 = vmax.f32 %v255, %v247
        %v257 = vmax.f32 %v256, %v251
        %v258 = vmax.f32 %v240, %v244
        %v259 = vmax.f32 %v258, %v248
        %v260 = vmax.f32 %v259, %v252
        %v261 = vmax.f32 %v241, %v245
        %v262 = vmax.f32 %v261, %v249
        %v263 = vmax.f32 %v262, %v253
        %v264 = vmax.f32 %v242, %v246
        %v265 = vmax.f32 %v264, %v250
        %v266 = vmax.f32 %v265, %v254
        %v267 = vpack.c.bf16 %v257, %v257
        %v268 = vpack.c.bf16 %v260, %v260
        %v269 = vpack.c.bf16 %v263, %v263
        %v270 = vpack.c.bf16 %v266, %v266
        %271 = vst [vmem:[%s221] sm:$0xf] %v267
        %272 = vst [vmem:[%s221 + $0x4] sm:$0xf] %v268
        %273 = vst [vmem:[%s221 + $0x8] sm:$0xf] %v269
        %274 = vst [vmem:[%s221 + $0xc] sm:$0xf] %v270
        %s275 = smul.u32 4, %s12
        %p276 = scmp.lt.s32.totalorder %s275, 7
        %s277 = scalar_select %p276, %s275, 7
        %s278 = smul.addr %s277, 4
        %s279 = scalar_lea.vmem %s1, %s278
        // Predicated region
        $region66: #{cnn_forward.8} parent=60 // pred_check
          %p280 = pneg %p56
        $region67: #{cnn_forward.8} parent=60 // pred_check_branch
          %282 = sbr.rel (%p280) target = $region69
        $region68: #{cnn_forward.8} parent=60 // pred_region
          %s283 = smul.u32 4, %s12
        $region69: #{cnn_forward.8} parent=60 // pred_fallthru
          _
      $region61: #{cnn_forward.8} parent=5 // pred_fallthru
        _
      %p284 = scmp.le.s32.totalorder 2, %s7
      // Predicated region
      $region70: #{cnn_forward.8} parent=5 // pred_check
        %p285 = pneg %p284
      $region71: #{cnn_forward.8} parent=5 // pred_check_branch
        %287 = sbr.rel (%p285) target = $region73
      $region72: #{cnn_forward.8} parent=5 // pred_region
        %s288 = ssub.s32 %s7, 2
        // Predicated region
        $region74: #{cnn_forward.8} parent=72 // pred_check
          %p289 = pneg %p62
        $region75: #{cnn_forward.8} parent=72 // pred_check_branch
          %291 = sbr.rel (%p289) target = $region77
        $region76: #{cnn_forward.8} parent=72 // pred_region
          %s292 = smul.u32 4, %s13
          %p293 = scmp.lt.s32.totalorder %s292, 7
          %s294 = scalar_select %p293, %s292, 7
          %s295 = smul.addr %s294, 4
          %s296 = scalar_lea.vmem %s1, %s295
        $region77: #{cnn_forward.8} parent=72 // pred_fallthru
          _
      $region73: #{cnn_forward.8} parent=5 // pred_fallthru
        _
    $region6: #{cnn_forward.8} parent=1 // loop_footer
      %s11 = sadd.s32 1, %s7
    $region7: #{cnn_forward.8} parent=1 // loop_footer_branch
      %6 = sbr.rel target = $region3
    $region8: #{cnn_forward.8} parent=1 // loop_exit
      _

// kernel: cnn_forward.9
$region0: #{cnn_forward.9}
  #allocation0 [shape = 'u32[]', space=smem, size = 0x4, offset = 0x4, fixed_abs, tag = 'smem constant byte address 0x4 - core index']
  #allocation1 [shape = 'u32[72,128]{1,0:T(1,128)}', space=vmem, size = 0x9000, scoped, tag = 'internal scratch']
  %s0 = inlined_call_operand.vmem [shape: bf16[512,512], index: 0, kind: input, shape index: {}]
  %s1 = inlined_call_operand.vmem [shape: bf16[512,128], index: 1, kind: input, shape index: {}]
  %s2 = inlined_call_operand.vmem [shape: f32[1,128], index: 2, kind: input, shape index: {}]
  %s3 = inlined_call_operand.vmem [shape: bf16[512,128], index: 3, kind: output, shape index: {}]
  %s4 = sld [smem:[#allocation0]]
  $region45: #{cnn_forward.9} parent=0
    _
  %s6 = ssub.s32 1, %s4
  %s7 = scalar_select 0, %s6, %s4
  loop: start=0, step=1, limit=4
  $region2: #{cnn_forward.9} parent=0 // loop_pre_header
    _
  $region3: #{cnn_forward.9} parent=0 // loop_header
    %s9 = sphi 0, %s13
    %p10 = scmp.ge.s32.totalorder %s9, 4
    %s19 = sphi 0, %s21
    %s22 = sphi 0, %s19
    %s23 = sphi 0, %s22
    %s39 = sphi 0, %s23
    %s43 = sphi 0, %s43
    %s45 = sphi 0, %s43
    %s46 = sphi 0, %s45
    %s60 = sphi 0, %s46
    %s64 = sphi 0, %s64
    %s66 = sphi 0, %s64
    %s67 = sphi 0, %s66
    %s81 = sphi 0, %s67
    %s87 = sphi 0, %s89
    %s90 = sphi 0, %s87
    %s91 = sphi 0, %s90
    %s107 = sphi 0, %s91
  $region4: #{cnn_forward.9} parent=0 // loop_header_branch
    %12 = sbr.rel (%p10) target = $region8
  $region5: #{cnn_forward.9} parent=0 // loop_body
    %s14 = ssub.s32 %s9, 1
    %s15 = ssub.s32 %s9, 2
    %s16 = sadd.s32 %s9, 1
    %s17 = ssub.s32 %s9, %s16
    %p18 = scmp.eq.s32.totalorder %s17, 0
    %s20 = sadd.s32 %s19, 1
    %s21 = scalar_select %p18, %s19, %s20
    %p24 = pneg %p18
    %p25 = scmp.eq.s32.totalorder %s9, 1
    %p26 = por %p24, %p25
    %p27 = scmp.ne.s32.totalorder %s19, %s22
    %p28 = scmp.eq.s32.totalorder %s9, 0
    %p29 = por %p27, %p28
    %p30 = scmp.ne.s32.totalorder %s19, %s22
    %p31 = scmp.eq.s32.totalorder %s14, 1
    %p32 = por %p30, %p31
    %p33 = scmp.ne.s32.totalorder %s22, %s23
    %p34 = scmp.eq.s32.totalorder %s14, 0
    %p35 = por %p33, %p34
    %p36 = scmp.ne.s32.totalorder %s22, %s23
    %p37 = scmp.eq.s32.totalorder %s15, 1
    %p38 = por %p36, %p37
    %p40 = scmp.ne.s32.totalorder %s23, %s39
    %p41 = scmp.eq.s32.totalorder %s15, 0
    %p42 = por %p40, %p41
    %s44 = sadd.s32 %s43, 1
    %p47 = scmp.eq.s32.totalorder %s9, 1
    %p48 = scmp.ne.s32.totalorder %s43, %s45
    %p49 = scmp.eq.s32.totalorder %s9, 0
    %p50 = por %p48, %p49
    %p51 = scmp.ne.s32.totalorder %s43, %s45
    %p52 = scmp.eq.s32.totalorder %s14, 1
    %p53 = por %p51, %p52
    %p54 = scmp.ne.s32.totalorder %s45, %s46
    %p55 = scmp.eq.s32.totalorder %s14, 0
    %p56 = por %p54, %p55
    %p57 = scmp.ne.s32.totalorder %s45, %s46
    %p58 = scmp.eq.s32.totalorder %s15, 1
    %p59 = por %p57, %p58
    %p61 = scmp.ne.s32.totalorder %s46, %s60
    %p62 = scmp.eq.s32.totalorder %s15, 0
    %p63 = por %p61, %p62
    %s65 = sadd.s32 %s64, 1
    %p68 = scmp.eq.s32.totalorder %s9, 1
    %p69 = scmp.ne.s32.totalorder %s64, %s66
    %p70 = scmp.eq.s32.totalorder %s9, 0
    %p71 = por %p69, %p70
    %p72 = scmp.ne.s32.totalorder %s64, %s66
    %p73 = scmp.eq.s32.totalorder %s14, 1
    %p74 = por %p72, %p73
    %p75 = scmp.ne.s32.totalorder %s66, %s67
    %p76 = scmp.eq.s32.totalorder %s14, 0
    %p77 = por %p75, %p76
    %p78 = scmp.ne.s32.totalorder %s66, %s67
    %p79 = scmp.eq.s32.totalorder %s15, 1
    %p80 = por %p78, %p79
    %p82 = scmp.ne.s32.totalorder %s67, %s81
    %p83 = scmp.eq.s32.totalorder %s15, 0
    %p84 = por %p82, %p83
    %s85 = ssub.s32 %s9, %s16
    %p86 = scmp.eq.s32.totalorder %s85, 0
    %s88 = sadd.s32 %s87, 1
    %s89 = scalar_select %p86, %s87, %s88
    %p92 = pneg %p86
    %p93 = scmp.eq.s32.totalorder %s9, 1
    %p94 = por %p92, %p93
    %p95 = scmp.ne.s32.totalorder %s87, %s90
    %p96 = scmp.eq.s32.totalorder %s9, 0
    %p97 = por %p95, %p96
    %p98 = scmp.ne.s32.totalorder %s87, %s90
    %p99 = scmp.eq.s32.totalorder %s14, 1
    %p100 = por %p98, %p99
    %p101 = scmp.ne.s32.totalorder %s90, %s91
    %p102 = scmp.eq.s32.totalorder %s14, 0
    %p103 = por %p101, %p102
    %p104 = scmp.ne.s32.totalorder %s90, %s91
    %p105 = scmp.eq.s32.totalorder %s15, 1
    %p106 = por %p104, %p105
    %p108 = scmp.ne.s32.totalorder %s91, %s107
    %p109 = scmp.eq.s32.totalorder %s15, 0
    %p110 = por %p108, %p109
    %p111 = scmp.le.s32.totalorder 1, %s9
    %p112 = scmp.lt.s32.totalorder %s9, 3
    %p113 = pnand %p111, %p112
    %p114 = pneg %p113
    // Predicated region
    $region9: #{cnn_forward.9} parent=5 // pred_check
      _
    $region10: #{cnn_forward.9} parent=5 // pred_check_branch
      %116 = sbr.rel (%p113) target = $region12
    $region11: #{cnn_forward.9} parent=5 // pred_region
      %s117 = ssub.s32 %s9, 1
      // Predicated region
      $region13: #{cnn_forward.9} parent=11 // pred_check
        %p118 = pneg %p56
      $region14: #{cnn_forward.9} parent=11 // pred_check_branch
        %120 = sbr.rel (%p118) target = $region16
      $region15: #{cnn_forward.9} parent=11 // pred_region
        _
      $region16: #{cnn_forward.9} parent=11 // pred_fallthru
        _
      // Predicated region
      $region17: #{cnn_forward.9} parent=11 // pred_check
        %p121 = pneg %p77
      $region18: #{cnn_forward.9} parent=11 // pred_check_branch
        %123 = sbr.rel (%p121) target = $region20
      $region19: #{cnn_forward.9} parent=11 // pred_region
        _
      $region20: #{cnn_forward.9} parent=11 // pred_fallthru
        _
    $region12: #{cnn_forward.9} parent=5 // pred_fallthru
      _
    %p124 = scmp.lt.s32.totalorder %s9, 2
    // Predicated region
    $region21: #{cnn_forward.9} parent=5 // pred_check
      %p125 = pneg %p124
    $region22: #{cnn_forward.9} parent=5 // pred_check_branch
      %127 = sbr.rel (%p125) target = $region24
    $region23: #{cnn_forward.9} parent=5 // pred_region
      // Predicated region
      $region25: #{cnn_forward.9} parent=23 // pred_check
        %p128 = pneg %p29
      $region26: #{cnn_forward.9} parent=23 // pred_check_branch
        %130 = sbr.rel (%p128) target = $region28
      $region27: #{cnn_forward.9} parent=23 // pred_region
        %s131 = smul.u32 32, %s9
        %p132 = scmp.lt.s32.totalorder %s131, 63
        %s133 = scalar_select %p132, %s131, 63
        %s134 = smul.addr %s133, 4
        %s135 = smul.addr %s134, 4
        %s136 = scalar_lea.vmem %s0, %s135
        %s137 = smul.u32 32, %s9
      $region28: #{cnn_forward.9} parent=23 // pred_fallthru
        _
    $region24: #{cnn_forward.9} parent=5 // pred_fallthru
      _
    %p138 = scmp.le.s32.totalorder 1, %s9
    %p139 = scmp.lt.s32.totalorder %s9, 3
    %p140 = pnand %p138, %p139
    %p141 = pneg %p140
    // Predicated region
    $region29: #{cnn_forward.9} parent=5 // pred_check
      _
    $region30: #{cnn_forward.9} parent=5 // pred_check_branch
      %143 = sbr.rel (%p140) target = $region32
    $region31: #{cnn_forward.9} parent=5 // pred_region
      %s144 = ssub.s32 %s9, 1
      %s145 = smul.u32 32, %s14
      %p146 = scmp.lt.s32.totalorder %s145, 63
      %s147 = scalar_select %p146, %s145, 63
      %s148 = smul.addr %s147, 4
      %s149 = smul.addr %s148, 4
      %s150 = scalar_lea.vmem %s0, %s149
      %p151 = pneg %p35
      %p152 = pneg %p32
      %p153 = pneg %p56
      %p154 = pneg %p53
      %p155 = pneg %p77
      %p156 = pneg %p74
      %p157 = pneg %p103
      %p158 = pneg %p100
      %s159 = smul.u32 32, %s14
      %p160 = scmp.lt.s32.totalorder %s159, 63
      %s161 = scalar_select %p160, %s159, 63
      %s162 = smul.addr %s161, 4
      %s163 = scalar_lea.vmem %s3, %s162
      %s164 = smul.u32 32, %s14
      %p165 = scmp.lt.s32.totalorder %s164, 63
      %s166 = scalar_select %p165, %s164, 63
      %s167 = smul.addr %s166, 4
      %s168 = smul.addr %s167, 4
      %s169 = scalar_lea.vmem %s0, %s168
      %s170 = smul.u32 32, %s14
      %s171 = smul.u32 32, %s14
      %p172 = scmp.lt.s32.totalorder %s171, 63
      %s173 = scalar_select %p172, %s171, 63
      %s174 = smul.addr %s173, 4
      %s175 = scalar_lea.vmem %s3, %s174
      %s176 = smul.u32 32, %s14
      %v177 = vld [vmem:[%s169] sm:$0xff]
      %v178 = vld [vmem:[%s169 + $0x8] sm:$0xff]
      %v179 = vld [vmem:[%s169 + $0x10] sm:$0xff]
      %v180 = vld [vmem:[%s169 + $0x18] sm:$0xff]
      %v181 = vld [vmem:[%s169 + $0x20] sm:$0xff]
      %v182 = vld [vmem:[%s169 + $0x28] sm:$0xff]
      %v183 = vld [vmem:[%s169 + $0x30] sm:$0xff]
      %v184 = vld [vmem:[%s169 + $0x38] sm:$0xff]
      %v185 = vld [vmem:[%s169 + $0x40] sm:$0xff]
      %v186 = vld [vmem:[%s169 + $0x48] sm:$0xff]
      %v187 = vld [vmem:[%s169 + $0x50] sm:$0xff]
      %v188 = vld [vmem:[%s169 + $0x58] sm:$0xff]
      %v189 = vld [vmem:[%s169 + $0x60] sm:$0xff]
      %v190 = vld [vmem:[%s169 + $0x68] sm:$0xff]
      %v191 = vld [vmem:[%s169 + $0x70] sm:$0xff]
      %v192 = vld [vmem:[%s169 + $0x78] sm:$0xff]
      %v193 = vld [vmem:[%s169 + $0x80] sm:$0xff]
      %v194 = vld [vmem:[%s169 + $0x88] sm:$0xff]
      %v195 = vld [vmem:[%s169 + $0x90] sm:$0xff]
      %v196 = vld [vmem:[%s169 + $0x98] sm:$0xff]
      %v197 = vld [vmem:[%s169 + $0xa0] sm:$0xff]
      %v198 = vld [vmem:[%s169 + $0xa8] sm:$0xff]
      %v199 = vld [vmem:[%s169 + $0xb0] sm:$0xff]
      %v200 = vld [vmem:[%s169 + $0xb8] sm:$0xff]
      %v201 = vld [vmem:[%s169 + $0xc0] sm:$0xff]
      %v202 = vld [vmem:[%s169 + $0xc8] sm:$0xff]
      %v203 = vld [vmem:[%s169 + $0xd0] sm:$0xff]
      %v204 = vld [vmem:[%s169 + $0xd8] sm:$0xff]
      %v205 = vld [vmem:[%s169 + $0xe0] sm:$0xff]
      %v206 = vld [vmem:[%s169 + $0xe8] sm:$0xff]
      %v207 = vld [vmem:[%s169 + $0xf0] sm:$0xff]
      %v208 = vld [vmem:[%s169 + $0xf8] sm:$0xff]
      %v209 = vld [vmem:[%s169 + $0x100] sm:$0xff]
      %v210 = vld [vmem:[%s169 + $0x108] sm:$0xff]
      %v211 = vld [vmem:[%s169 + $0x110] sm:$0xff]
      %v212 = vld [vmem:[%s169 + $0x118] sm:$0xff]
      %v213 = vld [vmem:[%s169 + $0x120] sm:$0xff]
      %v214 = vld [vmem:[%s169 + $0x128] sm:$0xff]
      %v215 = vld [vmem:[%s169 + $0x130] sm:$0xff]
      %v216 = vld [vmem:[%s169 + $0x138] sm:$0xff]
      %v217 = vld [vmem:[%s169 + $0x140] sm:$0xff]
      %v218 = vld [vmem:[%s169 + $0x148] sm:$0xff]
      %v219 = vld [vmem:[%s169 + $0x150] sm:$0xff]
      %v220 = vld [vmem:[%s169 + $0x158] sm:$0xff]
      %v221 = vld [vmem:[%s169 + $0x160] sm:$0xff]
      %v222 = vld [vmem:[%s169 + $0x168] sm:$0xff]
      %v223 = vld [vmem:[%s169 + $0x170] sm:$0xff]
      %v224 = vld [vmem:[%s169 + $0x178] sm:$0xff]
      %v225 = vld [vmem:[%s169 + $0x180] sm:$0xff]
      %v226 = vld [vmem:[%s169 + $0x188] sm:$0xff]
      %v227 = vld [vmem:[%s169 + $0x190] sm:$0xff]
      %v228 = vld [vmem:[%s169 + $0x198] sm:$0xff]
      %v229 = vld [vmem:[%s169 + $0x1a0] sm:$0xff]
      %v230 = vld [vmem:[%s169 + $0x1a8] sm:$0xff]
      %v231 = vld [vmem:[%s169 + $0x1b0] sm:$0xff]
      %v232 = vld [vmem:[%s169 + $0x1b8] sm:$0xff]
      %v233 = vld [vmem:[%s169 + $0x1c0] sm:$0xff]
      %v234 = vld [vmem:[%s169 + $0x1c8] sm:$0xff]
      %v235 = vld [vmem:[%s169 + $0x1d0] sm:$0xff]
      %v236 = vld [vmem:[%s169 + $0x1d8] sm:$0xff]
      %v237 = vld [vmem:[%s169 + $0x1e0] sm:$0xff]
      %v238 = vld [vmem:[%s169 + $0x1e8] sm:$0xff]
      %v239 = vld [vmem:[%s169 + $0x1f0] sm:$0xff]
      %v240 = vld [vmem:[%s169 + $0x1f8] sm:$0xff]
      %v241 = vld [vmem:[%s1] sm:$0xf]
      %v242 = vld [vmem:[%s1 + $0x4] sm:$0xf]
      %v243 = vld [vmem:[%s1 + $0x8] sm:$0xf]
      %v244 = vld [vmem:[%s1 + $0xc] sm:$0xf]
      %v245 = vld [vmem:[%s1 + $0x10] sm:$0xf]
      %v246 = vld [vmem:[%s1 + $0x14] sm:$0xf]
      %v247 = vld [vmem:[%s1 + $0x18] sm:$0xf]
      %v248 = vld [vmem:[%s1 + $0x1c] sm:$0xf]
      %v249 = vld [vmem:[%s1 + $0x20] sm:$0xf]
      %v250 = vld [vmem:[%s1 + $0x24] sm:$0xf]
      %v251 = vld [vmem:[%s1 + $0x28] sm:$0xf]
      %v252 = vld [vmem:[%s1 + $0x2c] sm:$0xf]
      %v253 = vld [vmem:[%s1 + $0x30] sm:$0xf]
      %v254 = vld [vmem:[%s1 + $0x34] sm:$0xf]
      %v255 = vld [vmem:[%s1 + $0x38] sm:$0xf]
      %v256 = vld [vmem:[%s1 + $0x3c] sm:$0xf]
      %v257 = vld [vmem:[%s1 + $0x40] sm:$0xf]
      %v258 = vld [vmem:[%s1 + $0x44] sm:$0xf]
      %v259 = vld [vmem:[%s1 + $0x48] sm:$0xf]
      %v260 = vld [vmem:[%s1 + $0x4c] sm:$0xf]
      %v261 = vld [vmem:[%s1 + $0x50] sm:$0xf]
      %v262 = vld [vmem:[%s1 + $0x54] sm:$0xf]
      %v263 = vld [vmem:[%s1 + $0x58] sm:$0xf]
      %v264 = vld [vmem:[%s1 + $0x5c] sm:$0xf]
      %v265 = vld [vmem:[%s1 + $0x60] sm:$0xf]
      %v266 = vld [vmem:[%s1 + $0x64] sm:$0xf]
      %v267 = vld [vmem:[%s1 + $0x68] sm:$0xf]
      %v268 = vld [vmem:[%s1 + $0x6c] sm:$0xf]
      %v269 = vld [vmem:[%s1 + $0x70] sm:$0xf]
      %v270 = vld [vmem:[%s1 + $0x74] sm:$0xf]
      %v271 = vld [vmem:[%s1 + $0x78] sm:$0xf]
      %v272 = vld [vmem:[%s1 + $0x7c] sm:$0xf]
      %v273 = vld [vmem:[%s1 + $0x80] sm:$0xf]
      %v274 = vld [vmem:[%s1 + $0x84] sm:$0xf]
      %v275 = vld [vmem:[%s1 + $0x88] sm:$0xf]
      %v276 = vld [vmem:[%s1 + $0x8c] sm:$0xf]
      %v277 = vld [vmem:[%s1 + $0x90] sm:$0xf]
      %v278 = vld [vmem:[%s1 + $0x94] sm:$0xf]
      %v279 = vld [vmem:[%s1 + $0x98] sm:$0xf]
      %v280 = vld [vmem:[%s1 + $0x9c] sm:$0xf]
      %v281 = vld [vmem:[%s1 + $0xa0] sm:$0xf]
      %v282 = vld [vmem:[%s1 + $0xa4] sm:$0xf]
      %v283 = vld [vmem:[%s1 + $0xa8] sm:$0xf]
      %v284 = vld [vmem:[%s1 + $0xac] sm:$0xf]
      %v285 = vld [vmem:[%s1 + $0xb0] sm:$0xf]
      %v286 = vld [vmem:[%s1 + $0xb4] sm:$0xf]
      %v287 = vld [vmem:[%s1 + $0xb8] sm:$0xf]
      %v288 = vld [vmem:[%s1 + $0xbc] sm:$0xf]
      %v289 = vld [vmem:[%s1 + $0xc0] sm:$0xf]
      %v290 = vld [vmem:[%s1 + $0xc4] sm:$0xf]
      %v291 = vld [vmem:[%s1 + $0xc8] sm:$0xf]
      %v292 = vld [vmem:[%s1 + $0xcc] sm:$0xf]
      %v293 = vld [vmem:[%s1 + $0xd0] sm:$0xf]
      %v294 = vld [vmem:[%s1 + $0xd4] sm:$0xf]
      %v295 = vld [vmem:[%s1 + $0xd8] sm:$0xf]
      %v296 = vld [vmem:[%s1 + $0xdc] sm:$0xf]
      %v297 = vld [vmem:[%s1 + $0xe0] sm:$0xf]
      %v298 = vld [vmem:[%s1 + $0xe4] sm:$0xf]
      %v299 = vld [vmem:[%s1 + $0xe8] sm:$0xf]
      %v300 = vld [vmem:[%s1 + $0xec] sm:$0xf]
      %v301 = vld [vmem:[%s1 + $0xf0] sm:$0xf]
      %v302 = vld [vmem:[%s1 + $0xf4] sm:$0xf]
      %v303 = vld [vmem:[%s1 + $0xf8] sm:$0xf]
      %v304 = vld [vmem:[%s1 + $0xfc] sm:$0xf]
      %v305 = vld [vmem:[%s2] sm:$0x1]
      %v307 = vperm.slane %v305, 0
      %v373 = vunpack.c.l.b16 %v177
      %v374 = vunpack.c.h.b16 %v177
      %v375 = vunpack.c.l.b16 %v178
      %v376 = vunpack.c.h.b16 %v178
      %v377 = vunpack.c.l.b16 %v179
      %v378 = vunpack.c.h.b16 %v179
      %v379 = vunpack.c.l.b16 %v180
      %v380 = vunpack.c.h.b16 %v180
      %v381 = vunpack.c.l.b16 %v181
      %v382 = vunpack.c.h.b16 %v181
      %v383 = vunpack.c.l.b16 %v182
      %v384 = vunpack.c.h.b16 %v182
      %v385 = vunpack.c.l.b16 %v183
      %v386 = vunpack.c.h.b16 %v183
      %v387 = vunpack.c.l.b16 %v184
      %v388 = vunpack.c.h.b16 %v184
      %v389 = vunpack.c.l.b16 %v185
      %v390 = vunpack.c.h.b16 %v185
      %v391 = vunpack.c.l.b16 %v186
      %v392 = vunpack.c.h.b16 %v186
      %v393 = vunpack.c.l.b16 %v187
      %v394 = vunpack.c.h.b16 %v187
      %v395 = vunpack.c.l.b16 %v188
      %v396 = vunpack.c.h.b16 %v188
      %v397 = vunpack.c.l.b16 %v189
      %v398 = vunpack.c.h.b16 %v189
      %v399 = vunpack.c.l.b16 %v190
      %v400 = vunpack.c.h.b16 %v190
      %v401 = vunpack.c.l.b16 %v191
      %v402 = vunpack.c.h.b16 %v191
      %v403 = vunpack.c.l.b16 %v192
      %v404 = vunpack.c.h.b16 %v192
      %v405 = vunpack.c.l.b16 %v193
      %v406 = vunpack.c.h.b16 %v193
      %v407 = vunpack.c.l.b16 %v194
      %v408 = vunpack.c.h.b16 %v194
      %v409 = vunpack.c.l.b16 %v195
      %v410 = vunpack.c.h.b16 %v195
      %v411 = vunpack.c.l.b16 %v196
      %v412 = vunpack.c.h.b16 %v196
      %v413 = vunpack.c.l.b16 %v197
      %v414 = vunpack.c.h.b16 %v197
      %v415 = vunpack.c.l.b16 %v198
      %v416 = vunpack.c.h.b16 %v198
      %v417 = vunpack.c.l.b16 %v199
      %v418 = vunpack.c.h.b16 %v199
      %v419 = vunpack.c.l.b16 %v200
      %v420 = vunpack.c.h.b16 %v200
      %v421 = vunpack.c.l.b16 %v201
      %v422 = vunpack.c.h.b16 %v201
      %v423 = vunpack.c.l.b16 %v202
      %v424 = vunpack.c.h.b16 %v202
      %v425 = vunpack.c.l.b16 %v203
      %v426 = vunpack.c.h.b16 %v203
      %v427 = vunpack.c.l.b16 %v204
      %v428 = vunpack.c.h.b16 %v204
      %v429 = vunpack.c.l.b16 %v205
      %v430 = vunpack.c.h.b16 %v205
      %v431 = vunpack.c.l.b16 %v206
      %v432 = vunpack.c.h.b16 %v206
      %v433 = vunpack.c.l.b16 %v207
      %v434 = vunpack.c.h.b16 %v207
      %v435 = vunpack.c.l.b16 %v208
      %v436 = vunpack.c.h.b16 %v208
      %v437 = vunpack.c.l.b16 %v209
      %v438 = vunpack.c.h.b16 %v209
      %v439 = vunpack.c.l.b16 %v210
      %v440 = vunpack.c.h.b16 %v210
      %v441 = vunpack.c.l.b16 %v211
      %v442 = vunpack.c.h.b16 %v211
      %v443 = vunpack.c.l.b16 %v212
      %v444 = vunpack.c.h.b16 %v212
      %v445 = vunpack.c.l.b16 %v213
      %v446 = vunpack.c.h.b16 %v213
      %v447 = vunpack.c.l.b16 %v214
      %v448 = vunpack.c.h.b16 %v214
      %v449 = vunpack.c.l.b16 %v215
      %v450 = vunpack.c.h.b16 %v215
      %v451 = vunpack.c.l.b16 %v216
      %v452 = vunpack.c.h.b16 %v216
      %v453 = vunpack.c.l.b16 %v217
      %v454 = vunpack.c.h.b16 %v217
      %v455 = vunpack.c.l.b16 %v218
      %v456 = vunpack.c.h.b16 %v218
      %v457 = vunpack.c.l.b16 %v219
      %v458 = vunpack.c.h.b16 %v219
      %v459 = vunpack.c.l.b16 %v220
      %v460 = vunpack.c.h.b16 %v220
      %v461 = vunpack.c.l.b16 %v221
      %v462 = vunpack.c.h.b16 %v221
      %v463 = vunpack.c.l.b16 %v222
      %v464 = vunpack.c.h.b16 %v222
      %v465 = vunpack.c.l.b16 %v223
      %v466 = vunpack.c.h.b16 %v223
      %v467 = vunpack.c.l.b16 %v224
      %v468 = vunpack.c.h.b16 %v224
      %v469 = vunpack.c.l.b16 %v225
      %v470 = vunpack.c.h.b16 %v225
      %v471 = vunpack.c.l.b16 %v226
      %v472 = vunpack.c.h.b16 %v226
      %v473 = vunpack.c.l.b16 %v227
      %v474 = vunpack.c.h.b16 %v227
      %v475 = vunpack.c.l.b16 %v228
      %v476 = vunpack.c.h.b16 %v228
      %v477 = vunpack.c.l.b16 %v229
      %v478 = vunpack.c.h.b16 %v229
      %v479 = vunpack.c.l.b16 %v230
      %v480 = vunpack.c.h.b16 %v230
      %v481 = vunpack.c.l.b16 %v231
      %v482 = vunpack.c.h.b16 %v231
      %v483 = vunpack.c.l.b16 %v232
      %v484 = vunpack.c.h.b16 %v232
      %v485 = vunpack.c.l.b16 %v233
      %v486 = vunpack.c.h.b16 %v233
      %v487 = vunpack.c.l.b16 %v234
      %v488 = vunpack.c.h.b16 %v234
      %v489 = vunpack.c.l.b16 %v235
      %v490 = vunpack.c.h.b16 %v235
      %v491 = vunpack.c.l.b16 %v236
      %v492 = vunpack.c.h.b16 %v236
      %v493 = vunpack.c.l.b16 %v237
      %v494 = vunpack.c.h.b16 %v237
      %v495 = vunpack.c.l.b16 %v238
      %v496 = vunpack.c.h.b16 %v238
      %v497 = vunpack.c.l.b16 %v239
      %v498 = vunpack.c.h.b16 %v239
      %v499 = vunpack.c.l.b16 %v240
      %v500 = vunpack.c.h.b16 %v240
      %v501 = vpack.c.b16 %v377, %v373
      %v502 = vpack.c.b16 %v378, %v374
      %v503 = vpack.c.b16 %v379, %v375
      %v504 = vpack.c.b16 %v380, %v376
      %v505 = vpack.c.b16 %v385, %v381
      %v506 = vpack.c.b16 %v386, %v382
      %v507 = vpack.c.b16 %v387, %v383
      %v508 = vpack.c.b16 %v388, %v384
      %v509 = vpack.c.b16 %v393, %v389
      %v510 = vpack.c.b16 %v394, %v390
      %v511 = vpack.c.b16 %v395, %v391
      %v512 = vpack.c.b16 %v396, %v392
      %v513 = vpack.c.b16 %v401, %v397
      %v514 = vpack.c.b16 %v402, %v398
      %v515 = vpack.c.b16 %v403, %v399
      %v516 = vpack.c.b16 %v404, %v400
      %v517 = vpack.c.b16 %v409, %v405
      %v518 = vpack.c.b16 %v410, %v406
      %v519 = vpack.c.b16 %v411, %v407
      %v520 = vpack.c.b16 %v412, %v408
      %v521 = vpack.c.b16 %v417, %v413
      %v522 = vpack.c.b16 %v418, %v414
      %v523 = vpack.c.b16 %v419, %v415
      %v524 = vpack.c.b16 %v420, %v416
      %v525 = vpack.c.b16 %v425, %v421
      %v526 = vpack.c.b16 %v426, %v422
      %v527 = vpack.c.b16 %v427, %v423
      %v528 = vpack.c.b16 %v428, %v424
      %v529 = vpack.c.b16 %v433, %v429
      %v530 = vpack.c.b16 %v434, %v430
      %v531 = vpack.c.b16 %v435, %v431
      %v532 = vpack.c.b16 %v436, %v432
      %v533 = vpack.c.b16 %v441, %v437
      %v534 = vpack.c.b16 %v442, %v438
      %v535 = vpack.c.b16 %v443, %v439
      %v536 = vpack.c.b16 %v444, %v440
      %v537 = vpack.c.b16 %v449, %v445
      %v538 = vpack.c.b16 %v450, %v446
      %v539 = vpack.c.b16 %v451, %v447
      %v540 = vpack.c.b16 %v452, %v448
      %v541 = vpack.c.b16 %v457, %v453
      %v542 = vpack.c.b16 %v458, %v454
      %v543 = vpack.c.b16 %v459, %v455
      %v544 = vpack.c.b16 %v460, %v456
      %v545 = vpack.c.b16 %v465, %v461
      %v546 = vpack.c.b16 %v466, %v462
      %v547 = vpack.c.b16 %v467, %v463
      %v548 = vpack.c.b16 %v468, %v464
      %v549 = vpack.c.b16 %v473, %v469
      %v550 = vpack.c.b16 %v474, %v470
      %v551 = vpack.c.b16 %v475, %v471
      %v552 = vpack.c.b16 %v476, %v472
      %v553 = vpack.c.b16 %v481, %v477
      %v554 = vpack.c.b16 %v482, %v478
      %v555 = vpack.c.b16 %v483, %v479
      %v556 = vpack.c.b16 %v484, %v480
      %v557 = vpack.c.b16 %v489, %v485
      %v558 = vpack.c.b16 %v490, %v486
      %v559 = vpack.c.b16 %v491, %v487
      %v560 = vpack.c.b16 %v492, %v488
      %v561 = vpack.c.b16 %v497, %v493
      %v562 = vpack.c.b16 %v498, %v494
      %v563 = vpack.c.b16 %v499, %v495
      %v564 = vpack.c.b16 %v500, %v496
      %v693 = vunpack.c.l.b16 %v241
      %v694 = vunpack.c.l.b16 %v242
      %v695 = vunpack.c.l.b16 %v243
      %v696 = vunpack.c.l.b16 %v244
      %v697 = vunpack.c.l.b16 %v245
      %v698 = vunpack.c.l.b16 %v246
      %v699 = vunpack.c.l.b16 %v247
      %v700 = vunpack.c.l.b16 %v248
      %v701 = vunpack.c.l.b16 %v249
      %v702 = vunpack.c.l.b16 %v250
      %v703 = vunpack.c.l.b16 %v251
      %v704 = vunpack.c.l.b16 %v252
      %v705 = vunpack.c.l.b16 %v253
      %v706 = vunpack.c.l.b16 %v254
      %v707 = vunpack.c.l.b16 %v255
      %v708 = vunpack.c.l.b16 %v256
      %v709 = vunpack.c.l.b16 %v257
      %v710 = vunpack.c.l.b16 %v258
      %v711 = vunpack.c.l.b16 %v259
      %v712 = vunpack.c.l.b16 %v260
      %v713 = vunpack.c.l.b16 %v261
      %v714 = vunpack.c.l.b16 %v262
      %v715 = vunpack.c.l.b16 %v263
      %v716 = vunpack.c.l.b16 %v264
      %v717 = vunpack.c.l.b16 %v265
      %v718 = vunpack.c.l.b16 %v266
      %v719 = vunpack.c.l.b16 %v267
      %v720 = vunpack.c.l.b16 %v268
      %v721 = vunpack.c.l.b16 %v269
      %v722 = vunpack.c.l.b16 %v270
      %v723 = vunpack.c.l.b16 %v271
      %v724 = vunpack.c.l.b16 %v272
      %v725 = vunpack.c.l.b16 %v273
      %v726 = vunpack.c.l.b16 %v274
      %v727 = vunpack.c.l.b16 %v275
      %v728 = vunpack.c.l.b16 %v276
      %v729 = vunpack.c.l.b16 %v277
      %v730 = vunpack.c.l.b16 %v278
      %v731 = vunpack.c.l.b16 %v279
      %v732 = vunpack.c.l.b16 %v280
      %v733 = vunpack.c.l.b16 %v281
      %v734 = vunpack.c.l.b16 %v282
      %v735 = vunpack.c.l.b16 %v283
      %v736 = vunpack.c.l.b16 %v284
      %v737 = vunpack.c.l.b16 %v285
      %v738 = vunpack.c.l.b16 %v286
      %v739 = vunpack.c.l.b16 %v287
      %v740 = vunpack.c.l.b16 %v288
      %v741 = vunpack.c.l.b16 %v289
      %v742 = vunpack.c.l.b16 %v290
      %v743 = vunpack.c.l.b16 %v291
      %v744 = vunpack.c.l.b16 %v292
      %v745 = vunpack.c.l.b16 %v293
      %v746 = vunpack.c.l.b16 %v294
      %v747 = vunpack.c.l.b16 %v295
      %v748 = vunpack.c.l.b16 %v296
      %v749 = vunpack.c.l.b16 %v297
      %v750 = vunpack.c.l.b16 %v298
      %v751 = vunpack.c.l.b16 %v299
      %v752 = vunpack.c.l.b16 %v300
      %v753 = vunpack.c.l.b16 %v301
      %v754 = vunpack.c.l.b16 %v302
      %v755 = vunpack.c.l.b16 %v303
      %v756 = vunpack.c.l.b16 %v304
      %v757 = vpack.c.b16 %v694, %v693
      %v758 = vpack.c.b16 %v696, %v695
      %v759 = vpack.c.b16 %v698, %v697
      %v760 = vpack.c.b16 %v700, %v699
      %v761 = vpack.c.b16 %v702, %v701
      %v762 = vpack.c.b16 %v704, %v703
      %v763 = vpack.c.b16 %v706, %v705
      %v764 = vpack.c.b16 %v708, %v707
      %v765 = vpack.c.b16 %v710, %v709
      %v766 = vpack.c.b16 %v712, %v711
      %v767 = vpack.c.b16 %v714, %v713
      %v768 = vpack.c.b16 %v716, %v715
      %v769 = vpack.c.b16 %v718, %v717
      %v770 = vpack.c.b16 %v720, %v719
      %v771 = vpack.c.b16 %v722, %v721
      %v772 = vpack.c.b16 %v724, %v723
      %v773 = vpack.c.b16 %v726, %v725
      %v774 = vpack.c.b16 %v728, %v727
      %v775 = vpack.c.b16 %v730, %v729
      %v776 = vpack.c.b16 %v732, %v731
      %v777 = vpack.c.b16 %v734, %v733
      %v778 = vpack.c.b16 %v736, %v735
      %v779 = vpack.c.b16 %v738, %v737
      %v780 = vpack.c.b16 %v740, %v739
      %v781 = vpack.c.b16 %v742, %v741
      %v782 = vpack.c.b16 %v744, %v743
      %v783 = vpack.c.b16 %v746, %v745
      %v784 = vpack.c.b16 %v748, %v747
      %v785 = vpack.c.b16 %v750, %v749
      %v786 = vpack.c.b16 %v752, %v751
      %v787 = vpack.c.b16 %v754, %v753
      %v788 = vpack.c.b16 %v756, %v755
      %821 = vmatpush.bf16.msra.mxu0 %v764
      %822 = vmatpush.bf16.msra.mxu0 %v763
      %823 = vmatpush.bf16.msra.mxu0 %v762
      %824 = vmatpush.bf16.msra.mxu0 %v761
      %825 = vmatpush.bf16.msra.mxu0 %v760
      %826 = vmatpush.bf16.msra.mxu0 %v759
      %827 = vmatpush.bf16.msra.mxu0 %v758
      %828 = vmatpush.bf16.msra.mxu0 %v757
      %829 = vmatmul.bf16.gmra.mxu0 %v501
      %v830 = vpop.f32.mrf.mxu0
      %v831 = vadd.f32 %v307, %v830
      %v832 = vpop.f32.mrf.mxu0
      %v833 = vadd.f32 %v307, %v832
      %834 = vmatmul.bf16.gmra.mxu0 %v505
      %v835 = vpop.f32.mrf.mxu0
      %v836 = vadd.f32 %v307, %v835
      %v837 = vpop.f32.mrf.mxu0
      %v838 = vadd.f32 %v307, %v837
      %839 = vmatmul.bf16.gmra.mxu0 %v509
      %v840 = vpop.f32.mrf.mxu0
      %v841 = vadd.f32 %v307, %v840
      %v842 = vpop.f32.mrf.mxu0
      %v843 = vadd.f32 %v307, %v842
      %844 = vmatmul.bf16.gmra.mxu0 %v513
      %v845 = vpop.f32.mrf.mxu0
      %v846 = vadd.f32 %v307, %v845
      %v847 = vpop.f32.mrf.mxu0
      %v848 = vadd.f32 %v307, %v847
      %849 = vmatmul.bf16.gmra.mxu0 %v517
      %v850 = vpop.f32.mrf.mxu0
      %v851 = vadd.f32 %v307, %v850
      %v852 = vpop.f32.mrf.mxu0
      %v853 = vadd.f32 %v307, %v852
      %854 = vmatmul.bf16.gmra.mxu0 %v521
      %v855 = vpop.f32.mrf.mxu0
      %v856 = vadd.f32 %v307, %v855
      %v857 = vpop.f32.mrf.mxu0
      %v858 = vadd.f32 %v307, %v857
      %859 = vmatmul.bf16.gmra.mxu0 %v525
      %v860 = vpop.f32.mrf.mxu0
      %v861 = vadd.f32 %v307, %v860
      %v862 = vpop.f32.mrf.mxu0
      %v863 = vadd.f32 %v307, %v862
      %864 = vmatmul.bf16.gmra.mxu0 %v529
      %v865 = vpop.f32.mrf.mxu0
      %v866 = vadd.f32 %v307, %v865
      %v867 = vpop.f32.mrf.mxu0
      %v868 = vadd.f32 %v307, %v867
      %869 = vmatmul.bf16.gmra.mxu0 %v533
      %v870 = vpop.f32.mrf.mxu0
      %v871 = vadd.f32 %v307, %v870
      %v872 = vpop.f32.mrf.mxu0
      %v873 = vadd.f32 %v307, %v872
      %874 = vmatmul.bf16.gmra.mxu0 %v537
      %v875 = vpop.f32.mrf.mxu0
      %v876 = vadd.f32 %v307, %v875
      %v877 = vpop.f32.mrf.mxu0
      %v878 = vadd.f32 %v307, %v877
      %879 = vmatmul.bf16.gmra.mxu0 %v541
      %v880 = vpop.f32.mrf.mxu0
      %v881 = vadd.f32 %v307, %v880
      %v882 = vpop.f32.mrf.mxu0
      %v883 = vadd.f32 %v307, %v882
      %884 = vmatmul.bf16.gmra.mxu0 %v545
      %v885 = vpop.f32.mrf.mxu0
      %v886 = vadd.f32 %v307, %v885
      %v887 = vpop.f32.mrf.mxu0
      %v888 = vadd.f32 %v307, %v887
      %889 = vmatmul.bf16.gmra.mxu0 %v549
      %v890 = vpop.f32.mrf.mxu0
      %v891 = vadd.f32 %v307, %v890
      %v892 = vpop.f32.mrf.mxu0
      %v893 = vadd.f32 %v307, %v892
      %894 = vmatmul.bf16.gmra.mxu0 %v553
      %v895 = vpop.f32.mrf.mxu0
      %v896 = vadd.f32 %v307, %v895
      %v897 = vpop.f32.mrf.mxu0
      %v898 = vadd.f32 %v307, %v897
      %899 = vmatmul.bf16.gmra.mxu0 %v557
      %v900 = vpop.f32.mrf.mxu0
      %v901 = vadd.f32 %v307, %v900
      %v902 = vpop.f32.mrf.mxu0
      %v903 = vadd.f32 %v307, %v902
      %904 = vmatmul.bf16.gmra.mxu0 %v561
      %v905 = vpop.f32.mrf.mxu0
      %v906 = vadd.f32 %v307, %v905
      %v907 = vpop.f32.mrf.mxu0
      %v908 = vadd.f32 %v307, %v907
      %909 = vdwg.mxu0
      %910 = vmatpush.bf16.msra.mxu0 %v772
      %911 = vmatpush.bf16.msra.mxu0 %v771
      %912 = vmatpush.bf16.msra.mxu0 %v770
      %913 = vmatpush.bf16.msra.mxu0 %v769
      %914 = vmatpush.bf16.msra.mxu0 %v768
      %915 = vmatpush.bf16.msra.mxu0 %v767
      %916 = vmatpush.bf16.msra.mxu0 %v766
      %917 = vmatpush.bf16.msra.mxu0 %v765
      %918 = vmatmul.bf16.gmra.mxu0 %v502
      %v919 = vpop.f32.mrf.mxu0
      %v920 = vadd.f32 %v831, %v919
      %v921 = vpop.f32.mrf.mxu0
      %v922 = vadd.f32 %v833, %v921
      %923 = vmatmul.bf16.gmra.mxu0 %v506
      %v924 = vpop.f32.mrf.mxu0
      %v925 = vadd.f32 %v836, %v924
      %v926 = vpop.f32.mrf.mxu0
      %v927 = vadd.f32 %v838, %v926
      %928 = vmatmul.bf16.gmra.mxu0 %v510
      %v929 = vpop.f32.mrf.mxu0
      %v930 = vadd.f32 %v841, %v929
      %v931 = vpop.f32.mrf.mxu0
      %v932 = vadd.f32 %v843, %v931
      %933 = vmatmul.bf16.gmra.mxu0 %v514
      %v934 = vpop.f32.mrf.mxu0
      %v935 = vadd.f32 %v846, %v934
      %v936 = vpop.f32.mrf.mxu0
      %v937 = vadd.f32 %v848, %v936
      %938 = vmatmul.bf16.gmra.mxu0 %v518
      %v939 = vpop.f32.mrf.mxu0
      %v940 = vadd.f32 %v851, %v939
      %v941 = vpop.f32.mrf.mxu0
      %v942 = vadd.f32 %v853, %v941
      %943 = vmatmul.bf16.gmra.mxu0 %v522
      %v944 = vpop.f32.mrf.mxu0
      %v945 = vadd.f32 %v856, %v944
      %v946 = vpop.f32.mrf.mxu0
      %v947 = vadd.f32 %v858, %v946
      %948 = vmatmul.bf16.gmra.mxu0 %v526
      %v949 = vpop.f32.mrf.mxu0
      %v950 = vadd.f32 %v861, %v949
      %v951 = vpop.f32.mrf.mxu0
      %v952 = vadd.f32 %v863, %v951
      %953 = vmatmul.bf16.gmra.mxu0 %v530
      %v954 = vpop.f32.mrf.mxu0
      %v955 = vadd.f32 %v866, %v954
      %v956 = vpop.f32.mrf.mxu0
      %v957 = vadd.f32 %v868, %v956
      %958 = vmatmul.bf16.gmra.mxu0 %v534
      %v959 = vpop.f32.mrf.mxu0
      %v960 = vadd.f32 %v871, %v959
      %v961 = vpop.f32.mrf.mxu0
      %v962 = vadd.f32 %v873, %v961
      %963 = vmatmul.bf16.gmra.mxu0 %v538
      %v964 = vpop.f32.mrf.mxu0
      %v965 = vadd.f32 %v876, %v964
      %v966 = vpop.f32.mrf.mxu0
      %v967 = vadd.f32 %v878, %v966
      %968 = vmatmul.bf16.gmra.mxu0 %v542
      %v969 = vpop.f32.mrf.mxu0
      %v970 = vadd.f32 %v881, %v969
      %v971 = vpop.f32.mrf.mxu0
      %v972 = vadd.f32 %v883, %v971
      %973 = vmatmul.bf16.gmra.mxu0 %v546
      %v974 = vpop.f32.mrf.mxu0
      %v975 = vadd.f32 %v886, %v974
      %v976 = vpop.f32.mrf.mxu0
      %v977 = vadd.f32 %v888, %v976
      %978 = vmatmul.bf16.gmra.mxu0 %v550
      %v979 = vpop.f32.mrf.mxu0
      %v980 = vadd.f32 %v891, %v979
      %v981 = vpop.f32.mrf.mxu0
      %v982 = vadd.f32 %v893, %v981
      %983 = vmatmul.bf16.gmra.mxu0 %v554
      %v984 = vpop.f32.mrf.mxu0
      %v985 = vadd.f32 %v896, %v984
      %v986 = vpop.f32.mrf.mxu0
      %v987 = vadd.f32 %v898, %v986
      %988 = vmatmul.bf16.gmra.mxu0 %v558
      %v989 = vpop.f32.mrf.mxu0
      %v990 = vadd.f32 %v901, %v989
      %v991 = vpop.f32.mrf.mxu0
      %v992 = vadd.f32 %v903, %v991
      %993 = vmatmul.bf16.gmra.mxu0 %v562
      %v994 = vpop.f32.mrf.mxu0
      %v995 = vadd.f32 %v906, %v994
      %v996 = vpop.f32.mrf.mxu0
      %v997 = vadd.f32 %v908, %v996
      %998 = vdwg.mxu0
      %999 = vmatpush.bf16.msra.mxu0 %v780
      %1000 = vmatpush.bf16.msra.mxu0 %v779
      %1001 = vmatpush.bf16.msra.mxu0 %v778
      %1002 = vmatpush.bf16.msra.mxu0 %v777
      %1003 = vmatpush.bf16.msra.mxu0 %v776
      %1004 = vmatpush.bf16.msra.mxu0 %v775
      %1005 = vmatpush.bf16.msra.mxu0 %v774
      %1006 = vmatpush.bf16.msra.mxu0 %v773
      %1007 = vmatmul.bf16.gmra.mxu0 %v503
      %v1008 = vpop.f32.mrf.mxu0
      %v1009 = vadd.f32 %v920, %v1008
      %v1010 = vpop.f32.mrf.mxu0
      %v1011 = vadd.f32 %v922, %v1010
      %1012 = vmatmul.bf16.gmra.mxu0 %v507
      %v1013 = vpop.f32.mrf.mxu0
      %v1014 = vadd.f32 %v925, %v1013
      %v1015 = vpop.f32.mrf.mxu0
      %v1016 = vadd.f32 %v927, %v1015
      %1017 = vmatmul.bf16.gmra.mxu0 %v511
      %v1018 = vpop.f32.mrf.mxu0
      %v1019 = vadd.f32 %v930, %v1018
      %v1020 = vpop.f32.mrf.mxu0
      %v1021 = vadd.f32 %v932, %v1020
      %1022 = vmatmul.bf16.gmra.mxu0 %v515
      %v1023 = vpop.f32.mrf.mxu0
      %v1024 = vadd.f32 %v935, %v1023
      %v1025 = vpop.f32.mrf.mxu0
      %v1026 = vadd.f32 %v937, %v1025
      %1027 = vmatmul.bf16.gmra.mxu0 %v519
      %v1028 = vpop.f32.mrf.mxu0
      %v1029 = vadd.f32 %v940, %v1028
      %v1030 = vpop.f32.mrf.mxu0
      %v1031 = vadd.f32 %v942, %v1030
      %1032 = vmatmul.bf16.gmra.mxu0 %v523
      %v1033 = vpop.f32.mrf.mxu0
      %v1034 = vadd.f32 %v945, %v1033
      %v1035 = vpop.f32.mrf.mxu0
      %v1036 = vadd.f32 %v947, %v1035
      %1037 = vmatmul.bf16.gmra.mxu0 %v527
      %v1038 = vpop.f32.mrf.mxu0
      %v1039 = vadd.f32 %v950, %v1038
      %v1040 = vpop.f32.mrf.mxu0
      %v1041 = vadd.f32 %v952, %v1040
      %1042 = vmatmul.bf16.gmra.mxu0 %v531
      %v1043 = vpop.f32.mrf.mxu0
      %v1044 = vadd.f32 %v955, %v1043
      %v1045 = vpop.f32.mrf.mxu0
      %v1046 = vadd.f32 %v957, %v1045
      %1047 = vmatmul.bf16.gmra.mxu0 %v535
      %v1048 = vpop.f32.mrf.mxu0
      %v1049 = vadd.f32 %v960, %v1048
      %v1050 = vpop.f32.mrf.mxu0
      %v1051 = vadd.f32 %v962, %v1050
      %1052 = vmatmul.bf16.gmra.mxu0 %v539
      %v1053 = vpop.f32.mrf.mxu0
      %v1054 = vadd.f32 %v965, %v1053
      %v1055 = vpop.f32.mrf.mxu0
      %v1056 = vadd.f32 %v967, %v1055
      %1057 = vmatmul.bf16.gmra.mxu0 %v543
      %v1058 = vpop.f32.mrf.mxu0
      %v1059 = vadd.f32 %v970, %v1058
      %v1060 = vpop.f32.mrf.mxu0
      %v1061 = vadd.f32 %v972, %v1060
      %1062 = vmatmul.bf16.gmra.mxu0 %v547
      %v1063 = vpop.f32.mrf.mxu0
      %v1064 = vadd.f32 %v975, %v1063
      %v1065 = vpop.f32.mrf.mxu0
      %v1066 = vadd.f32 %v977, %v1065
      %1067 = vmatmul.bf16.gmra.mxu0 %v551
      %v1068 = vpop.f32.mrf.mxu0
      %v1069 = vadd.f32 %v980, %v1068
      %v1070 = vpop.f32.mrf.mxu0
      %v1071 = vadd.f32 %v982, %v1070
      %1072 = vmatmul.bf16.gmra.mxu0 %v555
      %v1073 = vpop.f32.mrf.mxu0
      %v1074 = vadd.f32 %v985, %v1073
      %v1075 = vpop.f32.mrf.mxu0
      %v1076 = vadd.f32 %v987, %v1075
      %1077 = vmatmul.bf16.gmra.mxu0 %v559
      %v1078 = vpop.f32.mrf.mxu0
      %v1079 = vadd.f32 %v990, %v1078
      %v1080 = vpop.f32.mrf.mxu0
      %v1081 = vadd.f32 %v992, %v1080
      %1082 = vmatmul.bf16.gmra.mxu0 %v563
      %v1083 = vpop.f32.mrf.mxu0
      %v1084 = vadd.f32 %v995, %v1083
      %v1085 = vpop.f32.mrf.mxu0
      %v1086 = vadd.f32 %v997, %v1085
      %1087 = vdwg.mxu0
      %1088 = vmatpush.bf16.msra.mxu0 %v788
      %1089 = vmatpush.bf16.msra.mxu0 %v787
      %1090 = vmatpush.bf16.msra.mxu0 %v786
      %1091 = vmatpush.bf16.msra.mxu0 %v785
      %1092 = vmatpush.bf16.msra.mxu0 %v784
      %1093 = vmatpush.bf16.msra.mxu0 %v783
      %1094 = vmatpush.bf16.msra.mxu0 %v782
      %1095 = vmatpush.bf16.msra.mxu0 %v781
      %1096 = vmatmul.bf16.gmra.mxu0 %v504
      %v1097 = vpop.f32.mrf.mxu0
      %v1098 = vadd.f32 %v1009, %v1097
      %v1099 = vpop.f32.mrf.mxu0
      %v1100 = vadd.f32 %v1011, %v1099
      %1101 = vmatmul.bf16.gmra.mxu0 %v508
      %v1102 = vpop.f32.mrf.mxu0
      %v1103 = vadd.f32 %v1014, %v1102
      %v1104 = vpop.f32.mrf.mxu0
      %v1105 = vadd.f32 %v1016, %v1104
      %1106 = vmatmul.bf16.gmra.mxu0 %v512
      %v1107 = vpop.f32.mrf.mxu0
      %v1108 = vadd.f32 %v1019, %v1107
      %v1109 = vpop.f32.mrf.mxu0
      %v1110 = vadd.f32 %v1021, %v1109
      %1111 = vmatmul.bf16.gmra.mxu0 %v516
      %v1112 = vpop.f32.mrf.mxu0
      %v1113 = vadd.f32 %v1024, %v1112
      %v1114 = vpop.f32.mrf.mxu0
      %v1115 = vadd.f32 %v1026, %v1114
      %1116 = vmatmul.bf16.gmra.mxu0 %v520
      %v1117 = vpop.f32.mrf.mxu0
      %v1118 = vadd.f32 %v1029, %v1117
      %v1119 = vpop.f32.mrf.mxu0
      %v1120 = vadd.f32 %v1031, %v1119
      %1121 = vmatmul.bf16.gmra.mxu0 %v524
      %v1122 = vpop.f32.mrf.mxu0
      %v1123 = vadd.f32 %v1034, %v1122
      %v1124 = vpop.f32.mrf.mxu0
      %v1125 = vadd.f32 %v1036, %v1124
      %1126 = vmatmul.bf16.gmra.mxu0 %v528
      %v1127 = vpop.f32.mrf.mxu0
      %v1128 = vadd.f32 %v1039, %v1127
      %v1129 = vpop.f32.mrf.mxu0
      %v1130 = vadd.f32 %v1041, %v1129
      %1131 = vmatmul.bf16.gmra.mxu0 %v532
      %v1132 = vpop.f32.mrf.mxu0
      %v1133 = vadd.f32 %v1044, %v1132
      %v1134 = vpop.f32.mrf.mxu0
      %v1135 = vadd.f32 %v1046, %v1134
      %1136 = vmatmul.bf16.gmra.mxu0 %v536
      %v1137 = vpop.f32.mrf.mxu0
      %v1138 = vadd.f32 %v1049, %v1137
      %v1139 = vpop.f32.mrf.mxu0
      %v1140 = vadd.f32 %v1051, %v1139
      %1141 = vmatmul.bf16.gmra.mxu0 %v540
      %v1142 = vpop.f32.mrf.mxu0
      %v1143 = vadd.f32 %v1054, %v1142
      %v1144 = vpop.f32.mrf.mxu0
      %v1145 = vadd.f32 %v1056, %v1144
      %1146 = vmatmul.bf16.gmra.mxu0 %v544
      %v1147 = vpop.f32.mrf.mxu0
      %v1148 = vadd.f32 %v1059, %v1147
      %v1149 = vpop.f32.mrf.mxu0
      %v1150 = vadd.f32 %v1061, %v1149
      %1151 = vmatmul.bf16.gmra.mxu0 %v548
      %v1152 = vpop.f32.mrf.mxu0
      %v1153 = vadd.f32 %v1064, %v1152
      %v1154 = vpop.f32.mrf.mxu0
      %v1155 = vadd.f32 %v1066, %v1154
      %1156 = vmatmul.bf16.gmra.mxu0 %v552
      %v1157 = vpop.f32.mrf.mxu0
      %v1158 = vadd.f32 %v1069, %v1157
      %v1159 = vpop.f32.mrf.mxu0
      %v1160 = vadd.f32 %v1071, %v1159
      %1161 = vmatmul.bf16.gmra.mxu0 %v556
      %v1162 = vpop.f32.mrf.mxu0
      %v1163 = vadd.f32 %v1074, %v1162
      %v1164 = vpop.f32.mrf.mxu0
      %v1165 = vadd.f32 %v1076, %v1164
      %1166 = vmatmul.bf16.gmra.mxu0 %v560
      %v1167 = vpop.f32.mrf.mxu0
      %v1168 = vadd.f32 %v1079, %v1167
      %v1169 = vpop.f32.mrf.mxu0
      %v1170 = vadd.f32 %v1081, %v1169
      %1171 = vmatmul.bf16.gmra.mxu0 %v564
      %v1172 = vpop.f32.mrf.mxu0
      %v1173 = vadd.f32 %v1084, %v1172
      %v1174 = vpop.f32.mrf.mxu0
      %v1175 = vadd.f32 %v1086, %v1174
      %1176 = vdwg.mxu0
      %v1177 = vmax.f32 %v1098, 0.0
      %v1178 = vmax.f32 %v1100, 0.0
      %v1179 = vmax.f32 %v1103, 0.0
      %v1180 = vmax.f32 %v1105, 0.0
      %v1181 = vmax.f32 %v1108, 0.0
      %v1182 = vmax.f32 %v1110, 0.0
      %v1183 = vmax.f32 %v1113, 0.0
      %v1184 = vmax.f32 %v1115, 0.0
      %v1185 = vmax.f32 %v1118, 0.0
      %v1186 = vmax.f32 %v1120, 0.0
      %v1187 = vmax.f32 %v1123, 0.0
      %v1188 = vmax.f32 %v1125, 0.0
      %v1189 = vmax.f32 %v1128, 0.0
      %v1190 = vmax.f32 %v1130, 0.0
      %v1191 = vmax.f32 %v1133, 0.0
      %v1192 = vmax.f32 %v1135, 0.0
      %v1193 = vmax.f32 %v1138, 0.0
      %v1194 = vmax.f32 %v1140, 0.0
      %v1195 = vmax.f32 %v1143, 0.0
      %v1196 = vmax.f32 %v1145, 0.0
      %v1197 = vmax.f32 %v1148, 0.0
      %v1198 = vmax.f32 %v1150, 0.0
      %v1199 = vmax.f32 %v1153, 0.0
      %v1200 = vmax.f32 %v1155, 0.0
      %v1201 = vmax.f32 %v1158, 0.0
      %v1202 = vmax.f32 %v1160, 0.0
      %v1203 = vmax.f32 %v1163, 0.0
      %v1204 = vmax.f32 %v1165, 0.0
      %v1205 = vmax.f32 %v1168, 0.0
      %v1206 = vmax.f32 %v1170, 0.0
      %v1207 = vmax.f32 %v1173, 0.0
      %v1208 = vmax.f32 %v1175, 0.0
      %v1209 = vpack.c.bf16 %v1177, %v1177
      %v1210 = vpack.c.bf16 %v1178, %v1178
      %v1211 = vpack.c.bf16 %v1179, %v1179
      %v1212 = vpack.c.bf16 %v1180, %v1180
      %v1213 = vpack.c.bf16 %v1181, %v1181
      %v1214 = vpack.c.bf16 %v1182, %v1182
      %v1215 = vpack.c.bf16 %v1183, %v1183
      %v1216 = vpack.c.bf16 %v1184, %v1184
      %v1217 = vpack.c.bf16 %v1185, %v1185
      %v1218 = vpack.c.bf16 %v1186, %v1186
      %v1219 = vpack.c.bf16 %v1187, %v1187
      %v1220 = vpack.c.bf16 %v1188, %v1188
      %v1221 = vpack.c.bf16 %v1189, %v1189
      %v1222 = vpack.c.bf16 %v1190, %v1190
      %v1223 = vpack.c.bf16 %v1191, %v1191
      %v1224 = vpack.c.bf16 %v1192, %v1192
      %v1225 = vpack.c.bf16 %v1193, %v1193
      %v1226 = vpack.c.bf16 %v1194, %v1194
      %v1227 = vpack.c.bf16 %v1195, %v1195
      %v1228 = vpack.c.bf16 %v1196, %v1196
      %v1229 = vpack.c.bf16 %v1197, %v1197
      %v1230 = vpack.c.bf16 %v1198, %v1198
      %v1231 = vpack.c.bf16 %v1199, %v1199
      %v1232 = vpack.c.bf16 %v1200, %v1200
      %v1233 = vpack.c.bf16 %v1201, %v1201
      %v1234 = vpack.c.bf16 %v1202, %v1202
      %v1235 = vpack.c.bf16 %v1203, %v1203
      %v1236 = vpack.c.bf16 %v1204, %v1204
      %v1237 = vpack.c.bf16 %v1205, %v1205
      %v1238 = vpack.c.bf16 %v1206, %v1206
      %v1239 = vpack.c.bf16 %v1207, %v1207
      %v1240 = vpack.c.bf16 %v1208, %v1208
      %1241 = vst [vmem:[%s175] sm:$0xf] %v1209
      %1242 = vst [vmem:[%s175 + $0x4] sm:$0xf] %v1210
      %1243 = vst [vmem:[%s175 + $0x8] sm:$0xf] %v1211
      %1244 = vst [vmem:[%s175 + $0xc] sm:$0xf] %v1212
      %1245 = vst [vmem:[%s175 + $0x10] sm:$0xf] %v1213
      %1246 = vst [vmem:[%s175 + $0x14] sm:$0xf] %v1214
      %1247 = vst [vmem:[%s175 + $0x18] sm:$0xf] %v1215
      %1248 = vst [vmem:[%s175 + $0x1c] sm:$0xf] %v1216
      %1249 = vst [vmem:[%s175 + $0x20] sm:$0xf] %v1217
      %1250 = vst [vmem:[%s175 + $0x24] sm:$0xf] %v1218
      %1251 = vst [vmem:[%s175 + $0x28] sm:$0xf] %v1219
      %1252 = vst [vmem:[%s175 + $0x2c] sm:$0xf] %v1220
      %1253 = vst [vmem:[%s175 + $0x30] sm:$0xf] %v1221
      %1254 = vst [vmem:[%s175 + $0x34] sm:$0xf] %v1222
      %1255 = vst [vmem:[%s175 + $0x38] sm:$0xf] %v1223
      %1256 = vst [vmem:[%s175 + $0x3c] sm:$0xf] %v1224
      %1257 = vst [vmem:[%s175 + $0x40] sm:$0xf] %v1225
      %1258 = vst [vmem:[%s175 + $0x44] sm:$0xf] %v1226
      %1259 = vst [vmem:[%s175 + $0x48] sm:$0xf] %v1227
      %1260 = vst [vmem:[%s175 + $0x4c] sm:$0xf] %v1228
      %1261 = vst [vmem:[%s175 + $0x50] sm:$0xf] %v1229
      %1262 = vst [vmem:[%s175 + $0x54] sm:$0xf] %v1230
      %1263 = vst [vmem:[%s175 + $0x58] sm:$0xf] %v1231
      %1264 = vst [vmem:[%s175 + $0x5c] sm:$0xf] %v1232
      %1265 = vst [vmem:[%s175 + $0x60] sm:$0xf] %v1233
      %1266 = vst [vmem:[%s175 + $0x64] sm:$0xf] %v1234
      %1267 = vst [vmem:[%s175 + $0x68] sm:$0xf] %v1235
      %1268 = vst [vmem:[%s175 + $0x6c] sm:$0xf] %v1236
      %1269 = vst [vmem:[%s175 + $0x70] sm:$0xf] %v1237
      %1270 = vst [vmem:[%s175 + $0x74] sm:$0xf] %v1238
      %1271 = vst [vmem:[%s175 + $0x78] sm:$0xf] %v1239
      %1272 = vst [vmem:[%s175 + $0x7c] sm:$0xf] %v1240
      %s1273 = smul.u32 32, %s14
      %p1274 = scmp.lt.s32.totalorder %s1273, 63
      %s1275 = scalar_select %p1274, %s1273, 63
      %s1276 = smul.addr %s1275, 4
      %s1277 = scalar_lea.vmem %s3, %s1276
      // Predicated region
      $region33: #{cnn_forward.9} parent=31 // pred_check
        %p1278 = pneg %p100
      $region34: #{cnn_forward.9} parent=31 // pred_check_branch
        %1280 = sbr.rel (%p1278) target = $region36
      $region35: #{cnn_forward.9} parent=31 // pred_region
        %s1281 = smul.u32 32, %s14
      $region36: #{cnn_forward.9} parent=31 // pred_fallthru
        _
    $region32: #{cnn_forward.9} parent=5 // pred_fallthru
      _
    %p1282 = scmp.le.s32.totalorder 2, %s9
    // Predicated region
    $region37: #{cnn_forward.9} parent=5 // pred_check
      %p1283 = pneg %p1282
    $region38: #{cnn_forward.9} parent=5 // pred_check_branch
      %1285 = sbr.rel (%p1283) target = $region40
    $region39: #{cnn_forward.9} parent=5 // pred_region
      %s1286 = ssub.s32 %s9, 2
      // Predicated region
      $region41: #{cnn_forward.9} parent=39 // pred_check
        %p1287 = pneg %p106
      $region42: #{cnn_forward.9} parent=39 // pred_check_branch
        %1289 = sbr.rel (%p1287) target = $region44
      $region43: #{cnn_forward.9} parent=39 // pred_region
        %s1290 = smul.u32 32, %s15
        %p1291 = scmp.lt.s32.totalorder %s1290, 63
        %s1292 = scalar_select %p1291, %s1290, 63
        %s1293 = smul.addr %s1292, 4
        %s1294 = scalar_lea.vmem %s3, %s1293
      $region44: #{cnn_forward.9} parent=39 // pred_fallthru
        _
    $region40: #{cnn_forward.9} parent=5 // pred_fallthru
      _
  $region6: #{cnn_forward.9} parent=0 // loop_footer
    %s13 = sadd.s32 1, %s9
  $region7: #{cnn_forward.9} parent=0 // loop_footer_branch
    %8 = sbr.rel target = $region3
  $region8: #{cnn_forward.9} parent=0 // loop_exit
    _

// kernel: cnn_forward.10
$region0: #{cnn_forward.10}
  #allocation0 [shape = 'u32[]', space=smem, size = 0x4, offset = 0x4, fixed_abs, tag = 'smem constant byte address 0x4 - core index']
  #allocation1 [shape = 'u32[72,128]{1,0:T(1,128)}', space=vmem, size = 0x9000, scoped, tag = 'internal scratch']
  %s0 = inlined_call_operand.vmem [shape: bf16[128,384], index: 0, kind: input, shape index: {}]
  %s1 = inlined_call_operand.vmem [shape: bf16[384,128], index: 1, kind: input, shape index: {}]
  %s2 = inlined_call_operand.vmem [shape: f32[1,128], index: 2, kind: input, shape index: {}]
  %s3 = inlined_call_operand.vmem [shape: bf16[128,128], index: 3, kind: output, shape index: {}]
  %s4 = sld [smem:[#allocation0]]
  $region45: #{cnn_forward.10} parent=0
    _
  %s6 = ssub.s32 1, %s4
  %s7 = scalar_select 0, %s6, %s4
  loop: start=0, step=1, limit=4
  $region2: #{cnn_forward.10} parent=0 // loop_pre_header
    _
  $region3: #{cnn_forward.10} parent=0 // loop_header
    %s9 = sphi 0, %s13
    %p10 = scmp.ge.s32.totalorder %s9, 4
    %s19 = sphi 0, %s21
    %s22 = sphi 0, %s19
    %s23 = sphi 0, %s22
    %s39 = sphi 0, %s23
    %s43 = sphi 0, %s43
    %s45 = sphi 0, %s43
    %s46 = sphi 0, %s45
    %s60 = sphi 0, %s46
    %s64 = sphi 0, %s64
    %s66 = sphi 0, %s64
    %s67 = sphi 0, %s66
    %s81 = sphi 0, %s67
    %s87 = sphi 0, %s89
    %s90 = sphi 0, %s87
    %s91 = sphi 0, %s90
    %s107 = sphi 0, %s91
  $region4: #{cnn_forward.10} parent=0 // loop_header_branch
    %12 = sbr.rel (%p10) target = $region8
  $region5: #{cnn_forward.10} parent=0 // loop_body
    %s14 = ssub.s32 %s9, 1
    %s15 = ssub.s32 %s9, 2
    %s16 = sadd.s32 %s9, 1
    %s17 = ssub.s32 %s9, %s16
    %p18 = scmp.eq.s32.totalorder %s17, 0
    %s20 = sadd.s32 %s19, 1
    %s21 = scalar_select %p18, %s19, %s20
    %p24 = pneg %p18
    %p25 = scmp.eq.s32.totalorder %s9, 1
    %p26 = por %p24, %p25
    %p27 = scmp.ne.s32.totalorder %s19, %s22
    %p28 = scmp.eq.s32.totalorder %s9, 0
    %p29 = por %p27, %p28
    %p30 = scmp.ne.s32.totalorder %s19, %s22
    %p31 = scmp.eq.s32.totalorder %s14, 1
    %p32 = por %p30, %p31
    %p33 = scmp.ne.s32.totalorder %s22, %s23
    %p34 = scmp.eq.s32.totalorder %s14, 0
    %p35 = por %p33, %p34
    %p36 = scmp.ne.s32.totalorder %s22, %s23
    %p37 = scmp.eq.s32.totalorder %s15, 1
    %p38 = por %p36, %p37
    %p40 = scmp.ne.s32.totalorder %s23, %s39
    %p41 = scmp.eq.s32.totalorder %s15, 0
    %p42 = por %p40, %p41
    %s44 = sadd.s32 %s43, 1
    %p47 = scmp.eq.s32.totalorder %s9, 1
    %p48 = scmp.ne.s32.totalorder %s43, %s45
    %p49 = scmp.eq.s32.totalorder %s9, 0
    %p50 = por %p48, %p49
    %p51 = scmp.ne.s32.totalorder %s43, %s45
    %p52 = scmp.eq.s32.totalorder %s14, 1
    %p53 = por %p51, %p52
    %p54 = scmp.ne.s32.totalorder %s45, %s46
    %p55 = scmp.eq.s32.totalorder %s14, 0
    %p56 = por %p54, %p55
    %p57 = scmp.ne.s32.totalorder %s45, %s46
    %p58 = scmp.eq.s32.totalorder %s15, 1
    %p59 = por %p57, %p58
    %p61 = scmp.ne.s32.totalorder %s46, %s60
    %p62 = scmp.eq.s32.totalorder %s15, 0
    %p63 = por %p61, %p62
    %s65 = sadd.s32 %s64, 1
    %p68 = scmp.eq.s32.totalorder %s9, 1
    %p69 = scmp.ne.s32.totalorder %s64, %s66
    %p70 = scmp.eq.s32.totalorder %s9, 0
    %p71 = por %p69, %p70
    %p72 = scmp.ne.s32.totalorder %s64, %s66
    %p73 = scmp.eq.s32.totalorder %s14, 1
    %p74 = por %p72, %p73
    %p75 = scmp.ne.s32.totalorder %s66, %s67
    %p76 = scmp.eq.s32.totalorder %s14, 0
    %p77 = por %p75, %p76
    %p78 = scmp.ne.s32.totalorder %s66, %s67
    %p79 = scmp.eq.s32.totalorder %s15, 1
    %p80 = por %p78, %p79
    %p82 = scmp.ne.s32.totalorder %s67, %s81
    %p83 = scmp.eq.s32.totalorder %s15, 0
    %p84 = por %p82, %p83
    %s85 = ssub.s32 %s9, %s16
    %p86 = scmp.eq.s32.totalorder %s85, 0
    %s88 = sadd.s32 %s87, 1
    %s89 = scalar_select %p86, %s87, %s88
    %p92 = pneg %p86
    %p93 = scmp.eq.s32.totalorder %s9, 1
    %p94 = por %p92, %p93
    %p95 = scmp.ne.s32.totalorder %s87, %s90
    %p96 = scmp.eq.s32.totalorder %s9, 0
    %p97 = por %p95, %p96
    %p98 = scmp.ne.s32.totalorder %s87, %s90
    %p99 = scmp.eq.s32.totalorder %s14, 1
    %p100 = por %p98, %p99
    %p101 = scmp.ne.s32.totalorder %s90, %s91
    %p102 = scmp.eq.s32.totalorder %s14, 0
    %p103 = por %p101, %p102
    %p104 = scmp.ne.s32.totalorder %s90, %s91
    %p105 = scmp.eq.s32.totalorder %s15, 1
    %p106 = por %p104, %p105
    %p108 = scmp.ne.s32.totalorder %s91, %s107
    %p109 = scmp.eq.s32.totalorder %s15, 0
    %p110 = por %p108, %p109
    %p111 = scmp.le.s32.totalorder 1, %s9
    %p112 = scmp.lt.s32.totalorder %s9, 3
    %p113 = pnand %p111, %p112
    %p114 = pneg %p113
    // Predicated region
    $region9: #{cnn_forward.10} parent=5 // pred_check
      _
    $region10: #{cnn_forward.10} parent=5 // pred_check_branch
      %116 = sbr.rel (%p113) target = $region12
    $region11: #{cnn_forward.10} parent=5 // pred_region
      %s117 = ssub.s32 %s9, 1
      // Predicated region
      $region13: #{cnn_forward.10} parent=11 // pred_check
        %p118 = pneg %p56
      $region14: #{cnn_forward.10} parent=11 // pred_check_branch
        %120 = sbr.rel (%p118) target = $region16
      $region15: #{cnn_forward.10} parent=11 // pred_region
        _
      $region16: #{cnn_forward.10} parent=11 // pred_fallthru
        _
      // Predicated region
      $region17: #{cnn_forward.10} parent=11 // pred_check
        %p121 = pneg %p77
      $region18: #{cnn_forward.10} parent=11 // pred_check_branch
        %123 = sbr.rel (%p121) target = $region20
      $region19: #{cnn_forward.10} parent=11 // pred_region
        _
      $region20: #{cnn_forward.10} parent=11 // pred_fallthru
        _
    $region12: #{cnn_forward.10} parent=5 // pred_fallthru
      _
    %p124 = scmp.lt.s32.totalorder %s9, 2
    // Predicated region
    $region21: #{cnn_forward.10} parent=5 // pred_check
      %p125 = pneg %p124
    $region22: #{cnn_forward.10} parent=5 // pred_check_branch
      %127 = sbr.rel (%p125) target = $region24
    $region23: #{cnn_forward.10} parent=5 // pred_region
      // Predicated region
      $region25: #{cnn_forward.10} parent=23 // pred_check
        %p128 = pneg %p29
      $region26: #{cnn_forward.10} parent=23 // pred_check_branch
        %130 = sbr.rel (%p128) target = $region28
      $region27: #{cnn_forward.10} parent=23 // pred_region
        %s131 = smul.u32 8, %s9
        %p132 = scmp.lt.s32.totalorder %s131, 15
        %s133 = scalar_select %p132, %s131, 15
        %s134 = smul.addr %s133, 3
        %s135 = smul.addr %s134, 4
        %s136 = scalar_lea.vmem %s0, %s135
        %s137 = smul.u32 8, %s9
      $region28: #{cnn_forward.10} parent=23 // pred_fallthru
        _
    $region24: #{cnn_forward.10} parent=5 // pred_fallthru
      _
    %p138 = scmp.le.s32.totalorder 1, %s9
    %p139 = scmp.lt.s32.totalorder %s9, 3
    %p140 = pnand %p138, %p139
    %p141 = pneg %p140
    // Predicated region
    $region29: #{cnn_forward.10} parent=5 // pred_check
      _
    $region30: #{cnn_forward.10} parent=5 // pred_check_branch
      %143 = sbr.rel (%p140) target = $region32
    $region31: #{cnn_forward.10} parent=5 // pred_region
      %s144 = ssub.s32 %s9, 1
      %s145 = smul.u32 8, %s14
      %p146 = scmp.lt.s32.totalorder %s145, 15
      %s147 = scalar_select %p146, %s145, 15
      %s148 = smul.addr %s147, 3
      %s149 = smul.addr %s148, 4
      %s150 = scalar_lea.vmem %s0, %s149
      %p151 = pneg %p35
      %p152 = pneg %p32
      %p153 = pneg %p56
      %p154 = pneg %p53
      %p155 = pneg %p77
      %p156 = pneg %p74
      %p157 = pneg %p103
      %p158 = pneg %p100
      %s159 = smul.u32 8, %s14
      %p160 = scmp.lt.s32.totalorder %s159, 15
      %s161 = scalar_select %p160, %s159, 15
      %s162 = smul.addr %s161, 4
      %s163 = scalar_lea.vmem %s3, %s162
      %s164 = smul.u32 8, %s14
      %p165 = scmp.lt.s32.totalorder %s164, 15
      %s166 = scalar_select %p165, %s164, 15
      %s167 = smul.addr %s166, 3
      %s168 = smul.addr %s167, 4
      %s169 = scalar_lea.vmem %s0, %s168
      %s170 = smul.u32 8, %s14
      %s171 = smul.u32 8, %s14
      %p172 = scmp.lt.s32.totalorder %s171, 15
      %s173 = scalar_select %p172, %s171, 15
      %s174 = smul.addr %s173, 4
      %s175 = scalar_lea.vmem %s3, %s174
      %s176 = smul.u32 8, %s14
      %v177 = vld [vmem:[%s169] sm:$0xff]
      %v178 = vld [vmem:[%s169 + $0x8] sm:$0xf]
      %v179 = vld [vmem:[%s169 + $0xc] sm:$0xff]
      %v180 = vld [vmem:[%s169 + $0x14] sm:$0xf]
      %v181 = vld [vmem:[%s169 + $0x18] sm:$0xff]
      %v182 = vld [vmem:[%s169 + $0x20] sm:$0xf]
      %v183 = vld [vmem:[%s169 + $0x24] sm:$0xff]
      %v184 = vld [vmem:[%s169 + $0x2c] sm:$0xf]
      %v185 = vld [vmem:[%s169 + $0x30] sm:$0xff]
      %v186 = vld [vmem:[%s169 + $0x38] sm:$0xf]
      %v187 = vld [vmem:[%s169 + $0x3c] sm:$0xff]
      %v188 = vld [vmem:[%s169 + $0x44] sm:$0xf]
      %v189 = vld [vmem:[%s169 + $0x48] sm:$0xff]
      %v190 = vld [vmem:[%s169 + $0x50] sm:$0xf]
      %v191 = vld [vmem:[%s169 + $0x54] sm:$0xff]
      %v192 = vld [vmem:[%s169 + $0x5c] sm:$0xf]
      %v193 = vld [vmem:[%s1] sm:$0xf]
      %v194 = vld [vmem:[%s1 + $0x4] sm:$0xf]
      %v195 = vld [vmem:[%s1 + $0x8] sm:$0xf]
      %v196 = vld [vmem:[%s1 + $0xc] sm:$0xf]
      %v197 = vld [vmem:[%s1 + $0x10] sm:$0xf]
      %v198 = vld [vmem:[%s1 + $0x14] sm:$0xf]
      %v199 = vld [vmem:[%s1 + $0x18] sm:$0xf]
      %v200 = vld [vmem:[%s1 + $0x1c] sm:$0xf]
      %v201 = vld [vmem:[%s1 + $0x20] sm:$0xf]
      %v202 = vld [vmem:[%s1 + $0x24] sm:$0xf]
      %v203 = vld [vmem:[%s1 + $0x28] sm:$0xf]
      %v204 = vld [vmem:[%s1 + $0x2c] sm:$0xf]
      %v205 = vld [vmem:[%s1 + $0x30] sm:$0xf]
      %v206 = vld [vmem:[%s1 + $0x34] sm:$0xf]
      %v207 = vld [vmem:[%s1 + $0x38] sm:$0xf]
      %v208 = vld [vmem:[%s1 + $0x3c] sm:$0xf]
      %v209 = vld [vmem:[%s1 + $0x40] sm:$0xf]
      %v210 = vld [vmem:[%s1 + $0x44] sm:$0xf]
      %v211 = vld [vmem:[%s1 + $0x48] sm:$0xf]
      %v212 = vld [vmem:[%s1 + $0x4c] sm:$0xf]
      %v213 = vld [vmem:[%s1 + $0x50] sm:$0xf]
      %v214 = vld [vmem:[%s1 + $0x54] sm:$0xf]
      %v215 = vld [vmem:[%s1 + $0x58] sm:$0xf]
      %v216 = vld [vmem:[%s1 + $0x5c] sm:$0xf]
      %v217 = vld [vmem:[%s1 + $0x60] sm:$0xf]
      %v218 = vld [vmem:[%s1 + $0x64] sm:$0xf]
      %v219 = vld [vmem:[%s1 + $0x68] sm:$0xf]
      %v220 = vld [vmem:[%s1 + $0x6c] sm:$0xf]
      %v221 = vld [vmem:[%s1 + $0x70] sm:$0xf]
      %v222 = vld [vmem:[%s1 + $0x74] sm:$0xf]
      %v223 = vld [vmem:[%s1 + $0x78] sm:$0xf]
      %v224 = vld [vmem:[%s1 + $0x7c] sm:$0xf]
      %v225 = vld [vmem:[%s1 + $0x80] sm:$0xf]
      %v226 = vld [vmem:[%s1 + $0x84] sm:$0xf]
      %v227 = vld [vmem:[%s1 + $0x88] sm:$0xf]
      %v228 = vld [vmem:[%s1 + $0x8c] sm:$0xf]
      %v229 = vld [vmem:[%s1 + $0x90] sm:$0xf]
      %v230 = vld [vmem:[%s1 + $0x94] sm:$0xf]
      %v231 = vld [vmem:[%s1 + $0x98] sm:$0xf]
      %v232 = vld [vmem:[%s1 + $0x9c] sm:$0xf]
      %v233 = vld [vmem:[%s1 + $0xa0] sm:$0xf]
      %v234 = vld [vmem:[%s1 + $0xa4] sm:$0xf]
      %v235 = vld [vmem:[%s1 + $0xa8] sm:$0xf]
      %v236 = vld [vmem:[%s1 + $0xac] sm:$0xf]
      %v237 = vld [vmem:[%s1 + $0xb0] sm:$0xf]
      %v238 = vld [vmem:[%s1 + $0xb4] sm:$0xf]
      %v239 = vld [vmem:[%s1 + $0xb8] sm:$0xf]
      %v240 = vld [vmem:[%s1 + $0xbc] sm:$0xf]
      %v241 = vld [vmem:[%s2] sm:$0x1]
      %v243 = vperm.slane %v241, 0
      %v261 = vunpack.c.l.b16 %v177
      %v262 = vunpack.c.h.b16 %v177
      %v263 = vunpack.c.l.b16 %v178
      %v264 = vunpack.c.l.b16 %v179
      %v265 = vunpack.c.h.b16 %v179
      %v266 = vunpack.c.l.b16 %v180
      %v267 = vunpack.c.l.b16 %v181
      %v268 = vunpack.c.h.b16 %v181
      %v269 = vunpack.c.l.b16 %v182
      %v270 = vunpack.c.l.b16 %v183
      %v271 = vunpack.c.h.b16 %v183
      %v272 = vunpack.c.l.b16 %v184
      %v273 = vunpack.c.l.b16 %v185
      %v274 = vunpack.c.h.b16 %v185
      %v275 = vunpack.c.l.b16 %v186
      %v276 = vunpack.c.l.b16 %v187
      %v277 = vunpack.c.h.b16 %v187
      %v278 = vunpack.c.l.b16 %v188
      %v279 = vunpack.c.l.b16 %v189
      %v280 = vunpack.c.h.b16 %v189
      %v281 = vunpack.c.l.b16 %v190
      %v282 = vunpack.c.l.b16 %v191
      %v283 = vunpack.c.h.b16 %v191
      %v284 = vunpack.c.l.b16 %v192
      %v285 = vpack.c.b16 %v264, %v261
      %v286 = vpack.c.b16 %v265, %v262
      %v287 = vpack.c.b16 %v266, %v263
      %v288 = vpack.c.b16 %v270, %v267
      %v289 = vpack.c.b16 %v271, %v268
      %v290 = vpack.c.b16 %v272, %v269
      %v291 = vpack.c.b16 %v276, %v273
      %v292 = vpack.c.b16 %v277, %v274
      %v293 = vpack.c.b16 %v278, %v275
      %v294 = vpack.c.b16 %v282, %v279
      %v295 = vpack.c.b16 %v283, %v280
      %v296 = vpack.c.b16 %v284, %v281
      %v357 = vunpack.c.l.b16 %v193
      %v358 = vunpack.c.l.b16 %v194
      %v359 = vunpack.c.l.b16 %v195
      %v360 = vunpack.c.l.b16 %v196
      %v361 = vunpack.c.l.b16 %v197
      %v362 = vunpack.c.l.b16 %v198
      %v363 = vunpack.c.l.b16 %v199
      %v364 = vunpack.c.l.b16 %v200
      %v365 = vunpack.c.l.b16 %v201
      %v366 = vunpack.c.l.b16 %v202
      %v367 = vunpack.c.l.b16 %v203
      %v368 = vunpack.c.l.b16 %v204
      %v369 = vunpack.c.l.b16 %v205
      %v370 = vunpack.c.l.b16 %v206
      %v371 = vunpack.c.l.b16 %v207
      %v372 = vunpack.c.l.b16 %v208
      %v373 = vunpack.c.l.b16 %v209
      %v374 = vunpack.c.l.b16 %v210
      %v375 = vunpack.c.l.b16 %v211
      %v376 = vunpack.c.l.b16 %v212
      %v377 = vunpack.c.l.b16 %v213
      %v378 = vunpack.c.l.b16 %v214
      %v379 = vunpack.c.l.b16 %v215
      %v380 = vunpack.c.l.b16 %v216
      %v381 = vunpack.c.l.b16 %v217
      %v382 = vunpack.c.l.b16 %v218
      %v383 = vunpack.c.l.b16 %v219
      %v384 = vunpack.c.l.b16 %v220
      %v385 = vunpack.c.l.b16 %v221
      %v386 = vunpack.c.l.b16 %v222
      %v387 = vunpack.c.l.b16 %v223
      %v388 = vunpack.c.l.b16 %v224
      %v389 = vunpack.c.l.b16 %v225
      %v390 = vunpack.c.l.b16 %v226
      %v391 = vunpack.c.l.b16 %v227
      %v392 = vunpack.c.l.b16 %v228
      %v393 = vunpack.c.l.b16 %v229
      %v394 = vunpack.c.l.b16 %v230
      %v395 = vunpack.c.l.b16 %v231
      %v396 = vunpack.c.l.b16 %v232
      %v397 = vunpack.c.l.b16 %v233
      %v398 = vunpack.c.l.b16 %v234
      %v399 = vunpack.c.l.b16 %v235
      %v400 = vunpack.c.l.b16 %v236
      %v401 = vunpack.c.l.b16 %v237
      %v402 = vunpack.c.l.b16 %v238
      %v403 = vunpack.c.l.b16 %v239
      %v404 = vunpack.c.l.b16 %v240
      %v405 = vpack.c.b16 %v358, %v357
      %v406 = vpack.c.b16 %v360, %v359
      %v407 = vpack.c.b16 %v362, %v361
      %v408 = vpack.c.b16 %v364, %v363
      %v409 = vpack.c.b16 %v366, %v365
      %v410 = vpack.c.b16 %v368, %v367
      %v411 = vpack.c.b16 %v370, %v369
      %v412 = vpack.c.b16 %v372, %v371
      %v413 = vpack.c.b16 %v374, %v373
      %v414 = vpack.c.b16 %v376, %v375
      %v415 = vpack.c.b16 %v378, %v377
      %v416 = vpack.c.b16 %v380, %v379
      %v417 = vpack.c.b16 %v382, %v381
      %v418 = vpack.c.b16 %v384, %v383
      %v419 = vpack.c.b16 %v386, %v385
      %v420 = vpack.c.b16 %v388, %v387
      %v421 = vpack.c.b16 %v390, %v389
      %v422 = vpack.c.b16 %v392, %v391
      %v423 = vpack.c.b16 %v394, %v393
      %v424 = vpack.c.b16 %v396, %v395
      %v425 = vpack.c.b16 %v398, %v397
      %v426 = vpack.c.b16 %v400, %v399
      %v427 = vpack.c.b16 %v402, %v401
      %v428 = vpack.c.b16 %v404, %v403
      %453 = vmatpush.bf16.msra.mxu0 %v412
      %454 = vmatpush.bf16.msra.mxu0 %v411
      %455 = vmatpush.bf16.msra.mxu0 %v410
      %456 = vmatpush.bf16.msra.mxu0 %v409
      %457 = vmatpush.bf16.msra.mxu0 %v408
      %458 = vmatpush.bf16.msra.mxu0 %v407
      %459 = vmatpush.bf16.msra.mxu0 %v406
      %460 = vmatpush.bf16.msra.mxu0 %v405
      %461 = vmatmul.bf16.gmra.mxu0 %v285
      %v462 = vpop.f32.mrf.mxu0
      %v463 = vadd.f32 %v243, %v462
      %v464 = vpop.f32.mrf.mxu0
      %v465 = vadd.f32 %v243, %v464
      %466 = vmatmul.bf16.gmra.mxu0 %v288
      %v467 = vpop.f32.mrf.mxu0
      %v468 = vadd.f32 %v243, %v467
      %v469 = vpop.f32.mrf.mxu0
      %v470 = vadd.f32 %v243, %v469
      %471 = vmatmul.bf16.gmra.mxu0 %v291
      %v472 = vpop.f32.mrf.mxu0
      %v473 = vadd.f32 %v243, %v472
      %v474 = vpop.f32.mrf.mxu0
      %v475 = vadd.f32 %v243, %v474
      %476 = vmatmul.bf16.gmra.mxu0 %v294
      %v477 = vpop.f32.mrf.mxu0
      %v478 = vadd.f32 %v243, %v477
      %v479 = vpop.f32.mrf.mxu0
      %v480 = vadd.f32 %v243, %v479
      %481 = vdwg.mxu0
      %482 = vmatpush.bf16.msra.mxu0 %v420
      %483 = vmatpush.bf16.msra.mxu0 %v419
      %484 = vmatpush.bf16.msra.mxu0 %v418
      %485 = vmatpush.bf16.msra.mxu0 %v417
      %486 = vmatpush.bf16.msra.mxu0 %v416
      %487 = vmatpush.bf16.msra.mxu0 %v415
      %488 = vmatpush.bf16.msra.mxu0 %v414
      %489 = vmatpush.bf16.msra.mxu0 %v413
      %490 = vmatmul.bf16.gmra.mxu0 %v286
      %v491 = vpop.f32.mrf.mxu0
      %v492 = vadd.f32 %v463, %v491
      %v493 = vpop.f32.mrf.mxu0
      %v494 = vadd.f32 %v465, %v493
      %495 = vmatmul.bf16.gmra.mxu0 %v289
      %v496 = vpop.f32.mrf.mxu0
      %v497 = vadd.f32 %v468, %v496
      %v498 = vpop.f32.mrf.mxu0
      %v499 = vadd.f32 %v470, %v498
      %500 = vmatmul.bf16.gmra.mxu0 %v292
      %v501 = vpop.f32.mrf.mxu0
      %v502 = vadd.f32 %v473, %v501
      %v503 = vpop.f32.mrf.mxu0
      %v504 = vadd.f32 %v475, %v503
      %505 = vmatmul.bf16.gmra.mxu0 %v295
      %v506 = vpop.f32.mrf.mxu0
      %v507 = vadd.f32 %v478, %v506
      %v508 = vpop.f32.mrf.mxu0
      %v509 = vadd.f32 %v480, %v508
      %510 = vdwg.mxu0
      %511 = vmatpush.bf16.msra.mxu0 %v428
      %512 = vmatpush.bf16.msra.mxu0 %v427
      %513 = vmatpush.bf16.msra.mxu0 %v426
      %514 = vmatpush.bf16.msra.mxu0 %v425
      %515 = vmatpush.bf16.msra.mxu0 %v424
      %516 = vmatpush.bf16.msra.mxu0 %v423
      %517 = vmatpush.bf16.msra.mxu0 %v422
      %518 = vmatpush.bf16.msra.mxu0 %v421
      %519 = vmatmul.bf16.gmra.mxu0 %v287
      %v520 = vpop.f32.mrf.mxu0
      %v521 = vadd.f32 %v492, %v520
      %v522 = vpop.f32.mrf.mxu0
      %v523 = vadd.f32 %v494, %v522
      %524 = vmatmul.bf16.gmra.mxu0 %v290
      %v525 = vpop.f32.mrf.mxu0
      %v526 = vadd.f32 %v497, %v525
      %v527 = vpop.f32.mrf.mxu0
      %v528 = vadd.f32 %v499, %v527
      %529 = vmatmul.bf16.gmra.mxu0 %v293
      %v530 = vpop.f32.mrf.mxu0
      %v531 = vadd.f32 %v502, %v530
      %v532 = vpop.f32.mrf.mxu0
      %v533 = vadd.f32 %v504, %v532
      %534 = vmatmul.bf16.gmra.mxu0 %v296
      %v535 = vpop.f32.mrf.mxu0
      %v536 = vadd.f32 %v507, %v535
      %v537 = vpop.f32.mrf.mxu0
      %v538 = vadd.f32 %v509, %v537
      %539 = vdwg.mxu0
      %v540 = vmax.f32 %v521, 0.0
      %v541 = vmax.f32 %v523, 0.0
      %v542 = vmax.f32 %v526, 0.0
      %v543 = vmax.f32 %v528, 0.0
      %v544 = vmax.f32 %v531, 0.0
      %v545 = vmax.f32 %v533, 0.0
      %v546 = vmax.f32 %v536, 0.0
      %v547 = vmax.f32 %v538, 0.0
      %v548 = vpack.c.bf16 %v540, %v540
      %v549 = vpack.c.bf16 %v541, %v541
      %v550 = vpack.c.bf16 %v542, %v542
      %v551 = vpack.c.bf16 %v543, %v543
      %v552 = vpack.c.bf16 %v544, %v544
      %v553 = vpack.c.bf16 %v545, %v545
      %v554 = vpack.c.bf16 %v546, %v546
      %v555 = vpack.c.bf16 %v547, %v547
      %556 = vst [vmem:[%s175] sm:$0xf] %v548
      %557 = vst [vmem:[%s175 + $0x4] sm:$0xf] %v549
      %558 = vst [vmem:[%s175 + $0x8] sm:$0xf] %v550
      %559 = vst [vmem:[%s175 + $0xc] sm:$0xf] %v551
      %560 = vst [vmem:[%s175 + $0x10] sm:$0xf] %v552
      %561 = vst [vmem:[%s175 + $0x14] sm:$0xf] %v553
      %562 = vst [vmem:[%s175 + $0x18] sm:$0xf] %v554
      %563 = vst [vmem:[%s175 + $0x1c] sm:$0xf] %v555
      %s564 = smul.u32 8, %s14
      %p565 = scmp.lt.s32.totalorder %s564, 15
      %s566 = scalar_select %p565, %s564, 15
      %s567 = smul.addr %s566, 4
      %s568 = scalar_lea.vmem %s3, %s567
      // Predicated region
      $region33: #{cnn_forward.10} parent=31 // pred_check
        %p569 = pneg %p100
      $region34: #{cnn_forward.10} parent=31 // pred_check_branch
        %571 = sbr.rel (%p569) target = $region36
      $region35: #{cnn_forward.10} parent=31 // pred_region
        %s572 = smul.u32 8, %s14
      $region36: #{cnn_forward.10} parent=31 // pred_fallthru
        _
    $region32: #{cnn_forward.10} parent=5 // pred_fallthru
      _
    %p573 = scmp.le.s32.totalorder 2, %s9
    // Predicated region
    $region37: #{cnn_forward.10} parent=5 // pred_check
      %p574 = pneg %p573
    $region38: #{cnn_forward.10} parent=5 // pred_check_branch
      %576 = sbr.rel (%p574) target = $region40
    $region39: #{cnn_forward.10} parent=5 // pred_region
      %s577 = ssub.s32 %s9, 2
      // Predicated region
      $region41: #{cnn_forward.10} parent=39 // pred_check
        %p578 = pneg %p106
      $region42: #{cnn_forward.10} parent=39 // pred_check_branch
        %580 = sbr.rel (%p578) target = $region44
      $region43: #{cnn_forward.10} parent=39 // pred_region
        %s581 = smul.u32 8, %s15
        %p582 = scmp.lt.s32.totalorder %s581, 15
        %s583 = scalar_select %p582, %s581, 15
        %s584 = smul.addr %s583, 4
        %s585 = scalar_lea.vmem %s3, %s584
      $region44: #{cnn_forward.10} parent=39 // pred_fallthru
        _
    $region40: #{cnn_forward.10} parent=5 // pred_fallthru
      _
  $region6: #{cnn_forward.10} parent=0 // loop_footer
    %s13 = sadd.s32 1, %s9
  $region7: #{cnn_forward.10} parent=0 // loop_footer_branch
    %8 = sbr.rel target = $region3
  $region8: #{cnn_forward.10} parent=0 // loop_exit
    _

// kernel: cnn_forward.11
$region0: #{cnn_forward.11}
  #allocation0 [shape = 'u32[]', space=smem, size = 0x4, offset = 0x4, fixed_abs, tag = 'smem constant byte address 0x4 - core index']
  #allocation1 [shape = 'u32[72,128]{1,0:T(1,128)}', space=vmem, size = 0x9000, scoped, tag = 'internal scratch']
  %s0 = inlined_call_operand.vmem [shape: bf16[8,2048], index: 0, kind: input, shape index: {}]
  %s1 = inlined_call_operand.vmem [shape: f32[1,2048], index: 1, kind: input, shape index: {}]
  %s2 = inlined_call_operand.vmem [shape: f32[1,2048], index: 2, kind: input, shape index: {}]
  %s3 = inlined_call_operand.vmem [shape: bf16[2048,256], index: 3, kind: input, shape index: {}]
  %s4 = inlined_call_operand.vmem [shape: f32[1,256], index: 4, kind: input, shape index: {}]
  %s5 = inlined_call_operand.vmem [shape: bf16[256,128], index: 5, kind: input, shape index: {}]
  %s6 = inlined_call_operand.vmem [shape: f32[1,128], index: 6, kind: input, shape index: {}]
  %s7 = inlined_call_operand.vmem [shape: f32[8,128], index: 7, kind: output, shape index: {}]
  %s8 = sld [smem:[#allocation0]]
  $region38: #{cnn_forward.11} parent=0
    _
  %s10 = ssub.s32 1, %s8
  %s11 = scalar_select 0, %s10, %s8
  // Predicated region
  $region2: #{cnn_forward.11} parent=0 // pred_check
    _
  $region3: #{cnn_forward.11} parent=0 // pred_check_branch
    %13 = sbr.rel (0) target = $region5
  $region4: #{cnn_forward.11} parent=0 // pred_region
    _
  $region5: #{cnn_forward.11} parent=0 // pred_fallthru
    _
  // Predicated region
  $region6: #{cnn_forward.11} parent=0 // pred_check
    _
  $region7: #{cnn_forward.11} parent=0 // pred_check_branch
    %15 = sbr.rel (0) target = $region9
  $region8: #{cnn_forward.11} parent=0 // pred_region
    _
  $region9: #{cnn_forward.11} parent=0 // pred_fallthru
    _
  // Predicated region
  $region10: #{cnn_forward.11} parent=0 // pred_check
    _
  $region11: #{cnn_forward.11} parent=0 // pred_check_branch
    %17 = sbr.rel (0) target = $region13
  $region12: #{cnn_forward.11} parent=0 // pred_region
    _
  $region13: #{cnn_forward.11} parent=0 // pred_fallthru
    _
  // Predicated region
  $region14: #{cnn_forward.11} parent=0 // pred_check
    _
  $region15: #{cnn_forward.11} parent=0 // pred_check_branch
    %19 = sbr.rel (0) target = $region17
  $region16: #{cnn_forward.11} parent=0 // pred_region
    _
  $region17: #{cnn_forward.11} parent=0 // pred_fallthru
    _
  // Predicated region
  $region18: #{cnn_forward.11} parent=0 // pred_check
    _
  $region19: #{cnn_forward.11} parent=0 // pred_check_branch
    %21 = sbr.rel (0) target = $region21
  $region20: #{cnn_forward.11} parent=0 // pred_region
    _
  $region21: #{cnn_forward.11} parent=0 // pred_fallthru
    _
  // Predicated region
  $region22: #{cnn_forward.11} parent=0 // pred_check
    _
  $region23: #{cnn_forward.11} parent=0 // pred_check_branch
    %23 = sbr.rel (0) target = $region25
  $region24: #{cnn_forward.11} parent=0 // pred_region
    _
  $region25: #{cnn_forward.11} parent=0 // pred_fallthru
    _
  // Predicated region
  $region26: #{cnn_forward.11} parent=0 // pred_check
    _
  $region27: #{cnn_forward.11} parent=0 // pred_check_branch
    %25 = sbr.rel (0) target = $region29
  $region28: #{cnn_forward.11} parent=0 // pred_region
    _
  $region29: #{cnn_forward.11} parent=0 // pred_fallthru
    _
  %v26 = vld [vmem:[%s0] sm:$0xff]
  %v27 = vld [vmem:[%s0 + $0x8] sm:$0xff]
  %v28 = vld [vmem:[%s0 + $0x10] sm:$0xff]
  %v29 = vld [vmem:[%s0 + $0x18] sm:$0xff]
  %v30 = vld [vmem:[%s0 + $0x20] sm:$0xff]
  %v31 = vld [vmem:[%s0 + $0x28] sm:$0xff]
  %v32 = vld [vmem:[%s0 + $0x30] sm:$0xff]
  %v33 = vld [vmem:[%s0 + $0x38] sm:$0xff]
  %v34 = vunpack.c.l.bf16 %v26
  %v35 = vunpack.c.h.bf16 %v26
  %v36 = vunpack.c.l.bf16 %v27
  %v37 = vunpack.c.h.bf16 %v27
  %v38 = vunpack.c.l.bf16 %v28
  %v39 = vunpack.c.h.bf16 %v28
  %v40 = vunpack.c.l.bf16 %v29
  %v41 = vunpack.c.h.bf16 %v29
  %v42 = vunpack.c.l.bf16 %v30
  %v43 = vunpack.c.h.bf16 %v30
  %v44 = vunpack.c.l.bf16 %v31
  %v45 = vunpack.c.h.bf16 %v31
  %v46 = vunpack.c.l.bf16 %v32
  %v47 = vunpack.c.h.bf16 %v32
  %v48 = vunpack.c.l.bf16 %v33
  %v49 = vunpack.c.h.bf16 %v33
  %v50 = vld [vmem:[%s1] sm:$0xff]
  %v51 = vld [vmem:[%s1 + $0x8] sm:$0xff]
  %v54 = vperm.slane %v50, 0
  %v55 = vperm.slane %v50, 1
  %v56 = vperm.slane %v50, 2
  %v57 = vperm.slane %v50, 3
  %v58 = vperm.slane %v50, 4
  %v59 = vperm.slane %v50, 5
  %v60 = vperm.slane %v50, 6
  %v61 = vperm.slane %v50, 7
  %v62 = vperm.slane %v51, 0
  %v63 = vperm.slane %v51, 1
  %v64 = vperm.slane %v51, 2
  %v65 = vperm.slane %v51, 3
  %v66 = vperm.slane %v51, 4
  %v67 = vperm.slane %v51, 5
  %v68 = vperm.slane %v51, 6
  %v69 = vperm.slane %v51, 7
  %v86 = vmul.f32 %v34, %v54
  %v87 = vmul.f32 %v35, %v55
  %v88 = vmul.f32 %v36, %v56
  %v89 = vmul.f32 %v37, %v57
  %v90 = vmul.f32 %v38, %v58
  %v91 = vmul.f32 %v39, %v59
  %v92 = vmul.f32 %v40, %v60
  %v93 = vmul.f32 %v41, %v61
  %v94 = vmul.f32 %v42, %v62
  %v95 = vmul.f32 %v43, %v63
  %v96 = vmul.f32 %v44, %v64
  %v97 = vmul.f32 %v45, %v65
  %v98 = vmul.f32 %v46, %v66
  %v99 = vmul.f32 %v47, %v67
  %v100 = vmul.f32 %v48, %v68
  %v101 = vmul.f32 %v49, %v69
  %v102 = vld [vmem:[%s2] sm:$0xff]
  %v103 = vld [vmem:[%s2 + $0x8] sm:$0xff]
  %v106 = vperm.slane %v102, 0
  %v107 = vperm.slane %v102, 1
  %v108 = vperm.slane %v102, 2
  %v109 = vperm.slane %v102, 3
  %v110 = vperm.slane %v102, 4
  %v111 = vperm.slane %v102, 5
  %v112 = vperm.slane %v102, 6
  %v113 = vperm.slane %v102, 7
  %v114 = vperm.slane %v103, 0
  %v115 = vperm.slane %v103, 1
  %v116 = vperm.slane %v103, 2
  %v117 = vperm.slane %v103, 3
  %v118 = vperm.slane %v103, 4
  %v119 = vperm.slane %v103, 5
  %v120 = vperm.slane %v103, 6
  %v121 = vperm.slane %v103, 7
  %v138 = vadd.f32 %v86, %v106
  %v139 = vadd.f32 %v87, %v107
  %v140 = vadd.f32 %v88, %v108
  %v141 = vadd.f32 %v89, %v109
  %v142 = vadd.f32 %v90, %v110
  %v143 = vadd.f32 %v91, %v111
  %v144 = vadd.f32 %v92, %v112
  %v145 = vadd.f32 %v93, %v113
  %v146 = vadd.f32 %v94, %v114
  %v147 = vadd.f32 %v95, %v115
  %v148 = vadd.f32 %v96, %v116
  %v149 = vadd.f32 %v97, %v117
  %v150 = vadd.f32 %v98, %v118
  %v151 = vadd.f32 %v99, %v119
  %v152 = vadd.f32 %v100, %v120
  %v153 = vadd.f32 %v101, %v121
  %v154 = vpack.c.bf16 %v138, %v138
  %v155 = vpack.c.bf16 %v139, %v139
  %v156 = vpack.c.bf16 %v140, %v140
  %v157 = vpack.c.bf16 %v141, %v141
  %v158 = vpack.c.bf16 %v142, %v142
  %v159 = vpack.c.bf16 %v143, %v143
  %v160 = vpack.c.bf16 %v144, %v144
  %v161 = vpack.c.bf16 %v145, %v145
  %v162 = vpack.c.bf16 %v146, %v146
  %v163 = vpack.c.bf16 %v147, %v147
  %v164 = vpack.c.bf16 %v148, %v148
  %v165 = vpack.c.bf16 %v149, %v149
  %v166 = vpack.c.bf16 %v150, %v150
  %v167 = vpack.c.bf16 %v151, %v151
  %v168 = vpack.c.bf16 %v152, %v152
  %v169 = vpack.c.bf16 %v153, %v153
  %v170 = vld [vmem:[%s3] sm:$0xff]
  %v171 = vld [vmem:[%s3 + $0x8] sm:$0xff]
  %v172 = vld [vmem:[%s3 + $0x10] sm:$0xff]
  %v173 = vld [vmem:[%s3 + $0x18] sm:$0xff]
  %v174 = vld [vmem:[%s3 + $0x20] sm:$0xff]
  %v175 = vld [vmem:[%s3 + $0x28] sm:$0xff]
  %v176 = vld [vmem:[%s3 + $0x30] sm:$0xff]
  %v177 = vld [vmem:[%s3 + $0x38] sm:$0xff]
  %v178 = vld [vmem:[%s3 + $0x40] sm:$0xff]
  %v179 = vld [vmem:[%s3 + $0x48] sm:$0xff]
  %v180 = vld [vmem:[%s3 + $0x50] sm:$0xff]
  %v181 = vld [vmem:[%s3 + $0x58] sm:$0xff]
  %v182 = vld [vmem:[%s3 + $0x60] sm:$0xff]
  %v183 = vld [vmem:[%s3 + $0x68] sm:$0xff]
  %v184 = vld [vmem:[%s3 + $0x70] sm:$0xff]
  %v185 = vld [vmem:[%s3 + $0x78] sm:$0xff]
  %v186 = vld [vmem:[%s3 + $0x80] sm:$0xff]
  %v187 = vld [vmem:[%s3 + $0x88] sm:$0xff]
  %v188 = vld [vmem:[%s3 + $0x90] sm:$0xff]
  %v189 = vld [vmem:[%s3 + $0x98] sm:$0xff]
  %v190 = vld [vmem:[%s3 + $0xa0] sm:$0xff]
  %v191 = vld [vmem:[%s3 + $0xa8] sm:$0xff]
  %v192 = vld [vmem:[%s3 + $0xb0] sm:$0xff]
  %v193 = vld [vmem:[%s3 + $0xb8] sm:$0xff]
  %v194 = vld [vmem:[%s3 + $0xc0] sm:$0xff]
  %v195 = vld [vmem:[%s3 + $0xc8] sm:$0xff]
  %v196 = vld [vmem:[%s3 + $0xd0] sm:$0xff]
  %v197 = vld [vmem:[%s3 + $0xd8] sm:$0xff]
  %v198 = vld [vmem:[%s3 + $0xe0] sm:$0xff]
  %v199 = vld [vmem:[%s3 + $0xe8] sm:$0xff]
  %v200 = vld [vmem:[%s3 + $0xf0] sm:$0xff]
  %v201 = vld [vmem:[%s3 + $0xf8] sm:$0xff]
  %v202 = vld [vmem:[%s3 + $0x100] sm:$0xff]
  %v203 = vld [vmem:[%s3 + $0x108] sm:$0xff]
  %v204 = vld [vmem:[%s3 + $0x110] sm:$0xff]
  %v205 = vld [vmem:[%s3 + $0x118] sm:$0xff]
  %v206 = vld [vmem:[%s3 + $0x120] sm:$0xff]
  %v207 = vld [vmem:[%s3 + $0x128] sm:$0xff]
  %v208 = vld [vmem:[%s3 + $0x130] sm:$0xff]
  %v209 = vld [vmem:[%s3 + $0x138] sm:$0xff]
  %v210 = vld [vmem:[%s3 + $0x140] sm:$0xff]
  %v211 = vld [vmem:[%s3 + $0x148] sm:$0xff]
  %v212 = vld [vmem:[%s3 + $0x150] sm:$0xff]
  %v213 = vld [vmem:[%s3 + $0x158] sm:$0xff]
  %v214 = vld [vmem:[%s3 + $0x160] sm:$0xff]
  %v215 = vld [vmem:[%s3 + $0x168] sm:$0xff]
  %v216 = vld [vmem:[%s3 + $0x170] sm:$0xff]
  %v217 = vld [vmem:[%s3 + $0x178] sm:$0xff]
  %v218 = vld [vmem:[%s3 + $0x180] sm:$0xff]
  %v219 = vld [vmem:[%s3 + $0x188] sm:$0xff]
  %v220 = vld [vmem:[%s3 + $0x190] sm:$0xff]
  %v221 = vld [vmem:[%s3 + $0x198] sm:$0xff]
  %v222 = vld [vmem:[%s3 + $0x1a0] sm:$0xff]
  %v223 = vld [vmem:[%s3 + $0x1a8] sm:$0xff]
  %v224 = vld [vmem:[%s3 + $0x1b0] sm:$0xff]
  %v225 = vld [vmem:[%s3 + $0x1b8] sm:$0xff]
  %v226 = vld [vmem:[%s3 + $0x1c0] sm:$0xff]
  %v227 = vld [vmem:[%s3 + $0x1c8] sm:$0xff]
  %v228 = vld [vmem:[%s3 + $0x1d0] sm:$0xff]
  %v229 = vld [vmem:[%s3 + $0x1d8] sm:$0xff]
  %v230 = vld [vmem:[%s3 + $0x1e0] sm:$0xff]
  %v231 = vld [vmem:[%s3 + $0x1e8] sm:$0xff]
  %v232 = vld [vmem:[%s3 + $0x1f0] sm:$0xff]
  %v233 = vld [vmem:[%s3 + $0x1f8] sm:$0xff]
  %v234 = vld [vmem:[%s3 + $0x200] sm:$0xff]
  %v235 = vld [vmem:[%s3 + $0x208] sm:$0xff]
  %v236 = vld [vmem:[%s3 + $0x210] sm:$0xff]
  %v237 = vld [vmem:[%s3 + $0x218] sm:$0xff]
  %v238 = vld [vmem:[%s3 + $0x220] sm:$0xff]
  %v239 = vld [vmem:[%s3 + $0x228] sm:$0xff]
  %v240 = vld [vmem:[%s3 + $0x230] sm:$0xff]
  %v241 = vld [vmem:[%s3 + $0x238] sm:$0xff]
  %v242 = vld [vmem:[%s3 + $0x240] sm:$0xff]
  %v243 = vld [vmem:[%s3 + $0x248] sm:$0xff]
  %v244 = vld [vmem:[%s3 + $0x250] sm:$0xff]
  %v245 = vld [vmem:[%s3 + $0x258] sm:$0xff]
  %v246 = vld [vmem:[%s3 + $0x260] sm:$0xff]
  %v247 = vld [vmem:[%s3 + $0x268] sm:$0xff]
  %v248 = vld [vmem:[%s3 + $0x270] sm:$0xff]
  %v249 = vld [vmem:[%s3 + $0x278] sm:$0xff]
  %v250 = vld [vmem:[%s3 + $0x280] sm:$0xff]
  %v251 = vld [vmem:[%s3 + $0x288] sm:$0xff]
  %v252 = vld [vmem:[%s3 + $0x290] sm:$0xff]
  %v253 = vld [vmem:[%s3 + $0x298] sm:$0xff]
  %v254 = vld [vmem:[%s3 + $0x2a0] sm:$0xff]
  %v255 = vld [vmem:[%s3 + $0x2a8] sm:$0xff]
  %v256 = vld [vmem:[%s3 + $0x2b0] sm:$0xff]
  %v257 = vld [vmem:[%s3 + $0x2b8] sm:$0xff]
  %v258 = vld [vmem:[%s3 + $0x2c0] sm:$0xff]
  %v259 = vld [vmem:[%s3 + $0x2c8] sm:$0xff]
  %v260 = vld [vmem:[%s3 + $0x2d0] sm:$0xff]
  %v261 = vld [vmem:[%s3 + $0x2d8] sm:$0xff]
  %v262 = vld [vmem:[%s3 + $0x2e0] sm:$0xff]
  %v263 = vld [vmem:[%s3 + $0x2e8] sm:$0xff]
  %v264 = vld [vmem:[%s3 + $0x2f0] sm:$0xff]
  %v265 = vld [vmem:[%s3 + $0x2f8] sm:$0xff]
  %v266 = vld [vmem:[%s3 + $0x300] sm:$0xff]
  %v267 = vld [vmem:[%s3 + $0x308] sm:$0xff]
  %v268 = vld [vmem:[%s3 + $0x310] sm:$0xff]
  %v269 = vld [vmem:[%s3 + $0x318] sm:$0xff]
  %v270 = vld [vmem:[%s3 + $0x320] sm:$0xff]
  %v271 = vld [vmem:[%s3 + $0x328] sm:$0xff]
  %v272 = vld [vmem:[%s3 + $0x330] sm:$0xff]
  %v273 = vld [vmem:[%s3 + $0x338] sm:$0xff]
  %v274 = vld [vmem:[%s3 + $0x340] sm:$0xff]
  %v275 = vld [vmem:[%s3 + $0x348] sm:$0xff]
  %v276 = vld [vmem:[%s3 + $0x350] sm:$0xff]
  %v277 = vld [vmem:[%s3 + $0x358] sm:$0xff]
  %v278 = vld [vmem:[%s3 + $0x360] sm:$0xff]
  %v279 = vld [vmem:[%s3 + $0x368] sm:$0xff]
  %v280 = vld [vmem:[%s3 + $0x370] sm:$0xff]
  %v281 = vld [vmem:[%s3 + $0x378] sm:$0xff]
  %v282 = vld [vmem:[%s3 + $0x380] sm:$0xff]
  %v283 = vld [vmem:[%s3 + $0x388] sm:$0xff]
  %v284 = vld [vmem:[%s3 + $0x390] sm:$0xff]
  %v285 = vld [vmem:[%s3 + $0x398] sm:$0xff]
  %v286 = vld [vmem:[%s3 + $0x3a0] sm:$0xff]
  %v287 = vld [vmem:[%s3 + $0x3a8] sm:$0xff]
  %v288 = vld [vmem:[%s3 + $0x3b0] sm:$0xff]
  %v289 = vld [vmem:[%s3 + $0x3b8] sm:$0xff]
  %v290 = vld [vmem:[%s3 + $0x3c0] sm:$0xff]
  %v291 = vld [vmem:[%s3 + $0x3c8] sm:$0xff]
  %v292 = vld [vmem:[%s3 + $0x3d0] sm:$0xff]
  %v293 = vld [vmem:[%s3 + $0x3d8] sm:$0xff]
  %v294 = vld [vmem:[%s3 + $0x3e0] sm:$0xff]
  %v295 = vld [vmem:[%s3 + $0x3e8] sm:$0xff]
  %v296 = vld [vmem:[%s3 + $0x3f0] sm:$0xff]
  %v297 = vld [vmem:[%s3 + $0x3f8] sm:$0xff]
  %v298 = vld [vmem:[%s3 + $0x400] sm:$0xff]
  %v299 = vld [vmem:[%s3 + $0x408] sm:$0xff]
  %v300 = vld [vmem:[%s3 + $0x410] sm:$0xff]
  %v301 = vld [vmem:[%s3 + $0x418] sm:$0xff]
  %v302 = vld [vmem:[%s3 + $0x420] sm:$0xff]
  %v303 = vld [vmem:[%s3 + $0x428] sm:$0xff]
  %v304 = vld [vmem:[%s3 + $0x430] sm:$0xff]
  %v305 = vld [vmem:[%s3 + $0x438] sm:$0xff]
  %v306 = vld [vmem:[%s3 + $0x440] sm:$0xff]
  %v307 = vld [vmem:[%s3 + $0x448] sm:$0xff]
  %v308 = vld [vmem:[%s3 + $0x450] sm:$0xff]
  %v309 = vld [vmem:[%s3 + $0x458] sm:$0xff]
  %v310 = vld [vmem:[%s3 + $0x460] sm:$0xff]
  %v311 = vld [vmem:[%s3 + $0x468] sm:$0xff]
  %v312 = vld [vmem:[%s3 + $0x470] sm:$0xff]
  %v313 = vld [vmem:[%s3 + $0x478] sm:$0xff]
  %v314 = vld [vmem:[%s3 + $0x480] sm:$0xff]
  %v315 = vld [vmem:[%s3 + $0x488] sm:$0xff]
  %v316 = vld [vmem:[%s3 + $0x490] sm:$0xff]
  %v317 = vld [vmem:[%s3 + $0x498] sm:$0xff]
  %v318 = vld [vmem:[%s3 + $0x4a0] sm:$0xff]
  %v319 = vld [vmem:[%s3 + $0x4a8] sm:$0xff]
  %v320 = vld [vmem:[%s3 + $0x4b0] sm:$0xff]
  %v321 = vld [vmem:[%s3 + $0x4b8] sm:$0xff]
  %v322 = vld [vmem:[%s3 + $0x4c0] sm:$0xff]
  %v323 = vld [vmem:[%s3 + $0x4c8] sm:$0xff]
  %v324 = vld [vmem:[%s3 + $0x4d0] sm:$0xff]
  %v325 = vld [vmem:[%s3 + $0x4d8] sm:$0xff]
  %v326 = vld [vmem:[%s3 + $0x4e0] sm:$0xff]
  %v327 = vld [vmem:[%s3 + $0x4e8] sm:$0xff]
  %v328 = vld [vmem:[%s3 + $0x4f0] sm:$0xff]
  %v329 = vld [vmem:[%s3 + $0x4f8] sm:$0xff]
  %v330 = vld [vmem:[%s3 + $0x500] sm:$0xff]
  %v331 = vld [vmem:[%s3 + $0x508] sm:$0xff]
  %v332 = vld [vmem:[%s3 + $0x510] sm:$0xff]
  %v333 = vld [vmem:[%s3 + $0x518] sm:$0xff]
  %v334 = vld [vmem:[%s3 + $0x520] sm:$0xff]
  %v335 = vld [vmem:[%s3 + $0x528] sm:$0xff]
  %v336 = vld [vmem:[%s3 + $0x530] sm:$0xff]
  %v337 = vld [vmem:[%s3 + $0x538] sm:$0xff]
  %v338 = vld [vmem:[%s3 + $0x540] sm:$0xff]
  %v339 = vld [vmem:[%s3 + $0x548] sm:$0xff]
  %v340 = vld [vmem:[%s3 + $0x550] sm:$0xff]
  %v341 = vld [vmem:[%s3 + $0x558] sm:$0xff]
  %v342 = vld [vmem:[%s3 + $0x560] sm:$0xff]
  %v343 = vld [vmem:[%s3 + $0x568] sm:$0xff]
  %v344 = vld [vmem:[%s3 + $0x570] sm:$0xff]
  %v345 = vld [vmem:[%s3 + $0x578] sm:$0xff]
  %v346 = vld [vmem:[%s3 + $0x580] sm:$0xff]
  %v347 = vld [vmem:[%s3 + $0x588] sm:$0xff]
  %v348 = vld [vmem:[%s3 + $0x590] sm:$0xff]
  %v349 = vld [vmem:[%s3 + $0x598] sm:$0xff]
  %v350 = vld [vmem:[%s3 + $0x5a0] sm:$0xff]
  %v351 = vld [vmem:[%s3 + $0x5a8] sm:$0xff]
  %v352 = vld [vmem:[%s3 + $0x5b0] sm:$0xff]
  %v353 = vld [vmem:[%s3 + $0x5b8] sm:$0xff]
  %v354 = vld [vmem:[%s3 + $0x5c0] sm:$0xff]
  %v355 = vld [vmem:[%s3 + $0x5c8] sm:$0xff]
  %v356 = vld [vmem:[%s3 + $0x5d0] sm:$0xff]
  %v357 = vld [vmem:[%s3 + $0x5d8] sm:$0xff]
  %v358 = vld [vmem:[%s3 + $0x5e0] sm:$0xff]
  %v359 = vld [vmem:[%s3 + $0x5e8] sm:$0xff]
  %v360 = vld [vmem:[%s3 + $0x5f0] sm:$0xff]
  %v361 = vld [vmem:[%s3 + $0x5f8] sm:$0xff]
  %v362 = vld [vmem:[%s3 + $0x600] sm:$0xff]
  %v363 = vld [vmem:[%s3 + $0x608] sm:$0xff]
  %v364 = vld [vmem:[%s3 + $0x610] sm:$0xff]
  %v365 = vld [vmem:[%s3 + $0x618] sm:$0xff]
  %v366 = vld [vmem:[%s3 + $0x620] sm:$0xff]
  %v367 = vld [vmem:[%s3 + $0x628] sm:$0xff]
  %v368 = vld [vmem:[%s3 + $0x630] sm:$0xff]
  %v369 = vld [vmem:[%s3 + $0x638] sm:$0xff]
  %v370 = vld [vmem:[%s3 + $0x640] sm:$0xff]
  %v371 = vld [vmem:[%s3 + $0x648] sm:$0xff]
  %v372 = vld [vmem:[%s3 + $0x650] sm:$0xff]
  %v373 = vld [vmem:[%s3 + $0x658] sm:$0xff]
  %v374 = vld [vmem:[%s3 + $0x660] sm:$0xff]
  %v375 = vld [vmem:[%s3 + $0x668] sm:$0xff]
  %v376 = vld [vmem:[%s3 + $0x670] sm:$0xff]
  %v377 = vld [vmem:[%s3 + $0x678] sm:$0xff]
  %v378 = vld [vmem:[%s3 + $0x680] sm:$0xff]
  %v379 = vld [vmem:[%s3 + $0x688] sm:$0xff]
  %v380 = vld [vmem:[%s3 + $0x690] sm:$0xff]
  %v381 = vld [vmem:[%s3 + $0x698] sm:$0xff]
  %v382 = vld [vmem:[%s3 + $0x6a0] sm:$0xff]
  %v383 = vld [vmem:[%s3 + $0x6a8] sm:$0xff]
  %v384 = vld [vmem:[%s3 + $0x6b0] sm:$0xff]
  %v385 = vld [vmem:[%s3 + $0x6b8] sm:$0xff]
  %v386 = vld [vmem:[%s3 + $0x6c0] sm:$0xff]
  %v387 = vld [vmem:[%s3 + $0x6c8] sm:$0xff]
  %v388 = vld [vmem:[%s3 + $0x6d0] sm:$0xff]
  %v389 = vld [vmem:[%s3 + $0x6d8] sm:$0xff]
  %v390 = vld [vmem:[%s3 + $0x6e0] sm:$0xff]
  %v391 = vld [vmem:[%s3 + $0x6e8] sm:$0xff]
  %v392 = vld [vmem:[%s3 + $0x6f0] sm:$0xff]
  %v393 = vld [vmem:[%s3 + $0x6f8] sm:$0xff]
  %v394 = vld [vmem:[%s3 + $0x700] sm:$0xff]
  %v395 = vld [vmem:[%s3 + $0x708] sm:$0xff]
  %v396 = vld [vmem:[%s3 + $0x710] sm:$0xff]
  %v397 = vld [vmem:[%s3 + $0x718] sm:$0xff]
  %v398 = vld [vmem:[%s3 + $0x720] sm:$0xff]
  %v399 = vld [vmem:[%s3 + $0x728] sm:$0xff]
  %v400 = vld [vmem:[%s3 + $0x730] sm:$0xff]
  %v401 = vld [vmem:[%s3 + $0x738] sm:$0xff]
  %v402 = vld [vmem:[%s3 + $0x740] sm:$0xff]
  %v403 = vld [vmem:[%s3 + $0x748] sm:$0xff]
  %v404 = vld [vmem:[%s3 + $0x750] sm:$0xff]
  %v405 = vld [vmem:[%s3 + $0x758] sm:$0xff]
  %v406 = vld [vmem:[%s3 + $0x760] sm:$0xff]
  %v407 = vld [vmem:[%s3 + $0x768] sm:$0xff]
  %v408 = vld [vmem:[%s3 + $0x770] sm:$0xff]
  %v409 = vld [vmem:[%s3 + $0x778] sm:$0xff]
  %v410 = vld [vmem:[%s3 + $0x780] sm:$0xff]
  %v411 = vld [vmem:[%s3 + $0x788] sm:$0xff]
  %v412 = vld [vmem:[%s3 + $0x790] sm:$0xff]
  %v413 = vld [vmem:[%s3 + $0x798] sm:$0xff]
  %v414 = vld [vmem:[%s3 + $0x7a0] sm:$0xff]
  %v415 = vld [vmem:[%s3 + $0x7a8] sm:$0xff]
  %v416 = vld [vmem:[%s3 + $0x7b0] sm:$0xff]
  %v417 = vld [vmem:[%s3 + $0x7b8] sm:$0xff]
  %v418 = vld [vmem:[%s3 + $0x7c0] sm:$0xff]
  %v419 = vld [vmem:[%s3 + $0x7c8] sm:$0xff]
  %v420 = vld [vmem:[%s3 + $0x7d0] sm:$0xff]
  %v421 = vld [vmem:[%s3 + $0x7d8] sm:$0xff]
  %v422 = vld [vmem:[%s3 + $0x7e0] sm:$0xff]
  %v423 = vld [vmem:[%s3 + $0x7e8] sm:$0xff]
  %v424 = vld [vmem:[%s3 + $0x7f0] sm:$0xff]
  %v425 = vld [vmem:[%s3 + $0x7f8] sm:$0xff]
  %v426 = vld [vmem:[%s4] sm:$0x3]
  %v428 = vperm.slane %v426, 0
  %v429 = vperm.slane %v426, 1
  %v688 = vunpack.c.l.b16 %v170
  %v689 = vunpack.c.h.b16 %v170
  %v690 = vunpack.c.l.b16 %v171
  %v691 = vunpack.c.h.b16 %v171
  %v692 = vunpack.c.l.b16 %v172
  %v693 = vunpack.c.h.b16 %v172
  %v694 = vunpack.c.l.b16 %v173
  %v695 = vunpack.c.h.b16 %v173
  %v696 = vunpack.c.l.b16 %v174
  %v697 = vunpack.c.h.b16 %v174
  %v698 = vunpack.c.l.b16 %v175
  %v699 = vunpack.c.h.b16 %v175
  %v700 = vunpack.c.l.b16 %v176
  %v701 = vunpack.c.h.b16 %v176
  %v702 = vunpack.c.l.b16 %v177
  %v703 = vunpack.c.h.b16 %v177
  %v704 = vunpack.c.l.b16 %v178
  %v705 = vunpack.c.h.b16 %v178
  %v706 = vunpack.c.l.b16 %v179
  %v707 = vunpack.c.h.b16 %v179
  %v708 = vunpack.c.l.b16 %v180
  %v709 = vunpack.c.h.b16 %v180
  %v710 = vunpack.c.l.b16 %v181
  %v711 = vunpack.c.h.b16 %v181
  %v712 = vunpack.c.l.b16 %v182
  %v713 = vunpack.c.h.b16 %v182
  %v714 = vunpack.c.l.b16 %v183
  %v715 = vunpack.c.h.b16 %v183
  %v716 = vunpack.c.l.b16 %v184
  %v717 = vunpack.c.h.b16 %v184
  %v718 = vunpack.c.l.b16 %v185
  %v719 = vunpack.c.h.b16 %v185
  %v720 = vunpack.c.l.b16 %v186
  %v721 = vunpack.c.h.b16 %v186
  %v722 = vunpack.c.l.b16 %v187
  %v723 = vunpack.c.h.b16 %v187
  %v724 = vunpack.c.l.b16 %v188
  %v725 = vunpack.c.h.b16 %v188
  %v726 = vunpack.c.l.b16 %v189
  %v727 = vunpack.c.h.b16 %v189
  %v728 = vunpack.c.l.b16 %v190
  %v729 = vunpack.c.h.b16 %v190
  %v730 = vunpack.c.l.b16 %v191
  %v731 = vunpack.c.h.b16 %v191
  %v732 = vunpack.c.l.b16 %v192
  %v733 = vunpack.c.h.b16 %v192
  %v734 = vunpack.c.l.b16 %v193
  %v735 = vunpack.c.h.b16 %v193
  %v736 = vunpack.c.l.b16 %v194
  %v737 = vunpack.c.h.b16 %v194
  %v738 = vunpack.c.l.b16 %v195
  %v739 = vunpack.c.h.b16 %v195
  %v740 = vunpack.c.l.b16 %v196
  %v741 = vunpack.c.h.b16 %v196
  %v742 = vunpack.c.l.b16 %v197
  %v743 = vunpack.c.h.b16 %v197
  %v744 = vunpack.c.l.b16 %v198
  %v745 = vunpack.c.h.b16 %v198
  %v746 = vunpack.c.l.b16 %v199
  %v747 = vunpack.c.h.b16 %v199
  %v748 = vunpack.c.l.b16 %v200
  %v749 = vunpack.c.h.b16 %v200
  %v750 = vunpack.c.l.b16 %v201
  %v751 = vunpack.c.h.b16 %v201
  %v752 = vunpack.c.l.b16 %v202
  %v753 = vunpack.c.h.b16 %v202
  %v754 = vunpack.c.l.b16 %v203
  %v755 = vunpack.c.h.b16 %v203
  %v756 = vunpack.c.l.b16 %v204
  %v757 = vunpack.c.h.b16 %v204
  %v758 = vunpack.c.l.b16 %v205
  %v759 = vunpack.c.h.b16 %v205
  %v760 = vunpack.c.l.b16 %v206
  %v761 = vunpack.c.h.b16 %v206
  %v762 = vunpack.c.l.b16 %v207
  %v763 = vunpack.c.h.b16 %v207
  %v764 = vunpack.c.l.b16 %v208
  %v765 = vunpack.c.h.b16 %v208
  %v766 = vunpack.c.l.b16 %v209
  %v767 = vunpack.c.h.b16 %v209
  %v768 = vunpack.c.l.b16 %v210
  %v769 = vunpack.c.h.b16 %v210
  %v770 = vunpack.c.l.b16 %v211
  %v771 = vunpack.c.h.b16 %v211
  %v772 = vunpack.c.l.b16 %v212
  %v773 = vunpack.c.h.b16 %v212
  %v774 = vunpack.c.l.b16 %v213
  %v775 = vunpack.c.h.b16 %v213
  %v776 = vunpack.c.l.b16 %v214
  %v777 = vunpack.c.h.b16 %v214
  %v778 = vunpack.c.l.b16 %v215
  %v779 = vunpack.c.h.b16 %v215
  %v780 = vunpack.c.l.b16 %v216
  %v781 = vunpack.c.h.b16 %v216
  %v782 = vunpack.c.l.b16 %v217
  %v783 = vunpack.c.h.b16 %v217
  %v784 = vunpack.c.l.b16 %v218
  %v785 = vunpack.c.h.b16 %v218
  %v786 = vunpack.c.l.b16 %v219
  %v787 = vunpack.c.h.b16 %v219
  %v788 = vunpack.c.l.b16 %v220
  %v789 = vunpack.c.h.b16 %v220
  %v790 = vunpack.c.l.b16 %v221
  %v791 = vunpack.c.h.b16 %v221
  %v792 = vunpack.c.l.b16 %v222
  %v793 = vunpack.c.h.b16 %v222
  %v794 = vunpack.c.l.b16 %v223
  %v795 = vunpack.c.h.b16 %v223
  %v796 = vunpack.c.l.b16 %v224
  %v797 = vunpack.c.h.b16 %v224
  %v798 = vunpack.c.l.b16 %v225
  %v799 = vunpack.c.h.b16 %v225
  %v800 = vunpack.c.l.b16 %v226
  %v801 = vunpack.c.h.b16 %v226
  %v802 = vunpack.c.l.b16 %v227
  %v803 = vunpack.c.h.b16 %v227
  %v804 = vunpack.c.l.b16 %v228
  %v805 = vunpack.c.h.b16 %v228
  %v806 = vunpack.c.l.b16 %v229
  %v807 = vunpack.c.h.b16 %v229
  %v808 = vunpack.c.l.b16 %v230
  %v809 = vunpack.c.h.b16 %v230
  %v810 = vunpack.c.l.b16 %v231
  %v811 = vunpack.c.h.b16 %v231
  %v812 = vunpack.c.l.b16 %v232
  %v813 = vunpack.c.h.b16 %v232
  %v814 = vunpack.c.l.b16 %v233
  %v815 = vunpack.c.h.b16 %v233
  %v816 = vunpack.c.l.b16 %v234
  %v817 = vunpack.c.h.b16 %v234
  %v818 = vunpack.c.l.b16 %v235
  %v819 = vunpack.c.h.b16 %v235
  %v820 = vunpack.c.l.b16 %v236
  %v821 = vunpack.c.h.b16 %v236
  %v822 = vunpack.c.l.b16 %v237
  %v823 = vunpack.c.h.b16 %v237
  %v824 = vunpack.c.l.b16 %v238
  %v825 = vunpack.c.h.b16 %v238
  %v826 = vunpack.c.l.b16 %v239
  %v827 = vunpack.c.h.b16 %v239
  %v828 = vunpack.c.l.b16 %v240
  %v829 = vunpack.c.h.b16 %v240
  %v830 = vunpack.c.l.b16 %v241
  %v831 = vunpack.c.h.b16 %v241
  %v832 = vunpack.c.l.b16 %v242
  %v833 = vunpack.c.h.b16 %v242
  %v834 = vunpack.c.l.b16 %v243
  %v835 = vunpack.c.h.b16 %v243
  %v836 = vunpack.c.l.b16 %v244
  %v837 = vunpack.c.h.b16 %v244
  %v838 = vunpack.c.l.b16 %v245
  %v839 = vunpack.c.h.b16 %v245
  %v840 = vunpack.c.l.b16 %v246
  %v841 = vunpack.c.h.b16 %v246
  %v842 = vunpack.c.l.b16 %v247
  %v843 = vunpack.c.h.b16 %v247
  %v844 = vunpack.c.l.b16 %v248
  %v845 = vunpack.c.h.b16 %v248
  %v846 = vunpack.c.l.b16 %v249
  %v847 = vunpack.c.h.b16 %v249
  %v848 = vunpack.c.l.b16 %v250
  %v849 = vunpack.c.h.b16 %v250
  %v850 = vunpack.c.l.b16 %v251
  %v851 = vunpack.c.h.b16 %v251
  %v852 = vunpack.c.l.b16 %v252
  %v853 = vunpack.c.h.b16 %v252
  %v854 = vunpack.c.l.b16 %v253
  %v855 = vunpack.c.h.b16 %v253
  %v856 = vunpack.c.l.b16 %v254
  %v857 = vunpack.c.h.b16 %v254
  %v858 = vunpack.c.l.b16 %v255
  %v859 = vunpack.c.h.b16 %v255
  %v860 = vunpack.c.l.b16 %v256
  %v861 = vunpack.c.h.b16 %v256
  %v862 = vunpack.c.l.b16 %v257
  %v863 = vunpack.c.h.b16 %v257
  %v864 = vunpack.c.l.b16 %v258
  %v865 = vunpack.c.h.b16 %v258
  %v866 = vunpack.c.l.b16 %v259
  %v867 = vunpack.c.h.b16 %v259
  %v868 = vunpack.c.l.b16 %v260
  %v869 = vunpack.c.h.b16 %v260
  %v870 = vunpack.c.l.b16 %v261
  %v871 = vunpack.c.h.b16 %v261
  %v872 = vunpack.c.l.b16 %v262
  %v873 = vunpack.c.h.b16 %v262
  %v874 = vunpack.c.l.b16 %v263
  %v875 = vunpack.c.h.b16 %v263
  %v876 = vunpack.c.l.b16 %v264
  %v877 = vunpack.c.h.b16 %v264
  %v878 = vunpack.c.l.b16 %v265
  %v879 = vunpack.c.h.b16 %v265
  %v880 = vunpack.c.l.b16 %v266
  %v881 = vunpack.c.h.b16 %v266
  %v882 = vunpack.c.l.b16 %v267
  %v883 = vunpack.c.h.b16 %v267
  %v884 = vunpack.c.l.b16 %v268
  %v885 = vunpack.c.h.b16 %v268
  %v886 = vunpack.c.l.b16 %v269
  %v887 = vunpack.c.h.b16 %v269
  %v888 = vunpack.c.l.b16 %v270
  %v889 = vunpack.c.h.b16 %v270
  %v890 = vunpack.c.l.b16 %v271
  %v891 = vunpack.c.h.b16 %v271
  %v892 = vunpack.c.l.b16 %v272
  %v893 = vunpack.c.h.b16 %v272
  %v894 = vunpack.c.l.b16 %v273
  %v895 = vunpack.c.h.b16 %v273
  %v896 = vunpack.c.l.b16 %v274
  %v897 = vunpack.c.h.b16 %v274
  %v898 = vunpack.c.l.b16 %v275
  %v899 = vunpack.c.h.b16 %v275
  %v900 = vunpack.c.l.b16 %v276
  %v901 = vunpack.c.h.b16 %v276
  %v902 = vunpack.c.l.b16 %v277
  %v903 = vunpack.c.h.b16 %v277
  %v904 = vunpack.c.l.b16 %v278
  %v905 = vunpack.c.h.b16 %v278
  %v906 = vunpack.c.l.b16 %v279
  %v907 = vunpack.c.h.b16 %v279
  %v908 = vunpack.c.l.b16 %v280
  %v909 = vunpack.c.h.b16 %v280
  %v910 = vunpack.c.l.b16 %v281
  %v911 = vunpack.c.h.b16 %v281
  %v912 = vunpack.c.l.b16 %v282
  %v913 = vunpack.c.h.b16 %v282
  %v914 = vunpack.c.l.b16 %v283
  %v915 = vunpack.c.h.b16 %v283
  %v916 = vunpack.c.l.b16 %v284
  %v917 = vunpack.c.h.b16 %v284
  %v918 = vunpack.c.l.b16 %v285
  %v919 = vunpack.c.h.b16 %v285
  %v920 = vunpack.c.l.b16 %v286
  %v921 = vunpack.c.h.b16 %v286
  %v922 = vunpack.c.l.b16 %v287
  %v923 = vunpack.c.h.b16 %v287
  %v924 = vunpack.c.l.b16 %v288
  %v925 = vunpack.c.h.b16 %v288
  %v926 = vunpack.c.l.b16 %v289
  %v927 = vunpack.c.h.b16 %v289
  %v928 = vunpack.c.l.b16 %v290
  %v929 = vunpack.c.h.b16 %v290
  %v930 = vunpack.c.l.b16 %v291
  %v931 = vunpack.c.h.b16 %v291
  %v932 = vunpack.c.l.b16 %v292
  %v933 = vunpack.c.h.b16 %v292
  %v934 = vunpack.c.l.b16 %v293
  %v935 = vunpack.c.h.b16 %v293
  %v936 = vunpack.c.l.b16 %v294
  %v937 = vunpack.c.h.b16 %v294
  %v938 = vunpack.c.l.b16 %v295
  %v939 = vunpack.c.h.b16 %v295
  %v940 = vunpack.c.l.b16 %v296
  %v941 = vunpack.c.h.b16 %v296
  %v942 = vunpack.c.l.b16 %v297
  %v943 = vunpack.c.h.b16 %v297
  %v944 = vunpack.c.l.b16 %v298
  %v945 = vunpack.c.h.b16 %v298
  %v946 = vunpack.c.l.b16 %v299
  %v947 = vunpack.c.h.b16 %v299
  %v948 = vunpack.c.l.b16 %v300
  %v949 = vunpack.c.h.b16 %v300
  %v950 = vunpack.c.l.b16 %v301
  %v951 = vunpack.c.h.b16 %v301
  %v952 = vunpack.c.l.b16 %v302
  %v953 = vunpack.c.h.b16 %v302
  %v954 = vunpack.c.l.b16 %v303
  %v955 = vunpack.c.h.b16 %v303
  %v956 = vunpack.c.l.b16 %v304
  %v957 = vunpack.c.h.b16 %v304
  %v958 = vunpack.c.l.b16 %v305
  %v959 = vunpack.c.h.b16 %v305
  %v960 = vunpack.c.l.b16 %v306
  %v961 = vunpack.c.h.b16 %v306
  %v962 = vunpack.c.l.b16 %v307
  %v963 = vunpack.c.h.b16 %v307
  %v964 = vunpack.c.l.b16 %v308
  %v965 = vunpack.c.h.b16 %v308
  %v966 = vunpack.c.l.b16 %v309
  %v967 = vunpack.c.h.b16 %v309
  %v968 = vunpack.c.l.b16 %v310
  %v969 = vunpack.c.h.b16 %v310
  %v970 = vunpack.c.l.b16 %v311
  %v971 = vunpack.c.h.b16 %v311
  %v972 = vunpack.c.l.b16 %v312
  %v973 = vunpack.c.h.b16 %v312
  %v974 = vunpack.c.l.b16 %v313
  %v975 = vunpack.c.h.b16 %v313
  %v976 = vunpack.c.l.b16 %v314
  %v977 = vunpack.c.h.b16 %v314
  %v978 = vunpack.c.l.b16 %v315
  %v979 = vunpack.c.h.b16 %v315
  %v980 = vunpack.c.l.b16 %v316
  %v981 = vunpack.c.h.b16 %v316
  %v982 = vunpack.c.l.b16 %v317
  %v983 = vunpack.c.h.b16 %v317
  %v984 = vunpack.c.l.b16 %v318
  %v985 = vunpack.c.h.b16 %v318
  %v986 = vunpack.c.l.b16 %v319
  %v987 = vunpack.c.h.b16 %v319
  %v988 = vunpack.c.l.b16 %v320
  %v989 = vunpack.c.h.b16 %v320
  %v990 = vunpack.c.l.b16 %v321
  %v991 = vunpack.c.h.b16 %v321
  %v992 = vunpack.c.l.b16 %v322
  %v993 = vunpack.c.h.b16 %v322
  %v994 = vunpack.c.l.b16 %v323
  %v995 = vunpack.c.h.b16 %v323
  %v996 = vunpack.c.l.b16 %v324
  %v997 = vunpack.c.h.b16 %v324
  %v998 = vunpack.c.l.b16 %v325
  %v999 = vunpack.c.h.b16 %v325
  %v1000 = vunpack.c.l.b16 %v326
  %v1001 = vunpack.c.h.b16 %v326
  %v1002 = vunpack.c.l.b16 %v327
  %v1003 = vunpack.c.h.b16 %v327
  %v1004 = vunpack.c.l.b16 %v328
  %v1005 = vunpack.c.h.b16 %v328
  %v1006 = vunpack.c.l.b16 %v329
  %v1007 = vunpack.c.h.b16 %v329
  %v1008 = vunpack.c.l.b16 %v330
  %v1009 = vunpack.c.h.b16 %v330
  %v1010 = vunpack.c.l.b16 %v331
  %v1011 = vunpack.c.h.b16 %v331
  %v1012 = vunpack.c.l.b16 %v332
  %v1013 = vunpack.c.h.b16 %v332
  %v1014 = vunpack.c.l.b16 %v333
  %v1015 = vunpack.c.h.b16 %v333
  %v1016 = vunpack.c.l.b16 %v334
  %v1017 = vunpack.c.h.b16 %v334
  %v1018 = vunpack.c.l.b16 %v335
  %v1019 = vunpack.c.h.b16 %v335
  %v1020 = vunpack.c.l.b16 %v336
  %v1021 = vunpack.c.h.b16 %v336
  %v1022 = vunpack.c.l.b16 %v337
  %v1023 = vunpack.c.h.b16 %v337
  %v1024 = vunpack.c.l.b16 %v338
  %v1025 = vunpack.c.h.b16 %v338
  %v1026 = vunpack.c.l.b16 %v339
  %v1027 = vunpack.c.h.b16 %v339
  %v1028 = vunpack.c.l.b16 %v340
  %v1029 = vunpack.c.h.b16 %v340
  %v1030 = vunpack.c.l.b16 %v341
  %v1031 = vunpack.c.h.b16 %v341
  %v1032 = vunpack.c.l.b16 %v342
  %v1033 = vunpack.c.h.b16 %v342
  %v1034 = vunpack.c.l.b16 %v343
  %v1035 = vunpack.c.h.b16 %v343
  %v1036 = vunpack.c.l.b16 %v344
  %v1037 = vunpack.c.h.b16 %v344
  %v1038 = vunpack.c.l.b16 %v345
  %v1039 = vunpack.c.h.b16 %v345
  %v1040 = vunpack.c.l.b16 %v346
  %v1041 = vunpack.c.h.b16 %v346
  %v1042 = vunpack.c.l.b16 %v347
  %v1043 = vunpack.c.h.b16 %v347
  %v1044 = vunpack.c.l.b16 %v348
  %v1045 = vunpack.c.h.b16 %v348
  %v1046 = vunpack.c.l.b16 %v349
  %v1047 = vunpack.c.h.b16 %v349
  %v1048 = vunpack.c.l.b16 %v350
  %v1049 = vunpack.c.h.b16 %v350
  %v1050 = vunpack.c.l.b16 %v351
  %v1051 = vunpack.c.h.b16 %v351
  %v1052 = vunpack.c.l.b16 %v352
  %v1053 = vunpack.c.h.b16 %v352
  %v1054 = vunpack.c.l.b16 %v353
  %v1055 = vunpack.c.h.b16 %v353
  %v1056 = vunpack.c.l.b16 %v354
  %v1057 = vunpack.c.h.b16 %v354
  %v1058 = vunpack.c.l.b16 %v355
  %v1059 = vunpack.c.h.b16 %v355
  %v1060 = vunpack.c.l.b16 %v356
  %v1061 = vunpack.c.h.b16 %v356
  %v1062 = vunpack.c.l.b16 %v357
  %v1063 = vunpack.c.h.b16 %v357
  %v1064 = vunpack.c.l.b16 %v358
  %v1065 = vunpack.c.h.b16 %v358
  %v1066 = vunpack.c.l.b16 %v359
  %v1067 = vunpack.c.h.b16 %v359
  %v1068 = vunpack.c.l.b16 %v360
  %v1069 = vunpack.c.h.b16 %v360
  %v1070 = vunpack.c.l.b16 %v361
  %v1071 = vunpack.c.h.b16 %v361
  %v1072 = vunpack.c.l.b16 %v362
  %v1073 = vunpack.c.h.b16 %v362
  %v1074 = vunpack.c.l.b16 %v363
  %v1075 = vunpack.c.h.b16 %v363
  %v1076 = vunpack.c.l.b16 %v364
  %v1077 = vunpack.c.h.b16 %v364
  %v1078 = vunpack.c.l.b16 %v365
  %v1079 = vunpack.c.h.b16 %v365
  %v1080 = vunpack.c.l.b16 %v366
  %v1081 = vunpack.c.h.b16 %v366
  %v1082 = vunpack.c.l.b16 %v367
  %v1083 = vunpack.c.h.b16 %v367
  %v1084 = vunpack.c.l.b16 %v368
  %v1085 = vunpack.c.h.b16 %v368
  %v1086 = vunpack.c.l.b16 %v369
  %v1087 = vunpack.c.h.b16 %v369
  %v1088 = vunpack.c.l.b16 %v370
  %v1089 = vunpack.c.h.b16 %v370
  %v1090 = vunpack.c.l.b16 %v371
  %v1091 = vunpack.c.h.b16 %v371
  %v1092 = vunpack.c.l.b16 %v372
  %v1093 = vunpack.c.h.b16 %v372
  %v1094 = vunpack.c.l.b16 %v373
  %v1095 = vunpack.c.h.b16 %v373
  %v1096 = vunpack.c.l.b16 %v374
  %v1097 = vunpack.c.h.b16 %v374
  %v1098 = vunpack.c.l.b16 %v375
  %v1099 = vunpack.c.h.b16 %v375
  %v1100 = vunpack.c.l.b16 %v376
  %v1101 = vunpack.c.h.b16 %v376
  %v1102 = vunpack.c.l.b16 %v377
  %v1103 = vunpack.c.h.b16 %v377
  %v1104 = vunpack.c.l.b16 %v378
  %v1105 = vunpack.c.h.b16 %v378
  %v1106 = vunpack.c.l.b16 %v379
  %v1107 = vunpack.c.h.b16 %v379
  %v1108 = vunpack.c.l.b16 %v380
  %v1109 = vunpack.c.h.b16 %v380
  %v1110 = vunpack.c.l.b16 %v381
  %v1111 = vunpack.c.h.b16 %v381
  %v1112 = vunpack.c.l.b16 %v382
  %v1113 = vunpack.c.h.b16 %v382
  %v1114 = vunpack.c.l.b16 %v383
  %v1115 = vunpack.c.h.b16 %v383
  %v1116 = vunpack.c.l.b16 %v384
  %v1117 = vunpack.c.h.b16 %v384
  %v1118 = vunpack.c.l.b16 %v385
  %v1119 = vunpack.c.h.b16 %v385
  %v1120 = vunpack.c.l.b16 %v386
  %v1121 = vunpack.c.h.b16 %v386
  %v1122 = vunpack.c.l.b16 %v387
  %v1123 = vunpack.c.h.b16 %v387
  %v1124 = vunpack.c.l.b16 %v388
  %v1125 = vunpack.c.h.b16 %v388
  %v1126 = vunpack.c.l.b16 %v389
  %v1127 = vunpack.c.h.b16 %v389
  %v1128 = vunpack.c.l.b16 %v390
  %v1129 = vunpack.c.h.b16 %v390
  %v1130 = vunpack.c.l.b16 %v391
  %v1131 = vunpack.c.h.b16 %v391
  %v1132 = vunpack.c.l.b16 %v392
  %v1133 = vunpack.c.h.b16 %v392
  %v1134 = vunpack.c.l.b16 %v393
  %v1135 = vunpack.c.h.b16 %v393
  %v1136 = vunpack.c.l.b16 %v394
  %v1137 = vunpack.c.h.b16 %v394
  %v1138 = vunpack.c.l.b16 %v395
  %v1139 = vunpack.c.h.b16 %v395
  %v1140 = vunpack.c.l.b16 %v396
  %v1141 = vunpack.c.h.b16 %v396
  %v1142 = vunpack.c.l.b16 %v397
  %v1143 = vunpack.c.h.b16 %v397
  %v1144 = vunpack.c.l.b16 %v398
  %v1145 = vunpack.c.h.b16 %v398
  %v1146 = vunpack.c.l.b16 %v399
  %v1147 = vunpack.c.h.b16 %v399
  %v1148 = vunpack.c.l.b16 %v400
  %v1149 = vunpack.c.h.b16 %v400
  %v1150 = vunpack.c.l.b16 %v401
  %v1151 = vunpack.c.h.b16 %v401
  %v1152 = vunpack.c.l.b16 %v402
  %v1153 = vunpack.c.h.b16 %v402
  %v1154 = vunpack.c.l.b16 %v403
  %v1155 = vunpack.c.h.b16 %v403
  %v1156 = vunpack.c.l.b16 %v404
  %v1157 = vunpack.c.h.b16 %v404
  %v1158 = vunpack.c.l.b16 %v405
  %v1159 = vunpack.c.h.b16 %v405
  %v1160 = vunpack.c.l.b16 %v406
  %v1161 = vunpack.c.h.b16 %v406
  %v1162 = vunpack.c.l.b16 %v407
  %v1163 = vunpack.c.h.b16 %v407
  %v1164 = vunpack.c.l.b16 %v408
  %v1165 = vunpack.c.h.b16 %v408
  %v1166 = vunpack.c.l.b16 %v409
  %v1167 = vunpack.c.h.b16 %v409
  %v1168 = vunpack.c.l.b16 %v410
  %v1169 = vunpack.c.h.b16 %v410
  %v1170 = vunpack.c.l.b16 %v411
  %v1171 = vunpack.c.h.b16 %v411
  %v1172 = vunpack.c.l.b16 %v412
  %v1173 = vunpack.c.h.b16 %v412
  %v1174 = vunpack.c.l.b16 %v413
  %v1175 = vunpack.c.h.b16 %v413
  %v1176 = vunpack.c.l.b16 %v414
  %v1177 = vunpack.c.h.b16 %v414
  %v1178 = vunpack.c.l.b16 %v415
  %v1179 = vunpack.c.h.b16 %v415
  %v1180 = vunpack.c.l.b16 %v416
  %v1181 = vunpack.c.h.b16 %v416
  %v1182 = vunpack.c.l.b16 %v417
  %v1183 = vunpack.c.h.b16 %v417
  %v1184 = vunpack.c.l.b16 %v418
  %v1185 = vunpack.c.h.b16 %v418
  %v1186 = vunpack.c.l.b16 %v419
  %v1187 = vunpack.c.h.b16 %v419
  %v1188 = vunpack.c.l.b16 %v420
  %v1189 = vunpack.c.h.b16 %v420
  %v1190 = vunpack.c.l.b16 %v421
  %v1191 = vunpack.c.h.b16 %v421
  %v1192 = vunpack.c.l.b16 %v422
  %v1193 = vunpack.c.h.b16 %v422
  %v1194 = vunpack.c.l.b16 %v423
  %v1195 = vunpack.c.h.b16 %v423
  %v1196 = vunpack.c.l.b16 %v424
  %v1197 = vunpack.c.h.b16 %v424
  %v1198 = vunpack.c.l.b16 %v425
  %v1199 = vunpack.c.h.b16 %v425
  %v1200 = vpack.c.b16 %v690, %v688
  %v1201 = vpack.c.b16 %v691, %v689
  %v1202 = vpack.c.b16 %v694, %v692
  %v1203 = vpack.c.b16 %v695, %v693
  %v1204 = vpack.c.b16 %v698, %v696
  %v1205 = vpack.c.b16 %v699, %v697
  %v1206 = vpack.c.b16 %v702, %v700
  %v1207 = vpack.c.b16 %v703, %v701
  %v1208 = vpack.c.b16 %v706, %v704
  %v1209 = vpack.c.b16 %v707, %v705
  %v1210 = vpack.c.b16 %v710, %v708
  %v1211 = vpack.c.b16 %v711, %v709
  %v1212 = vpack.c.b16 %v714, %v712
  %v1213 = vpack.c.b16 %v715, %v713
  %v1214 = vpack.c.b16 %v718, %v716
  %v1215 = vpack.c.b16 %v719, %v717
  %v1216 = vpack.c.b16 %v722, %v720
  %v1217 = vpack.c.b16 %v723, %v721
  %v1218 = vpack.c.b16 %v726, %v724
  %v1219 = vpack.c.b16 %v727, %v725
  %v1220 = vpack.c.b16 %v730, %v728
  %v1221 = vpack.c.b16 %v731, %v729
  %v1222 = vpack.c.b16 %v734, %v732
  %v1223 = vpack.c.b16 %v735, %v733
  %v1224 = vpack.c.b16 %v738, %v736
  %v1225 = vpack.c.b16 %v739, %v737
  %v1226 = vpack.c.b16 %v742, %v740
  %v1227 = vpack.c.b16 %v743, %v741
  %v1228 = vpack.c.b16 %v746, %v744
  %v1229 = vpack.c.b16 %v747, %v745
  %v1230 = vpack.c.b16 %v750, %v748
  %v1231 = vpack.c.b16 %v751, %v749
  %v1232 = vpack.c.b16 %v754, %v752
  %v1233 = vpack.c.b16 %v755, %v753
  %v1234 = vpack.c.b16 %v758, %v756
  %v1235 = vpack.c.b16 %v759, %v757
  %v1236 = vpack.c.b16 %v762, %v760
  %v1237 = vpack.c.b16 %v763, %v761
  %v1238 = vpack.c.b16 %v766, %v764
  %v1239 = vpack.c.b16 %v767, %v765
  %v1240 = vpack.c.b16 %v770, %v768
  %v1241 = vpack.c.b16 %v771, %v769
  %v1242 = vpack.c.b16 %v774, %v772
  %v1243 = vpack.c.b16 %v775, %v773
  %v1244 = vpack.c.b16 %v778, %v776
  %v1245 = vpack.c.b16 %v779, %v777
  %v1246 = vpack.c.b16 %v782, %v780
  %v1247 = vpack.c.b16 %v783, %v781
  %v1248 = vpack.c.b16 %v786, %v784
  %v1249 = vpack.c.b16 %v787, %v785
  %v1250 = vpack.c.b16 %v790, %v788
  %v1251 = vpack.c.b16 %v791, %v789
  %v1252 = vpack.c.b16 %v794, %v792
  %v1253 = vpack.c.b16 %v795, %v793
  %v1254 = vpack.c.b16 %v798, %v796
  %v1255 = vpack.c.b16 %v799, %v797
  %v1256 = vpack.c.b16 %v802, %v800
  %v1257 = vpack.c.b16 %v803, %v801
  %v1258 = vpack.c.b16 %v806, %v804
  %v1259 = vpack.c.b16 %v807, %v805
  %v1260 = vpack.c.b16 %v810, %v808
  %v1261 = vpack.c.b16 %v811, %v809
  %v1262 = vpack.c.b16 %v814, %v812
  %v1263 = vpack.c.b16 %v815, %v813
  %v1264 = vpack.c.b16 %v818, %v816
  %v1265 = vpack.c.b16 %v819, %v817
  %v1266 = vpack.c.b16 %v822, %v820
  %v1267 = vpack.c.b16 %v823, %v821
  %v1268 = vpack.c.b16 %v826, %v824
  %v1269 = vpack.c.b16 %v827, %v825
  %v1270 = vpack.c.b16 %v830, %v828
  %v1271 = vpack.c.b16 %v831, %v829
  %v1272 = vpack.c.b16 %v834, %v832
  %v1273 = vpack.c.b16 %v835, %v833
  %v1274 = vpack.c.b16 %v838, %v836
  %v1275 = vpack.c.b16 %v839, %v837
  %v1276 = vpack.c.b16 %v842, %v840
  %v1277 = vpack.c.b16 %v843, %v841
  %v1278 = vpack.c.b16 %v846, %v844
  %v1279 = vpack.c.b16 %v847, %v845
  %v1280 = vpack.c.b16 %v850, %v848
  %v1281 = vpack.c.b16 %v851, %v849
  %v1282 = vpack.c.b16 %v854, %v852
  %v1283 = vpack.c.b16 %v855, %v853
  %v1284 = vpack.c.b16 %v858, %v856
  %v1285 = vpack.c.b16 %v859, %v857
  %v1286 = vpack.c.b16 %v862, %v860
  %v1287 = vpack.c.b16 %v863, %v861
  %v1288 = vpack.c.b16 %v866, %v864
  %v1289 = vpack.c.b16 %v867, %v865
  %v1290 = vpack.c.b16 %v870, %v868
  %v1291 = vpack.c.b16 %v871, %v869
  %v1292 = vpack.c.b16 %v874, %v872
  %v1293 = vpack.c.b16 %v875, %v873
  %v1294 = vpack.c.b16 %v878, %v876
  %v1295 = vpack.c.b16 %v879, %v877
  %v1296 = vpack.c.b16 %v882, %v880
  %v1297 = vpack.c.b16 %v883, %v881
  %v1298 = vpack.c.b16 %v886, %v884
  %v1299 = vpack.c.b16 %v887, %v885
  %v1300 = vpack.c.b16 %v890, %v888
  %v1301 = vpack.c.b16 %v891, %v889
  %v1302 = vpack.c.b16 %v894, %v892
  %v1303 = vpack.c.b16 %v895, %v893
  %v1304 = vpack.c.b16 %v898, %v896
  %v1305 = vpack.c.b16 %v899, %v897
  %v1306 = vpack.c.b16 %v902, %v900
  %v1307 = vpack.c.b16 %v903, %v901
  %v1308 = vpack.c.b16 %v906, %v904
  %v1309 = vpack.c.b16 %v907, %v905
  %v1310 = vpack.c.b16 %v910, %v908
  %v1311 = vpack.c.b16 %v911, %v909
  %v1312 = vpack.c.b16 %v914, %v912
  %v1313 = vpack.c.b16 %v915, %v913
  %v1314 = vpack.c.b16 %v918, %v916
  %v1315 = vpack.c.b16 %v919, %v917
  %v1316 = vpack.c.b16 %v922, %v920
  %v1317 = vpack.c.b16 %v923, %v921
  %v1318 = vpack.c.b16 %v926, %v924
  %v1319 = vpack.c.b16 %v927, %v925
  %v1320 = vpack.c.b16 %v930, %v928
  %v1321 = vpack.c.b16 %v931, %v929
  %v1322 = vpack.c.b16 %v934, %v932
  %v1323 = vpack.c.b16 %v935, %v933
  %v1324 = vpack.c.b16 %v938, %v936
  %v1325 = vpack.c.b16 %v939, %v937
  %v1326 = vpack.c.b16 %v942, %v940
  %v1327 = vpack.c.b16 %v943, %v941
  %v1328 = vpack.c.b16 %v946, %v944
  %v1329 = vpack.c.b16 %v947, %v945
  %v1330 = vpack.c.b16 %v950, %v948
  %v1331 = vpack.c.b16 %v951, %v949
  %v1332 = vpack.c.b16 %v954, %v952
  %v1333 = vpack.c.b16 %v955, %v953
  %v1334 = vpack.c.b16 %v958, %v956
  %v1335 = vpack.c.b16 %v959, %v957
  %v1336 = vpack.c.b16 %v962, %v960
  %v1337 = vpack.c.b16 %v963, %v961
  %v1338 = vpack.c.b16 %v966, %v964
  %v1339 = vpack.c.b16 %v967, %v965
  %v1340 = vpack.c.b16 %v970, %v968
  %v1341 = vpack.c.b16 %v971, %v969
  %v1342 = vpack.c.b16 %v974, %v972
  %v1343 = vpack.c.b16 %v975, %v973
  %v1344 = vpack.c.b16 %v978, %v976
  %v1345 = vpack.c.b16 %v979, %v977
  %v1346 = vpack.c.b16 %v982, %v980
  %v1347 = vpack.c.b16 %v983, %v981
  %v1348 = vpack.c.b16 %v986, %v984
  %v1349 = vpack.c.b16 %v987, %v985
  %v1350 = vpack.c.b16 %v990, %v988
  %v1351 = vpack.c.b16 %v991, %v989
  %v1352 = vpack.c.b16 %v994, %v992
  %v1353 = vpack.c.b16 %v995, %v993
  %v1354 = vpack.c.b16 %v998, %v996
  %v1355 = vpack.c.b16 %v999, %v997
  %v1356 = vpack.c.b16 %v1002, %v1000
  %v1357 = vpack.c.b16 %v1003, %v1001
  %v1358 = vpack.c.b16 %v1006, %v1004
  %v1359 = vpack.c.b16 %v1007, %v1005
  %v1360 = vpack.c.b16 %v1010, %v1008
  %v1361 = vpack.c.b16 %v1011, %v1009
  %v1362 = vpack.c.b16 %v1014, %v1012
  %v1363 = vpack.c.b16 %v1015, %v1013
  %v1364 = vpack.c.b16 %v1018, %v1016
  %v1365 = vpack.c.b16 %v1019, %v1017
  %v1366 = vpack.c.b16 %v1022, %v1020
  %v1367 = vpack.c.b16 %v1023, %v1021
  %v1368 = vpack.c.b16 %v1026, %v1024
  %v1369 = vpack.c.b16 %v1027, %v1025
  %v1370 = vpack.c.b16 %v1030, %v1028
  %v1371 = vpack.c.b16 %v1031, %v1029
  %v1372 = vpack.c.b16 %v1034, %v1032
  %v1373 = vpack.c.b16 %v1035, %v1033
  %v1374 = vpack.c.b16 %v1038, %v1036
  %v1375 = vpack.c.b16 %v1039, %v1037
  %v1376 = vpack.c.b16 %v1042, %v1040
  %v1377 = vpack.c.b16 %v1043, %v1041
  %v1378 = vpack.c.b16 %v1046, %v1044
  %v1379 = vpack.c.b16 %v1047, %v1045
  %v1380 = vpack.c.b16 %v1050, %v1048
  %v1381 = vpack.c.b16 %v1051, %v1049
  %v1382 = vpack.c.b16 %v1054, %v1052
  %v1383 = vpack.c.b16 %v1055, %v1053
  %v1384 = vpack.c.b16 %v1058, %v1056
  %v1385 = vpack.c.b16 %v1059, %v1057
  %v1386 = vpack.c.b16 %v1062, %v1060
  %v1387 = vpack.c.b16 %v1063, %v1061
  %v1388 = vpack.c.b16 %v1066, %v1064
  %v1389 = vpack.c.b16 %v1067, %v1065
  %v1390 = vpack.c.b16 %v1070, %v1068
  %v1391 = vpack.c.b16 %v1071, %v1069
  %v1392 = vpack.c.b16 %v1074, %v1072
  %v1393 = vpack.c.b16 %v1075, %v1073
  %v1394 = vpack.c.b16 %v1078, %v1076
  %v1395 = vpack.c.b16 %v1079, %v1077
  %v1396 = vpack.c.b16 %v1082, %v1080
  %v1397 = vpack.c.b16 %v1083, %v1081
  %v1398 = vpack.c.b16 %v1086, %v1084
  %v1399 = vpack.c.b16 %v1087, %v1085
  %v1400 = vpack.c.b16 %v1090, %v1088
  %v1401 = vpack.c.b16 %v1091, %v1089
  %v1402 = vpack.c.b16 %v1094, %v1092
  %v1403 = vpack.c.b16 %v1095, %v1093
  %v1404 = vpack.c.b16 %v1098, %v1096
  %v1405 = vpack.c.b16 %v1099, %v1097
  %v1406 = vpack.c.b16 %v1102, %v1100
  %v1407 = vpack.c.b16 %v1103, %v1101
  %v1408 = vpack.c.b16 %v1106, %v1104
  %v1409 = vpack.c.b16 %v1107, %v1105
  %v1410 = vpack.c.b16 %v1110, %v1108
  %v1411 = vpack.c.b16 %v1111, %v1109
  %v1412 = vpack.c.b16 %v1114, %v1112
  %v1413 = vpack.c.b16 %v1115, %v1113
  %v1414 = vpack.c.b16 %v1118, %v1116
  %v1415 = vpack.c.b16 %v1119, %v1117
  %v1416 = vpack.c.b16 %v1122, %v1120
  %v1417 = vpack.c.b16 %v1123, %v1121
  %v1418 = vpack.c.b16 %v1126, %v1124
  %v1419 = vpack.c.b16 %v1127, %v1125
  %v1420 = vpack.c.b16 %v1130, %v1128
  %v1421 = vpack.c.b16 %v1131, %v1129
  %v1422 = vpack.c.b16 %v1134, %v1132
  %v1423 = vpack.c.b16 %v1135, %v1133
  %v1424 = vpack.c.b16 %v1138, %v1136
  %v1425 = vpack.c.b16 %v1139, %v1137
  %v1426 = vpack.c.b16 %v1142, %v1140
  %v1427 = vpack.c.b16 %v1143, %v1141
  %v1428 = vpack.c.b16 %v1146, %v1144
  %v1429 = vpack.c.b16 %v1147, %v1145
  %v1430 = vpack.c.b16 %v1150, %v1148
  %v1431 = vpack.c.b16 %v1151, %v1149
  %v1432 = vpack.c.b16 %v1154, %v1152
  %v1433 = vpack.c.b16 %v1155, %v1153
  %v1434 = vpack.c.b16 %v1158, %v1156
  %v1435 = vpack.c.b16 %v1159, %v1157
  %v1436 = vpack.c.b16 %v1162, %v1160
  %v1437 = vpack.c.b16 %v1163, %v1161
  %v1438 = vpack.c.b16 %v1166, %v1164
  %v1439 = vpack.c.b16 %v1167, %v1165
  %v1440 = vpack.c.b16 %v1170, %v1168
  %v1441 = vpack.c.b16 %v1171, %v1169
  %v1442 = vpack.c.b16 %v1174, %v1172
  %v1443 = vpack.c.b16 %v1175, %v1173
  %v1444 = vpack.c.b16 %v1178, %v1176
  %v1445 = vpack.c.b16 %v1179, %v1177
  %v1446 = vpack.c.b16 %v1182, %v1180
  %v1447 = vpack.c.b16 %v1183, %v1181
  %v1448 = vpack.c.b16 %v1186, %v1184
  %v1449 = vpack.c.b16 %v1187, %v1185
  %v1450 = vpack.c.b16 %v1190, %v1188
  %v1451 = vpack.c.b16 %v1191, %v1189
  %v1452 = vpack.c.b16 %v1194, %v1192
  %v1453 = vpack.c.b16 %v1195, %v1193
  %v1454 = vpack.c.b16 %v1198, %v1196
  %v1455 = vpack.c.b16 %v1199, %v1197
  %1712 = vmatpush.bf16.msra.mxu0 %v1214
  %1713 = vmatpush.bf16.msra.mxu0 %v1212
  %1714 = vmatpush.bf16.msra.mxu0 %v1210
  %1715 = vmatpush.bf16.msra.mxu0 %v1208
  %1716 = vmatpush.bf16.msra.mxu0 %v1206
  %1717 = vmatpush.bf16.msra.mxu0 %v1204
  %1718 = vmatpush.bf16.msra.mxu0 %v1202
  %1719 = vmatpush.bf16.msra.mxu0 %v1200
  %1720 = vmatmul.bf16.gmra.mxu0 %v154
  %v1721 = vpop.f32.mrf.mxu0
  %v1722 = vadd.f32 %v428, %v1721
  %v1723 = vpop.f32.mrf.mxu0
  %1724 = vdwg.mxu0
  %1725 = vmatpush.bf16.msra.mxu0 %v1230
  %1726 = vmatpush.bf16.msra.mxu0 %v1228
  %1727 = vmatpush.bf16.msra.mxu0 %v1226
  %1728 = vmatpush.bf16.msra.mxu0 %v1224
  %1729 = vmatpush.bf16.msra.mxu0 %v1222
  %1730 = vmatpush.bf16.msra.mxu0 %v1220
  %1731 = vmatpush.bf16.msra.mxu0 %v1218
  %1732 = vmatpush.bf16.msra.mxu0 %v1216
  %1733 = vmatmul.bf16.gmra.mxu0 %v155
  %v1734 = vpop.f32.mrf.mxu0
  %v1735 = vadd.f32 %v1722, %v1734
  %v1736 = vpop.f32.mrf.mxu0
  %1737 = vdwg.mxu0
  %1738 = vmatpush.bf16.msra.mxu0 %v1246
  %1739 = vmatpush.bf16.msra.mxu0 %v1244
  %1740 = vmatpush.bf16.msra.mxu0 %v1242
  %1741 = vmatpush.bf16.msra.mxu0 %v1240
  %1742 = vmatpush.bf16.msra.mxu0 %v1238
  %1743 = vmatpush.bf16.msra.mxu0 %v1236
  %1744 = vmatpush.bf16.msra.mxu0 %v1234
  %1745 = vmatpush.bf16.msra.mxu0 %v1232
  %1746 = vmatmul.bf16.gmra.mxu0 %v156
  %v1747 = vpop.f32.mrf.mxu0
  %v1748 = vadd.f32 %v1735, %v1747
  %v1749 = vpop.f32.mrf.mxu0
  %1750 = vdwg.mxu0
  %1751 = vmatpush.bf16.msra.mxu0 %v1262
  %1752 = vmatpush.bf16.msra.mxu0 %v1260
  %1753 = vmatpush.bf16.msra.mxu0 %v1258
  %1754 = vmatpush.bf16.msra.mxu0 %v1256
  %1755 = vmatpush.bf16.msra.mxu0 %v1254
  %1756 = vmatpush.bf16.msra.mxu0 %v1252
  %1757 = vmatpush.bf16.msra.mxu0 %v1250
  %1758 = vmatpush.bf16.msra.mxu0 %v1248
  %1759 = vmatmul.bf16.gmra.mxu0 %v157
  %v1760 = vpop.f32.mrf.mxu0
  %v1761 = vadd.f32 %v1748, %v1760
  %v1762 = vpop.f32.mrf.mxu0
  %1763 = vdwg.mxu0
  %1764 = vmatpush.bf16.msra.mxu0 %v1278
  %1765 = vmatpush.bf16.msra.mxu0 %v1276
  %1766 = vmatpush.bf16.msra.mxu0 %v1274
  %1767 = vmatpush.bf16.msra.mxu0 %v1272
  %1768 = vmatpush.bf16.msra.mxu0 %v1270
  %1769 = vmatpush.bf16.msra.mxu0 %v1268
  %1770 = vmatpush.bf16.msra.mxu0 %v1266
  %1771 = vmatpush.bf16.msra.mxu0 %v1264
  %1772 = vmatmul.bf16.gmra.mxu0 %v158
  %v1773 = vpop.f32.mrf.mxu0
  %v1774 = vadd.f32 %v1761, %v1773
  %v1775 = vpop.f32.mrf.mxu0
  %1776 = vdwg.mxu0
  %1777 = vmatpush.bf16.msra.mxu0 %v1294
  %1778 = vmatpush.bf16.msra.mxu0 %v1292
  %1779 = vmatpush.bf16.msra.mxu0 %v1290
  %1780 = vmatpush.bf16.msra.mxu0 %v1288
  %1781 = vmatpush.bf16.msra.mxu0 %v1286
  %1782 = vmatpush.bf16.msra.mxu0 %v1284
  %1783 = vmatpush.bf16.msra.mxu0 %v1282
  %1784 = vmatpush.bf16.msra.mxu0 %v1280
  %1785 = vmatmul.bf16.gmra.mxu0 %v159
  %v1786 = vpop.f32.mrf.mxu0
  %v1787 = vadd.f32 %v1774, %v1786
  %v1788 = vpop.f32.mrf.mxu0
  %1789 = vdwg.mxu0
  %1790 = vmatpush.bf16.msra.mxu0 %v1310
  %1791 = vmatpush.bf16.msra.mxu0 %v1308
  %1792 = vmatpush.bf16.msra.mxu0 %v1306
  %1793 = vmatpush.bf16.msra.mxu0 %v1304
  %1794 = vmatpush.bf16.msra.mxu0 %v1302
  %1795 = vmatpush.bf16.msra.mxu0 %v1300
  %1796 = vmatpush.bf16.msra.mxu0 %v1298
  %1797 = vmatpush.bf16.msra.mxu0 %v1296
  %1798 = vmatmul.bf16.gmra.mxu0 %v160
  %v1799 = vpop.f32.mrf.mxu0
  %v1800 = vadd.f32 %v1787, %v1799
  %v1801 = vpop.f32.mrf.mxu0
  %1802 = vdwg.mxu0
  %1803 = vmatpush.bf16.msra.mxu0 %v1326
  %1804 = vmatpush.bf16.msra.mxu0 %v1324
  %1805 = vmatpush.bf16.msra.mxu0 %v1322
  %1806 = vmatpush.bf16.msra.mxu0 %v1320
  %1807 = vmatpush.bf16.msra.mxu0 %v1318
  %1808 = vmatpush.bf16.msra.mxu0 %v1316
  %1809 = vmatpush.bf16.msra.mxu0 %v1314
  %1810 = vmatpush.bf16.msra.mxu0 %v1312
  %1811 = vmatmul.bf16.gmra.mxu0 %v161
  %v1812 = vpop.f32.mrf.mxu0
  %v1813 = vadd.f32 %v1800, %v1812
  %v1814 = vpop.f32.mrf.mxu0
  %1815 = vdwg.mxu0
  %1816 = vmatpush.bf16.msra.mxu0 %v1342
  %1817 = vmatpush.bf16.msra.mxu0 %v1340
  %1818 = vmatpush.bf16.msra.mxu0 %v1338
  %1819 = vmatpush.bf16.msra.mxu0 %v1336
  %1820 = vmatpush.bf16.msra.mxu0 %v1334
  %1821 = vmatpush.bf16.msra.mxu0 %v1332
  %1822 = vmatpush.bf16.msra.mxu0 %v1330
  %1823 = vmatpush.bf16.msra.mxu0 %v1328
  %1824 = vmatmul.bf16.gmra.mxu0 %v162
  %v1825 = vpop.f32.mrf.mxu0
  %v1826 = vadd.f32 %v1813, %v1825
  %v1827 = vpop.f32.mrf.mxu0
  %1828 = vdwg.mxu0
  %1829 = vmatpush.bf16.msra.mxu0 %v1358
  %1830 = vmatpush.bf16.msra.mxu0 %v1356
  %1831 = vmatpush.bf16.msra.mxu0 %v1354
  %1832 = vmatpush.bf16.msra.mxu0 %v1352
  %1833 = vmatpush.bf16.msra.mxu0 %v1350
  %1834 = vmatpush.bf16.msra.mxu0 %v1348
  %1835 = vmatpush.bf16.msra.mxu0 %v1346
  %1836 = vmatpush.bf16.msra.mxu0 %v1344
  %1837 = vmatmul.bf16.gmra.mxu0 %v163
  %v1838 = vpop.f32.mrf.mxu0
  %v1839 = vadd.f32 %v1826, %v1838
  %v1840 = vpop.f32.mrf.mxu0
  %1841 = vdwg.mxu0
  %1842 = vmatpush.bf16.msra.mxu0 %v1374
  %1843 = vmatpush.bf16.msra.mxu0 %v1372
  %1844 = vmatpush.bf16.msra.mxu0 %v1370
  %1845 = vmatpush.bf16.msra.mxu0 %v1368
  %1846 = vmatpush.bf16.msra.mxu0 %v1366
  %1847 = vmatpush.bf16.msra.mxu0 %v1364
  %1848 = vmatpush.bf16.msra.mxu0 %v1362
  %1849 = vmatpush.bf16.msra.mxu0 %v1360
  %1850 = vmatmul.bf16.gmra.mxu0 %v164
  %v1851 = vpop.f32.mrf.mxu0
  %v1852 = vadd.f32 %v1839, %v1851
  %v1853 = vpop.f32.mrf.mxu0
  %1854 = vdwg.mxu0
  %1855 = vmatpush.bf16.msra.mxu0 %v1390
  %1856 = vmatpush.bf16.msra.mxu0 %v1388
  %1857 = vmatpush.bf16.msra.mxu0 %v1386
  %1858 = vmatpush.bf16.msra.mxu0 %v1384
  %1859 = vmatpush.bf16.msra.mxu0 %v1382
  %1860 = vmatpush.bf16.msra.mxu0 %v1380
  %1861 = vmatpush.bf16.msra.mxu0 %v1378
  %1862 = vmatpush.bf16.msra.mxu0 %v1376
  %1863 = vmatmul.bf16.gmra.mxu0 %v165
  %v1864 = vpop.f32.mrf.mxu0
  %v1865 = vadd.f32 %v1852, %v1864
  %v1866 = vpop.f32.mrf.mxu0
  %1867 = vdwg.mxu0
  %1868 = vmatpush.bf16.msra.mxu0 %v1406
  %1869 = vmatpush.bf16.msra.mxu0 %v1404
  %1870 = vmatpush.bf16.msra.mxu0 %v1402
  %1871 = vmatpush.bf16.msra.mxu0 %v1400
  %1872 = vmatpush.bf16.msra.mxu0 %v1398
  %1873 = vmatpush.bf16.msra.mxu0 %v1396
  %1874 = vmatpush.bf16.msra.mxu0 %v1394
  %1875 = vmatpush.bf16.msra.mxu0 %v1392
  %1876 = vmatmul.bf16.gmra.mxu0 %v166
  %v1877 = vpop.f32.mrf.mxu0
  %v1878 = vadd.f32 %v1865, %v1877
  %v1879 = vpop.f32.mrf.mxu0
  %1880 = vdwg.mxu0
  %1881 = vmatpush.bf16.msra.mxu0 %v1422
  %1882 = vmatpush.bf16.msra.mxu0 %v1420
  %1883 = vmatpush.bf16.msra.mxu0 %v1418
  %1884 = vmatpush.bf16.msra.mxu0 %v1416
  %1885 = vmatpush.bf16.msra.mxu0 %v1414
  %1886 = vmatpush.bf16.msra.mxu0 %v1412
  %1887 = vmatpush.bf16.msra.mxu0 %v1410
  %1888 = vmatpush.bf16.msra.mxu0 %v1408
  %1889 = vmatmul.bf16.gmra.mxu0 %v167
  %v1890 = vpop.f32.mrf.mxu0
  %v1891 = vadd.f32 %v1878, %v1890
  %v1892 = vpop.f32.mrf.mxu0
  %1893 = vdwg.mxu0
  %1894 = vmatpush.bf16.msra.mxu0 %v1438
  %1895 = vmatpush.bf16.msra.mxu0 %v1436
  %1896 = vmatpush.bf16.msra.mxu0 %v1434
  %1897 = vmatpush.bf16.msra.mxu0 %v1432
  %1898 = vmatpush.bf16.msra.mxu0 %v1430
  %1899 = vmatpush.bf16.msra.mxu0 %v1428
  %1900 = vmatpush.bf16.msra.mxu0 %v1426
  %1901 = vmatpush.bf16.msra.mxu0 %v1424
  %1902 = vmatmul.bf16.gmra.mxu0 %v168
  %v1903 = vpop.f32.mrf.mxu0
  %v1904 = vadd.f32 %v1891, %v1903
  %v1905 = vpop.f32.mrf.mxu0
  %1906 = vdwg.mxu0
  %1907 = vmatpush.bf16.msra.mxu0 %v1454
  %1908 = vmatpush.bf16.msra.mxu0 %v1452
  %1909 = vmatpush.bf16.msra.mxu0 %v1450
  %1910 = vmatpush.bf16.msra.mxu0 %v1448
  %1911 = vmatpush.bf16.msra.mxu0 %v1446
  %1912 = vmatpush.bf16.msra.mxu0 %v1444
  %1913 = vmatpush.bf16.msra.mxu0 %v1442
  %1914 = vmatpush.bf16.msra.mxu0 %v1440
  %1915 = vmatmul.bf16.gmra.mxu0 %v169
  %v1916 = vpop.f32.mrf.mxu0
  %v1917 = vadd.f32 %v1904, %v1916
  %v1918 = vpop.f32.mrf.mxu0
  %1919 = vdwg.mxu0
  %1920 = vmatpush.bf16.msra.mxu0 %v1215
  %1921 = vmatpush.bf16.msra.mxu0 %v1213
  %1922 = vmatpush.bf16.msra.mxu0 %v1211
  %1923 = vmatpush.bf16.msra.mxu0 %v1209
  %1924 = vmatpush.bf16.msra.mxu0 %v1207
  %1925 = vmatpush.bf16.msra.mxu0 %v1205
  %1926 = vmatpush.bf16.msra.mxu0 %v1203
  %1927 = vmatpush.bf16.msra.mxu0 %v1201
  %1928 = vmatmul.bf16.gmra.mxu0 %v154
  %v1929 = vpop.f32.mrf.mxu0
  %v1930 = vadd.f32 %v429, %v1929
  %v1931 = vpop.f32.mrf.mxu0
  %1932 = vdwg.mxu0
  %1933 = vmatpush.bf16.msra.mxu0 %v1231
  %1934 = vmatpush.bf16.msra.mxu0 %v1229
  %1935 = vmatpush.bf16.msra.mxu0 %v1227
  %1936 = vmatpush.bf16.msra.mxu0 %v1225
  %1937 = vmatpush.bf16.msra.mxu0 %v1223
  %1938 = vmatpush.bf16.msra.mxu0 %v1221
  %1939 = vmatpush.bf16.msra.mxu0 %v1219
  %1940 = vmatpush.bf16.msra.mxu0 %v1217
  %1941 = vmatmul.bf16.gmra.mxu0 %v155
  %v1942 = vpop.f32.mrf.mxu0
  %v1943 = vadd.f32 %v1930, %v1942
  %v1944 = vpop.f32.mrf.mxu0
  %1945 = vdwg.mxu0
  %1946 = vmatpush.bf16.msra.mxu0 %v1247
  %1947 = vmatpush.bf16.msra.mxu0 %v1245
  %1948 = vmatpush.bf16.msra.mxu0 %v1243
  %1949 = vmatpush.bf16.msra.mxu0 %v1241
  %1950 = vmatpush.bf16.msra.mxu0 %v1239
  %1951 = vmatpush.bf16.msra.mxu0 %v1237
  %1952 = vmatpush.bf16.msra.mxu0 %v1235
  %1953 = vmatpush.bf16.msra.mxu0 %v1233
  %1954 = vmatmul.bf16.gmra.mxu0 %v156
  %v1955 = vpop.f32.mrf.mxu0
  %v1956 = vadd.f32 %v1943, %v1955
  %v1957 = vpop.f32.mrf.mxu0
  %1958 = vdwg.mxu0
  %1959 = vmatpush.bf16.msra.mxu0 %v1263
  %1960 = vmatpush.bf16.msra.mxu0 %v1261
  %1961 = vmatpush.bf16.msra.mxu0 %v1259
  %1962 = vmatpush.bf16.msra.mxu0 %v1257
  %1963 = vmatpush.bf16.msra.mxu0 %v1255
  %1964 = vmatpush.bf16.msra.mxu0 %v1253
  %1965 = vmatpush.bf16.msra.mxu0 %v1251
  %1966 = vmatpush.bf16.msra.mxu0 %v1249
  %1967 = vmatmul.bf16.gmra.mxu0 %v157
  %v1968 = vpop.f32.mrf.mxu0
  %v1969 = vadd.f32 %v1956, %v1968
  %v1970 = vpop.f32.mrf.mxu0
  %1971 = vdwg.mxu0
  %1972 = vmatpush.bf16.msra.mxu0 %v1279
  %1973 = vmatpush.bf16.msra.mxu0 %v1277
  %1974 = vmatpush.bf16.msra.mxu0 %v1275
  %1975 = vmatpush.bf16.msra.mxu0 %v1273
  %1976 = vmatpush.bf16.msra.mxu0 %v1271
  %1977 = vmatpush.bf16.msra.mxu0 %v1269
  %1978 = vmatpush.bf16.msra.mxu0 %v1267
  %1979 = vmatpush.bf16.msra.mxu0 %v1265
  %1980 = vmatmul.bf16.gmra.mxu0 %v158
  %v1981 = vpop.f32.mrf.mxu0
  %v1982 = vadd.f32 %v1969, %v1981
  %v1983 = vpop.f32.mrf.mxu0
  %1984 = vdwg.mxu0
  %1985 = vmatpush.bf16.msra.mxu0 %v1295
  %1986 = vmatpush.bf16.msra.mxu0 %v1293
  %1987 = vmatpush.bf16.msra.mxu0 %v1291
  %1988 = vmatpush.bf16.msra.mxu0 %v1289
  %1989 = vmatpush.bf16.msra.mxu0 %v1287
  %1990 = vmatpush.bf16.msra.mxu0 %v1285
  %1991 = vmatpush.bf16.msra.mxu0 %v1283
  %1992 = vmatpush.bf16.msra.mxu0 %v1281
  %1993 = vmatmul.bf16.gmra.mxu0 %v159
  %v1994 = vpop.f32.mrf.mxu0
  %v1995 = vadd.f32 %v1982, %v1994
  %v1996 = vpop.f32.mrf.mxu0
  %1997 = vdwg.mxu0
  %1998 = vmatpush.bf16.msra.mxu0 %v1311
  %1999 = vmatpush.bf16.msra.mxu0 %v1309
  %2000 = vmatpush.bf16.msra.mxu0 %v1307
  %2001 = vmatpush.bf16.msra.mxu0 %v1305
  %2002 = vmatpush.bf16.msra.mxu0 %v1303
  %2003 = vmatpush.bf16.msra.mxu0 %v1301
  %2004 = vmatpush.bf16.msra.mxu0 %v1299
  %2005 = vmatpush.bf16.msra.mxu0 %v1297
  %2006 = vmatmul.bf16.gmra.mxu0 %v160
  %v2007 = vpop.f32.mrf.mxu0
  %v2008 = vadd.f32 %v1995, %v2007
  %v2009 = vpop.f32.mrf.mxu0
  %2010 = vdwg.mxu0
  %2011 = vmatpush.bf16.msra.mxu0 %v1327
  %2012 = vmatpush.bf16.msra.mxu0 %v1325
  %2013 = vmatpush.bf16.msra.mxu0 %v1323
  %2014 = vmatpush.bf16.msra.mxu0 %v1321
  %2015 = vmatpush.bf16.msra.mxu0 %v1319
  %2016 = vmatpush.bf16.msra.mxu0 %v1317
  %2017 = vmatpush.bf16.msra.mxu0 %v1315
  %2018 = vmatpush.bf16.msra.mxu0 %v1313
  %2019 = vmatmul.bf16.gmra.mxu0 %v161
  %v2020 = vpop.f32.mrf.mxu0
  %v2021 = vadd.f32 %v2008, %v2020
  %v2022 = vpop.f32.mrf.mxu0
  %2023 = vdwg.mxu0
  %2024 = vmatpush.bf16.msra.mxu0 %v1343
  %2025 = vmatpush.bf16.msra.mxu0 %v1341
  %2026 = vmatpush.bf16.msra.mxu0 %v1339
  %2027 = vmatpush.bf16.msra.mxu0 %v1337
  %2028 = vmatpush.bf16.msra.mxu0 %v1335
  %2029 = vmatpush.bf16.msra.mxu0 %v1333
  %2030 = vmatpush.bf16.msra.mxu0 %v1331
  %2031 = vmatpush.bf16.msra.mxu0 %v1329
  %2032 = vmatmul.bf16.gmra.mxu0 %v162
  %v2033 = vpop.f32.mrf.mxu0
  %v2034 = vadd.f32 %v2021, %v2033
  %v2035 = vpop.f32.mrf.mxu0
  %2036 = vdwg.mxu0
  %2037 = vmatpush.bf16.msra.mxu0 %v1359
  %2038 = vmatpush.bf16.msra.mxu0 %v1357
  %2039 = vmatpush.bf16.msra.mxu0 %v1355
  %2040 = vmatpush.bf16.msra.mxu0 %v1353
  %2041 = vmatpush.bf16.msra.mxu0 %v1351
  %2042 = vmatpush.bf16.msra.mxu0 %v1349
  %2043 = vmatpush.bf16.msra.mxu0 %v1347
  %2044 = vmatpush.bf16.msra.mxu0 %v1345
  %2045 = vmatmul.bf16.gmra.mxu0 %v163
  %v2046 = vpop.f32.mrf.mxu0
  %v2047 = vadd.f32 %v2034, %v2046
  %v2048 = vpop.f32.mrf.mxu0
  %2049 = vdwg.mxu0
  %2050 = vmatpush.bf16.msra.mxu0 %v1375
  %2051 = vmatpush.bf16.msra.mxu0 %v1373
  %2052 = vmatpush.bf16.msra.mxu0 %v1371
  %2053 = vmatpush.bf16.msra.mxu0 %v1369
  %2054 = vmatpush.bf16.msra.mxu0 %v1367
  %2055 = vmatpush.bf16.msra.mxu0 %v1365
  %2056 = vmatpush.bf16.msra.mxu0 %v1363
  %2057 = vmatpush.bf16.msra.mxu0 %v1361
  %2058 = vmatmul.bf16.gmra.mxu0 %v164
  %v2059 = vpop.f32.mrf.mxu0
  %v2060 = vadd.f32 %v2047, %v2059
  %v2061 = vpop.f32.mrf.mxu0
  %2062 = vdwg.mxu0
  %2063 = vmatpush.bf16.msra.mxu0 %v1391
  %2064 = vmatpush.bf16.msra.mxu0 %v1389
  %2065 = vmatpush.bf16.msra.mxu0 %v1387
  %2066 = vmatpush.bf16.msra.mxu0 %v1385
  %2067 = vmatpush.bf16.msra.mxu0 %v1383
  %2068 = vmatpush.bf16.msra.mxu0 %v1381
  %2069 = vmatpush.bf16.msra.mxu0 %v1379
  %2070 = vmatpush.bf16.msra.mxu0 %v1377
  %2071 = vmatmul.bf16.gmra.mxu0 %v165
  %v2072 = vpop.f32.mrf.mxu0
  %v2073 = vadd.f32 %v2060, %v2072
  %v2074 = vpop.f32.mrf.mxu0
  %2075 = vdwg.mxu0
  %2076 = vmatpush.bf16.msra.mxu0 %v1407
  %2077 = vmatpush.bf16.msra.mxu0 %v1405
  %2078 = vmatpush.bf16.msra.mxu0 %v1403
  %2079 = vmatpush.bf16.msra.mxu0 %v1401
  %2080 = vmatpush.bf16.msra.mxu0 %v1399
  %2081 = vmatpush.bf16.msra.mxu0 %v1397
  %2082 = vmatpush.bf16.msra.mxu0 %v1395
  %2083 = vmatpush.bf16.msra.mxu0 %v1393
  %2084 = vmatmul.bf16.gmra.mxu0 %v166
  %v2085 = vpop.f32.mrf.mxu0
  %v2086 = vadd.f32 %v2073, %v2085
  %v2087 = vpop.f32.mrf.mxu0
  %2088 = vdwg.mxu0
  %2089 = vmatpush.bf16.msra.mxu0 %v1423
  %2090 = vmatpush.bf16.msra.mxu0 %v1421
  %2091 = vmatpush.bf16.msra.mxu0 %v1419
  %2092 = vmatpush.bf16.msra.mxu0 %v1417
  %2093 = vmatpush.bf16.msra.mxu0 %v1415
  %2094 = vmatpush.bf16.msra.mxu0 %v1413
  %2095 = vmatpush.bf16.msra.mxu0 %v1411
  %2096 = vmatpush.bf16.msra.mxu0 %v1409
  %2097 = vmatmul.bf16.gmra.mxu0 %v167
  %v2098 = vpop.f32.mrf.mxu0
  %v2099 = vadd.f32 %v2086, %v2098
  %v2100 = vpop.f32.mrf.mxu0
  %2101 = vdwg.mxu0
  %2102 = vmatpush.bf16.msra.mxu0 %v1439
  %2103 = vmatpush.bf16.msra.mxu0 %v1437
  %2104 = vmatpush.bf16.msra.mxu0 %v1435
  %2105 = vmatpush.bf16.msra.mxu0 %v1433
  %2106 = vmatpush.bf16.msra.mxu0 %v1431
  %2107 = vmatpush.bf16.msra.mxu0 %v1429
  %2108 = vmatpush.bf16.msra.mxu0 %v1427
  %2109 = vmatpush.bf16.msra.mxu0 %v1425
  %2110 = vmatmul.bf16.gmra.mxu0 %v168
  %v2111 = vpop.f32.mrf.mxu0
  %v2112 = vadd.f32 %v2099, %v2111
  %v2113 = vpop.f32.mrf.mxu0
  %2114 = vdwg.mxu0
  %2115 = vmatpush.bf16.msra.mxu0 %v1455
  %2116 = vmatpush.bf16.msra.mxu0 %v1453
  %2117 = vmatpush.bf16.msra.mxu0 %v1451
  %2118 = vmatpush.bf16.msra.mxu0 %v1449
  %2119 = vmatpush.bf16.msra.mxu0 %v1447
  %2120 = vmatpush.bf16.msra.mxu0 %v1445
  %2121 = vmatpush.bf16.msra.mxu0 %v1443
  %2122 = vmatpush.bf16.msra.mxu0 %v1441
  %2123 = vmatmul.bf16.gmra.mxu0 %v169
  %v2124 = vpop.f32.mrf.mxu0
  %v2125 = vadd.f32 %v2112, %v2124
  %v2126 = vpop.f32.mrf.mxu0
  %2127 = vdwg.mxu0
  %v2128 = vmax.f32 %v1917, 0.0
  %v2129 = vmax.f32 %v2125, 0.0
  %v2130 = vpack.c.bf16 %v2128, %v2128
  %v2131 = vpack.c.bf16 %v2129, %v2129
  %v2132 = vld [vmem:[%s5] sm:$0xf]
  %v2133 = vld [vmem:[%s5 + $0x4] sm:$0xf]
  %v2134 = vld [vmem:[%s5 + $0x8] sm:$0xf]
  %v2135 = vld [vmem:[%s5 + $0xc] sm:$0xf]
  %v2136 = vld [vmem:[%s5 + $0x10] sm:$0xf]
  %v2137 = vld [vmem:[%s5 + $0x14] sm:$0xf]
  %v2138 = vld [vmem:[%s5 + $0x18] sm:$0xf]
  %v2139 = vld [vmem:[%s5 + $0x1c] sm:$0xf]
  %v2140 = vld [vmem:[%s5 + $0x20] sm:$0xf]
  %v2141 = vld [vmem:[%s5 + $0x24] sm:$0xf]
  %v2142 = vld [vmem:[%s5 + $0x28] sm:$0xf]
  %v2143 = vld [vmem:[%s5 + $0x2c] sm:$0xf]
  %v2144 = vld [vmem:[%s5 + $0x30] sm:$0xf]
  %v2145 = vld [vmem:[%s5 + $0x34] sm:$0xf]
  %v2146 = vld [vmem:[%s5 + $0x38] sm:$0xf]
  %v2147 = vld [vmem:[%s5 + $0x3c] sm:$0xf]
  %v2148 = vld [vmem:[%s5 + $0x40] sm:$0xf]
  %v2149 = vld [vmem:[%s5 + $0x44] sm:$0xf]
  %v2150 = vld [vmem:[%s5 + $0x48] sm:$0xf]
  %v2151 = vld [vmem:[%s5 + $0x4c] sm:$0xf]
  %v2152 = vld [vmem:[%s5 + $0x50] sm:$0xf]
  %v2153 = vld [vmem:[%s5 + $0x54] sm:$0xf]
  %v2154 = vld [vmem:[%s5 + $0x58] sm:$0xf]
  %v2155 = vld [vmem:[%s5 + $0x5c] sm:$0xf]
  %v2156 = vld [vmem:[%s5 + $0x60] sm:$0xf]
  %v2157 = vld [vmem:[%s5 + $0x64] sm:$0xf]
  %v2158 = vld [vmem:[%s5 + $0x68] sm:$0xf]
  %v2159 = vld [vmem:[%s5 + $0x6c] sm:$0xf]
  %v2160 = vld [vmem:[%s5 + $0x70] sm:$0xf]
  %v2161 = vld [vmem:[%s5 + $0x74] sm:$0xf]
  %v2162 = vld [vmem:[%s5 + $0x78] sm:$0xf]
  %v2163 = vld [vmem:[%s5 + $0x7c] sm:$0xf]
  %v2164 = vld [vmem:[%s6] sm:$0x1]
  %v2166 = vperm.slane %v2164, 0
  %v2200 = vunpack.c.l.b16 %v2132
  %v2201 = vunpack.c.l.b16 %v2133
  %v2202 = vunpack.c.l.b16 %v2134
  %v2203 = vunpack.c.l.b16 %v2135
  %v2204 = vunpack.c.l.b16 %v2136
  %v2205 = vunpack.c.l.b16 %v2137
  %v2206 = vunpack.c.l.b16 %v2138
  %v2207 = vunpack.c.l.b16 %v2139
  %v2208 = vunpack.c.l.b16 %v2140
  %v2209 = vunpack.c.l.b16 %v2141
  %v2210 = vunpack.c.l.b16 %v2142
  %v2211 = vunpack.c.l.b16 %v2143
  %v2212 = vunpack.c.l.b16 %v2144
  %v2213 = vunpack.c.l.b16 %v2145
  %v2214 = vunpack.c.l.b16 %v2146
  %v2215 = vunpack.c.l.b16 %v2147
  %v2216 = vunpack.c.l.b16 %v2148
  %v2217 = vunpack.c.l.b16 %v2149
  %v2218 = vunpack.c.l.b16 %v2150
  %v2219 = vunpack.c.l.b16 %v2151
  %v2220 = vunpack.c.l.b16 %v2152
  %v2221 = vunpack.c.l.b16 %v2153
  %v2222 = vunpack.c.l.b16 %v2154
  %v2223 = vunpack.c.l.b16 %v2155
  %v2224 = vunpack.c.l.b16 %v2156
  %v2225 = vunpack.c.l.b16 %v2157
  %v2226 = vunpack.c.l.b16 %v2158
  %v2227 = vunpack.c.l.b16 %v2159
  %v2228 = vunpack.c.l.b16 %v2160
  %v2229 = vunpack.c.l.b16 %v2161
  %v2230 = vunpack.c.l.b16 %v2162
  %v2231 = vunpack.c.l.b16 %v2163
  %v2232 = vpack.c.b16 %v2201, %v2200
  %v2233 = vpack.c.b16 %v2203, %v2202
  %v2234 = vpack.c.b16 %v2205, %v2204
  %v2235 = vpack.c.b16 %v2207, %v2206
  %v2236 = vpack.c.b16 %v2209, %v2208
  %v2237 = vpack.c.b16 %v2211, %v2210
  %v2238 = vpack.c.b16 %v2213, %v2212
  %v2239 = vpack.c.b16 %v2215, %v2214
  %v2240 = vpack.c.b16 %v2217, %v2216
  %v2241 = vpack.c.b16 %v2219, %v2218
  %v2242 = vpack.c.b16 %v2221, %v2220
  %v2243 = vpack.c.b16 %v2223, %v2222
  %v2244 = vpack.c.b16 %v2225, %v2224
  %v2245 = vpack.c.b16 %v2227, %v2226
  %v2246 = vpack.c.b16 %v2229, %v2228
  %v2247 = vpack.c.b16 %v2231, %v2230
  %2264 = vmatpush.bf16.msra.mxu0 %v2239
  %2265 = vmatpush.bf16.msra.mxu0 %v2238
  %2266 = vmatpush.bf16.msra.mxu0 %v2237
  %2267 = vmatpush.bf16.msra.mxu0 %v2236
  %2268 = vmatpush.bf16.msra.mxu0 %v2235
  %2269 = vmatpush.bf16.msra.mxu0 %v2234
  %2270 = vmatpush.bf16.msra.mxu0 %v2233
  %2271 = vmatpush.bf16.msra.mxu0 %v2232
  %2272 = vmatmul.bf16.gmra.mxu0 %v2130
  %v2273 = vpop.f32.mrf.mxu0
  %v2274 = vadd.f32 %v2166, %v2273
  %v2275 = vpop.f32.mrf.mxu0
  %2276 = vdwg.mxu0
  %2277 = vmatpush.bf16.msra.mxu0 %v2247
  %2278 = vmatpush.bf16.msra.mxu0 %v2246
  %2279 = vmatpush.bf16.msra.mxu0 %v2245
  %2280 = vmatpush.bf16.msra.mxu0 %v2244
  %2281 = vmatpush.bf16.msra.mxu0 %v2243
  %2282 = vmatpush.bf16.msra.mxu0 %v2242
  %2283 = vmatpush.bf16.msra.mxu0 %v2241
  %2284 = vmatpush.bf16.msra.mxu0 %v2240
  %2285 = vmatmul.bf16.gmra.mxu0 %v2131
  %v2286 = vpop.f32.mrf.mxu0
  %v2287 = vadd.f32 %v2274, %v2286
  %v2288 = vpop.f32.mrf.mxu0
  %2289 = vdwg.mxu0
  %2290 = vst [vmem:[%s7] sm:$0xff] %v2287
  // Predicated region
  $region30: #{cnn_forward.11} parent=0 // pred_check
    _
  $region31: #{cnn_forward.11} parent=0 // pred_check_branch
    %2292 = sbr.rel (0) target = $region33
  $region32: #{cnn_forward.11} parent=0 // pred_region
    _
  $region33: #{cnn_forward.11} parent=0 // pred_fallthru
    _
  // Predicated region
  $region34: #{cnn_forward.11} parent=0 // pred_check
    _
  $region35: #{cnn_forward.11} parent=0 // pred_check_branch
    %2294 = sbr.rel (0) target = $region37
  $region36: #{cnn_forward.11} parent=0 // pred_region
    _
  $region37: #{cnn_forward.11} parent=0 // pred_fallthru
    _

</llo_original>
